<compile_context>
chip_gen: v7x
topology: tpu7x:2x2x1
jax: 0.10.0
libtpu: 0.0.40
codegen_flags: <defaults>
</compile_context>

<pallas_src>
import math

import jax
import jax.numpy as jnp
from jax.experimental import pallas as pl
from jax.experimental.pallas import tpu as pltpu


def _make_kernel(n_heads, head_dim, dim, n_tokens):
    H, hd, C, N = n_heads, head_dim, dim, n_tokens
    # Folds the quantum-map factor 2 and the 1/sqrt(head_dim) attention scale.
    scale2 = 2.0 / math.sqrt(head_dim)

    def kernel(x_ref, topo_ref, wqkv_ref, bqkv_ref, wo_ref, bo_ref, out_ref):
        x = x_ref[...]  # (N, C)  (leading batch dim squeezed by BlockSpec)

        # Fused QKV projection: one lane-dense (N, C) @ (C, 3C) MXU pass.
        qkv = jnp.dot(x, wqkv_ref[...],
                      preferred_element_type=jnp.float32) + bqkv_ref[...]
        q = qkv[:, :C]
        k = qkv[:, C:2 * C]
        v = qkv[:, 2 * C:]

        # Quantum feature map collapsed by the trig identity (n_layers == 2):
        # cos/sin computed once on the dense (N, C) projections (4 EUP passes).
        qc, qs = jnp.cos(q), jnp.sin(q)
        kc, ks = jnp.cos(k), jnp.sin(k)

        # (N, C) -> (H, N, hd): hoisted relayouts, one per tensor (no head loop).
        def heads(a):
            return jnp.transpose(a.reshape(N, H, hd), (1, 0, 2))

        qf = jnp.concatenate([heads(qc), heads(qs)], axis=-1)   # (H, N, 2*hd)
        kf = jnp.concatenate([heads(kc), heads(ks)], axis=-1)   # (H, N, 2*hd)
        vh = heads(v)                                           # (H, N, hd)

        # All heads' scores in ONE batched MXU pass; the K-transpose is folded
        # into the contraction dimension numbers (no explicit .T).
        s = jnp.einsum("hnd,hmd->hnm", qf, kf,
                       preferred_element_type=jnp.float32)      # (H, N, N)

        # topo * (2 / sqrt(head_dim)): computed once per batch, shared by heads.
        s = s * (topo_ref[...] * scale2)                        # bcast over H

        # Batched softmax over the key axis for all heads at once.
        m = jnp.max(s, axis=2, keepdims=True)
        e = jnp.exp(s - m)
        l = jnp.sum(e, axis=2, keepdims=True)
        inv = pl.reciprocal(l, approx=True)   # EUP slot
        inv = inv * (2.0 - l * inv)           # one Newton step -> ~f32 exact
        a = e * inv

        # Batched A @ V, then reassemble the (N, C) context in registers
        # (no masked per-head VMEM stores, no scratch readback).
        ctx = jnp.einsum("hnm,hmd->hnd", a, vh,
                         preferred_element_type=jnp.float32)    # (H, N, hd)
        ctx = jnp.transpose(ctx, (1, 0, 2)).reshape(N, C)

        # Output projection as one dense matmul.
        out_ref[...] = (jnp.dot(ctx, wo_ref[...],
                                preferred_element_type=jnp.float32)
                        + bo_ref[...])

    return kernel


def topological_quantum_attention(x, topo_weights, params, n_heads):
    B, N, C = x.shape
    head_dim = C // n_heads

    # Host-side fusion of the three projection weights/biases -> one wide matmul.
    wqkv = jnp.concatenate([params["wq"], params["wk"], params["wv"]], axis=1)  # (C, 3C)
    bqkv = jnp.concatenate([params["bq"], params["bk"], params["bv"]], axis=1)  # (1, 3C)

    kernel = _make_kernel(n_heads, head_dim, C, N)

    def call(single_buffer_weights):
        def wspec(shape):
            # Grid-constant weights: single-buffer to reclaim VMEM (double
            # buffering a constant-index block only wastes space).
            kwargs = {}
            if single_buffer_weights:
                kwargs["pipeline_mode"] = pl.Buffered(1)
            return pl.BlockSpec(shape, lambda b: (0,) * len(shape), **kwargs)

        return pl.pallas_call(
            kernel,
            out_shape=jax.ShapeDtypeStruct((B, N, C), jnp.float32),
            grid=(B,),
            in_specs=[
                pl.BlockSpec((pl.Squeezed(), N, C), lambda b: (b, 0, 0)),  # x
                pl.BlockSpec((pl.Squeezed(), N, N), lambda b: (b, 0, 0)),  # topo
                wspec((C, 3 * C)),                                         # wqkv
                wspec((1, 3 * C)),                                         # bqkv
                wspec((C, C)),                                             # wo
                wspec((1, C)),                                             # bo
            ],
            out_specs=pl.BlockSpec((pl.Squeezed(), N, C), lambda b: (b, 0, 0)),
            compiler_params=pltpu.CompilerParams(
                dimension_semantics=("parallel",)),
        )(x, topo_weights, wqkv, bqkv, params["wo"], params["bo"])

    try:
        return jax.block_until_ready(call(True))
    except Exception:
        # pipeline_mode=pl.Buffered(1) not accepted by this JAX/backend combo;
        # fall back to default (double-buffered) weight specs.
        return call(False)


# ----------------------------------------------------------------------------
# Pure-JAX reference mirroring the PyTorch forward (uses the literal 4-feature
# quantum map, so it also validates the trig-identity simplification).
# ----------------------------------------------------------------------------
def _quantum_map_ref(t, n_layers=2):
    feats = []
    for i in range(n_layers):
        shift = i * math.pi / 2.0
        feats.append(jnp.cos(t + shift))
        feats.append(jnp.sin(t + shift))
    return jnp.concatenate(feats, axis=-1)


def reference(x, topo_weights, params, n_heads):
    B, N, C = x.shape
    hd = C // n_heads
    q = (x @ params["wq"] + params["bq"][0]).reshape(B, N, n_heads, hd)
    k = (x @ params["wk"] + params["bk"][0]).reshape(B, N, n_heads, hd)
    v = (x @ params["wv"] + params["bv"][0]).reshape(B, N, n_heads, hd)
    qq = _quantum_map_ref(q)
    kk = _quantum_map_ref(k)
    scores = jnp.einsum("bnhd,bmhd->bnmh", qq, kk) / math.sqrt(hd)
    scores = scores * topo_weights[..., None]
    attn = jax.nn.softmax(scores, axis=2)
    out = jnp.einsum("bnmh,bmhd->bnhd", attn, v).reshape(B, N, C)
    return out @ params["wo"] + params["bo"][0]


def init_params(key, dim):
    """Deterministic synthetic parameters (Linear(dim, dim) x4)."""
    ks = jax.random.split(key, 8)
    scale = 1.0 / math.sqrt(dim)

    def lin(kw, kb):
        w = jax.random.uniform(kw, (dim, dim), jnp.float32, -scale, scale)
        b = jax.random.uniform(kb, (1, dim), jnp.float32, -scale, scale)
        return w, b

    wq, bq = lin(ks[0], ks[1])
    wk, bk = lin(ks[2], ks[3])
    wv, bv = lin(ks[4], ks[5])
    wo, bo = lin(ks[6], ks[7])
    return dict(wq=wq, bq=bq, wk=wk, bk=bk, wv=wv, bv=bv, wo=wo, bo=bo)


if __name__ == "__main__":
    B, N, C, H = 2, 8, 32, 8  # head_dim = 4

    key = jax.random.PRNGKey(0)
    kx, kt, kp = jax.random.split(key, 3)
    x = jax.random.normal(kx, (B, N, C), jnp.float32)
    topo_weights = jax.random.uniform(kt, (B, N, N), jnp.float32)
    params = init_params(kp, C)

    out = topological_quantum_attention(x, topo_weights, params, H)
    out = jax.block_until_ready(out)

    ref = reference(x, topo_weights, params, H)
    assert out.shape == (B, N, C)
    assert jnp.allclose(out, ref, atol=1e-4, rtol=1e-4), "mismatch vs reference"

    print("KERNEL_OK")
</pallas_src>

<mosaic_0001>
module attributes {stable_mosaic.version = 11 : i64} {
  func.func @kernel(%arg0: i32, %arg1: memref<1x8x32xf32, #tpu.memory_space<vmem>>, %arg2: memref<1x8x8xf32, #tpu.memory_space<vmem>>, %arg3: memref<32x96xf32, #tpu.memory_space<vmem>>, %arg4: memref<1x96xf32, #tpu.memory_space<vmem>>, %arg5: memref<32x32xf32, #tpu.memory_space<vmem>>, %arg6: memref<1x32xf32, #tpu.memory_space<vmem>>, %arg7: memref<1x8x32xf32, #tpu.memory_space<vmem>>) attributes {dimension_semantics = [#tpu.dimension_semantics<parallel>], iteration_bounds = array<i64: 2>, scalar_prefetch = 0 : i64, scratch_operands = 0 : i64, tpu.core_type = #tpu.core_type<tc>, window_params = [{transform_indices = @transform_0, window_bounds = array<i64: 1, 8, 32>}, {transform_indices = @transform_1, window_bounds = array<i64: 1, 8, 8>}, {pipeline_mode = #tpu.pipeline_mode<synchronous>, transform_indices = @transform_2, window_bounds = array<i64: 32, 96>}, {pipeline_mode = #tpu.pipeline_mode<synchronous>, transform_indices = @transform_3, window_bounds = array<i64: 1, 96>}, {pipeline_mode = #tpu.pipeline_mode<synchronous>, transform_indices = @transform_4, window_bounds = array<i64: 32, 32>}, {pipeline_mode = #tpu.pipeline_mode<synchronous>, transform_indices = @transform_5, window_bounds = array<i64: 1, 32>}, {transform_indices = @transform_6, window_bounds = array<i64: 1, 8, 32>}]} {
    %c0 = arith.constant 0 : index
    %c0_0 = arith.constant 0 : index
    %c0_1 = arith.constant 0 : index
    %0 = vector.load %arg1[%c0, %c0_0, %c0_1] : memref<1x8x32xf32, #tpu.memory_space<vmem>>, vector<1x8x32xf32>
    %1 = vector.shape_cast %0 : vector<1x8x32xf32> to vector<8x32xf32>
    %c0_2 = arith.constant 0 : index
    %c0_3 = arith.constant 0 : index
    %2 = vector.load %arg3[%c0_2, %c0_3] : memref<32x96xf32, #tpu.memory_space<vmem>>, vector<32x96xf32>
    %cst = arith.constant dense<0.000000e+00> : vector<8x96xf32>
    %3 = tpu.matmul %1, %2, %cst {dimension_numbers = #tpu.dot_dimension_numbers<[1], [0], [0], [1], [0, 0, 1, 1], [], []>} : vector<8x32xf32>, vector<32x96xf32>, vector<8x96xf32> -> vector<8x96xf32>
    %c0_4 = arith.constant 0 : index
    %c0_5 = arith.constant 0 : index
    %4 = vector.load %arg4[%c0_4, %c0_5] : memref<1x96xf32, #tpu.memory_space<vmem>>, vector<1x96xf32>
    %5 = vector.broadcast %4 : vector<1x96xf32> to vector<8x96xf32>
    %6 = arith.addf %3, %5 : vector<8x96xf32>
    %7 = vector.extract_strided_slice %6 {offsets = [0, 0], sizes = [8, 32], strides = [1, 1]} : vector<8x96xf32> to vector<8x32xf32>
    %8 = vector.extract_strided_slice %6 {offsets = [0, 32], sizes = [8, 32], strides = [1, 1]} : vector<8x96xf32> to vector<8x32xf32>
    %9 = vector.extract_strided_slice %6 {offsets = [0, 64], sizes = [8, 32], strides = [1, 1]} : vector<8x96xf32> to vector<8x32xf32>
    %10 = math.cos %7 : vector<8x32xf32>
    %11 = math.sin %7 : vector<8x32xf32>
    %12 = math.cos %8 : vector<8x32xf32>
    %13 = math.sin %8 : vector<8x32xf32>
    %14 = vector.shape_cast %10 : vector<8x32xf32> to vector<8x8x4xf32>
    %15 = tpu.transpose %14, [1, 0, 2] : vector<8x8x4xf32> -> vector<8x8x4xf32>
    %16 = vector.shape_cast %11 : vector<8x32xf32> to vector<8x8x4xf32>
    %17 = tpu.transpose %16, [1, 0, 2] : vector<8x8x4xf32> -> vector<8x8x4xf32>
    %18 = tpu.concatenate %15, %17 in 2 : vector<8x8x4xf32>, vector<8x8x4xf32> -> vector<8x8x8xf32>
    %19 = vector.shape_cast %12 : vector<8x32xf32> to vector<8x8x4xf32>
    %20 = tpu.transpose %19, [1, 0, 2] : vector<8x8x4xf32> -> vector<8x8x4xf32>
    %21 = vector.shape_cast %13 : vector<8x32xf32> to vector<8x8x4xf32>
    %22 = tpu.transpose %21, [1, 0, 2] : vector<8x8x4xf32> -> vector<8x8x4xf32>
    %23 = tpu.concatenate %20, %22 in 2 : vector<8x8x4xf32>, vector<8x8x4xf32> -> vector<8x8x8xf32>
    %24 = vector.shape_cast %9 : vector<8x32xf32> to vector<8x8x4xf32>
    %25 = tpu.transpose %24, [1, 0, 2] : vector<8x8x4xf32> -> vector<8x8x4xf32>
    "tpu.trace_start"() <{level = 10 : i32, message = "hnd,hmd->hnm"}> : () -> ()
    %cst_6 = arith.constant dense<0.000000e+00> : vector<8x8x8xf32>
    %26 = tpu.matmul %18, %23, %cst_6 {dimension_numbers = #tpu.dot_dimension_numbers<[2], [2], [1], [1], [0, 0, 0, 1, 1, 1], [0], [0]>} : vector<8x8x8xf32>, vector<8x8x8xf32>, vector<8x8x8xf32> -> vector<8x8x8xf32>
    "tpu.trace_stop"() : () -> ()
    %c0_7 = arith.constant 0 : index
    %c0_8 = arith.constant 0 : index
    %c0_9 = arith.constant 0 : index
    %27 = vector.load %arg2[%c0_7, %c0_8, %c0_9] : memref<1x8x8xf32, #tpu.memory_space<vmem>>, vector<1x8x8xf32>
    %28 = vector.shape_cast %27 : vector<1x8x8xf32> to vector<8x8xf32>
    %cst_10 = arith.constant 1.000000e+00 : f32
    %29 = vector.broadcast %cst_10 : f32 to vector<8x8xf32>
    %30 = arith.mulf %28, %29 : vector<8x8xf32>
    %31 = vector.shape_cast %30 : vector<8x8xf32> to vector<1x8x8xf32>
    %32 = vector.broadcast %31 : vector<1x8x8xf32> to vector<8x8x8xf32>
    %33 = arith.mulf %26, %32 : vector<8x8x8xf32>
    %cst_11 = arith.constant dense<0xFF800000> : vector<8x8xf32>
    %34 = vector.multi_reduction <maximumf>, %33, %cst_11 [2] : vector<8x8x8xf32> to vector<8x8xf32>
    %35 = vector.shape_cast %34 : vector<8x8xf32> to vector<8x8x1xf32>
    %36 = vector.broadcast %35 : vector<8x8x1xf32> to vector<8x8x8xf32>
    %37 = arith.subf %33, %36 : vector<8x8x8xf32>
    %38 = math.exp %37 : vector<8x8x8xf32>
    %cst_12 = arith.constant dense<0.000000e+00> : vector<8x8xf32>
    %39 = vector.multi_reduction <add>, %38, %cst_12 [2] : vector<8x8x8xf32> to vector<8x8xf32>
    %40 = vector.shape_cast %39 : vector<8x8xf32> to vector<8x8x1xf32>
    %41 = tpu.reciprocal %40 {approx = true} : vector<8x8x1xf32> -> vector<8x8x1xf32>
    %42 = arith.mulf %40, %41 : vector<8x8x1xf32>
    %cst_13 = arith.constant 2.000000e+00 : f32
    %43 = vector.broadcast %cst_13 : f32 to vector<8x8x1xf32>
    %44 = arith.subf %43, %42 : vector<8x8x1xf32>
    %45 = arith.mulf %41, %44 : vector<8x8x1xf32>
    %46 = vector.broadcast %45 : vector<8x8x1xf32> to vector<8x8x8xf32>
    %47 = arith.mulf %38, %46 : vector<8x8x8xf32>
    "tpu.trace_start"() <{level = 10 : i32, message = "hnm,hmd->hnd"}> : () -> ()
    %cst_14 = arith.constant dense<0.000000e+00> : vector<8x8x4xf32>
    %48 = tpu.matmul %47, %25, %cst_14 {dimension_numbers = #tpu.dot_dimension_numbers<[2], [1], [1], [2], [0, 0, 0, 1, 1, 2], [0], [0]>} : vector<8x8x8xf32>, vector<8x8x4xf32>, vector<8x8x4xf32> -> vector<8x8x4xf32>
    "tpu.trace_stop"() : () -> ()
    %49 = tpu.transpose %48, [1, 0, 2] : vector<8x8x4xf32> -> vector<8x8x4xf32>
    %50 = vector.shape_cast %49 : vector<8x8x4xf32> to vector<8x32xf32>
    %c0_15 = arith.constant 0 : index
    %c0_16 = arith.constant 0 : index
    %51 = vector.load %arg5[%c0_15, %c0_16] : memref<32x32xf32, #tpu.memory_space<vmem>>, vector<32x32xf32>
    %cst_17 = arith.constant dense<0.000000e+00> : vector<8x32xf32>
    %52 = tpu.matmul %50, %51, %cst_17 {dimension_numbers = #tpu.dot_dimension_numbers<[1], [0], [0], [1], [0, 0, 1, 1], [], []>} : vector<8x32xf32>, vector<32x32xf32>, vector<8x32xf32> -> vector<8x32xf32>
    %c0_18 = arith.constant 0 : index
    %c0_19 = arith.constant 0 : index
    %53 = vector.load %arg6[%c0_18, %c0_19] : memref<1x32xf32, #tpu.memory_space<vmem>>, vector<1x32xf32>
    %54 = vector.broadcast %53 : vector<1x32xf32> to vector<8x32xf32>
    %55 = arith.addf %52, %54 : vector<8x32xf32>
    %c0_20 = arith.constant 0 : index
    %c0_21 = arith.constant 0 : index
    %c0_22 = arith.constant 0 : index
    %56 = vector.load %arg7[%c0_20, %c0_21, %c0_22] : memref<1x8x32xf32, #tpu.memory_space<vmem>>, vector<1x8x32xf32>
    %57 = vector.shape_cast %56 : vector<1x8x32xf32> to vector<8x32xf32>
    %58 = vector.shape_cast %55 : vector<8x32xf32> to vector<1x8x32xf32>
    tpu.vector_store %arg7[%c0_20, %c0_21, %c0_22], %58 {strides = array<i32>} : memref<1x8x32xf32, #tpu.memory_space<vmem>>, vector<1x8x32xf32>,
    return
  }
  func.func @transform_0(%arg0: i32) -> (i32, i32, i32) {
    %c0_i32 = arith.constant 0 : i32
    %c0_i32_0 = arith.constant 0 : i32
    %c0_i32_1 = arith.constant 0 : i32
    return %arg0, %c0_i32, %c0_i32_0 : i32, i32, i32
  }
  func.func @transform_1(%arg0: i32) -> (i32, i32, i32) {
    %c0_i32 = arith.constant 0 : i32
    %c0_i32_0 = arith.constant 0 : i32
    %c0_i32_1 = arith.constant 0 : i32
    return %arg0, %c0_i32, %c0_i32_0 : i32, i32, i32
  }
  func.func @transform_2(%arg0: i32) -> (i32, i32) {
    %c0_i32 = arith.constant 0 : i32
    %c0_i32_0 = arith.constant 0 : i32
    %c0_i32_1 = arith.constant 0 : i32
    return %c0_i32, %c0_i32_0 : i32, i32
  }
  func.func @transform_3(%arg0: i32) -> (i32, i32) {
    %c0_i32 = arith.constant 0 : i32
    %c0_i32_0 = arith.constant 0 : i32
    %c0_i32_1 = arith.constant 0 : i32
    return %c0_i32, %c0_i32_0 : i32, i32
  }
  func.func @transform_4(%arg0: i32) -> (i32, i32) {
    %c0_i32 = arith.constant 0 : i32
    %c0_i32_0 = arith.constant 0 : i32
    %c0_i32_1 = arith.constant 0 : i32
    return %c0_i32, %c0_i32_0 : i32, i32
  }
  func.func @transform_5(%arg0: i32) -> (i32, i32) {
    %c0_i32 = arith.constant 0 : i32
    %c0_i32_0 = arith.constant 0 : i32
    %c0_i32_1 = arith.constant 0 : i32
    return %c0_i32, %c0_i32_0 : i32, i32
  }
  func.func @transform_6(%arg0: i32) -> (i32, i32, i32) {
    %c0_i32 = arith.constant 0 : i32
    %c0_i32_0 = arith.constant 0 : i32
    %c0_i32_1 = arith.constant 0 : i32
    return %arg0, %c0_i32, %c0_i32_0 : i32, i32, i32
  }
}

module attributes {stable_mosaic.version = 11 : i64} {
  func.func @kernel(%arg0: i32, %arg1: memref<1x8x32xf32, #tpu.memory_space<vmem>>, %arg2: memref<1x8x8xf32, #tpu.memory_space<vmem>>, %arg3: memref<32x96xf32, #tpu.memory_space<vmem>>, %arg4: memref<1x96xf32, #tpu.memory_space<vmem>>, %arg5: memref<32x32xf32, #tpu.memory_space<vmem>>, %arg6: memref<1x32xf32, #tpu.memory_space<vmem>>, %arg7: memref<1x8x32xf32, #tpu.memory_space<vmem>>) attributes {dimension_semantics = [#tpu.dimension_semantics<parallel>], iteration_bounds = array<i64: 2>, scalar_prefetch = 0 : i64, scratch_operands = 0 : i64, tpu.core_type = #tpu.core_type<tc>, window_params = [{transform_indices = @transform_0, window_bounds = array<i64: 1, 8, 32>}, {transform_indices = @transform_1, window_bounds = array<i64: 1, 8, 8>}, {pipeline_mode = #tpu.pipeline_mode<synchronous>, transform_indices = @transform_2, window_bounds = array<i64: 32, 96>}, {pipeline_mode = #tpu.pipeline_mode<synchronous>, transform_indices = @transform_3, window_bounds = array<i64: 1, 96>}, {pipeline_mode = #tpu.pipeline_mode<synchronous>, transform_indices = @transform_4, window_bounds = array<i64: 32, 32>}, {pipeline_mode = #tpu.pipeline_mode<synchronous>, transform_indices = @transform_5, window_bounds = array<i64: 1, 32>}, {transform_indices = @transform_6, window_bounds = array<i64: 1, 8, 32>}]} {
    %c0 = arith.constant 0 : index
    %c0_0 = arith.constant 0 : index
    %c0_1 = arith.constant 0 : index
    %0 = vector.load %arg1[%c0, %c0_0, %c0_1] : memref<1x8x32xf32, #tpu.memory_space<vmem>>, vector<1x8x32xf32>
    %1 = vector.shape_cast %0 : vector<1x8x32xf32> to vector<8x32xf32>
    %c0_2 = arith.constant 0 : index
    %c0_3 = arith.constant 0 : index
    %2 = vector.load %arg3[%c0_2, %c0_3] : memref<32x96xf32, #tpu.memory_space<vmem>>, vector<32x96xf32>
    %cst = arith.constant dense<0.000000e+00> : vector<8x96xf32>
    %3 = tpu.matmul %1, %2, %cst {dimension_numbers = #tpu.dot_dimension_numbers<[1], [0], [0], [1], [0, 0, 1, 1], [], []>} : vector<8x32xf32>, vector<32x96xf32>, vector<8x96xf32> -> vector<8x96xf32>
    %c0_4 = arith.constant 0 : index
    %c0_5 = arith.constant 0 : index
    %4 = vector.load %arg4[%c0_4, %c0_5] : memref<1x96xf32, #tpu.memory_space<vmem>>, vector<1x96xf32>
    %5 = vector.broadcast %4 : vector<1x96xf32> to vector<8x96xf32>
    %6 = arith.addf %3, %5 : vector<8x96xf32>
    %7 = vector.extract_strided_slice %6 {offsets = [0, 0], sizes = [8, 32], strides = [1, 1]} : vector<8x96xf32> to vector<8x32xf32>
    %8 = vector.extract_strided_slice %6 {offsets = [0, 32], sizes = [8, 32], strides = [1, 1]} : vector<8x96xf32> to vector<8x32xf32>
    %9 = vector.extract_strided_slice %6 {offsets = [0, 64], sizes = [8, 32], strides = [1, 1]} : vector<8x96xf32> to vector<8x32xf32>
    %10 = math.cos %7 : vector<8x32xf32>
    %11 = math.sin %7 : vector<8x32xf32>
    %12 = math.cos %8 : vector<8x32xf32>
    %13 = math.sin %8 : vector<8x32xf32>
    %14 = vector.shape_cast %10 : vector<8x32xf32> to vector<8x8x4xf32>
    %15 = tpu.transpose %14, [1, 0, 2] : vector<8x8x4xf32> -> vector<8x8x4xf32>
    %16 = vector.shape_cast %11 : vector<8x32xf32> to vector<8x8x4xf32>
    %17 = tpu.transpose %16, [1, 0, 2] : vector<8x8x4xf32> -> vector<8x8x4xf32>
    %18 = tpu.concatenate %15, %17 in 2 : vector<8x8x4xf32>, vector<8x8x4xf32> -> vector<8x8x8xf32>
    %19 = vector.shape_cast %12 : vector<8x32xf32> to vector<8x8x4xf32>
    %20 = tpu.transpose %19, [1, 0, 2] : vector<8x8x4xf32> -> vector<8x8x4xf32>
    %21 = vector.shape_cast %13 : vector<8x32xf32> to vector<8x8x4xf32>
    %22 = tpu.transpose %21, [1, 0, 2] : vector<8x8x4xf32> -> vector<8x8x4xf32>
    %23 = tpu.concatenate %20, %22 in 2 : vector<8x8x4xf32>, vector<8x8x4xf32> -> vector<8x8x8xf32>
    %24 = vector.shape_cast %9 : vector<8x32xf32> to vector<8x8x4xf32>
    %25 = tpu.transpose %24, [1, 0, 2] : vector<8x8x4xf32> -> vector<8x8x4xf32>
    "tpu.trace_start"() <{level = 10 : i32, message = "hnd,hmd->hnm"}> : () -> ()
    %cst_6 = arith.constant dense<0.000000e+00> : vector<8x8x8xf32>
    %26 = tpu.matmul %18, %23, %cst_6 {dimension_numbers = #tpu.dot_dimension_numbers<[2], [2], [1], [1], [0, 0, 0, 1, 1, 1], [0], [0]>} : vector<8x8x8xf32>, vector<8x8x8xf32>, vector<8x8x8xf32> -> vector<8x8x8xf32>
    "tpu.trace_stop"() : () -> ()
    %c0_7 = arith.constant 0 : index
    %c0_8 = arith.constant 0 : index
    %c0_9 = arith.constant 0 : index
    %27 = vector.load %arg2[%c0_7, %c0_8, %c0_9] : memref<1x8x8xf32, #tpu.memory_space<vmem>>, vector<1x8x8xf32>
    %28 = vector.shape_cast %27 : vector<1x8x8xf32> to vector<8x8xf32>
    %cst_10 = arith.constant 1.000000e+00 : f32
    %29 = vector.broadcast %cst_10 : f32 to vector<8x8xf32>
    %30 = arith.mulf %28, %29 : vector<8x8xf32>
    %31 = vector.shape_cast %30 : vector<8x8xf32> to vector<1x8x8xf32>
    %32 = vector.broadcast %31 : vector<1x8x8xf32> to vector<8x8x8xf32>
    %33 = arith.mulf %26, %32 : vector<8x8x8xf32>
    %cst_11 = arith.constant dense<0xFF800000> : vector<8x8xf32>
    %34 = vector.multi_reduction <maximumf>, %33, %cst_11 [2] : vector<8x8x8xf32> to vector<8x8xf32>
    %35 = vector.shape_cast %34 : vector<8x8xf32> to vector<8x8x1xf32>
    %36 = vector.broadcast %35 : vector<8x8x1xf32> to vector<8x8x8xf32>
    %37 = arith.subf %33, %36 : vector<8x8x8xf32>
    %38 = math.exp %37 : vector<8x8x8xf32>
    %cst_12 = arith.constant dense<0.000000e+00> : vector<8x8xf32>
    %39 = vector.multi_reduction <add>, %38, %cst_12 [2] : vector<8x8x8xf32> to vector<8x8xf32>
    %40 = vector.shape_cast %39 : vector<8x8xf32> to vector<8x8x1xf32>
    %41 = tpu.reciprocal %40 {approx = true} : vector<8x8x1xf32> -> vector<8x8x1xf32>
    %42 = arith.mulf %40, %41 : vector<8x8x1xf32>
    %cst_13 = arith.constant 2.000000e+00 : f32
    %43 = vector.broadcast %cst_13 : f32 to vector<8x8x1xf32>
    %44 = arith.subf %43, %42 : vector<8x8x1xf32>
    %45 = arith.mulf %41, %44 : vector<8x8x1xf32>
    %46 = vector.broadcast %45 : vector<8x8x1xf32> to vector<8x8x8xf32>
    %47 = arith.mulf %38, %46 : vector<8x8x8xf32>
    "tpu.trace_start"() <{level = 10 : i32, message = "hnm,hmd->hnd"}> : () -> ()
    %cst_14 = arith.constant dense<0.000000e+00> : vector<8x8x4xf32>
    %48 = tpu.matmul %47, %25, %cst_14 {dimension_numbers = #tpu.dot_dimension_numbers<[2], [1], [1], [2], [0, 0, 0, 1, 1, 2], [0], [0]>} : vector<8x8x8xf32>, vector<8x8x4xf32>, vector<8x8x4xf32> -> vector<8x8x4xf32>
    "tpu.trace_stop"() : () -> ()
    %49 = tpu.transpose %48, [1, 0, 2] : vector<8x8x4xf32> -> vector<8x8x4xf32>
    %50 = vector.shape_cast %49 : vector<8x8x4xf32> to vector<8x32xf32>
    %c0_15 = arith.constant 0 : index
    %c0_16 = arith.constant 0 : index
    %51 = vector.load %arg5[%c0_15, %c0_16] : memref<32x32xf32, #tpu.memory_space<vmem>>, vector<32x32xf32>
    %cst_17 = arith.constant dense<0.000000e+00> : vector<8x32xf32>
    %52 = tpu.matmul %50, %51, %cst_17 {dimension_numbers = #tpu.dot_dimension_numbers<[1], [0], [0], [1], [0, 0, 1, 1], [], []>} : vector<8x32xf32>, vector<32x32xf32>, vector<8x32xf32> -> vector<8x32xf32>
    %c0_18 = arith.constant 0 : index
    %c0_19 = arith.constant 0 : index
    %53 = vector.load %arg6[%c0_18, %c0_19] : memref<1x32xf32, #tpu.memory_space<vmem>>, vector<1x32xf32>
    %54 = vector.broadcast %53 : vector<1x32xf32> to vector<8x32xf32>
    %55 = arith.addf %52, %54 : vector<8x32xf32>
    %c0_20 = arith.constant 0 : index
    %c0_21 = arith.constant 0 : index
    %c0_22 = arith.constant 0 : index
    %56 = vector.load %arg7[%c0_20, %c0_21, %c0_22] : memref<1x8x32xf32, #tpu.memory_space<vmem>>, vector<1x8x32xf32>
    %57 = vector.shape_cast %56 : vector<1x8x32xf32> to vector<8x32xf32>
    %58 = vector.shape_cast %55 : vector<8x32xf32> to vector<1x8x32xf32>
    tpu.vector_store %arg7[%c0_20, %c0_21, %c0_22], %58 {strides = array<i32>} : memref<1x8x32xf32, #tpu.memory_space<vmem>>, vector<1x8x32xf32>,
    return
  }
  func.func @transform_0(%arg0: i32) -> (i32, i32, i32) {
    %c0_i32 = arith.constant 0 : i32
    %c0_i32_0 = arith.constant 0 : i32
    %c0_i32_1 = arith.constant 0 : i32
    return %arg0, %c0_i32, %c0_i32_0 : i32, i32, i32
  }
  func.func @transform_1(%arg0: i32) -> (i32, i32, i32) {
    %c0_i32 = arith.constant 0 : i32
    %c0_i32_0 = arith.constant 0 : i32
    %c0_i32_1 = arith.constant 0 : i32
    return %arg0, %c0_i32, %c0_i32_0 : i32, i32, i32
  }
  func.func @transform_2(%arg0: i32) -> (i32, i32) {
    %c0_i32 = arith.constant 0 : i32
    %c0_i32_0 = arith.constant 0 : i32
    %c0_i32_1 = arith.constant 0 : i32
    return %c0_i32, %c0_i32_0 : i32, i32
  }
  func.func @transform_3(%arg0: i32) -> (i32, i32) {
    %c0_i32 = arith.constant 0 : i32
    %c0_i32_0 = arith.constant 0 : i32
    %c0_i32_1 = arith.constant 0 : i32
    return %c0_i32, %c0_i32_0 : i32, i32
  }
  func.func @transform_4(%arg0: i32) -> (i32, i32) {
    %c0_i32 = arith.constant 0 : i32
    %c0_i32_0 = arith.constant 0 : i32
    %c0_i32_1 = arith.constant 0 : i32
    return %c0_i32, %c0_i32_0 : i32, i32
  }
  func.func @transform_5(%arg0: i32) -> (i32, i32) {
    %c0_i32 = arith.constant 0 : i32
    %c0_i32_0 = arith.constant 0 : i32
    %c0_i32_1 = arith.constant 0 : i32
    return %c0_i32, %c0_i32_0 : i32, i32
  }
  func.func @transform_6(%arg0: i32) -> (i32, i32, i32) {
    %c0_i32 = arith.constant 0 : i32
    %c0_i32_0 = arith.constant 0 : i32
    %c0_i32_1 = arith.constant 0 : i32
    return %arg0, %c0_i32, %c0_i32_0 : i32, i32, i32
  }
}

</mosaic_0001>

<llo_original>
// kernel: tpu_custom_call.1
$region0: #{tpu_custom_call.1}
  #allocation0 [shape = 'u32[]', space=smem, size = 0x4, offset = 0x4, fixed_abs, tag = 'smem constant byte address 0x4 - core index']
  #allocation1 [shape = 'u32[144,128]{1,0:T(1,128)}', space=vmem, size = 0x12000, scoped, tag = 'internal scratch']
  %s0 = inlined_call_operand.hbm [shape: f32[2,8,32], index: 0, kind: input, shape index: {}]
  %s1 = inlined_call_operand.hbm [shape: f32[2,8,8], index: 1, kind: input, shape index: {}]
  %s2 = inlined_call_operand.hbm [shape: f32[32,96], index: 2, kind: input, shape index: {}]
  %s3 = inlined_call_operand.vmem [shape: f32[1,96], index: 3, kind: input, shape index: {}]
  %s4 = inlined_call_operand.hbm [shape: f32[32,32], index: 4, kind: input, shape index: {}]
  %s5 = inlined_call_operand.vmem [shape: f32[1,32], index: 5, kind: input, shape index: {}]
  %s6 = inlined_call_operand.hbm [shape: f32[2,8,32], index: 6, kind: output, shape index: {}]
  %s7 = sld [smem:[#allocation0]]
  $region73: #{tpu_custom_call.1} parent=0
    _
  %s9 = ssub.s32 1, %s7
  %s10 = scalar_select 0, %s9, %s7
  $region1: #{tpu_custom_call.1} parent=0
    #allocation2 [shape = 'u8[8192]{0}', space=vmem, size = 0x2000, scoped, tag = 'input window, operand 0']
    #allocation3 [shape = 's32[2]{0}', space=sflag, size = 0x8, scoped, tag = 'scoped memory for tpu_custom_call.1']
    #allocation4 [shape = 's32[2]{0}', space=sflag, size = 0x8, scoped, tag = 'scoped memory for tpu_custom_call.1']
    #allocation5 [shape = 'u8[8192]{0}', space=vmem, size = 0x2000, scoped, tag = 'input window, operand 1']
    #allocation6 [shape = 's32[2]{0}', space=sflag, size = 0x8, scoped, tag = 'scoped memory for tpu_custom_call.1']
    #allocation7 [shape = 'u8[16384]{0}', space=vmem, size = 0x4000, scoped, tag = 'input window, operand 2, single buffered']
    #allocation8 [shape = 'u8[16384]{0}', space=vmem, size = 0x4000, scoped, tag = 'input window, operand 4, single buffered']
    #allocation9 [shape = 's32[1]{0}', space=sflag, size = 0x4, scoped, tag = 'scoped memory for tpu_custom_call.1']
    #allocation10 [shape = 'u8[8192]{0}', space=vmem, size = 0x2000, scoped, tag = 'output window, operand 0']
    %11 = vsyncpa [#allocation3], 0
    %s12 = scalar_lea.sflag [#allocation3], 1
    %13 = vsyncpa %s12, 0
    %14 = vsyncpa [#allocation6], 0
    %s15 = scalar_lea.sflag [#allocation6], 1
    %16 = vsyncpa %s15, 0
    %17 = vsyncpa [#allocation9], 0
    %18 = vsyncpa [#allocation4], 0
    %s19 = scalar_lea.sflag [#allocation4], 1
    %20 = vsyncpa %s19, 0
    loop: start=0, step=1, limit=4
    $region2: #{tpu_custom_call.1} parent=1 // loop_pre_header
      _
    $region3: #{tpu_custom_call.1} parent=1 // loop_header
      %s22 = sphi 0, %s26
      %p23 = scmp.ge.s32.totalorder %s22, 4
      %s32 = sphi 0, %s34
      %s35 = sphi 0, %s32
      %s36 = sphi 0, %s35
      %s52 = sphi 0, %s36
      %s58 = sphi 0, %s60
      %s61 = sphi 0, %s58
      %s62 = sphi 0, %s61
      %s78 = sphi 0, %s62
      %s82 = sphi 0, %s82
      %s84 = sphi 0, %s82
      %s85 = sphi 0, %s84
      %s99 = sphi 0, %s85
      %s103 = sphi 0, %s103
      %s105 = sphi 0, %s103
      %s106 = sphi 0, %s105
      %s120 = sphi 0, %s106
      %s124 = sphi 0, %s124
      %s126 = sphi 0, %s124
      %s127 = sphi 0, %s126
      %s141 = sphi 0, %s127
      %s145 = sphi 0, %s145
      %s147 = sphi 0, %s145
      %s148 = sphi 0, %s147
      %s162 = sphi 0, %s148
      %s168 = sphi 0, %s170
      %s171 = sphi 0, %s168
      %s172 = sphi 0, %s171
      %s188 = sphi 0, %s172
    $region4: #{tpu_custom_call.1} parent=1 // loop_header_branch
      %25 = sbr.rel (%p23) target = $region8
    $region5: #{tpu_custom_call.1} parent=1 // loop_body
      %s27 = ssub.s32 %s22, 1
      %s28 = ssub.s32 %s22, 2
      %s29 = sadd.s32 %s22, 1
      %s30 = ssub.s32 %s22, %s29
      %p31 = scmp.eq.s32.totalorder %s30, 0
      %s33 = sadd.s32 %s32, 1
      %s34 = scalar_select %p31, %s32, %s33
      %p37 = pneg %p31
      %p38 = scmp.eq.s32.totalorder %s22, 1
      %p39 = por %p37, %p38
      %p40 = scmp.ne.s32.totalorder %s32, %s35
      %p41 = scmp.eq.s32.totalorder %s22, 0
      %p42 = por %p40, %p41
      %p43 = scmp.ne.s32.totalorder %s32, %s35
      %p44 = scmp.eq.s32.totalorder %s27, 1
      %p45 = por %p43, %p44
      %p46 = scmp.ne.s32.totalorder %s35, %s36
      %p47 = scmp.eq.s32.totalorder %s27, 0
      %p48 = por %p46, %p47
      %p49 = scmp.ne.s32.totalorder %s35, %s36
      %p50 = scmp.eq.s32.totalorder %s28, 1
      %p51 = por %p49, %p50
      %p53 = scmp.ne.s32.totalorder %s36, %s52
      %p54 = scmp.eq.s32.totalorder %s28, 0
      %p55 = por %p53, %p54
      %s56 = ssub.s32 %s22, %s29
      %p57 = scmp.eq.s32.totalorder %s56, 0
      %s59 = sadd.s32 %s58, 1
      %s60 = scalar_select %p57, %s58, %s59
      %p63 = pneg %p57
      %p64 = scmp.eq.s32.totalorder %s22, 1
      %p65 = por %p63, %p64
      %p66 = scmp.ne.s32.totalorder %s58, %s61
      %p67 = scmp.eq.s32.totalorder %s22, 0
      %p68 = por %p66, %p67
      %p69 = scmp.ne.s32.totalorder %s58, %s61
      %p70 = scmp.eq.s32.totalorder %s27, 1
      %p71 = por %p69, %p70
      %p72 = scmp.ne.s32.totalorder %s61, %s62
      %p73 = scmp.eq.s32.totalorder %s27, 0
      %p74 = por %p72, %p73
      %p75 = scmp.ne.s32.totalorder %s61, %s62
      %p76 = scmp.eq.s32.totalorder %s28, 1
      %p77 = por %p75, %p76
      %p79 = scmp.ne.s32.totalorder %s62, %s78
      %p80 = scmp.eq.s32.totalorder %s28, 0
      %p81 = por %p79, %p80
      %s83 = sadd.s32 %s82, 1
      %p86 = scmp.eq.s32.totalorder %s22, 1
      %p87 = scmp.ne.s32.totalorder %s82, %s84
      %p88 = scmp.eq.s32.totalorder %s22, 0
      %p89 = por %p87, %p88
      %p90 = scmp.ne.s32.totalorder %s82, %s84
      %p91 = scmp.eq.s32.totalorder %s27, 1
      %p92 = por %p90, %p91
      %p93 = scmp.ne.s32.totalorder %s84, %s85
      %p94 = scmp.eq.s32.totalorder %s27, 0
      %p95 = por %p93, %p94
      %p96 = scmp.ne.s32.totalorder %s84, %s85
      %p97 = scmp.eq.s32.totalorder %s28, 1
      %p98 = por %p96, %p97
      %p100 = scmp.ne.s32.totalorder %s85, %s99
      %p101 = scmp.eq.s32.totalorder %s28, 0
      %p102 = por %p100, %p101
      %s104 = sadd.s32 %s103, 1
      %p107 = scmp.eq.s32.totalorder %s22, 1
      %p108 = scmp.ne.s32.totalorder %s103, %s105
      %p109 = scmp.eq.s32.totalorder %s22, 0
      %p110 = por %p108, %p109
      %p111 = scmp.ne.s32.totalorder %s103, %s105
      %p112 = scmp.eq.s32.totalorder %s27, 1
      %p113 = por %p111, %p112
      %p114 = scmp.ne.s32.totalorder %s105, %s106
      %p115 = scmp.eq.s32.totalorder %s27, 0
      %p116 = por %p114, %p115
      %p117 = scmp.ne.s32.totalorder %s105, %s106
      %p118 = scmp.eq.s32.totalorder %s28, 1
      %p119 = por %p117, %p118
      %p121 = scmp.ne.s32.totalorder %s106, %s120
      %p122 = scmp.eq.s32.totalorder %s28, 0
      %p123 = por %p121, %p122
      %s125 = sadd.s32 %s124, 1
      %p128 = scmp.eq.s32.totalorder %s22, 1
      %p129 = scmp.ne.s32.totalorder %s124, %s126
      %p130 = scmp.eq.s32.totalorder %s22, 0
      %p131 = por %p129, %p130
      %p132 = scmp.ne.s32.totalorder %s124, %s126
      %p133 = scmp.eq.s32.totalorder %s27, 1
      %p134 = por %p132, %p133
      %p135 = scmp.ne.s32.totalorder %s126, %s127
      %p136 = scmp.eq.s32.totalorder %s27, 0
      %p137 = por %p135, %p136
      %p138 = scmp.ne.s32.totalorder %s126, %s127
      %p139 = scmp.eq.s32.totalorder %s28, 1
      %p140 = por %p138, %p139
      %p142 = scmp.ne.s32.totalorder %s127, %s141
      %p143 = scmp.eq.s32.totalorder %s28, 0
      %p144 = por %p142, %p143
      %s146 = sadd.s32 %s145, 1
      %p149 = scmp.eq.s32.totalorder %s22, 1
      %p150 = scmp.ne.s32.totalorder %s145, %s147
      %p151 = scmp.eq.s32.totalorder %s22, 0
      %p152 = por %p150, %p151
      %p153 = scmp.ne.s32.totalorder %s145, %s147
      %p154 = scmp.eq.s32.totalorder %s27, 1
      %p155 = por %p153, %p154
      %p156 = scmp.ne.s32.totalorder %s147, %s148
      %p157 = scmp.eq.s32.totalorder %s27, 0
      %p158 = por %p156, %p157
      %p159 = scmp.ne.s32.totalorder %s147, %s148
      %p160 = scmp.eq.s32.totalorder %s28, 1
      %p161 = por %p159, %p160
      %p163 = scmp.ne.s32.totalorder %s148, %s162
      %p164 = scmp.eq.s32.totalorder %s28, 0
      %p165 = por %p163, %p164
      %s166 = ssub.s32 %s22, %s29
      %p167 = scmp.eq.s32.totalorder %s166, 0
      %s169 = sadd.s32 %s168, 1
      %s170 = scalar_select %p167, %s168, %s169
      %p173 = pneg %p167
      %p174 = scmp.eq.s32.totalorder %s22, 1
      %p175 = por %p173, %p174
      %p176 = scmp.ne.s32.totalorder %s168, %s171
      %p177 = scmp.eq.s32.totalorder %s22, 0
      %p178 = por %p176, %p177
      %p179 = scmp.ne.s32.totalorder %s168, %s171
      %p180 = scmp.eq.s32.totalorder %s27, 1
      %p181 = por %p179, %p180
      %p182 = scmp.ne.s32.totalorder %s171, %s172
      %p183 = scmp.eq.s32.totalorder %s27, 0
      %p184 = por %p182, %p183
      %p185 = scmp.ne.s32.totalorder %s171, %s172
      %p186 = scmp.eq.s32.totalorder %s28, 1
      %p187 = por %p185, %p186
      %p189 = scmp.ne.s32.totalorder %s172, %s188
      %p190 = scmp.eq.s32.totalorder %s28, 0
      %p191 = por %p189, %p190
      %p192 = scmp.le.s32.totalorder 1, %s22
      %p193 = scmp.lt.s32.totalorder %s22, 3
      %p194 = pnand %p192, %p193
      %p195 = pneg %p194
      // Predicated region
      $region9: #{tpu_custom_call.1} parent=5 // pred_check
        _
      $region10: #{tpu_custom_call.1} parent=5 // pred_check_branch
        %197 = sbr.rel (%p194) target = $region12
      $region11: #{tpu_custom_call.1} parent=5 // pred_region
        %s198 = ssub.s32 %s22, 1
        // Predicated region
        $region13: #{tpu_custom_call.1} parent=11 // pred_check
          %p199 = pneg %p95
        $region14: #{tpu_custom_call.1} parent=11 // pred_check_branch
          %201 = sbr.rel (%p199) target = $region16
        $region15: #{tpu_custom_call.1} parent=11 // pred_region
          %s203 = ssub.s32 512, 512
          %204 = vsyncadd [#allocation6], %s203
          %s205 = sshll.u32 [#allocation7], 4
          %s206 = int_to_ptr.vmem [resolvable:$true] %s205
          %211 = dma.hbm_to_vmem [thread:$0]  %s2, 512, %s206, [#allocation6], 128, 128, 8
        $region16: #{tpu_custom_call.1} parent=11 // pred_fallthru
          _
        // Predicated region
        $region17: #{tpu_custom_call.1} parent=11 // pred_check
          %p212 = pneg %p116
        $region18: #{tpu_custom_call.1} parent=11 // pred_check_branch
          %214 = sbr.rel (%p212) target = $region20
        $region19: #{tpu_custom_call.1} parent=11 // pred_region
          _
        $region20: #{tpu_custom_call.1} parent=11 // pred_fallthru
          _
        // Predicated region
        $region21: #{tpu_custom_call.1} parent=11 // pred_check
          %p215 = pneg %p137
        $region22: #{tpu_custom_call.1} parent=11 // pred_check_branch
          %217 = sbr.rel (%p215) target = $region24
        $region23: #{tpu_custom_call.1} parent=11 // pred_region
          %s219 = ssub.s32 512, 512
          %220 = vsyncadd [#allocation9], %s219
          %s221 = sshll.u32 [#allocation8], 4
          %s222 = int_to_ptr.vmem [resolvable:$true] %s221
          %227 = dma.hbm_to_vmem [thread:$0]  %s4, 512, %s222, [#allocation9], 128, 128, 8
        $region24: #{tpu_custom_call.1} parent=11 // pred_fallthru
          _
        // Predicated region
        $region25: #{tpu_custom_call.1} parent=11 // pred_check
          %p228 = pneg %p158
        $region26: #{tpu_custom_call.1} parent=11 // pred_check_branch
          %230 = sbr.rel (%p228) target = $region28
        $region27: #{tpu_custom_call.1} parent=11 // pred_region
          _
        $region28: #{tpu_custom_call.1} parent=11 // pred_fallthru
          _
      $region12: #{tpu_custom_call.1} parent=5 // pred_fallthru
        _
      %p231 = scmp.lt.s32.totalorder %s22, 2
      // Predicated region
      $region29: #{tpu_custom_call.1} parent=5 // pred_check
        %p232 = pneg %p231
      $region30: #{tpu_custom_call.1} parent=5 // pred_check_branch
        %234 = sbr.rel (%p232) target = $region32
      $region31: #{tpu_custom_call.1} parent=5 // pred_region
        // Predicated region
        $region33: #{tpu_custom_call.1} parent=31 // pred_check
          %p235 = pneg %p42
        $region34: #{tpu_custom_call.1} parent=31 // pred_check_branch
          %237 = sbr.rel (%p235) target = $region36
        $region35: #{tpu_custom_call.1} parent=31 // pred_region
          %s238 = sand.u32 %s32, 1
          %s239 = scalar_lea.sflag [#allocation3], %s238
          %s240 = sand.u32 %s32, 1
          %s241 = smul.addr %s240, 8
          %s242 = scalar_lea.vmem [#allocation2], %s241
          %s244 = ssub.s32 128, 128
          %245 = vsyncadd %s239, %s244
          %s246 = smul.addr %s22, 128
          %s247 = scalar_lea.hbm %s0, %s246
          %s249 = sshll.u32 %s242, 4
          %s250 = int_to_ptr.vmem [resolvable:$true] %s249
          %252 = dma.hbm_to_vmem [thread:$0]  %s247, 128, %s250, %s239
        $region36: #{tpu_custom_call.1} parent=31 // pred_fallthru
          _
        // Predicated region
        $region37: #{tpu_custom_call.1} parent=31 // pred_check
          %p253 = pneg %p68
        $region38: #{tpu_custom_call.1} parent=31 // pred_check_branch
          %255 = sbr.rel (%p253) target = $region40
        $region39: #{tpu_custom_call.1} parent=31 // pred_region
          %s256 = sand.u32 %s22, 1
          %s257 = scalar_lea.sflag [#allocation6], %s256
          %s258 = sand.u32 %s58, 1
          %s259 = smul.addr %s258, 8
          %s260 = scalar_lea.vmem [#allocation5], %s259
          %s262 = ssub.s32 128, 128
          %263 = vsyncadd %s257, %s262
          %s264 = smul.addr %s22, 128
          %s265 = scalar_lea.hbm %s1, %s264
          %s267 = sshll.u32 %s260, 4
          %s268 = int_to_ptr.vmem [resolvable:$true] %s267
          %270 = dma.hbm_to_vmem [thread:$0]  %s265, 128, %s268, %s257
        $region40: #{tpu_custom_call.1} parent=31 // pred_fallthru
          _
      $region32: #{tpu_custom_call.1} parent=5 // pred_fallthru
        _
      %p271 = scmp.le.s32.totalorder 1, %s22
      %p272 = scmp.lt.s32.totalorder %s22, 3
      %p273 = pnand %p271, %p272
      %p274 = pneg %p273
      // Predicated region
      $region41: #{tpu_custom_call.1} parent=5 // pred_check
        _
      $region42: #{tpu_custom_call.1} parent=5 // pred_check_branch
        %276 = sbr.rel (%p273) target = $region44
      $region43: #{tpu_custom_call.1} parent=5 // pred_region
        %s277 = ssub.s32 %s22, 1
        %s278 = sand.u32 %s35, 1
        %s279 = scalar_lea.sflag [#allocation3], %s278
        %s280 = sand.u32 %s35, 1
        %s281 = smul.addr %s280, 8
        %s282 = scalar_lea.vmem [#allocation2], %s281
        // Predicated region
        $region45: #{tpu_custom_call.1} parent=43 // pred_check
          %p283 = pneg %p48
        $region46: #{tpu_custom_call.1} parent=43 // pred_check_branch
          %285 = sbr.rel (%p283) target = $region48
        $region47: #{tpu_custom_call.1} parent=43 // pred_region
          %286 = dma.done %s279, 128
        $region48: #{tpu_custom_call.1} parent=43 // pred_fallthru
          _
        %s287 = sand.u32 %s27, 1
        %s288 = scalar_lea.sflag [#allocation6], %s287
        %s289 = sand.u32 %s61, 1
        %s290 = smul.addr %s289, 8
        %s291 = scalar_lea.vmem [#allocation5], %s290
        // Predicated region
        $region49: #{tpu_custom_call.1} parent=43 // pred_check
          %p292 = pneg %p74
        $region50: #{tpu_custom_call.1} parent=43 // pred_check_branch
          %294 = sbr.rel (%p292) target = $region52
        $region51: #{tpu_custom_call.1} parent=43 // pred_region
          %295 = dma.done %s288, 128
        $region52: #{tpu_custom_call.1} parent=43 // pred_fallthru
          _
        // Predicated region
        $region53: #{tpu_custom_call.1} parent=43 // pred_check
          %p296 = pneg %p95
        $region54: #{tpu_custom_call.1} parent=43 // pred_check_branch
          %298 = sbr.rel (%p296) target = $region56
        $region55: #{tpu_custom_call.1} parent=43 // pred_region
          %299 = dma.done [#allocation6], 512
        $region56: #{tpu_custom_call.1} parent=43 // pred_fallthru
          _
        // Predicated region
        $region57: #{tpu_custom_call.1} parent=43 // pred_check
          %p300 = pneg %p137
        $region58: #{tpu_custom_call.1} parent=43 // pred_check_branch
          %302 = sbr.rel (%p300) target = $region60
        $region59: #{tpu_custom_call.1} parent=43 // pred_region
          %303 = dma.done [#allocation9], 512
        $region60: #{tpu_custom_call.1} parent=43 // pred_fallthru
          _
        %s304 = sand.u32 %s35, 1
        %s305 = scalar_lea.sflag [#allocation3], %s304
        %s306 = sand.u32 %s35, 1
        %s307 = smul.addr %s306, 8
        %s308 = scalar_lea.vmem [#allocation2], %s307
        %p309 = pneg %p48
        %p310 = pneg %p45
        %s311 = sand.u32 %s27, 1
        %s312 = scalar_lea.sflag [#allocation6], %s311
        %s313 = sand.u32 %s61, 1
        %s314 = smul.addr %s313, 8
        %s315 = scalar_lea.vmem [#allocation5], %s314
        %p316 = pneg %p74
        %p317 = pneg %p71
        %p318 = pneg %p95
        %p319 = pneg %p92
        %p320 = pneg %p116
        %p321 = pneg %p113
        %p322 = pneg %p137
        %p323 = pneg %p134
        %p324 = pneg %p158
        %p325 = pneg %p155
        %p326 = pneg %p184
        %p327 = pneg %p181
        %s328 = sand.u32 %s171, 1
        %s329 = scalar_lea.sflag [#allocation4], %s328
        %s330 = sand.u32 %s171, 1
        %s331 = smul.addr %s330, 8
        %s332 = scalar_lea.vmem [#allocation10], %s331
        %v333 = vld [vmem:[%s282] sm:$0xff]
        %v334 = vld [vmem:[#allocation7] sm:$0xff]
        %v335 = vld [vmem:[#allocation7 + $0x8] sm:$0xff]
        %v336 = vld [vmem:[#allocation7 + $0x10] sm:$0xff]
        %v337 = vld [vmem:[#allocation7 + $0x18] sm:$0xff]
        %v338 = vld [vmem:[%s3] sm:$0x1]
        %v340 = vlaneseq
        %v341 = vshrl.u32 %v340, 7
        %v342 = vsub.s32 0, %v341
        %v343 = vrot.slane %v338, %v342
        %vm345 = vcmask 261120
        %v347 = vsel %vm345, %v333, 0
        %349 = vmatprep.subr.mxu0 0.0
        %350 = vmatpush1.msra.mxu0 %v334
        %351 = vmatprep.subr.mxu0 0.0
        %352 = vmatpush1.msra.mxu0 %v335
        %353 = vmatprep.subr.mxu0 0.0
        %354 = vmatpush1.msra.mxu0 %v336
        %355 = vmatprep.subr.mxu0 0.0
        %356 = vmatpush1.msra.mxu0 %v337
        %357 = vmatprep.subr.mxu0 0.0
        %358 = vmatpush1.msra.mxu0 0.0
        %359 = vmatprep.subr.mxu0 0.0
        %360 = vmatpush1.msra.mxu0 0.0
        %361 = vmatprep.subr.mxu0 0.0
        %362 = vmatpush1.msra.mxu0 0.0
        %363 = vmatprep.subr.mxu0 0.0
        %364 = vmatpush1.msra.mxu0 0.0
        %365 = vmatprep.subr.mxu0 0.0
        %366 = vmatpush1.msra.mxu0 0.0
        %367 = vmatprep.subr.mxu0 0.0
        %368 = vmatpush1.msra.mxu0 0.0
        %369 = vmatprep.subr.mxu0 0.0
        %370 = vmatpush1.msra.mxu0 0.0
        %371 = vmatprep.subr.mxu0 0.0
        %372 = vmatpush1.msra.mxu0 0.0
        %373 = vmatprep.subr.mxu0 0.0
        %374 = vmatpush1.msra.mxu0 0.0
        %375 = vmatprep.subr.mxu0 0.0
        %376 = vmatpush1.msra.mxu0 0.0
        %377 = vmatprep.subr.mxu0 0.0
        %378 = vmatpush1.msra.mxu0 0.0
        %379 = vmatprep.subr.mxu0 0.0
        %380 = vmatpush1.msra.mxu0 0.0
        %381 = vmatprep.subr.mxu0 0.0
        %382 = vmatpush1.msra.mxu0 0.0
        %383 = vmatprep.subr.mxu0 0.0
        %384 = vmatpush1.msra.mxu0 0.0
        %385 = vmatprep.subr.mxu0 0.0
        %386 = vmatpush1.msra.mxu0 0.0
        %387 = vmatprep.subr.mxu0 0.0
        %388 = vmatpush1.msra.mxu0 0.0
        %389 = vmatprep.subr.mxu0 0.0
        %390 = vmatpush1.msra.mxu0 0.0
        %391 = vmatprep.subr.mxu0 0.0
        %392 = vmatpush1.msra.mxu0 0.0
        %393 = vmatprep.subr.mxu0 0.0
        %394 = vmatpush1.msra.mxu0 0.0
        %395 = vmatprep.subr.mxu0 0.0
        %396 = vmatpush1.msra.mxu0 0.0
        %397 = vmatprep.subr.mxu0 0.0
        %398 = vmatpush1.msra.mxu0 0.0
        %399 = vmatprep.subr.mxu0 0.0
        %400 = vmatpush1.msra.mxu0 0.0
        %401 = vmatprep.subr.mxu0 0.0
        %402 = vmatpush1.msra.mxu0 0.0
        %403 = vmatprep.subr.mxu0 0.0
        %404 = vmatpush1.msra.mxu0 0.0
        %405 = vmatprep.subr.mxu0 0.0
        %406 = vmatpush1.msra.mxu0 0.0
        %407 = vmatprep.subr.mxu0 0.0
        %408 = vmatpush1.msra.mxu0 0.0
        %409 = vmatprep.subr.mxu0 0.0
        %410 = vmatpush1.msra.mxu0 0.0
        %411 = vmatprep.subr.mxu0 0.0
        %412 = vmatpush1.msra.mxu0 0.0
        %413 = vmatprep.mubr.f32.mxu0 0.0
        %414 = vmatmul.mubr.f32.gmra.mrb[0].mxu0 %v347
        %v415 = vpop.f32.mrb[0].mxu0
        %v416 = vadd.f32 %v343, %v415
        %v417 = vpop.f32.mrb[0].mxu0
        %418 = vdwg.mxu0
        %v419 = vand.u32 2147483647, %v416
        %vm420 = vcmp.le.f32.partialorder %v419, 0.7853982
        %vm421 = vcmp.lt.s32.totalorder %v416, 0
        %v422 = vand.u32 %v416, 2139095040
        %v423 = vshrl.u32 %v422, 23
        %v424 = vsub.s32 %v423, 127
        %v425 = vand.u32 2147483647, %v416
        %v426 = vand.u32 %v425, 8388607
        %v427 = vor.u32 %v426, 8388608
        %v428 = vsub.s32 0, %v427
        %v429 = vadd.s32 %v424, 1
        %vm430 = vcmp.gt.s32.totalorder %v429, 0
        %v431 = vsel %vm430, %v429, 0
        %v432 = vshrl.u32 %v431, 5
        %v433 = vand.u32 %v431, 31
        %v434 = vsub.s32 32, %v433
        %v435 = vshrl.u32 683565275, %v434
        %v436 = vshll.u32 683565275, %v433
        %v437 = vshrl.u32 2475754826, %v434
        %v438 = vor.u32 %v436, %v437
        %v439 = vshll.u32 2475754826, %v433
        %v440 = vshrl.u32 2131351028, %v434
        %v441 = vor.u32 %v439, %v440
        %v442 = vshll.u32 2131351028, %v433
        %v443 = vshrl.u32 2102212464, %v434
        %v444 = vor.u32 %v442, %v443
        %v445 = vshll.u32 2102212464, %v433
        %v446 = vshrl.u32 920167782, %v434
        %v447 = vor.u32 %v445, %v446
        %v448 = vshll.u32 920167782, %v433
        %v449 = vshrl.u32 1326507024, %v434
        %v450 = vor.u32 %v448, %v449
        %vm451 = vcmp.lt.s32.totalorder %v432, 1
        %vm452 = vcmp.lt.s32.totalorder %v432, 2
        %vm453 = vcmp.lt.s32.totalorder %v432, 3
        %vm454 = vcmp.lt.s32.totalorder %v432, 4
        %v455 = vsel %vm451, %v435, %v438
        %v456 = vsel %vm454, %v444, 2102212464
        %v457 = vsel %vm453, %v441, %v456
        %v458 = vsel %vm452, %v455, %v457
        %v459 = vsel %vm451, %v438, %v441
        %v460 = vsel %vm454, %v447, 920167782
        %v461 = vsel %vm453, %v444, %v460
        %v462 = vsel %vm452, %v459, %v461
        %v463 = vsel %vm451, %v441, %v444
        %v464 = vsel %vm454, %v450, 1326507024
        %v465 = vsel %vm453, %v447, %v464
        %v466 = vsel %vm452, %v463, %v465
        %v467 = vshll.u32 %v427, 8
        %v468 = vmul.u32.u64.compose %v467, %v466
        %v469 = vextract.low.u32 %v468
        %v470 = vextract.high.u32 %v468
        %v471 = vmul.u32.u64.compose %v467, %v462
        %v472 = vextract.low.u32 %v471
        %v473 = vextract.high.u32 %v471
        %v474 = vmul.u32 %v467, %v458
        %v475 = vadd.s32 %v470, %v472
        %vm476 = vc.u32 %v470, %v472
        %v477 = vadd.s32 %v473, 1
        %v478 = vsel %vm476, %v477, %v473
        %v479 = vadd.s32 %v474, %v478
        %v480 = vadd.s32 %v479, 536870912
        %v481 = vshrl.u32 %v480, 30
        %v482 = vshll.u32 %v481, 30
        %v483 = vsub.s32 %v479, %v482
        %vm484 = vcmp.lt.s32.totalorder %v483, 0
        %v485 = vsub.s32 0, %v483
        %v486 = vsel %vm484, %v485, %v483
        %v487 = vclz %v486
        %v488 = vsub.s32 %v487, 2
        %vm489 = vcmp.gt.s32.totalorder 0, %v488
        %v490 = vsel %vm489, 0, %v488
        %v491 = vsub.s32 32, %v490
        %v492 = vshll.u32 %v483, %v490
        %v493 = vshrl.u32 %v475, %v491
        %v494 = vor.u32 %v492, %v493
        %v495 = vsub.s32 4294967266, %v490
        %v496 = vadd.s32 %v495, 127
        %v497 = vshll.u32 %v496, 23
        %v498 = vor.u32 4788187, %v497
        %v499 = vand.u32 2147483647, %v498
        %v501 = vcvt.s32.f32 %v494
        %v502 = vmul.f32 %v501, %v499
        %v503 = vxor.u32 %v502, 2147483648
        %v504 = vsel %vm421, %v503, %v502
        %v505 = vsub.s32 4, %v481
        %v506 = vsel %vm421, %v505, %v481
        %v507 = vsel %vm420, %v416, %v504
        %v508 = vsel %vm420, 0, %v506
        %v509 = vcosq.f32.pop %v507
        %v510 = vsinq.f32.pop %v507
        %vm511 = vweird.f32 %v416
        %v512 = vand.u32 %v508, 3
        %vm513 = vcmp.lt.s32.totalorder %v512, 2
        %vm514 = vcmp.eq.s32.totalorder %v512, 0
        %v515 = vxor.u32 %v510, 2147483648
        %v516 = vsel %vm514, %v509, %v515
        %vm517 = vcmp.eq.s32.totalorder %v512, 2
        %v518 = vxor.u32 %v509, 2147483648
        %v519 = vsel %vm517, %v518, %v510
        %v520 = vsel %vm513, %v516, %v519
        %v521 = vsel %vm511, nan, %v520
        %v522 = vand.u32 2147483647, %v416
        %vm523 = vcmp.le.f32.partialorder %v522, 0.7853982
        %vm524 = vcmp.lt.s32.totalorder %v416, 0
        %v525 = vand.u32 %v416, 2139095040
        %v526 = vshrl.u32 %v525, 23
        %v527 = vsub.s32 %v526, 127
        %v528 = vand.u32 2147483647, %v416
        %v529 = vand.u32 %v528, 8388607
        %v530 = vor.u32 %v529, 8388608
        %v531 = vsub.s32 0, %v530
        %v532 = vadd.s32 %v527, 1
        %vm533 = vcmp.gt.s32.totalorder %v532, 0
        %v534 = vsel %vm533, %v532, 0
        %v535 = vshrl.u32 %v534, 5
        %v536 = vand.u32 %v534, 31
        %v537 = vsub.s32 32, %v536
        %v538 = vshrl.u32 683565275, %v537
        %v539 = vshll.u32 683565275, %v536
        %v540 = vshrl.u32 2475754826, %v537
        %v541 = vor.u32 %v539, %v540
        %v542 = vshll.u32 2475754826, %v536
        %v543 = vshrl.u32 2131351028, %v537
        %v544 = vor.u32 %v542, %v543
        %v545 = vshll.u32 2131351028, %v536
        %v546 = vshrl.u32 2102212464, %v537
        %v547 = vor.u32 %v545, %v546
        %v548 = vshll.u32 2102212464, %v536
        %v549 = vshrl.u32 920167782, %v537
        %v550 = vor.u32 %v548, %v549
        %v551 = vshll.u32 920167782, %v536
        %v552 = vshrl.u32 1326507024, %v537
        %v553 = vor.u32 %v551, %v552
        %vm554 = vcmp.lt.s32.totalorder %v535, 1
        %vm555 = vcmp.lt.s32.totalorder %v535, 2
        %vm556 = vcmp.lt.s32.totalorder %v535, 3
        %vm557 = vcmp.lt.s32.totalorder %v535, 4
        %v558 = vsel %vm554, %v538, %v541
        %v559 = vsel %vm557, %v547, 2102212464
        %v560 = vsel %vm556, %v544, %v559
        %v561 = vsel %vm555, %v558, %v560
        %v562 = vsel %vm554, %v541, %v544
        %v563 = vsel %vm557, %v550, 920167782
        %v564 = vsel %vm556, %v547, %v563
        %v565 = vsel %vm555, %v562, %v564
        %v566 = vsel %vm554, %v544, %v547
        %v567 = vsel %vm557, %v553, 1326507024
        %v568 = vsel %vm556, %v550, %v567
        %v569 = vsel %vm555, %v566, %v568
        %v570 = vshll.u32 %v530, 8
        %v571 = vmul.u32.u64.compose %v570, %v569
        %v572 = vextract.low.u32 %v571
        %v573 = vextract.high.u32 %v571
        %v574 = vmul.u32.u64.compose %v570, %v565
        %v575 = vextract.low.u32 %v574
        %v576 = vextract.high.u32 %v574
        %v577 = vmul.u32 %v570, %v561
        %v578 = vadd.s32 %v573, %v575
        %vm579 = vc.u32 %v573, %v575
        %v580 = vadd.s32 %v576, 1
        %v581 = vsel %vm579, %v580, %v576
        %v582 = vadd.s32 %v577, %v581
        %v583 = vadd.s32 %v582, 536870912
        %v584 = vshrl.u32 %v583, 30
        %v585 = vshll.u32 %v584, 30
        %v586 = vsub.s32 %v582, %v585
        %vm587 = vcmp.lt.s32.totalorder %v586, 0
        %v588 = vsub.s32 0, %v586
        %v589 = vsel %vm587, %v588, %v586
        %v590 = vclz %v589
        %v591 = vsub.s32 %v590, 2
        %vm592 = vcmp.gt.s32.totalorder 0, %v591
        %v593 = vsel %vm592, 0, %v591
        %v594 = vsub.s32 32, %v593
        %v595 = vshll.u32 %v586, %v593
        %v596 = vshrl.u32 %v578, %v594
        %v597 = vor.u32 %v595, %v596
        %v598 = vsub.s32 4294967266, %v593
        %v599 = vadd.s32 %v598, 127
        %v600 = vshll.u32 %v599, 23
        %v601 = vor.u32 4788187, %v600
        %v602 = vand.u32 2147483647, %v601
        %v604 = vcvt.s32.f32 %v597
        %v605 = vmul.f32 %v604, %v602
        %v606 = vxor.u32 %v605, 2147483648
        %v607 = vsel %vm524, %v606, %v605
        %v608 = vsub.s32 4, %v584
        %v609 = vsel %vm524, %v608, %v584
        %v610 = vsel %vm523, %v416, %v607
        %v611 = vsel %vm523, 0, %v609
        %v612 = vcosq.f32.pop %v610
        %v613 = vsinq.f32.pop %v610
        %vm614 = vweird.f32 %v416
        %v615 = vadd.s32 %v611, 3
        %v616 = vand.u32 %v615, 3
        %vm617 = vcmp.lt.s32.totalorder %v616, 2
        %vm618 = vcmp.eq.s32.totalorder %v616, 0
        %v619 = vxor.u32 %v613, 2147483648
        %v620 = vsel %vm618, %v612, %v619
        %vm621 = vcmp.eq.s32.totalorder %v616, 2
        %v622 = vxor.u32 %v612, 2147483648
        %v623 = vsel %vm621, %v622, %v613
        %v624 = vsel %vm617, %v620, %v623
        %v625 = vsel %vm614, nan, %v624
        %627 = vrot.lane.b32.xlu0 %v521, 124
        %v628 = vpop.permute.xlu0 %627
        %630 = vrot.lane.b32.xlu0 %v521, 120
        %v631 = vpop.permute.xlu0 %630
        %633 = vrot.lane.b32.xlu0 %v521, 116
        %v634 = vpop.permute.xlu0 %633
        %636 = vrot.lane.b32.xlu0 %v521, 112
        %v637 = vpop.permute.xlu0 %636
        %639 = vrot.lane.b32.xlu0 %v521, 108
        %v640 = vpop.permute.xlu0 %639
        %642 = vrot.lane.b32.xlu0 %v521, 104
        %v643 = vpop.permute.xlu0 %642
        %645 = vrot.lane.b32.xlu0 %v521, 100
        %v646 = vpop.permute.xlu0 %645
        %v648 = vcombine.low %v521, %v631
        %v649 = vcombine.high %v521, %v631
        %v651 = vunpack.c.l.s4 1983009808
        %v652 = vunpack.c.0.s8 %v651
        %v653 = vlaneseq
        %v654 = vshrl.u32 %v653, 7
        %v655 = vsub.s32 %v652, %v654
        %v656 = vrot.slane %v648, %v655
        %v658 = vunpack.c.l.s4 1983009808
        %v659 = vunpack.c.0.s8 %v658
        %v660 = vlaneseq
        %v661 = vshrl.u32 %v660, 7
        %v662 = vsub.s32 %v659, %v661
        %v663 = vrot.slane %v649, %v662
        %v664 = vcombine.low %v628, %v634
        %v665 = vcombine.high %v628, %v634
        %v667 = vunpack.c.l.s4 1983009808
        %v668 = vunpack.c.0.s8 %v667
        %v669 = vlaneseq
        %v670 = vshrl.u32 %v669, 7
        %v671 = vsub.s32 %v668, %v670
        %v672 = vrot.slane %v664, %v671
        %v674 = vunpack.c.l.s4 1983009808
        %v675 = vunpack.c.0.s8 %v674
        %v676 = vlaneseq
        %v677 = vshrl.u32 %v676, 7
        %v678 = vsub.s32 %v675, %v677
        %v679 = vrot.slane %v665, %v678
        %v680 = vcombine.low %v637, %v643
        %v681 = vcombine.high %v637, %v643
        %v683 = vunpack.c.l.s4 1983009808
        %v684 = vunpack.c.0.s8 %v683
        %v685 = vlaneseq
        %v686 = vshrl.u32 %v685, 7
        %v687 = vsub.s32 %v684, %v686
        %v688 = vrot.slane %v680, %v687
        %v690 = vunpack.c.l.s4 1983009808
        %v691 = vunpack.c.0.s8 %v690
        %v692 = vlaneseq
        %v693 = vshrl.u32 %v692, 7
        %v694 = vsub.s32 %v691, %v693
        %v695 = vrot.slane %v681, %v694
        %v696 = vcombine.low %v640, %v646
        %v697 = vcombine.high %v640, %v646
        %v699 = vunpack.c.l.s4 1983009808
        %v700 = vunpack.c.0.s8 %v699
        %v701 = vlaneseq
        %v702 = vshrl.u32 %v701, 7
        %v703 = vsub.s32 %v700, %v702
        %v704 = vrot.slane %v696, %v703
        %v706 = vunpack.c.l.s4 1983009808
        %v707 = vunpack.c.0.s8 %v706
        %v708 = vlaneseq
        %v709 = vshrl.u32 %v708, 7
        %v710 = vsub.s32 %v707, %v709
        %v711 = vrot.slane %v697, %v710
        %v712 = vcombine.low %v656, %v672
        %v713 = vcombine.high %v656, %v672
        %v715 = vunpack.c.l.s4 1934713408
        %v716 = vunpack.c.0.s8 %v715
        %v717 = vlaneseq
        %v718 = vshrl.u32 %v717, 7
        %v719 = vsub.s32 %v716, %v718
        %v720 = vrot.slane %v712, %v719
        %v722 = vunpack.c.l.s4 1934713408
        %v723 = vunpack.c.0.s8 %v722
        %v724 = vlaneseq
        %v725 = vshrl.u32 %v724, 7
        %v726 = vsub.s32 %v723, %v725
        %v727 = vrot.slane %v713, %v726
        %v728 = vcombine.low %v663, %v679
        %v729 = vcombine.high %v663, %v679
        %v731 = vunpack.c.l.s4 1934713408
        %v732 = vunpack.c.0.s8 %v731
        %v733 = vlaneseq
        %v734 = vshrl.u32 %v733, 7
        %v735 = vsub.s32 %v732, %v734
        %v736 = vrot.slane %v728, %v735
        %v738 = vunpack.c.l.s4 1934713408
        %v739 = vunpack.c.0.s8 %v738
        %v740 = vlaneseq
        %v741 = vshrl.u32 %v740, 7
        %v742 = vsub.s32 %v739, %v741
        %v743 = vrot.slane %v729, %v742
        %v744 = vcombine.low %v688, %v704
        %v745 = vcombine.high %v688, %v704
        %v747 = vunpack.c.l.s4 1934713408
        %v748 = vunpack.c.0.s8 %v747
        %v749 = vlaneseq
        %v750 = vshrl.u32 %v749, 7
        %v751 = vsub.s32 %v748, %v750
        %v752 = vrot.slane %v744, %v751
        %v754 = vunpack.c.l.s4 1934713408
        %v755 = vunpack.c.0.s8 %v754
        %v756 = vlaneseq
        %v757 = vshrl.u32 %v756, 7
        %v758 = vsub.s32 %v755, %v757
        %v759 = vrot.slane %v745, %v758
        %v760 = vcombine.low %v695, %v711
        %v761 = vcombine.high %v695, %v711
        %v763 = vunpack.c.l.s4 1934713408
        %v764 = vunpack.c.0.s8 %v763
        %v765 = vlaneseq
        %v766 = vshrl.u32 %v765, 7
        %v767 = vsub.s32 %v764, %v766
        %v768 = vrot.slane %v760, %v767
        %v770 = vunpack.c.l.s4 1934713408
        %v771 = vunpack.c.0.s8 %v770
        %v772 = vlaneseq
        %v773 = vshrl.u32 %v772, 7
        %v774 = vsub.s32 %v771, %v773
        %v775 = vrot.slane %v761, %v774
        %v776 = vcombine.low %v720, %v752
        %v777 = vcombine.high %v720, %v752
        %v778 = vcombine.low %v727, %v759
        %v779 = vcombine.high %v727, %v759
        %v780 = vcombine.low %v736, %v768
        %v781 = vcombine.high %v736, %v768
        %v782 = vcombine.low %v743, %v775
        %v783 = vcombine.high %v743, %v775
        %v784 = vcombine.low %v776, %v778
        %v785 = vcombine.high %v776, %v778
        %v787 = vunpack.c.l.s4 1983009808
        %v788 = vunpack.c.0.s8 %v787
        %v789 = vlaneseq
        %v790 = vshrl.u32 %v789, 7
        %v791 = vsub.s32 %v788, %v790
        %v792 = vrot.slane %v784, %v791
        %v794 = vunpack.c.l.s4 1983009808
        %v795 = vunpack.c.0.s8 %v794
        %v796 = vlaneseq
        %v797 = vshrl.u32 %v796, 7
        %v798 = vsub.s32 %v795, %v797
        %v799 = vrot.slane %v785, %v798
        %v800 = vcombine.low %v777, %v779
        %v801 = vcombine.high %v777, %v779
        %v803 = vunpack.c.l.s4 1983009808
        %v804 = vunpack.c.0.s8 %v803
        %v805 = vlaneseq
        %v806 = vshrl.u32 %v805, 7
        %v807 = vsub.s32 %v804, %v806
        %v808 = vrot.slane %v800, %v807
        %v810 = vunpack.c.l.s4 1983009808
        %v811 = vunpack.c.0.s8 %v810
        %v812 = vlaneseq
        %v813 = vshrl.u32 %v812, 7
        %v814 = vsub.s32 %v811, %v813
        %v815 = vrot.slane %v801, %v814
        %v816 = vcombine.low %v780, %v782
        %v817 = vcombine.high %v780, %v782
        %v819 = vunpack.c.l.s4 1983009808
        %v820 = vunpack.c.0.s8 %v819
        %v821 = vlaneseq
        %v822 = vshrl.u32 %v821, 7
        %v823 = vsub.s32 %v820, %v822
        %v824 = vrot.slane %v816, %v823
        %v826 = vunpack.c.l.s4 1983009808
        %v827 = vunpack.c.0.s8 %v826
        %v828 = vlaneseq
        %v829 = vshrl.u32 %v828, 7
        %v830 = vsub.s32 %v827, %v829
        %v831 = vrot.slane %v817, %v830
        %v832 = vcombine.low %v781, %v783
        %v833 = vcombine.high %v781, %v783
        %v835 = vunpack.c.l.s4 1983009808
        %v836 = vunpack.c.0.s8 %v835
        %v837 = vlaneseq
        %v838 = vshrl.u32 %v837, 7
        %v839 = vsub.s32 %v836, %v838
        %v840 = vrot.slane %v832, %v839
        %v842 = vunpack.c.l.s4 1983009808
        %v843 = vunpack.c.0.s8 %v842
        %v844 = vlaneseq
        %v845 = vshrl.u32 %v844, 7
        %v846 = vsub.s32 %v843, %v845
        %v847 = vrot.slane %v833, %v846
        %v848 = vcombine.low %v792, %v808
        %v849 = vcombine.high %v792, %v808
        %v851 = vunpack.c.l.s4 1934713408
        %v852 = vunpack.c.0.s8 %v851
        %v853 = vlaneseq
        %v854 = vshrl.u32 %v853, 7
        %v855 = vsub.s32 %v852, %v854
        %v856 = vrot.slane %v848, %v855
        %v858 = vunpack.c.l.s4 1934713408
        %v859 = vunpack.c.0.s8 %v858
        %v860 = vlaneseq
        %v861 = vshrl.u32 %v860, 7
        %v862 = vsub.s32 %v859, %v861
        %v863 = vrot.slane %v849, %v862
        %v864 = vcombine.low %v799, %v815
        %v865 = vcombine.high %v799, %v815
        %v867 = vunpack.c.l.s4 1934713408
        %v868 = vunpack.c.0.s8 %v867
        %v869 = vlaneseq
        %v870 = vshrl.u32 %v869, 7
        %v871 = vsub.s32 %v868, %v870
        %v872 = vrot.slane %v864, %v871
        %v874 = vunpack.c.l.s4 1934713408
        %v875 = vunpack.c.0.s8 %v874
        %v876 = vlaneseq
        %v877 = vshrl.u32 %v876, 7
        %v878 = vsub.s32 %v875, %v877
        %v879 = vrot.slane %v865, %v878
        %v880 = vcombine.low %v824, %v840
        %v881 = vcombine.high %v824, %v840
        %v883 = vunpack.c.l.s4 1934713408
        %v884 = vunpack.c.0.s8 %v883
        %v885 = vlaneseq
        %v886 = vshrl.u32 %v885, 7
        %v887 = vsub.s32 %v884, %v886
        %v888 = vrot.slane %v880, %v887
        %v890 = vunpack.c.l.s4 1934713408
        %v891 = vunpack.c.0.s8 %v890
        %v892 = vlaneseq
        %v893 = vshrl.u32 %v892, 7
        %v894 = vsub.s32 %v891, %v893
        %v895 = vrot.slane %v881, %v894
        %v896 = vcombine.low %v831, %v847
        %v897 = vcombine.high %v831, %v847
        %v899 = vunpack.c.l.s4 1934713408
        %v900 = vunpack.c.0.s8 %v899
        %v901 = vlaneseq
        %v902 = vshrl.u32 %v901, 7
        %v903 = vsub.s32 %v900, %v902
        %v904 = vrot.slane %v896, %v903
        %v906 = vunpack.c.l.s4 1934713408
        %v907 = vunpack.c.0.s8 %v906
        %v908 = vlaneseq
        %v909 = vshrl.u32 %v908, 7
        %v910 = vsub.s32 %v907, %v909
        %v911 = vrot.slane %v897, %v910
        %v912 = vcombine.low %v856, %v888
        %v913 = vcombine.high %v856, %v888
        %v914 = vcombine.low %v863, %v895
        %v915 = vcombine.high %v863, %v895
        %v916 = vcombine.low %v872, %v904
        %v917 = vcombine.high %v872, %v904
        %v918 = vcombine.low %v879, %v911
        %v919 = vcombine.high %v879, %v911
        %921 = vrot.lane.b32.xlu0 %v625, 124
        %v922 = vpop.permute.xlu0 %921
        %924 = vrot.lane.b32.xlu0 %v625, 120
        %v925 = vpop.permute.xlu0 %924
        %927 = vrot.lane.b32.xlu0 %v625, 116
        %v928 = vpop.permute.xlu0 %927
        %930 = vrot.lane.b32.xlu0 %v625, 112
        %v931 = vpop.permute.xlu0 %930
        %933 = vrot.lane.b32.xlu0 %v625, 108
        %v934 = vpop.permute.xlu0 %933
        %936 = vrot.lane.b32.xlu0 %v625, 104
        %v937 = vpop.permute.xlu0 %936
        %939 = vrot.lane.b32.xlu0 %v625, 100
        %v940 = vpop.permute.xlu0 %939
        %v942 = vcombine.low %v625, %v925
        %v943 = vcombine.high %v625, %v925
        %v945 = vunpack.c.l.s4 1983009808
        %v946 = vunpack.c.0.s8 %v945
        %v947 = vlaneseq
        %v948 = vshrl.u32 %v947, 7
        %v949 = vsub.s32 %v946, %v948
        %v950 = vrot.slane %v942, %v949
        %v952 = vunpack.c.l.s4 1983009808
        %v953 = vunpack.c.0.s8 %v952
        %v954 = vlaneseq
        %v955 = vshrl.u32 %v954, 7
        %v956 = vsub.s32 %v953, %v955
        %v957 = vrot.slane %v943, %v956
        %v958 = vcombine.low %v922, %v928
        %v959 = vcombine.high %v922, %v928
        %v961 = vunpack.c.l.s4 1983009808
        %v962 = vunpack.c.0.s8 %v961
        %v963 = vlaneseq
        %v964 = vshrl.u32 %v963, 7
        %v965 = vsub.s32 %v962, %v964
        %v966 = vrot.slane %v958, %v965
        %v968 = vunpack.c.l.s4 1983009808
        %v969 = vunpack.c.0.s8 %v968
        %v970 = vlaneseq
        %v971 = vshrl.u32 %v970, 7
        %v972 = vsub.s32 %v969, %v971
        %v973 = vrot.slane %v959, %v972
        %v974 = vcombine.low %v931, %v937
        %v975 = vcombine.high %v931, %v937
        %v977 = vunpack.c.l.s4 1983009808
        %v978 = vunpack.c.0.s8 %v977
        %v979 = vlaneseq
        %v980 = vshrl.u32 %v979, 7
        %v981 = vsub.s32 %v978, %v980
        %v982 = vrot.slane %v974, %v981
        %v984 = vunpack.c.l.s4 1983009808
        %v985 = vunpack.c.0.s8 %v984
        %v986 = vlaneseq
        %v987 = vshrl.u32 %v986, 7
        %v988 = vsub.s32 %v985, %v987
        %v989 = vrot.slane %v975, %v988
        %v990 = vcombine.low %v934, %v940
        %v991 = vcombine.high %v934, %v940
        %v993 = vunpack.c.l.s4 1983009808
        %v994 = vunpack.c.0.s8 %v993
        %v995 = vlaneseq
        %v996 = vshrl.u32 %v995, 7
        %v997 = vsub.s32 %v994, %v996
        %v998 = vrot.slane %v990, %v997
        %v1000 = vunpack.c.l.s4 1983009808
        %v1001 = vunpack.c.0.s8 %v1000
        %v1002 = vlaneseq
        %v1003 = vshrl.u32 %v1002, 7
        %v1004 = vsub.s32 %v1001, %v1003
        %v1005 = vrot.slane %v991, %v1004
        %v1006 = vcombine.low %v950, %v966
        %v1007 = vcombine.high %v950, %v966
        %v1009 = vunpack.c.l.s4 1934713408
        %v1010 = vunpack.c.0.s8 %v1009
        %v1011 = vlaneseq
        %v1012 = vshrl.u32 %v1011, 7
        %v1013 = vsub.s32 %v1010, %v1012
        %v1014 = vrot.slane %v1006, %v1013
        %v1016 = vunpack.c.l.s4 1934713408
        %v1017 = vunpack.c.0.s8 %v1016
        %v1018 = vlaneseq
        %v1019 = vshrl.u32 %v1018, 7
        %v1020 = vsub.s32 %v1017, %v1019
        %v1021 = vrot.slane %v1007, %v1020
        %v1022 = vcombine.low %v957, %v973
        %v1023 = vcombine.high %v957, %v973
        %v1025 = vunpack.c.l.s4 1934713408
        %v1026 = vunpack.c.0.s8 %v1025
        %v1027 = vlaneseq
        %v1028 = vshrl.u32 %v1027, 7
        %v1029 = vsub.s32 %v1026, %v1028
        %v1030 = vrot.slane %v1022, %v1029
        %v1032 = vunpack.c.l.s4 1934713408
        %v1033 = vunpack.c.0.s8 %v1032
        %v1034 = vlaneseq
        %v1035 = vshrl.u32 %v1034, 7
        %v1036 = vsub.s32 %v1033, %v1035
        %v1037 = vrot.slane %v1023, %v1036
        %v1038 = vcombine.low %v982, %v998
        %v1039 = vcombine.high %v982, %v998
        %v1041 = vunpack.c.l.s4 1934713408
        %v1042 = vunpack.c.0.s8 %v1041
        %v1043 = vlaneseq
        %v1044 = vshrl.u32 %v1043, 7
        %v1045 = vsub.s32 %v1042, %v1044
        %v1046 = vrot.slane %v1038, %v1045
        %v1048 = vunpack.c.l.s4 1934713408
        %v1049 = vunpack.c.0.s8 %v1048
        %v1050 = vlaneseq
        %v1051 = vshrl.u32 %v1050, 7
        %v1052 = vsub.s32 %v1049, %v1051
        %v1053 = vrot.slane %v1039, %v1052
        %v1054 = vcombine.low %v989, %v1005
        %v1055 = vcombine.high %v989, %v1005
        %v1057 = vunpack.c.l.s4 1934713408
        %v1058 = vunpack.c.0.s8 %v1057
        %v1059 = vlaneseq
        %v1060 = vshrl.u32 %v1059, 7
        %v1061 = vsub.s32 %v1058, %v1060
        %v1062 = vrot.slane %v1054, %v1061
        %v1064 = vunpack.c.l.s4 1934713408
        %v1065 = vunpack.c.0.s8 %v1064
        %v1066 = vlaneseq
        %v1067 = vshrl.u32 %v1066, 7
        %v1068 = vsub.s32 %v1065, %v1067
        %v1069 = vrot.slane %v1055, %v1068
        %v1070 = vcombine.low %v1014, %v1046
        %v1071 = vcombine.high %v1014, %v1046
        %v1072 = vcombine.low %v1021, %v1053
        %v1073 = vcombine.high %v1021, %v1053
        %v1074 = vcombine.low %v1030, %v1062
        %v1075 = vcombine.high %v1030, %v1062
        %v1076 = vcombine.low %v1037, %v1069
        %v1077 = vcombine.high %v1037, %v1069
        %v1078 = vcombine.low %v1070, %v1072
        %v1079 = vcombine.high %v1070, %v1072
        %v1081 = vunpack.c.l.s4 1983009808
        %v1082 = vunpack.c.0.s8 %v1081
        %v1083 = vlaneseq
        %v1084 = vshrl.u32 %v1083, 7
        %v1085 = vsub.s32 %v1082, %v1084
        %v1086 = vrot.slane %v1078, %v1085
        %v1088 = vunpack.c.l.s4 1983009808
        %v1089 = vunpack.c.0.s8 %v1088
        %v1090 = vlaneseq
        %v1091 = vshrl.u32 %v1090, 7
        %v1092 = vsub.s32 %v1089, %v1091
        %v1093 = vrot.slane %v1079, %v1092
        %v1094 = vcombine.low %v1071, %v1073
        %v1095 = vcombine.high %v1071, %v1073
        %v1097 = vunpack.c.l.s4 1983009808
        %v1098 = vunpack.c.0.s8 %v1097
        %v1099 = vlaneseq
        %v1100 = vshrl.u32 %v1099, 7
        %v1101 = vsub.s32 %v1098, %v1100
        %v1102 = vrot.slane %v1094, %v1101
        %v1104 = vunpack.c.l.s4 1983009808
        %v1105 = vunpack.c.0.s8 %v1104
        %v1106 = vlaneseq
        %v1107 = vshrl.u32 %v1106, 7
        %v1108 = vsub.s32 %v1105, %v1107
        %v1109 = vrot.slane %v1095, %v1108
        %v1110 = vcombine.low %v1074, %v1076
        %v1111 = vcombine.high %v1074, %v1076
        %v1113 = vunpack.c.l.s4 1983009808
        %v1114 = vunpack.c.0.s8 %v1113
        %v1115 = vlaneseq
        %v1116 = vshrl.u32 %v1115, 7
        %v1117 = vsub.s32 %v1114, %v1116
        %v1118 = vrot.slane %v1110, %v1117
        %v1120 = vunpack.c.l.s4 1983009808
        %v1121 = vunpack.c.0.s8 %v1120
        %v1122 = vlaneseq
        %v1123 = vshrl.u32 %v1122, 7
        %v1124 = vsub.s32 %v1121, %v1123
        %v1125 = vrot.slane %v1111, %v1124
        %v1126 = vcombine.low %v1075, %v1077
        %v1127 = vcombine.high %v1075, %v1077
        %v1129 = vunpack.c.l.s4 1983009808
        %v1130 = vunpack.c.0.s8 %v1129
        %v1131 = vlaneseq
        %v1132 = vshrl.u32 %v1131, 7
        %v1133 = vsub.s32 %v1130, %v1132
        %v1134 = vrot.slane %v1126, %v1133
        %v1136 = vunpack.c.l.s4 1983009808
        %v1137 = vunpack.c.0.s8 %v1136
        %v1138 = vlaneseq
        %v1139 = vshrl.u32 %v1138, 7
        %v1140 = vsub.s32 %v1137, %v1139
        %v1141 = vrot.slane %v1127, %v1140
        %v1142 = vcombine.low %v1086, %v1102
        %v1143 = vcombine.high %v1086, %v1102
        %v1145 = vunpack.c.l.s4 1934713408
        %v1146 = vunpack.c.0.s8 %v1145
        %v1147 = vlaneseq
        %v1148 = vshrl.u32 %v1147, 7
        %v1149 = vsub.s32 %v1146, %v1148
        %v1150 = vrot.slane %v1142, %v1149
        %v1152 = vunpack.c.l.s4 1934713408
        %v1153 = vunpack.c.0.s8 %v1152
        %v1154 = vlaneseq
        %v1155 = vshrl.u32 %v1154, 7
        %v1156 = vsub.s32 %v1153, %v1155
        %v1157 = vrot.slane %v1143, %v1156
        %v1158 = vcombine.low %v1093, %v1109
        %v1159 = vcombine.high %v1093, %v1109
        %v1161 = vunpack.c.l.s4 1934713408
        %v1162 = vunpack.c.0.s8 %v1161
        %v1163 = vlaneseq
        %v1164 = vshrl.u32 %v1163, 7
        %v1165 = vsub.s32 %v1162, %v1164
        %v1166 = vrot.slane %v1158, %v1165
        %v1168 = vunpack.c.l.s4 1934713408
        %v1169 = vunpack.c.0.s8 %v1168
        %v1170 = vlaneseq
        %v1171 = vshrl.u32 %v1170, 7
        %v1172 = vsub.s32 %v1169, %v1171
        %v1173 = vrot.slane %v1159, %v1172
        %v1174 = vcombine.low %v1118, %v1134
        %v1175 = vcombine.high %v1118, %v1134
        %v1177 = vunpack.c.l.s4 1934713408
        %v1178 = vunpack.c.0.s8 %v1177
        %v1179 = vlaneseq
        %v1180 = vshrl.u32 %v1179, 7
        %v1181 = vsub.s32 %v1178, %v1180
        %v1182 = vrot.slane %v1174, %v1181
        %v1184 = vunpack.c.l.s4 1934713408
        %v1185 = vunpack.c.0.s8 %v1184
        %v1186 = vlaneseq
        %v1187 = vshrl.u32 %v1186, 7
        %v1188 = vsub.s32 %v1185, %v1187
        %v1189 = vrot.slane %v1175, %v1188
        %v1190 = vcombine.low %v1125, %v1141
        %v1191 = vcombine.high %v1125, %v1141
        %v1193 = vunpack.c.l.s4 1934713408
        %v1194 = vunpack.c.0.s8 %v1193
        %v1195 = vlaneseq
        %v1196 = vshrl.u32 %v1195, 7
        %v1197 = vsub.s32 %v1194, %v1196
        %v1198 = vrot.slane %v1190, %v1197
        %v1200 = vunpack.c.l.s4 1934713408
        %v1201 = vunpack.c.0.s8 %v1200
        %v1202 = vlaneseq
        %v1203 = vshrl.u32 %v1202, 7
        %v1204 = vsub.s32 %v1201, %v1203
        %v1205 = vrot.slane %v1191, %v1204
        %v1206 = vcombine.low %v1150, %v1182
        %v1207 = vcombine.high %v1150, %v1182
        %v1208 = vcombine.low %v1157, %v1189
        %v1209 = vcombine.high %v1157, %v1189
        %v1210 = vcombine.low %v1166, %v1198
        %v1211 = vcombine.high %v1166, %v1198
        %v1212 = vcombine.low %v1173, %v1205
        %v1213 = vcombine.high %v1173, %v1205
        %1222 = vrot.lane.b32.xlu0 %v1206, 4
        %v1223 = vpop.permute.xlu0 %1222
        %1224 = vrot.lane.b32.xlu0 %v1207, 4
        %v1225 = vpop.permute.xlu0 %1224
        %1226 = vrot.lane.b32.xlu0 %v1208, 4
        %v1227 = vpop.permute.xlu0 %1226
        %1228 = vrot.lane.b32.xlu0 %v1209, 4
        %v1229 = vpop.permute.xlu0 %1228
        %1230 = vrot.lane.b32.xlu0 %v1210, 4
        %v1231 = vpop.permute.xlu0 %1230
        %1232 = vrot.lane.b32.xlu0 %v1211, 4
        %v1233 = vpop.permute.xlu0 %1232
        %1234 = vrot.lane.b32.xlu0 %v1212, 4
        %v1235 = vpop.permute.xlu0 %1234
        %1236 = vrot.lane.b32.xlu0 %v1213, 4
        %v1237 = vpop.permute.xlu0 %1236
        %vm1246 = vcmask 31744
        %v1247 = vsel %vm1246, %v912, %v1223
        %v1248 = vsel %vm1246, %v913, %v1225
        %v1249 = vsel %vm1246, %v914, %v1227
        %v1250 = vsel %vm1246, %v915, %v1229
        %v1251 = vsel %vm1246, %v916, %v1231
        %v1252 = vsel %vm1246, %v917, %v1233
        %v1253 = vsel %vm1246, %v918, %v1235
        %v1254 = vsel %vm1246, %v919, %v1237
        %1255 = vrot.lane.b32.xlu0 %v521, 96
        %v1256 = vpop.permute.xlu0 %1255
        %1257 = vrot.lane.b32.xlu0 %v628, 96
        %v1258 = vpop.permute.xlu0 %1257
        %1259 = vrot.lane.b32.xlu0 %v631, 96
        %v1260 = vpop.permute.xlu0 %1259
        %1261 = vrot.lane.b32.xlu0 %v634, 96
        %v1262 = vpop.permute.xlu0 %1261
        %1263 = vrot.lane.b32.xlu0 %v637, 96
        %v1264 = vpop.permute.xlu0 %1263
        %1265 = vrot.lane.b32.xlu0 %v640, 96
        %v1266 = vpop.permute.xlu0 %1265
        %1267 = vrot.lane.b32.xlu0 %v643, 96
        %v1268 = vpop.permute.xlu0 %1267
        %1269 = vrot.lane.b32.xlu0 %v646, 96
        %v1270 = vpop.permute.xlu0 %1269
        %v1279 = vcombine.low %v1256, %v1260
        %v1280 = vcombine.high %v1256, %v1260
        %v1282 = vunpack.c.l.s4 1983009808
        %v1283 = vunpack.c.0.s8 %v1282
        %v1284 = vlaneseq
        %v1285 = vshrl.u32 %v1284, 7
        %v1286 = vsub.s32 %v1283, %v1285
        %v1287 = vrot.slane %v1279, %v1286
        %v1289 = vunpack.c.l.s4 1983009808
        %v1290 = vunpack.c.0.s8 %v1289
        %v1291 = vlaneseq
        %v1292 = vshrl.u32 %v1291, 7
        %v1293 = vsub.s32 %v1290, %v1292
        %v1294 = vrot.slane %v1280, %v1293
        %v1295 = vcombine.low %v1258, %v1262
        %v1296 = vcombine.high %v1258, %v1262
        %v1298 = vunpack.c.l.s4 1983009808
        %v1299 = vunpack.c.0.s8 %v1298
        %v1300 = vlaneseq
        %v1301 = vshrl.u32 %v1300, 7
        %v1302 = vsub.s32 %v1299, %v1301
        %v1303 = vrot.slane %v1295, %v1302
        %v1305 = vunpack.c.l.s4 1983009808
        %v1306 = vunpack.c.0.s8 %v1305
        %v1307 = vlaneseq
        %v1308 = vshrl.u32 %v1307, 7
        %v1309 = vsub.s32 %v1306, %v1308
        %v1310 = vrot.slane %v1296, %v1309
        %v1311 = vcombine.low %v1264, %v1268
        %v1312 = vcombine.high %v1264, %v1268
        %v1314 = vunpack.c.l.s4 1983009808
        %v1315 = vunpack.c.0.s8 %v1314
        %v1316 = vlaneseq
        %v1317 = vshrl.u32 %v1316, 7
        %v1318 = vsub.s32 %v1315, %v1317
        %v1319 = vrot.slane %v1311, %v1318
        %v1321 = vunpack.c.l.s4 1983009808
        %v1322 = vunpack.c.0.s8 %v1321
        %v1323 = vlaneseq
        %v1324 = vshrl.u32 %v1323, 7
        %v1325 = vsub.s32 %v1322, %v1324
        %v1326 = vrot.slane %v1312, %v1325
        %v1327 = vcombine.low %v1266, %v1270
        %v1328 = vcombine.high %v1266, %v1270
        %v1330 = vunpack.c.l.s4 1983009808
        %v1331 = vunpack.c.0.s8 %v1330
        %v1332 = vlaneseq
        %v1333 = vshrl.u32 %v1332, 7
        %v1334 = vsub.s32 %v1331, %v1333
        %v1335 = vrot.slane %v1327, %v1334
        %v1337 = vunpack.c.l.s4 1983009808
        %v1338 = vunpack.c.0.s8 %v1337
        %v1339 = vlaneseq
        %v1340 = vshrl.u32 %v1339, 7
        %v1341 = vsub.s32 %v1338, %v1340
        %v1342 = vrot.slane %v1328, %v1341
        %v1343 = vcombine.low %v1287, %v1303
        %v1344 = vcombine.high %v1287, %v1303
        %v1346 = vunpack.c.l.s4 1934713408
        %v1347 = vunpack.c.0.s8 %v1346
        %v1348 = vlaneseq
        %v1349 = vshrl.u32 %v1348, 7
        %v1350 = vsub.s32 %v1347, %v1349
        %v1351 = vrot.slane %v1343, %v1350
        %v1353 = vunpack.c.l.s4 1934713408
        %v1354 = vunpack.c.0.s8 %v1353
        %v1355 = vlaneseq
        %v1356 = vshrl.u32 %v1355, 7
        %v1357 = vsub.s32 %v1354, %v1356
        %v1358 = vrot.slane %v1344, %v1357
        %v1359 = vcombine.low %v1294, %v1310
        %v1360 = vcombine.high %v1294, %v1310
        %v1362 = vunpack.c.l.s4 1934713408
        %v1363 = vunpack.c.0.s8 %v1362
        %v1364 = vlaneseq
        %v1365 = vshrl.u32 %v1364, 7
        %v1366 = vsub.s32 %v1363, %v1365
        %v1367 = vrot.slane %v1359, %v1366
        %v1369 = vunpack.c.l.s4 1934713408
        %v1370 = vunpack.c.0.s8 %v1369
        %v1371 = vlaneseq
        %v1372 = vshrl.u32 %v1371, 7
        %v1373 = vsub.s32 %v1370, %v1372
        %v1374 = vrot.slane %v1360, %v1373
        %v1375 = vcombine.low %v1319, %v1335
        %v1376 = vcombine.high %v1319, %v1335
        %v1378 = vunpack.c.l.s4 1934713408
        %v1379 = vunpack.c.0.s8 %v1378
        %v1380 = vlaneseq
        %v1381 = vshrl.u32 %v1380, 7
        %v1382 = vsub.s32 %v1379, %v1381
        %v1383 = vrot.slane %v1375, %v1382
        %v1385 = vunpack.c.l.s4 1934713408
        %v1386 = vunpack.c.0.s8 %v1385
        %v1387 = vlaneseq
        %v1388 = vshrl.u32 %v1387, 7
        %v1389 = vsub.s32 %v1386, %v1388
        %v1390 = vrot.slane %v1376, %v1389
        %v1391 = vcombine.low %v1326, %v1342
        %v1392 = vcombine.high %v1326, %v1342
        %v1394 = vunpack.c.l.s4 1934713408
        %v1395 = vunpack.c.0.s8 %v1394
        %v1396 = vlaneseq
        %v1397 = vshrl.u32 %v1396, 7
        %v1398 = vsub.s32 %v1395, %v1397
        %v1399 = vrot.slane %v1391, %v1398
        %v1401 = vunpack.c.l.s4 1934713408
        %v1402 = vunpack.c.0.s8 %v1401
        %v1403 = vlaneseq
        %v1404 = vshrl.u32 %v1403, 7
        %v1405 = vsub.s32 %v1402, %v1404
        %v1406 = vrot.slane %v1392, %v1405
        %v1407 = vcombine.low %v1351, %v1383
        %v1408 = vcombine.high %v1351, %v1383
        %v1409 = vcombine.low %v1358, %v1390
        %v1410 = vcombine.high %v1358, %v1390
        %v1411 = vcombine.low %v1367, %v1399
        %v1412 = vcombine.high %v1367, %v1399
        %v1413 = vcombine.low %v1374, %v1406
        %v1414 = vcombine.high %v1374, %v1406
        %v1415 = vcombine.low %v1407, %v1409
        %v1416 = vcombine.high %v1407, %v1409
        %v1418 = vunpack.c.l.s4 1983009808
        %v1419 = vunpack.c.0.s8 %v1418
        %v1420 = vlaneseq
        %v1421 = vshrl.u32 %v1420, 7
        %v1422 = vsub.s32 %v1419, %v1421
        %v1423 = vrot.slane %v1415, %v1422
        %v1425 = vunpack.c.l.s4 1983009808
        %v1426 = vunpack.c.0.s8 %v1425
        %v1427 = vlaneseq
        %v1428 = vshrl.u32 %v1427, 7
        %v1429 = vsub.s32 %v1426, %v1428
        %v1430 = vrot.slane %v1416, %v1429
        %v1431 = vcombine.low %v1408, %v1410
        %v1432 = vcombine.high %v1408, %v1410
        %v1434 = vunpack.c.l.s4 1983009808
        %v1435 = vunpack.c.0.s8 %v1434
        %v1436 = vlaneseq
        %v1437 = vshrl.u32 %v1436, 7
        %v1438 = vsub.s32 %v1435, %v1437
        %v1439 = vrot.slane %v1431, %v1438
        %v1441 = vunpack.c.l.s4 1983009808
        %v1442 = vunpack.c.0.s8 %v1441
        %v1443 = vlaneseq
        %v1444 = vshrl.u32 %v1443, 7
        %v1445 = vsub.s32 %v1442, %v1444
        %v1446 = vrot.slane %v1432, %v1445
        %v1447 = vcombine.low %v1411, %v1413
        %v1448 = vcombine.high %v1411, %v1413
        %v1450 = vunpack.c.l.s4 1983009808
        %v1451 = vunpack.c.0.s8 %v1450
        %v1452 = vlaneseq
        %v1453 = vshrl.u32 %v1452, 7
        %v1454 = vsub.s32 %v1451, %v1453
        %v1455 = vrot.slane %v1447, %v1454
        %v1457 = vunpack.c.l.s4 1983009808
        %v1458 = vunpack.c.0.s8 %v1457
        %v1459 = vlaneseq
        %v1460 = vshrl.u32 %v1459, 7
        %v1461 = vsub.s32 %v1458, %v1460
        %v1462 = vrot.slane %v1448, %v1461
        %v1463 = vcombine.low %v1412, %v1414
        %v1464 = vcombine.high %v1412, %v1414
        %v1466 = vunpack.c.l.s4 1983009808
        %v1467 = vunpack.c.0.s8 %v1466
        %v1468 = vlaneseq
        %v1469 = vshrl.u32 %v1468, 7
        %v1470 = vsub.s32 %v1467, %v1469
        %v1471 = vrot.slane %v1463, %v1470
        %v1473 = vunpack.c.l.s4 1983009808
        %v1474 = vunpack.c.0.s8 %v1473
        %v1475 = vlaneseq
        %v1476 = vshrl.u32 %v1475, 7
        %v1477 = vsub.s32 %v1474, %v1476
        %v1478 = vrot.slane %v1464, %v1477
        %v1479 = vcombine.low %v1423, %v1439
        %v1480 = vcombine.high %v1423, %v1439
        %v1482 = vunpack.c.l.s4 1934713408
        %v1483 = vunpack.c.0.s8 %v1482
        %v1484 = vlaneseq
        %v1485 = vshrl.u32 %v1484, 7
        %v1486 = vsub.s32 %v1483, %v1485
        %v1487 = vrot.slane %v1479, %v1486
        %v1489 = vunpack.c.l.s4 1934713408
        %v1490 = vunpack.c.0.s8 %v1489
        %v1491 = vlaneseq
        %v1492 = vshrl.u32 %v1491, 7
        %v1493 = vsub.s32 %v1490, %v1492
        %v1494 = vrot.slane %v1480, %v1493
        %v1495 = vcombine.low %v1430, %v1446
        %v1496 = vcombine.high %v1430, %v1446
        %v1498 = vunpack.c.l.s4 1934713408
        %v1499 = vunpack.c.0.s8 %v1498
        %v1500 = vlaneseq
        %v1501 = vshrl.u32 %v1500, 7
        %v1502 = vsub.s32 %v1499, %v1501
        %v1503 = vrot.slane %v1495, %v1502
        %v1505 = vunpack.c.l.s4 1934713408
        %v1506 = vunpack.c.0.s8 %v1505
        %v1507 = vlaneseq
        %v1508 = vshrl.u32 %v1507, 7
        %v1509 = vsub.s32 %v1506, %v1508
        %v1510 = vrot.slane %v1496, %v1509
        %v1511 = vcombine.low %v1455, %v1471
        %v1512 = vcombine.high %v1455, %v1471
        %v1514 = vunpack.c.l.s4 1934713408
        %v1515 = vunpack.c.0.s8 %v1514
        %v1516 = vlaneseq
        %v1517 = vshrl.u32 %v1516, 7
        %v1518 = vsub.s32 %v1515, %v1517
        %v1519 = vrot.slane %v1511, %v1518
        %v1521 = vunpack.c.l.s4 1934713408
        %v1522 = vunpack.c.0.s8 %v1521
        %v1523 = vlaneseq
        %v1524 = vshrl.u32 %v1523, 7
        %v1525 = vsub.s32 %v1522, %v1524
        %v1526 = vrot.slane %v1512, %v1525
        %v1527 = vcombine.low %v1462, %v1478
        %v1528 = vcombine.high %v1462, %v1478
        %v1530 = vunpack.c.l.s4 1934713408
        %v1531 = vunpack.c.0.s8 %v1530
        %v1532 = vlaneseq
        %v1533 = vshrl.u32 %v1532, 7
        %v1534 = vsub.s32 %v1531, %v1533
        %v1535 = vrot.slane %v1527, %v1534
        %v1537 = vunpack.c.l.s4 1934713408
        %v1538 = vunpack.c.0.s8 %v1537
        %v1539 = vlaneseq
        %v1540 = vshrl.u32 %v1539, 7
        %v1541 = vsub.s32 %v1538, %v1540
        %v1542 = vrot.slane %v1528, %v1541
        %v1543 = vcombine.low %v1487, %v1519
        %v1544 = vcombine.high %v1487, %v1519
        %v1545 = vcombine.low %v1494, %v1526
        %v1546 = vcombine.high %v1494, %v1526
        %v1547 = vcombine.low %v1503, %v1535
        %v1548 = vcombine.high %v1503, %v1535
        %v1549 = vcombine.low %v1510, %v1542
        %v1550 = vcombine.high %v1510, %v1542
        %1551 = vrot.lane.b32.xlu0 %v625, 96
        %v1552 = vpop.permute.xlu0 %1551
        %1553 = vrot.lane.b32.xlu0 %v922, 96
        %v1554 = vpop.permute.xlu0 %1553
        %1555 = vrot.lane.b32.xlu0 %v925, 96
        %v1556 = vpop.permute.xlu0 %1555
        %1557 = vrot.lane.b32.xlu0 %v928, 96
        %v1558 = vpop.permute.xlu0 %1557
        %1559 = vrot.lane.b32.xlu0 %v931, 96
        %v1560 = vpop.permute.xlu0 %1559
        %1561 = vrot.lane.b32.xlu0 %v934, 96
        %v1562 = vpop.permute.xlu0 %1561
        %1563 = vrot.lane.b32.xlu0 %v937, 96
        %v1564 = vpop.permute.xlu0 %1563
        %1565 = vrot.lane.b32.xlu0 %v940, 96
        %v1566 = vpop.permute.xlu0 %1565
        %v1575 = vcombine.low %v1552, %v1556
        %v1576 = vcombine.high %v1552, %v1556
        %v1578 = vunpack.c.l.s4 1983009808
        %v1579 = vunpack.c.0.s8 %v1578
        %v1580 = vlaneseq
        %v1581 = vshrl.u32 %v1580, 7
        %v1582 = vsub.s32 %v1579, %v1581
        %v1583 = vrot.slane %v1575, %v1582
        %v1585 = vunpack.c.l.s4 1983009808
        %v1586 = vunpack.c.0.s8 %v1585
        %v1587 = vlaneseq
        %v1588 = vshrl.u32 %v1587, 7
        %v1589 = vsub.s32 %v1586, %v1588
        %v1590 = vrot.slane %v1576, %v1589
        %v1591 = vcombine.low %v1554, %v1558
        %v1592 = vcombine.high %v1554, %v1558
        %v1594 = vunpack.c.l.s4 1983009808
        %v1595 = vunpack.c.0.s8 %v1594
        %v1596 = vlaneseq
        %v1597 = vshrl.u32 %v1596, 7
        %v1598 = vsub.s32 %v1595, %v1597
        %v1599 = vrot.slane %v1591, %v1598
        %v1601 = vunpack.c.l.s4 1983009808
        %v1602 = vunpack.c.0.s8 %v1601
        %v1603 = vlaneseq
        %v1604 = vshrl.u32 %v1603, 7
        %v1605 = vsub.s32 %v1602, %v1604
        %v1606 = vrot.slane %v1592, %v1605
        %v1607 = vcombine.low %v1560, %v1564
        %v1608 = vcombine.high %v1560, %v1564
        %v1610 = vunpack.c.l.s4 1983009808
        %v1611 = vunpack.c.0.s8 %v1610
        %v1612 = vlaneseq
        %v1613 = vshrl.u32 %v1612, 7
        %v1614 = vsub.s32 %v1611, %v1613
        %v1615 = vrot.slane %v1607, %v1614
        %v1617 = vunpack.c.l.s4 1983009808
        %v1618 = vunpack.c.0.s8 %v1617
        %v1619 = vlaneseq
        %v1620 = vshrl.u32 %v1619, 7
        %v1621 = vsub.s32 %v1618, %v1620
        %v1622 = vrot.slane %v1608, %v1621
        %v1623 = vcombine.low %v1562, %v1566
        %v1624 = vcombine.high %v1562, %v1566
        %v1626 = vunpack.c.l.s4 1983009808
        %v1627 = vunpack.c.0.s8 %v1626
        %v1628 = vlaneseq
        %v1629 = vshrl.u32 %v1628, 7
        %v1630 = vsub.s32 %v1627, %v1629
        %v1631 = vrot.slane %v1623, %v1630
        %v1633 = vunpack.c.l.s4 1983009808
        %v1634 = vunpack.c.0.s8 %v1633
        %v1635 = vlaneseq
        %v1636 = vshrl.u32 %v1635, 7
        %v1637 = vsub.s32 %v1634, %v1636
        %v1638 = vrot.slane %v1624, %v1637
        %v1639 = vcombine.low %v1583, %v1599
        %v1640 = vcombine.high %v1583, %v1599
        %v1642 = vunpack.c.l.s4 1934713408
        %v1643 = vunpack.c.0.s8 %v1642
        %v1644 = vlaneseq
        %v1645 = vshrl.u32 %v1644, 7
        %v1646 = vsub.s32 %v1643, %v1645
        %v1647 = vrot.slane %v1639, %v1646
        %v1649 = vunpack.c.l.s4 1934713408
        %v1650 = vunpack.c.0.s8 %v1649
        %v1651 = vlaneseq
        %v1652 = vshrl.u32 %v1651, 7
        %v1653 = vsub.s32 %v1650, %v1652
        %v1654 = vrot.slane %v1640, %v1653
        %v1655 = vcombine.low %v1590, %v1606
        %v1656 = vcombine.high %v1590, %v1606
        %v1658 = vunpack.c.l.s4 1934713408
        %v1659 = vunpack.c.0.s8 %v1658
        %v1660 = vlaneseq
        %v1661 = vshrl.u32 %v1660, 7
        %v1662 = vsub.s32 %v1659, %v1661
        %v1663 = vrot.slane %v1655, %v1662
        %v1665 = vunpack.c.l.s4 1934713408
        %v1666 = vunpack.c.0.s8 %v1665
        %v1667 = vlaneseq
        %v1668 = vshrl.u32 %v1667, 7
        %v1669 = vsub.s32 %v1666, %v1668
        %v1670 = vrot.slane %v1656, %v1669
        %v1671 = vcombine.low %v1615, %v1631
        %v1672 = vcombine.high %v1615, %v1631
        %v1674 = vunpack.c.l.s4 1934713408
        %v1675 = vunpack.c.0.s8 %v1674
        %v1676 = vlaneseq
        %v1677 = vshrl.u32 %v1676, 7
        %v1678 = vsub.s32 %v1675, %v1677
        %v1679 = vrot.slane %v1671, %v1678
        %v1681 = vunpack.c.l.s4 1934713408
        %v1682 = vunpack.c.0.s8 %v1681
        %v1683 = vlaneseq
        %v1684 = vshrl.u32 %v1683, 7
        %v1685 = vsub.s32 %v1682, %v1684
        %v1686 = vrot.slane %v1672, %v1685
        %v1687 = vcombine.low %v1622, %v1638
        %v1688 = vcombine.high %v1622, %v1638
        %v1690 = vunpack.c.l.s4 1934713408
        %v1691 = vunpack.c.0.s8 %v1690
        %v1692 = vlaneseq
        %v1693 = vshrl.u32 %v1692, 7
        %v1694 = vsub.s32 %v1691, %v1693
        %v1695 = vrot.slane %v1687, %v1694
        %v1697 = vunpack.c.l.s4 1934713408
        %v1698 = vunpack.c.0.s8 %v1697
        %v1699 = vlaneseq
        %v1700 = vshrl.u32 %v1699, 7
        %v1701 = vsub.s32 %v1698, %v1700
        %v1702 = vrot.slane %v1688, %v1701
        %v1703 = vcombine.low %v1647, %v1679
        %v1704 = vcombine.high %v1647, %v1679
        %v1705 = vcombine.low %v1654, %v1686
        %v1706 = vcombine.high %v1654, %v1686
        %v1707 = vcombine.low %v1663, %v1695
        %v1708 = vcombine.high %v1663, %v1695
        %v1709 = vcombine.low %v1670, %v1702
        %v1710 = vcombine.high %v1670, %v1702
        %v1711 = vcombine.low %v1703, %v1705
        %v1712 = vcombine.high %v1703, %v1705
        %v1714 = vunpack.c.l.s4 1983009808
        %v1715 = vunpack.c.0.s8 %v1714
        %v1716 = vlaneseq
        %v1717 = vshrl.u32 %v1716, 7
        %v1718 = vsub.s32 %v1715, %v1717
        %v1719 = vrot.slane %v1711, %v1718
        %v1721 = vunpack.c.l.s4 1983009808
        %v1722 = vunpack.c.0.s8 %v1721
        %v1723 = vlaneseq
        %v1724 = vshrl.u32 %v1723, 7
        %v1725 = vsub.s32 %v1722, %v1724
        %v1726 = vrot.slane %v1712, %v1725
        %v1727 = vcombine.low %v1704, %v1706
        %v1728 = vcombine.high %v1704, %v1706
        %v1730 = vunpack.c.l.s4 1983009808
        %v1731 = vunpack.c.0.s8 %v1730
        %v1732 = vlaneseq
        %v1733 = vshrl.u32 %v1732, 7
        %v1734 = vsub.s32 %v1731, %v1733
        %v1735 = vrot.slane %v1727, %v1734
        %v1737 = vunpack.c.l.s4 1983009808
        %v1738 = vunpack.c.0.s8 %v1737
        %v1739 = vlaneseq
        %v1740 = vshrl.u32 %v1739, 7
        %v1741 = vsub.s32 %v1738, %v1740
        %v1742 = vrot.slane %v1728, %v1741
        %v1743 = vcombine.low %v1707, %v1709
        %v1744 = vcombine.high %v1707, %v1709
        %v1746 = vunpack.c.l.s4 1983009808
        %v1747 = vunpack.c.0.s8 %v1746
        %v1748 = vlaneseq
        %v1749 = vshrl.u32 %v1748, 7
        %v1750 = vsub.s32 %v1747, %v1749
        %v1751 = vrot.slane %v1743, %v1750
        %v1753 = vunpack.c.l.s4 1983009808
        %v1754 = vunpack.c.0.s8 %v1753
        %v1755 = vlaneseq
        %v1756 = vshrl.u32 %v1755, 7
        %v1757 = vsub.s32 %v1754, %v1756
        %v1758 = vrot.slane %v1744, %v1757
        %v1759 = vcombine.low %v1708, %v1710
        %v1760 = vcombine.high %v1708, %v1710
        %v1762 = vunpack.c.l.s4 1983009808
        %v1763 = vunpack.c.0.s8 %v1762
        %v1764 = vlaneseq
        %v1765 = vshrl.u32 %v1764, 7
        %v1766 = vsub.s32 %v1763, %v1765
        %v1767 = vrot.slane %v1759, %v1766
        %v1769 = vunpack.c.l.s4 1983009808
        %v1770 = vunpack.c.0.s8 %v1769
        %v1771 = vlaneseq
        %v1772 = vshrl.u32 %v1771, 7
        %v1773 = vsub.s32 %v1770, %v1772
        %v1774 = vrot.slane %v1760, %v1773
        %v1775 = vcombine.low %v1719, %v1735
        %v1776 = vcombine.high %v1719, %v1735
        %v1778 = vunpack.c.l.s4 1934713408
        %v1779 = vunpack.c.0.s8 %v1778
        %v1780 = vlaneseq
        %v1781 = vshrl.u32 %v1780, 7
        %v1782 = vsub.s32 %v1779, %v1781
        %v1783 = vrot.slane %v1775, %v1782
        %v1785 = vunpack.c.l.s4 1934713408
        %v1786 = vunpack.c.0.s8 %v1785
        %v1787 = vlaneseq
        %v1788 = vshrl.u32 %v1787, 7
        %v1789 = vsub.s32 %v1786, %v1788
        %v1790 = vrot.slane %v1776, %v1789
        %v1791 = vcombine.low %v1726, %v1742
        %v1792 = vcombine.high %v1726, %v1742
        %v1794 = vunpack.c.l.s4 1934713408
        %v1795 = vunpack.c.0.s8 %v1794
        %v1796 = vlaneseq
        %v1797 = vshrl.u32 %v1796, 7
        %v1798 = vsub.s32 %v1795, %v1797
        %v1799 = vrot.slane %v1791, %v1798
        %v1801 = vunpack.c.l.s4 1934713408
        %v1802 = vunpack.c.0.s8 %v1801
        %v1803 = vlaneseq
        %v1804 = vshrl.u32 %v1803, 7
        %v1805 = vsub.s32 %v1802, %v1804
        %v1806 = vrot.slane %v1792, %v1805
        %v1807 = vcombine.low %v1751, %v1767
        %v1808 = vcombine.high %v1751, %v1767
        %v1810 = vunpack.c.l.s4 1934713408
        %v1811 = vunpack.c.0.s8 %v1810
        %v1812 = vlaneseq
        %v1813 = vshrl.u32 %v1812, 7
        %v1814 = vsub.s32 %v1811, %v1813
        %v1815 = vrot.slane %v1807, %v1814
        %v1817 = vunpack.c.l.s4 1934713408
        %v1818 = vunpack.c.0.s8 %v1817
        %v1819 = vlaneseq
        %v1820 = vshrl.u32 %v1819, 7
        %v1821 = vsub.s32 %v1818, %v1820
        %v1822 = vrot.slane %v1808, %v1821
        %v1823 = vcombine.low %v1758, %v1774
        %v1824 = vcombine.high %v1758, %v1774
        %v1826 = vunpack.c.l.s4 1934713408
        %v1827 = vunpack.c.0.s8 %v1826
        %v1828 = vlaneseq
        %v1829 = vshrl.u32 %v1828, 7
        %v1830 = vsub.s32 %v1827, %v1829
        %v1831 = vrot.slane %v1823, %v1830
        %v1833 = vunpack.c.l.s4 1934713408
        %v1834 = vunpack.c.0.s8 %v1833
        %v1835 = vlaneseq
        %v1836 = vshrl.u32 %v1835, 7
        %v1837 = vsub.s32 %v1834, %v1836
        %v1838 = vrot.slane %v1824, %v1837
        %v1839 = vcombine.low %v1783, %v1815
        %v1840 = vcombine.high %v1783, %v1815
        %v1841 = vcombine.low %v1790, %v1822
        %v1842 = vcombine.high %v1790, %v1822
        %v1843 = vcombine.low %v1799, %v1831
        %v1844 = vcombine.high %v1799, %v1831
        %v1845 = vcombine.low %v1806, %v1838
        %v1846 = vcombine.high %v1806, %v1838
        %1855 = vrot.lane.b32.xlu0 %v1839, 4
        %v1856 = vpop.permute.xlu0 %1855
        %1857 = vrot.lane.b32.xlu0 %v1840, 4
        %v1858 = vpop.permute.xlu0 %1857
        %1859 = vrot.lane.b32.xlu0 %v1841, 4
        %v1860 = vpop.permute.xlu0 %1859
        %1861 = vrot.lane.b32.xlu0 %v1842, 4
        %v1862 = vpop.permute.xlu0 %1861
        %1863 = vrot.lane.b32.xlu0 %v1843, 4
        %v1864 = vpop.permute.xlu0 %1863
        %1865 = vrot.lane.b32.xlu0 %v1844, 4
        %v1866 = vpop.permute.xlu0 %1865
        %1867 = vrot.lane.b32.xlu0 %v1845, 4
        %v1868 = vpop.permute.xlu0 %1867
        %1869 = vrot.lane.b32.xlu0 %v1846, 4
        %v1870 = vpop.permute.xlu0 %1869
        %v1879 = vsel %vm1246, %v1543, %v1856
        %v1880 = vsel %vm1246, %v1544, %v1858
        %v1881 = vsel %vm1246, %v1545, %v1860
        %v1882 = vsel %vm1246, %v1546, %v1862
        %v1883 = vsel %vm1246, %v1547, %v1864
        %v1884 = vsel %vm1246, %v1548, %v1866
        %v1885 = vsel %vm1246, %v1549, %v1868
        %v1886 = vsel %vm1246, %v1550, %v1870
        %1888 = vrot.lane.b32.xlu0 %v416, 124
        %v1889 = vpop.permute.xlu0 %1888
        %1890 = vrot.lane.b32.xlu0 %v416, 120
        %v1891 = vpop.permute.xlu0 %1890
        %1892 = vrot.lane.b32.xlu0 %v416, 116
        %v1893 = vpop.permute.xlu0 %1892
        %1894 = vrot.lane.b32.xlu0 %v416, 112
        %v1895 = vpop.permute.xlu0 %1894
        %1896 = vrot.lane.b32.xlu0 %v416, 108
        %v1897 = vpop.permute.xlu0 %1896
        %1898 = vrot.lane.b32.xlu0 %v416, 104
        %v1899 = vpop.permute.xlu0 %1898
        %1900 = vrot.lane.b32.xlu0 %v416, 100
        %v1901 = vpop.permute.xlu0 %1900
        %1902 = vrot.lane.b32.xlu0 %v416, 64
        %v1903 = vpop.permute.xlu0 %1902
        %1904 = vrot.lane.b32.xlu0 %v1889, 64
        %v1905 = vpop.permute.xlu0 %1904
        %1906 = vrot.lane.b32.xlu0 %v1891, 64
        %v1907 = vpop.permute.xlu0 %1906
        %1908 = vrot.lane.b32.xlu0 %v1893, 64
        %v1909 = vpop.permute.xlu0 %1908
        %1910 = vrot.lane.b32.xlu0 %v1895, 64
        %v1911 = vpop.permute.xlu0 %1910
        %1912 = vrot.lane.b32.xlu0 %v1897, 64
        %v1913 = vpop.permute.xlu0 %1912
        %1914 = vrot.lane.b32.xlu0 %v1899, 64
        %v1915 = vpop.permute.xlu0 %1914
        %1916 = vrot.lane.b32.xlu0 %v1901, 64
        %v1917 = vpop.permute.xlu0 %1916
        %v1926 = vcombine.low %v1903, %v1907
        %v1927 = vcombine.high %v1903, %v1907
        %v1929 = vunpack.c.l.s4 1983009808
        %v1930 = vunpack.c.0.s8 %v1929
        %v1931 = vlaneseq
        %v1932 = vshrl.u32 %v1931, 7
        %v1933 = vsub.s32 %v1930, %v1932
        %v1934 = vrot.slane %v1926, %v1933
        %v1936 = vunpack.c.l.s4 1983009808
        %v1937 = vunpack.c.0.s8 %v1936
        %v1938 = vlaneseq
        %v1939 = vshrl.u32 %v1938, 7
        %v1940 = vsub.s32 %v1937, %v1939
        %v1941 = vrot.slane %v1927, %v1940
        %v1942 = vcombine.low %v1905, %v1909
        %v1943 = vcombine.high %v1905, %v1909
        %v1945 = vunpack.c.l.s4 1983009808
        %v1946 = vunpack.c.0.s8 %v1945
        %v1947 = vlaneseq
        %v1948 = vshrl.u32 %v1947, 7
        %v1949 = vsub.s32 %v1946, %v1948
        %v1950 = vrot.slane %v1942, %v1949
        %v1952 = vunpack.c.l.s4 1983009808
        %v1953 = vunpack.c.0.s8 %v1952
        %v1954 = vlaneseq
        %v1955 = vshrl.u32 %v1954, 7
        %v1956 = vsub.s32 %v1953, %v1955
        %v1957 = vrot.slane %v1943, %v1956
        %v1958 = vcombine.low %v1911, %v1915
        %v1959 = vcombine.high %v1911, %v1915
        %v1961 = vunpack.c.l.s4 1983009808
        %v1962 = vunpack.c.0.s8 %v1961
        %v1963 = vlaneseq
        %v1964 = vshrl.u32 %v1963, 7
        %v1965 = vsub.s32 %v1962, %v1964
        %v1966 = vrot.slane %v1958, %v1965
        %v1968 = vunpack.c.l.s4 1983009808
        %v1969 = vunpack.c.0.s8 %v1968
        %v1970 = vlaneseq
        %v1971 = vshrl.u32 %v1970, 7
        %v1972 = vsub.s32 %v1969, %v1971
        %v1973 = vrot.slane %v1959, %v1972
        %v1974 = vcombine.low %v1913, %v1917
        %v1975 = vcombine.high %v1913, %v1917
        %v1977 = vunpack.c.l.s4 1983009808
        %v1978 = vunpack.c.0.s8 %v1977
        %v1979 = vlaneseq
        %v1980 = vshrl.u32 %v1979, 7
        %v1981 = vsub.s32 %v1978, %v1980
        %v1982 = vrot.slane %v1974, %v1981
        %v1984 = vunpack.c.l.s4 1983009808
        %v1985 = vunpack.c.0.s8 %v1984
        %v1986 = vlaneseq
        %v1987 = vshrl.u32 %v1986, 7
        %v1988 = vsub.s32 %v1985, %v1987
        %v1989 = vrot.slane %v1975, %v1988
        %v1990 = vcombine.low %v1934, %v1950
        %v1991 = vcombine.high %v1934, %v1950
        %v1993 = vunpack.c.l.s4 1934713408
        %v1994 = vunpack.c.0.s8 %v1993
        %v1995 = vlaneseq
        %v1996 = vshrl.u32 %v1995, 7
        %v1997 = vsub.s32 %v1994, %v1996
        %v1998 = vrot.slane %v1990, %v1997
        %v2000 = vunpack.c.l.s4 1934713408
        %v2001 = vunpack.c.0.s8 %v2000
        %v2002 = vlaneseq
        %v2003 = vshrl.u32 %v2002, 7
        %v2004 = vsub.s32 %v2001, %v2003
        %v2005 = vrot.slane %v1991, %v2004
        %v2006 = vcombine.low %v1941, %v1957
        %v2007 = vcombine.high %v1941, %v1957
        %v2009 = vunpack.c.l.s4 1934713408
        %v2010 = vunpack.c.0.s8 %v2009
        %v2011 = vlaneseq
        %v2012 = vshrl.u32 %v2011, 7
        %v2013 = vsub.s32 %v2010, %v2012
        %v2014 = vrot.slane %v2006, %v2013
        %v2016 = vunpack.c.l.s4 1934713408
        %v2017 = vunpack.c.0.s8 %v2016
        %v2018 = vlaneseq
        %v2019 = vshrl.u32 %v2018, 7
        %v2020 = vsub.s32 %v2017, %v2019
        %v2021 = vrot.slane %v2007, %v2020
        %v2022 = vcombine.low %v1966, %v1982
        %v2023 = vcombine.high %v1966, %v1982
        %v2025 = vunpack.c.l.s4 1934713408
        %v2026 = vunpack.c.0.s8 %v2025
        %v2027 = vlaneseq
        %v2028 = vshrl.u32 %v2027, 7
        %v2029 = vsub.s32 %v2026, %v2028
        %v2030 = vrot.slane %v2022, %v2029
        %v2032 = vunpack.c.l.s4 1934713408
        %v2033 = vunpack.c.0.s8 %v2032
        %v2034 = vlaneseq
        %v2035 = vshrl.u32 %v2034, 7
        %v2036 = vsub.s32 %v2033, %v2035
        %v2037 = vrot.slane %v2023, %v2036
        %v2038 = vcombine.low %v1973, %v1989
        %v2039 = vcombine.high %v1973, %v1989
        %v2041 = vunpack.c.l.s4 1934713408
        %v2042 = vunpack.c.0.s8 %v2041
        %v2043 = vlaneseq
        %v2044 = vshrl.u32 %v2043, 7
        %v2045 = vsub.s32 %v2042, %v2044
        %v2046 = vrot.slane %v2038, %v2045
        %v2048 = vunpack.c.l.s4 1934713408
        %v2049 = vunpack.c.0.s8 %v2048
        %v2050 = vlaneseq
        %v2051 = vshrl.u32 %v2050, 7
        %v2052 = vsub.s32 %v2049, %v2051
        %v2053 = vrot.slane %v2039, %v2052
        %v2054 = vcombine.low %v1998, %v2030
        %v2055 = vcombine.high %v1998, %v2030
        %v2056 = vcombine.low %v2005, %v2037
        %v2057 = vcombine.high %v2005, %v2037
        %v2058 = vcombine.low %v2014, %v2046
        %v2059 = vcombine.high %v2014, %v2046
        %v2060 = vcombine.low %v2021, %v2053
        %v2061 = vcombine.high %v2021, %v2053
        %v2062 = vcombine.low %v2054, %v2056
        %v2063 = vcombine.high %v2054, %v2056
        %v2065 = vunpack.c.l.s4 1983009808
        %v2066 = vunpack.c.0.s8 %v2065
        %v2067 = vlaneseq
        %v2068 = vshrl.u32 %v2067, 7
        %v2069 = vsub.s32 %v2066, %v2068
        %v2070 = vrot.slane %v2062, %v2069
        %v2072 = vunpack.c.l.s4 1983009808
        %v2073 = vunpack.c.0.s8 %v2072
        %v2074 = vlaneseq
        %v2075 = vshrl.u32 %v2074, 7
        %v2076 = vsub.s32 %v2073, %v2075
        %v2077 = vrot.slane %v2063, %v2076
        %v2078 = vcombine.low %v2055, %v2057
        %v2079 = vcombine.high %v2055, %v2057
        %v2081 = vunpack.c.l.s4 1983009808
        %v2082 = vunpack.c.0.s8 %v2081
        %v2083 = vlaneseq
        %v2084 = vshrl.u32 %v2083, 7
        %v2085 = vsub.s32 %v2082, %v2084
        %v2086 = vrot.slane %v2078, %v2085
        %v2088 = vunpack.c.l.s4 1983009808
        %v2089 = vunpack.c.0.s8 %v2088
        %v2090 = vlaneseq
        %v2091 = vshrl.u32 %v2090, 7
        %v2092 = vsub.s32 %v2089, %v2091
        %v2093 = vrot.slane %v2079, %v2092
        %v2094 = vcombine.low %v2058, %v2060
        %v2095 = vcombine.high %v2058, %v2060
        %v2097 = vunpack.c.l.s4 1983009808
        %v2098 = vunpack.c.0.s8 %v2097
        %v2099 = vlaneseq
        %v2100 = vshrl.u32 %v2099, 7
        %v2101 = vsub.s32 %v2098, %v2100
        %v2102 = vrot.slane %v2094, %v2101
        %v2104 = vunpack.c.l.s4 1983009808
        %v2105 = vunpack.c.0.s8 %v2104
        %v2106 = vlaneseq
        %v2107 = vshrl.u32 %v2106, 7
        %v2108 = vsub.s32 %v2105, %v2107
        %v2109 = vrot.slane %v2095, %v2108
        %v2110 = vcombine.low %v2059, %v2061
        %v2111 = vcombine.high %v2059, %v2061
        %v2113 = vunpack.c.l.s4 1983009808
        %v2114 = vunpack.c.0.s8 %v2113
        %v2115 = vlaneseq
        %v2116 = vshrl.u32 %v2115, 7
        %v2117 = vsub.s32 %v2114, %v2116
        %v2118 = vrot.slane %v2110, %v2117
        %v2120 = vunpack.c.l.s4 1983009808
        %v2121 = vunpack.c.0.s8 %v2120
        %v2122 = vlaneseq
        %v2123 = vshrl.u32 %v2122, 7
        %v2124 = vsub.s32 %v2121, %v2123
        %v2125 = vrot.slane %v2111, %v2124
        %v2126 = vcombine.low %v2070, %v2086
        %v2127 = vcombine.high %v2070, %v2086
        %v2129 = vunpack.c.l.s4 1934713408
        %v2130 = vunpack.c.0.s8 %v2129
        %v2131 = vlaneseq
        %v2132 = vshrl.u32 %v2131, 7
        %v2133 = vsub.s32 %v2130, %v2132
        %v2134 = vrot.slane %v2126, %v2133
        %v2136 = vunpack.c.l.s4 1934713408
        %v2137 = vunpack.c.0.s8 %v2136
        %v2138 = vlaneseq
        %v2139 = vshrl.u32 %v2138, 7
        %v2140 = vsub.s32 %v2137, %v2139
        %v2141 = vrot.slane %v2127, %v2140
        %v2142 = vcombine.low %v2077, %v2093
        %v2143 = vcombine.high %v2077, %v2093
        %v2145 = vunpack.c.l.s4 1934713408
        %v2146 = vunpack.c.0.s8 %v2145
        %v2147 = vlaneseq
        %v2148 = vshrl.u32 %v2147, 7
        %v2149 = vsub.s32 %v2146, %v2148
        %v2150 = vrot.slane %v2142, %v2149
        %v2152 = vunpack.c.l.s4 1934713408
        %v2153 = vunpack.c.0.s8 %v2152
        %v2154 = vlaneseq
        %v2155 = vshrl.u32 %v2154, 7
        %v2156 = vsub.s32 %v2153, %v2155
        %v2157 = vrot.slane %v2143, %v2156
        %v2158 = vcombine.low %v2102, %v2118
        %v2159 = vcombine.high %v2102, %v2118
        %v2161 = vunpack.c.l.s4 1934713408
        %v2162 = vunpack.c.0.s8 %v2161
        %v2163 = vlaneseq
        %v2164 = vshrl.u32 %v2163, 7
        %v2165 = vsub.s32 %v2162, %v2164
        %v2166 = vrot.slane %v2158, %v2165
        %v2168 = vunpack.c.l.s4 1934713408
        %v2169 = vunpack.c.0.s8 %v2168
        %v2170 = vlaneseq
        %v2171 = vshrl.u32 %v2170, 7
        %v2172 = vsub.s32 %v2169, %v2171
        %v2173 = vrot.slane %v2159, %v2172
        %v2174 = vcombine.low %v2109, %v2125
        %v2175 = vcombine.high %v2109, %v2125
        %v2177 = vunpack.c.l.s4 1934713408
        %v2178 = vunpack.c.0.s8 %v2177
        %v2179 = vlaneseq
        %v2180 = vshrl.u32 %v2179, 7
        %v2181 = vsub.s32 %v2178, %v2180
        %v2182 = vrot.slane %v2174, %v2181
        %v2184 = vunpack.c.l.s4 1934713408
        %v2185 = vunpack.c.0.s8 %v2184
        %v2186 = vlaneseq
        %v2187 = vshrl.u32 %v2186, 7
        %v2188 = vsub.s32 %v2185, %v2187
        %v2189 = vrot.slane %v2175, %v2188
        %v2190 = vcombine.low %v2134, %v2166
        %v2191 = vcombine.high %v2134, %v2166
        %v2192 = vcombine.low %v2141, %v2173
        %v2193 = vcombine.high %v2141, %v2173
        %v2194 = vcombine.low %v2150, %v2182
        %v2195 = vcombine.high %v2150, %v2182
        %v2196 = vcombine.low %v2157, %v2189
        %v2197 = vcombine.high %v2157, %v2189
        %vm2198 = vcmask 64512
        %v2200 = vsel %vm2198, %v1247, 0
        %v2203 = vsel %vm2198, %v1879, 0
        %2205 = vmatprep.subr.mxu0 0.0
        %2206 = vmatpush1.xpose.msra.mxu0 %v2203
        %2207 = vmatprep.subr.mxu0 0.0
        %2208 = vmatpush1.xpose.msra.mxu0 0.0
        %2209 = vmatprep.subr.mxu0 0.0
        %2210 = vmatpush1.xpose.msra.mxu0 0.0
        %2211 = vmatprep.subr.mxu0 0.0
        %2212 = vmatpush1.xpose.msra.mxu0 0.0
        %2213 = vmatprep.subr.mxu0 0.0
        %2214 = vmatpush1.xpose.msra.mxu0 0.0
        %2215 = vmatprep.subr.mxu0 0.0
        %2216 = vmatpush1.xpose.msra.mxu0 0.0
        %2217 = vmatprep.subr.mxu0 0.0
        %2218 = vmatpush1.xpose.msra.mxu0 0.0
        %2219 = vmatprep.subr.mxu0 0.0
        %2220 = vmatpush1.xpose.msra.mxu0 0.0
        %2221 = vmatprep.subr.mxu0 0.0
        %2222 = vmatpush1.xpose.msra.mxu0 0.0
        %2223 = vmatprep.subr.mxu0 0.0
        %2224 = vmatpush1.xpose.msra.mxu0 0.0
        %2225 = vmatprep.subr.mxu0 0.0
        %2226 = vmatpush1.xpose.msra.mxu0 0.0
        %2227 = vmatprep.subr.mxu0 0.0
        %2228 = vmatpush1.xpose.msra.mxu0 0.0
        %2229 = vmatprep.subr.mxu0 0.0
        %2230 = vmatpush1.xpose.msra.mxu0 0.0
        %2231 = vmatprep.subr.mxu0 0.0
        %2232 = vmatpush1.xpose.msra.mxu0 0.0
        %2233 = vmatprep.subr.mxu0 0.0
        %2234 = vmatpush1.xpose.msra.mxu0 0.0
        %2235 = vmatprep.subr.mxu0 0.0
        %2236 = vmatpush1.xpose.msra.mxu0 0.0
        %2237 = vmatprep.subr.mxu0 0.0
        %2238 = vmatpush1.xpose.msra.mxu0 0.0
        %2239 = vmatprep.subr.mxu0 0.0
        %2240 = vmatpush1.xpose.msra.mxu0 0.0
        %2241 = vmatprep.subr.mxu0 0.0
        %2242 = vmatpush1.xpose.msra.mxu0 0.0
        %2243 = vmatprep.subr.mxu0 0.0
        %2244 = vmatpush1.xpose.msra.mxu0 0.0
        %2245 = vmatprep.subr.mxu0 0.0
        %2246 = vmatpush1.xpose.msra.mxu0 0.0
        %2247 = vmatprep.subr.mxu0 0.0
        %2248 = vmatpush1.xpose.msra.mxu0 0.0
        %2249 = vmatprep.subr.mxu0 0.0
        %2250 = vmatpush1.xpose.msra.mxu0 0.0
        %2251 = vmatprep.subr.mxu0 0.0
        %2252 = vmatpush1.xpose.msra.mxu0 0.0
        %2253 = vmatprep.subr.mxu0 0.0
        %2254 = vmatpush1.xpose.msra.mxu0 0.0
        %2255 = vmatprep.subr.mxu0 0.0
        %2256 = vmatpush1.xpose.msra.mxu0 0.0
        %2257 = vmatprep.subr.mxu0 0.0
        %2258 = vmatpush1.xpose.msra.mxu0 0.0
        %2259 = vmatprep.subr.mxu0 0.0
        %2260 = vmatpush1.xpose.msra.mxu0 0.0
        %2261 = vmatprep.subr.mxu0 0.0
        %2262 = vmatpush1.xpose.msra.mxu0 0.0
        %2263 = vmatprep.subr.mxu0 0.0
        %2264 = vmatpush1.xpose.msra.mxu0 0.0
        %2265 = vmatprep.subr.mxu0 0.0
        %2266 = vmatpush1.xpose.msra.mxu0 0.0
        %2267 = vmatprep.subr.mxu0 0.0
        %2268 = vmatpush1.xpose.msra.mxu0 0.0
        %2269 = vmatprep.mubr.f32.mxu0 0.0
        %2270 = vmatmul.mubr.f32.gmra.mrb[0].mxu0 %v2200
        %v2271 = vpop.f32.mrb[0].mxu0
        %v2272 = vadd.f32 0.0, %v2271
        %v2273 = vpop.f32.mrb[0].mxu0
        %2274 = vdwg.mxu0
        %v2276 = vsel %vm2198, %v1248, 0
        %v2279 = vsel %vm2198, %v1880, 0
        %2281 = vmatprep.subr.mxu0 0.0
        %2282 = vmatpush1.xpose.msra.mxu0 %v2279
        %2283 = vmatprep.subr.mxu0 0.0
        %2284 = vmatpush1.xpose.msra.mxu0 0.0
        %2285 = vmatprep.subr.mxu0 0.0
        %2286 = vmatpush1.xpose.msra.mxu0 0.0
        %2287 = vmatprep.subr.mxu0 0.0
        %2288 = vmatpush1.xpose.msra.mxu0 0.0
        %2289 = vmatprep.subr.mxu0 0.0
        %2290 = vmatpush1.xpose.msra.mxu0 0.0
        %2291 = vmatprep.subr.mxu0 0.0
        %2292 = vmatpush1.xpose.msra.mxu0 0.0
        %2293 = vmatprep.subr.mxu0 0.0
        %2294 = vmatpush1.xpose.msra.mxu0 0.0
        %2295 = vmatprep.subr.mxu0 0.0
        %2296 = vmatpush1.xpose.msra.mxu0 0.0
        %2297 = vmatprep.subr.mxu0 0.0
        %2298 = vmatpush1.xpose.msra.mxu0 0.0
        %2299 = vmatprep.subr.mxu0 0.0
        %2300 = vmatpush1.xpose.msra.mxu0 0.0
        %2301 = vmatprep.subr.mxu0 0.0
        %2302 = vmatpush1.xpose.msra.mxu0 0.0
        %2303 = vmatprep.subr.mxu0 0.0
        %2304 = vmatpush1.xpose.msra.mxu0 0.0
        %2305 = vmatprep.subr.mxu0 0.0
        %2306 = vmatpush1.xpose.msra.mxu0 0.0
        %2307 = vmatprep.subr.mxu0 0.0
        %2308 = vmatpush1.xpose.msra.mxu0 0.0
        %2309 = vmatprep.subr.mxu0 0.0
        %2310 = vmatpush1.xpose.msra.mxu0 0.0
        %2311 = vmatprep.subr.mxu0 0.0
        %2312 = vmatpush1.xpose.msra.mxu0 0.0
        %2313 = vmatprep.subr.mxu0 0.0
        %2314 = vmatpush1.xpose.msra.mxu0 0.0
        %2315 = vmatprep.subr.mxu0 0.0
        %2316 = vmatpush1.xpose.msra.mxu0 0.0
        %2317 = vmatprep.subr.mxu0 0.0
        %2318 = vmatpush1.xpose.msra.mxu0 0.0
        %2319 = vmatprep.subr.mxu0 0.0
        %2320 = vmatpush1.xpose.msra.mxu0 0.0
        %2321 = vmatprep.subr.mxu0 0.0
        %2322 = vmatpush1.xpose.msra.mxu0 0.0
        %2323 = vmatprep.subr.mxu0 0.0
        %2324 = vmatpush1.xpose.msra.mxu0 0.0
        %2325 = vmatprep.subr.mxu0 0.0
        %2326 = vmatpush1.xpose.msra.mxu0 0.0
        %2327 = vmatprep.subr.mxu0 0.0
        %2328 = vmatpush1.xpose.msra.mxu0 0.0
        %2329 = vmatprep.subr.mxu0 0.0
        %2330 = vmatpush1.xpose.msra.mxu0 0.0
        %2331 = vmatprep.subr.mxu0 0.0
        %2332 = vmatpush1.xpose.msra.mxu0 0.0
        %2333 = vmatprep.subr.mxu0 0.0
        %2334 = vmatpush1.xpose.msra.mxu0 0.0
        %2335 = vmatprep.subr.mxu0 0.0
        %2336 = vmatpush1.xpose.msra.mxu0 0.0
        %2337 = vmatprep.subr.mxu0 0.0
        %2338 = vmatpush1.xpose.msra.mxu0 0.0
        %2339 = vmatprep.subr.mxu0 0.0
        %2340 = vmatpush1.xpose.msra.mxu0 0.0
        %2341 = vmatprep.subr.mxu0 0.0
        %2342 = vmatpush1.xpose.msra.mxu0 0.0
        %2343 = vmatprep.subr.mxu0 0.0
        %2344 = vmatpush1.xpose.msra.mxu0 0.0
        %2345 = vmatprep.mubr.f32.mxu0 0.0
        %2346 = vmatmul.mubr.f32.gmra.mrb[0].mxu0 %v2276
        %v2347 = vpop.f32.mrb[0].mxu0
        %v2348 = vadd.f32 0.0, %v2347
        %v2349 = vpop.f32.mrb[0].mxu0
        %2350 = vdwg.mxu0
        %v2352 = vsel %vm2198, %v1249, 0
        %v2355 = vsel %vm2198, %v1881, 0
        %2357 = vmatprep.subr.mxu0 0.0
        %2358 = vmatpush1.xpose.msra.mxu0 %v2355
        %2359 = vmatprep.subr.mxu0 0.0
        %2360 = vmatpush1.xpose.msra.mxu0 0.0
        %2361 = vmatprep.subr.mxu0 0.0
        %2362 = vmatpush1.xpose.msra.mxu0 0.0
        %2363 = vmatprep.subr.mxu0 0.0
        %2364 = vmatpush1.xpose.msra.mxu0 0.0
        %2365 = vmatprep.subr.mxu0 0.0
        %2366 = vmatpush1.xpose.msra.mxu0 0.0
        %2367 = vmatprep.subr.mxu0 0.0
        %2368 = vmatpush1.xpose.msra.mxu0 0.0
        %2369 = vmatprep.subr.mxu0 0.0
        %2370 = vmatpush1.xpose.msra.mxu0 0.0
        %2371 = vmatprep.subr.mxu0 0.0
        %2372 = vmatpush1.xpose.msra.mxu0 0.0
        %2373 = vmatprep.subr.mxu0 0.0
        %2374 = vmatpush1.xpose.msra.mxu0 0.0
        %2375 = vmatprep.subr.mxu0 0.0
        %2376 = vmatpush1.xpose.msra.mxu0 0.0
        %2377 = vmatprep.subr.mxu0 0.0
        %2378 = vmatpush1.xpose.msra.mxu0 0.0
        %2379 = vmatprep.subr.mxu0 0.0
        %2380 = vmatpush1.xpose.msra.mxu0 0.0
        %2381 = vmatprep.subr.mxu0 0.0
        %2382 = vmatpush1.xpose.msra.mxu0 0.0
        %2383 = vmatprep.subr.mxu0 0.0
        %2384 = vmatpush1.xpose.msra.mxu0 0.0
        %2385 = vmatprep.subr.mxu0 0.0
        %2386 = vmatpush1.xpose.msra.mxu0 0.0
        %2387 = vmatprep.subr.mxu0 0.0
        %2388 = vmatpush1.xpose.msra.mxu0 0.0
        %2389 = vmatprep.subr.mxu0 0.0
        %2390 = vmatpush1.xpose.msra.mxu0 0.0
        %2391 = vmatprep.subr.mxu0 0.0
        %2392 = vmatpush1.xpose.msra.mxu0 0.0
        %2393 = vmatprep.subr.mxu0 0.0
        %2394 = vmatpush1.xpose.msra.mxu0 0.0
        %2395 = vmatprep.subr.mxu0 0.0
        %2396 = vmatpush1.xpose.msra.mxu0 0.0
        %2397 = vmatprep.subr.mxu0 0.0
        %2398 = vmatpush1.xpose.msra.mxu0 0.0
        %2399 = vmatprep.subr.mxu0 0.0
        %2400 = vmatpush1.xpose.msra.mxu0 0.0
        %2401 = vmatprep.subr.mxu0 0.0
        %2402 = vmatpush1.xpose.msra.mxu0 0.0
        %2403 = vmatprep.subr.mxu0 0.0
        %2404 = vmatpush1.xpose.msra.mxu0 0.0
        %2405 = vmatprep.subr.mxu0 0.0
        %2406 = vmatpush1.xpose.msra.mxu0 0.0
        %2407 = vmatprep.subr.mxu0 0.0
        %2408 = vmatpush1.xpose.msra.mxu0 0.0
        %2409 = vmatprep.subr.mxu0 0.0
        %2410 = vmatpush1.xpose.msra.mxu0 0.0
        %2411 = vmatprep.subr.mxu0 0.0
        %2412 = vmatpush1.xpose.msra.mxu0 0.0
        %2413 = vmatprep.subr.mxu0 0.0
        %2414 = vmatpush1.xpose.msra.mxu0 0.0
        %2415 = vmatprep.subr.mxu0 0.0
        %2416 = vmatpush1.xpose.msra.mxu0 0.0
        %2417 = vmatprep.subr.mxu0 0.0
        %2418 = vmatpush1.xpose.msra.mxu0 0.0
        %2419 = vmatprep.subr.mxu0 0.0
        %2420 = vmatpush1.xpose.msra.mxu0 0.0
        %2421 = vmatprep.mubr.f32.mxu0 0.0
        %2422 = vmatmul.mubr.f32.gmra.mrb[0].mxu0 %v2352
        %v2423 = vpop.f32.mrb[0].mxu0
        %v2424 = vadd.f32 0.0, %v2423
        %v2425 = vpop.f32.mrb[0].mxu0
        %2426 = vdwg.mxu0
        %v2428 = vsel %vm2198, %v1250, 0
        %v2431 = vsel %vm2198, %v1882, 0
        %2433 = vmatprep.subr.mxu0 0.0
        %2434 = vmatpush1.xpose.msra.mxu0 %v2431
        %2435 = vmatprep.subr.mxu0 0.0
        %2436 = vmatpush1.xpose.msra.mxu0 0.0
        %2437 = vmatprep.subr.mxu0 0.0
        %2438 = vmatpush1.xpose.msra.mxu0 0.0
        %2439 = vmatprep.subr.mxu0 0.0
        %2440 = vmatpush1.xpose.msra.mxu0 0.0
        %2441 = vmatprep.subr.mxu0 0.0
        %2442 = vmatpush1.xpose.msra.mxu0 0.0
        %2443 = vmatprep.subr.mxu0 0.0
        %2444 = vmatpush1.xpose.msra.mxu0 0.0
        %2445 = vmatprep.subr.mxu0 0.0
        %2446 = vmatpush1.xpose.msra.mxu0 0.0
        %2447 = vmatprep.subr.mxu0 0.0
        %2448 = vmatpush1.xpose.msra.mxu0 0.0
        %2449 = vmatprep.subr.mxu0 0.0
        %2450 = vmatpush1.xpose.msra.mxu0 0.0
        %2451 = vmatprep.subr.mxu0 0.0
        %2452 = vmatpush1.xpose.msra.mxu0 0.0
        %2453 = vmatprep.subr.mxu0 0.0
        %2454 = vmatpush1.xpose.msra.mxu0 0.0
        %2455 = vmatprep.subr.mxu0 0.0
        %2456 = vmatpush1.xpose.msra.mxu0 0.0
        %2457 = vmatprep.subr.mxu0 0.0
        %2458 = vmatpush1.xpose.msra.mxu0 0.0
        %2459 = vmatprep.subr.mxu0 0.0
        %2460 = vmatpush1.xpose.msra.mxu0 0.0
        %2461 = vmatprep.subr.mxu0 0.0
        %2462 = vmatpush1.xpose.msra.mxu0 0.0
        %2463 = vmatprep.subr.mxu0 0.0
        %2464 = vmatpush1.xpose.msra.mxu0 0.0
        %2465 = vmatprep.subr.mxu0 0.0
        %2466 = vmatpush1.xpose.msra.mxu0 0.0
        %2467 = vmatprep.subr.mxu0 0.0
        %2468 = vmatpush1.xpose.msra.mxu0 0.0
        %2469 = vmatprep.subr.mxu0 0.0
        %2470 = vmatpush1.xpose.msra.mxu0 0.0
        %2471 = vmatprep.subr.mxu0 0.0
        %2472 = vmatpush1.xpose.msra.mxu0 0.0
        %2473 = vmatprep.subr.mxu0 0.0
        %2474 = vmatpush1.xpose.msra.mxu0 0.0
        %2475 = vmatprep.subr.mxu0 0.0
        %2476 = vmatpush1.xpose.msra.mxu0 0.0
        %2477 = vmatprep.subr.mxu0 0.0
        %2478 = vmatpush1.xpose.msra.mxu0 0.0
        %2479 = vmatprep.subr.mxu0 0.0
        %2480 = vmatpush1.xpose.msra.mxu0 0.0
        %2481 = vmatprep.subr.mxu0 0.0
        %2482 = vmatpush1.xpose.msra.mxu0 0.0
        %2483 = vmatprep.subr.mxu0 0.0
        %2484 = vmatpush1.xpose.msra.mxu0 0.0
        %2485 = vmatprep.subr.mxu0 0.0
        %2486 = vmatpush1.xpose.msra.mxu0 0.0
        %2487 = vmatprep.subr.mxu0 0.0
        %2488 = vmatpush1.xpose.msra.mxu0 0.0
        %2489 = vmatprep.subr.mxu0 0.0
        %2490 = vmatpush1.xpose.msra.mxu0 0.0
        %2491 = vmatprep.subr.mxu0 0.0
        %2492 = vmatpush1.xpose.msra.mxu0 0.0
        %2493 = vmatprep.subr.mxu0 0.0
        %2494 = vmatpush1.xpose.msra.mxu0 0.0
        %2495 = vmatprep.subr.mxu0 0.0
        %2496 = vmatpush1.xpose.msra.mxu0 0.0
        %2497 = vmatprep.mubr.f32.mxu0 0.0
        %2498 = vmatmul.mubr.f32.gmra.mrb[0].mxu0 %v2428
        %v2499 = vpop.f32.mrb[0].mxu0
        %v2500 = vadd.f32 0.0, %v2499
        %v2501 = vpop.f32.mrb[0].mxu0
        %2502 = vdwg.mxu0
        %v2504 = vsel %vm2198, %v1251, 0
        %v2507 = vsel %vm2198, %v1883, 0
        %2509 = vmatprep.subr.mxu0 0.0
        %2510 = vmatpush1.xpose.msra.mxu0 %v2507
        %2511 = vmatprep.subr.mxu0 0.0
        %2512 = vmatpush1.xpose.msra.mxu0 0.0
        %2513 = vmatprep.subr.mxu0 0.0
        %2514 = vmatpush1.xpose.msra.mxu0 0.0
        %2515 = vmatprep.subr.mxu0 0.0
        %2516 = vmatpush1.xpose.msra.mxu0 0.0
        %2517 = vmatprep.subr.mxu0 0.0
        %2518 = vmatpush1.xpose.msra.mxu0 0.0
        %2519 = vmatprep.subr.mxu0 0.0
        %2520 = vmatpush1.xpose.msra.mxu0 0.0
        %2521 = vmatprep.subr.mxu0 0.0
        %2522 = vmatpush1.xpose.msra.mxu0 0.0
        %2523 = vmatprep.subr.mxu0 0.0
        %2524 = vmatpush1.xpose.msra.mxu0 0.0
        %2525 = vmatprep.subr.mxu0 0.0
        %2526 = vmatpush1.xpose.msra.mxu0 0.0
        %2527 = vmatprep.subr.mxu0 0.0
        %2528 = vmatpush1.xpose.msra.mxu0 0.0
        %2529 = vmatprep.subr.mxu0 0.0
        %2530 = vmatpush1.xpose.msra.mxu0 0.0
        %2531 = vmatprep.subr.mxu0 0.0
        %2532 = vmatpush1.xpose.msra.mxu0 0.0
        %2533 = vmatprep.subr.mxu0 0.0
        %2534 = vmatpush1.xpose.msra.mxu0 0.0
        %2535 = vmatprep.subr.mxu0 0.0
        %2536 = vmatpush1.xpose.msra.mxu0 0.0
        %2537 = vmatprep.subr.mxu0 0.0
        %2538 = vmatpush1.xpose.msra.mxu0 0.0
        %2539 = vmatprep.subr.mxu0 0.0
        %2540 = vmatpush1.xpose.msra.mxu0 0.0
        %2541 = vmatprep.subr.mxu0 0.0
        %2542 = vmatpush1.xpose.msra.mxu0 0.0
        %2543 = vmatprep.subr.mxu0 0.0
        %2544 = vmatpush1.xpose.msra.mxu0 0.0
        %2545 = vmatprep.subr.mxu0 0.0
        %2546 = vmatpush1.xpose.msra.mxu0 0.0
        %2547 = vmatprep.subr.mxu0 0.0
        %2548 = vmatpush1.xpose.msra.mxu0 0.0
        %2549 = vmatprep.subr.mxu0 0.0
        %2550 = vmatpush1.xpose.msra.mxu0 0.0
        %2551 = vmatprep.subr.mxu0 0.0
        %2552 = vmatpush1.xpose.msra.mxu0 0.0
        %2553 = vmatprep.subr.mxu0 0.0
        %2554 = vmatpush1.xpose.msra.mxu0 0.0
        %2555 = vmatprep.subr.mxu0 0.0
        %2556 = vmatpush1.xpose.msra.mxu0 0.0
        %2557 = vmatprep.subr.mxu0 0.0
        %2558 = vmatpush1.xpose.msra.mxu0 0.0
        %2559 = vmatprep.subr.mxu0 0.0
        %2560 = vmatpush1.xpose.msra.mxu0 0.0
        %2561 = vmatprep.subr.mxu0 0.0
        %2562 = vmatpush1.xpose.msra.mxu0 0.0
        %2563 = vmatprep.subr.mxu0 0.0
        %2564 = vmatpush1.xpose.msra.mxu0 0.0
        %2565 = vmatprep.subr.mxu0 0.0
        %2566 = vmatpush1.xpose.msra.mxu0 0.0
        %2567 = vmatprep.subr.mxu0 0.0
        %2568 = vmatpush1.xpose.msra.mxu0 0.0
        %2569 = vmatprep.subr.mxu0 0.0
        %2570 = vmatpush1.xpose.msra.mxu0 0.0
        %2571 = vmatprep.subr.mxu0 0.0
        %2572 = vmatpush1.xpose.msra.mxu0 0.0
        %2573 = vmatprep.mubr.f32.mxu0 0.0
        %2574 = vmatmul.mubr.f32.gmra.mrb[0].mxu0 %v2504
        %v2575 = vpop.f32.mrb[0].mxu0
        %v2576 = vadd.f32 0.0, %v2575
        %v2577 = vpop.f32.mrb[0].mxu0
        %2578 = vdwg.mxu0
        %v2580 = vsel %vm2198, %v1252, 0
        %v2583 = vsel %vm2198, %v1884, 0
        %2585 = vmatprep.subr.mxu0 0.0
        %2586 = vmatpush1.xpose.msra.mxu0 %v2583
        %2587 = vmatprep.subr.mxu0 0.0
        %2588 = vmatpush1.xpose.msra.mxu0 0.0
        %2589 = vmatprep.subr.mxu0 0.0
        %2590 = vmatpush1.xpose.msra.mxu0 0.0
        %2591 = vmatprep.subr.mxu0 0.0
        %2592 = vmatpush1.xpose.msra.mxu0 0.0
        %2593 = vmatprep.subr.mxu0 0.0
        %2594 = vmatpush1.xpose.msra.mxu0 0.0
        %2595 = vmatprep.subr.mxu0 0.0
        %2596 = vmatpush1.xpose.msra.mxu0 0.0
        %2597 = vmatprep.subr.mxu0 0.0
        %2598 = vmatpush1.xpose.msra.mxu0 0.0
        %2599 = vmatprep.subr.mxu0 0.0
        %2600 = vmatpush1.xpose.msra.mxu0 0.0
        %2601 = vmatprep.subr.mxu0 0.0
        %2602 = vmatpush1.xpose.msra.mxu0 0.0
        %2603 = vmatprep.subr.mxu0 0.0
        %2604 = vmatpush1.xpose.msra.mxu0 0.0
        %2605 = vmatprep.subr.mxu0 0.0
        %2606 = vmatpush1.xpose.msra.mxu0 0.0
        %2607 = vmatprep.subr.mxu0 0.0
        %2608 = vmatpush1.xpose.msra.mxu0 0.0
        %2609 = vmatprep.subr.mxu0 0.0
        %2610 = vmatpush1.xpose.msra.mxu0 0.0
        %2611 = vmatprep.subr.mxu0 0.0
        %2612 = vmatpush1.xpose.msra.mxu0 0.0
        %2613 = vmatprep.subr.mxu0 0.0
        %2614 = vmatpush1.xpose.msra.mxu0 0.0
        %2615 = vmatprep.subr.mxu0 0.0
        %2616 = vmatpush1.xpose.msra.mxu0 0.0
        %2617 = vmatprep.subr.mxu0 0.0
        %2618 = vmatpush1.xpose.msra.mxu0 0.0
        %2619 = vmatprep.subr.mxu0 0.0
        %2620 = vmatpush1.xpose.msra.mxu0 0.0
        %2621 = vmatprep.subr.mxu0 0.0
        %2622 = vmatpush1.xpose.msra.mxu0 0.0
        %2623 = vmatprep.subr.mxu0 0.0
        %2624 = vmatpush1.xpose.msra.mxu0 0.0
        %2625 = vmatprep.subr.mxu0 0.0
        %2626 = vmatpush1.xpose.msra.mxu0 0.0
        %2627 = vmatprep.subr.mxu0 0.0
        %2628 = vmatpush1.xpose.msra.mxu0 0.0
        %2629 = vmatprep.subr.mxu0 0.0
        %2630 = vmatpush1.xpose.msra.mxu0 0.0
        %2631 = vmatprep.subr.mxu0 0.0
        %2632 = vmatpush1.xpose.msra.mxu0 0.0
        %2633 = vmatprep.subr.mxu0 0.0
        %2634 = vmatpush1.xpose.msra.mxu0 0.0
        %2635 = vmatprep.subr.mxu0 0.0
        %2636 = vmatpush1.xpose.msra.mxu0 0.0
        %2637 = vmatprep.subr.mxu0 0.0
        %2638 = vmatpush1.xpose.msra.mxu0 0.0
        %2639 = vmatprep.subr.mxu0 0.0
        %2640 = vmatpush1.xpose.msra.mxu0 0.0
        %2641 = vmatprep.subr.mxu0 0.0
        %2642 = vmatpush1.xpose.msra.mxu0 0.0
        %2643 = vmatprep.subr.mxu0 0.0
        %2644 = vmatpush1.xpose.msra.mxu0 0.0
        %2645 = vmatprep.subr.mxu0 0.0
        %2646 = vmatpush1.xpose.msra.mxu0 0.0
        %2647 = vmatprep.subr.mxu0 0.0
        %2648 = vmatpush1.xpose.msra.mxu0 0.0
        %2649 = vmatprep.mubr.f32.mxu0 0.0
        %2650 = vmatmul.mubr.f32.gmra.mrb[0].mxu0 %v2580
        %v2651 = vpop.f32.mrb[0].mxu0
        %v2652 = vadd.f32 0.0, %v2651
        %v2653 = vpop.f32.mrb[0].mxu0
        %2654 = vdwg.mxu0
        %v2656 = vsel %vm2198, %v1253, 0
        %v2659 = vsel %vm2198, %v1885, 0
        %2661 = vmatprep.subr.mxu0 0.0
        %2662 = vmatpush1.xpose.msra.mxu0 %v2659
        %2663 = vmatprep.subr.mxu0 0.0
        %2664 = vmatpush1.xpose.msra.mxu0 0.0
        %2665 = vmatprep.subr.mxu0 0.0
        %2666 = vmatpush1.xpose.msra.mxu0 0.0
        %2667 = vmatprep.subr.mxu0 0.0
        %2668 = vmatpush1.xpose.msra.mxu0 0.0
        %2669 = vmatprep.subr.mxu0 0.0
        %2670 = vmatpush1.xpose.msra.mxu0 0.0
        %2671 = vmatprep.subr.mxu0 0.0
        %2672 = vmatpush1.xpose.msra.mxu0 0.0
        %2673 = vmatprep.subr.mxu0 0.0
        %2674 = vmatpush1.xpose.msra.mxu0 0.0
        %2675 = vmatprep.subr.mxu0 0.0
        %2676 = vmatpush1.xpose.msra.mxu0 0.0
        %2677 = vmatprep.subr.mxu0 0.0
        %2678 = vmatpush1.xpose.msra.mxu0 0.0
        %2679 = vmatprep.subr.mxu0 0.0
        %2680 = vmatpush1.xpose.msra.mxu0 0.0
        %2681 = vmatprep.subr.mxu0 0.0
        %2682 = vmatpush1.xpose.msra.mxu0 0.0
        %2683 = vmatprep.subr.mxu0 0.0
        %2684 = vmatpush1.xpose.msra.mxu0 0.0
        %2685 = vmatprep.subr.mxu0 0.0
        %2686 = vmatpush1.xpose.msra.mxu0 0.0
        %2687 = vmatprep.subr.mxu0 0.0
        %2688 = vmatpush1.xpose.msra.mxu0 0.0
        %2689 = vmatprep.subr.mxu0 0.0
        %2690 = vmatpush1.xpose.msra.mxu0 0.0
        %2691 = vmatprep.subr.mxu0 0.0
        %2692 = vmatpush1.xpose.msra.mxu0 0.0
        %2693 = vmatprep.subr.mxu0 0.0
        %2694 = vmatpush1.xpose.msra.mxu0 0.0
        %2695 = vmatprep.subr.mxu0 0.0
        %2696 = vmatpush1.xpose.msra.mxu0 0.0
        %2697 = vmatprep.subr.mxu0 0.0
        %2698 = vmatpush1.xpose.msra.mxu0 0.0
        %2699 = vmatprep.subr.mxu0 0.0
        %2700 = vmatpush1.xpose.msra.mxu0 0.0
        %2701 = vmatprep.subr.mxu0 0.0
        %2702 = vmatpush1.xpose.msra.mxu0 0.0
        %2703 = vmatprep.subr.mxu0 0.0
        %2704 = vmatpush1.xpose.msra.mxu0 0.0
        %2705 = vmatprep.subr.mxu0 0.0
        %2706 = vmatpush1.xpose.msra.mxu0 0.0
        %2707 = vmatprep.subr.mxu0 0.0
        %2708 = vmatpush1.xpose.msra.mxu0 0.0
        %2709 = vmatprep.subr.mxu0 0.0
        %2710 = vmatpush1.xpose.msra.mxu0 0.0
        %2711 = vmatprep.subr.mxu0 0.0
        %2712 = vmatpush1.xpose.msra.mxu0 0.0
        %2713 = vmatprep.subr.mxu0 0.0
        %2714 = vmatpush1.xpose.msra.mxu0 0.0
        %2715 = vmatprep.subr.mxu0 0.0
        %2716 = vmatpush1.xpose.msra.mxu0 0.0
        %2717 = vmatprep.subr.mxu0 0.0
        %2718 = vmatpush1.xpose.msra.mxu0 0.0
        %2719 = vmatprep.subr.mxu0 0.0
        %2720 = vmatpush1.xpose.msra.mxu0 0.0
        %2721 = vmatprep.subr.mxu0 0.0
        %2722 = vmatpush1.xpose.msra.mxu0 0.0
        %2723 = vmatprep.subr.mxu0 0.0
        %2724 = vmatpush1.xpose.msra.mxu0 0.0
        %2725 = vmatprep.mubr.f32.mxu0 0.0
        %2726 = vmatmul.mubr.f32.gmra.mrb[0].mxu0 %v2656
        %v2727 = vpop.f32.mrb[0].mxu0
        %v2728 = vadd.f32 0.0, %v2727
        %v2729 = vpop.f32.mrb[0].mxu0
        %2730 = vdwg.mxu0
        %v2732 = vsel %vm2198, %v1254, 0
        %v2735 = vsel %vm2198, %v1886, 0
        %2737 = vmatprep.subr.mxu0 0.0
        %2738 = vmatpush1.xpose.msra.mxu0 %v2735
        %2739 = vmatprep.subr.mxu0 0.0
        %2740 = vmatpush1.xpose.msra.mxu0 0.0
        %2741 = vmatprep.subr.mxu0 0.0
        %2742 = vmatpush1.xpose.msra.mxu0 0.0
        %2743 = vmatprep.subr.mxu0 0.0
        %2744 = vmatpush1.xpose.msra.mxu0 0.0
        %2745 = vmatprep.subr.mxu0 0.0
        %2746 = vmatpush1.xpose.msra.mxu0 0.0
        %2747 = vmatprep.subr.mxu0 0.0
        %2748 = vmatpush1.xpose.msra.mxu0 0.0
        %2749 = vmatprep.subr.mxu0 0.0
        %2750 = vmatpush1.xpose.msra.mxu0 0.0
        %2751 = vmatprep.subr.mxu0 0.0
        %2752 = vmatpush1.xpose.msra.mxu0 0.0
        %2753 = vmatprep.subr.mxu0 0.0
        %2754 = vmatpush1.xpose.msra.mxu0 0.0
        %2755 = vmatprep.subr.mxu0 0.0
        %2756 = vmatpush1.xpose.msra.mxu0 0.0
        %2757 = vmatprep.subr.mxu0 0.0
        %2758 = vmatpush1.xpose.msra.mxu0 0.0
        %2759 = vmatprep.subr.mxu0 0.0
        %2760 = vmatpush1.xpose.msra.mxu0 0.0
        %2761 = vmatprep.subr.mxu0 0.0
        %2762 = vmatpush1.xpose.msra.mxu0 0.0
        %2763 = vmatprep.subr.mxu0 0.0
        %2764 = vmatpush1.xpose.msra.mxu0 0.0
        %2765 = vmatprep.subr.mxu0 0.0
        %2766 = vmatpush1.xpose.msra.mxu0 0.0
        %2767 = vmatprep.subr.mxu0 0.0
        %2768 = vmatpush1.xpose.msra.mxu0 0.0
        %2769 = vmatprep.subr.mxu0 0.0
        %2770 = vmatpush1.xpose.msra.mxu0 0.0
        %2771 = vmatprep.subr.mxu0 0.0
        %2772 = vmatpush1.xpose.msra.mxu0 0.0
        %2773 = vmatprep.subr.mxu0 0.0
        %2774 = vmatpush1.xpose.msra.mxu0 0.0
        %2775 = vmatprep.subr.mxu0 0.0
        %2776 = vmatpush1.xpose.msra.mxu0 0.0
        %2777 = vmatprep.subr.mxu0 0.0
        %2778 = vmatpush1.xpose.msra.mxu0 0.0
        %2779 = vmatprep.subr.mxu0 0.0
        %2780 = vmatpush1.xpose.msra.mxu0 0.0
        %2781 = vmatprep.subr.mxu0 0.0
        %2782 = vmatpush1.xpose.msra.mxu0 0.0
        %2783 = vmatprep.subr.mxu0 0.0
        %2784 = vmatpush1.xpose.msra.mxu0 0.0
        %2785 = vmatprep.subr.mxu0 0.0
        %2786 = vmatpush1.xpose.msra.mxu0 0.0
        %2787 = vmatprep.subr.mxu0 0.0
        %2788 = vmatpush1.xpose.msra.mxu0 0.0
        %2789 = vmatprep.subr.mxu0 0.0
        %2790 = vmatpush1.xpose.msra.mxu0 0.0
        %2791 = vmatprep.subr.mxu0 0.0
        %2792 = vmatpush1.xpose.msra.mxu0 0.0
        %2793 = vmatprep.subr.mxu0 0.0
        %2794 = vmatpush1.xpose.msra.mxu0 0.0
        %2795 = vmatprep.subr.mxu0 0.0
        %2796 = vmatpush1.xpose.msra.mxu0 0.0
        %2797 = vmatprep.subr.mxu0 0.0
        %2798 = vmatpush1.xpose.msra.mxu0 0.0
        %2799 = vmatprep.subr.mxu0 0.0
        %2800 = vmatpush1.xpose.msra.mxu0 0.0
        %2801 = vmatprep.mubr.f32.mxu0 0.0
        %2802 = vmatmul.mubr.f32.gmra.mrb[0].mxu0 %v2732
        %v2803 = vpop.f32.mrb[0].mxu0
        %v2804 = vadd.f32 0.0, %v2803
        %v2805 = vpop.f32.mrb[0].mxu0
        %2806 = vdwg.mxu0
        %v2807 = vld [vmem:[%s291] sm:$0xff]
        %v2808 = vmul.f32 %v2272, %v2807
        %v2809 = vmul.f32 %v2348, %v2807
        %v2810 = vmul.f32 %v2424, %v2807
        %v2811 = vmul.f32 %v2500, %v2807
        %v2812 = vmul.f32 %v2576, %v2807
        %v2813 = vmul.f32 %v2652, %v2807
        %v2814 = vmul.f32 %v2728, %v2807
        %v2815 = vmul.f32 %v2804, %v2807
        %v2816 = vsel %vm2198, %v2808, -inf
        %2817 = vmax.xlane.f32.xlu0 %v2816
        %v2818 = vpop.xlane.xlu0 %2817
        %v2819 = vsel %vm2198, %v2809, -inf
        %2820 = vmax.xlane.f32.xlu0 %v2819
        %v2821 = vpop.xlane.xlu0 %2820
        %v2822 = vsel %vm2198, %v2810, -inf
        %2823 = vmax.xlane.f32.xlu0 %v2822
        %v2824 = vpop.xlane.xlu0 %2823
        %v2825 = vsel %vm2198, %v2811, -inf
        %2826 = vmax.xlane.f32.xlu0 %v2825
        %v2827 = vpop.xlane.xlu0 %2826
        %v2828 = vsel %vm2198, %v2812, -inf
        %2829 = vmax.xlane.f32.xlu0 %v2828
        %v2830 = vpop.xlane.xlu0 %2829
        %v2831 = vsel %vm2198, %v2813, -inf
        %2832 = vmax.xlane.f32.xlu0 %v2831
        %v2833 = vpop.xlane.xlu0 %2832
        %v2834 = vsel %vm2198, %v2814, -inf
        %2835 = vmax.xlane.f32.xlu0 %v2834
        %v2836 = vpop.xlane.xlu0 %2835
        %v2837 = vsel %vm2198, %v2815, -inf
        %2838 = vmax.xlane.f32.xlu0 %v2837
        %v2839 = vpop.xlane.xlu0 %2838
        %v2840 = vsub.f32 %v2808, %v2818
        %v2841 = vsub.f32 %v2809, %v2821
        %v2842 = vsub.f32 %v2810, %v2824
        %v2843 = vsub.f32 %v2811, %v2827
        %v2844 = vsub.f32 %v2812, %v2830
        %v2845 = vsub.f32 %v2813, %v2833
        %v2846 = vsub.f32 %v2814, %v2836
        %v2847 = vsub.f32 %v2815, %v2839
        %v2848 = vmul.f32 %v2840, 1.442695
        %v2849 = vpow.pop %v2848
        %v2850 = vmul.f32 %v2841, 1.442695
        %v2851 = vpow.pop %v2850
        %v2852 = vmul.f32 %v2842, 1.442695
        %v2853 = vpow.pop %v2852
        %v2854 = vmul.f32 %v2843, 1.442695
        %v2855 = vpow.pop %v2854
        %v2856 = vmul.f32 %v2844, 1.442695
        %v2857 = vpow.pop %v2856
        %v2858 = vmul.f32 %v2845, 1.442695
        %v2859 = vpow.pop %v2858
        %v2860 = vmul.f32 %v2846, 1.442695
        %v2861 = vpow.pop %v2860
        %v2862 = vmul.f32 %v2847, 1.442695
        %v2863 = vpow.pop %v2862
        %v2864 = vsel %vm2198, %v2849, 0.0
        %2865 = vadd.xlane.f32.xlu0 %v2864
        %v2866 = vpop.xlane.xlu0 %2865
        %v2867 = vsel %vm2198, %v2851, 0.0
        %2868 = vadd.xlane.f32.xlu0 %v2867
        %v2869 = vpop.xlane.xlu0 %2868
        %v2870 = vsel %vm2198, %v2853, 0.0
        %2871 = vadd.xlane.f32.xlu0 %v2870
        %v2872 = vpop.xlane.xlu0 %2871
        %v2873 = vsel %vm2198, %v2855, 0.0
        %2874 = vadd.xlane.f32.xlu0 %v2873
        %v2875 = vpop.xlane.xlu0 %2874
        %v2876 = vsel %vm2198, %v2857, 0.0
        %2877 = vadd.xlane.f32.xlu0 %v2876
        %v2878 = vpop.xlane.xlu0 %2877
        %v2879 = vsel %vm2198, %v2859, 0.0
        %2880 = vadd.xlane.f32.xlu0 %v2879
        %v2881 = vpop.xlane.xlu0 %2880
        %v2882 = vsel %vm2198, %v2861, 0.0
        %2883 = vadd.xlane.f32.xlu0 %v2882
        %v2884 = vpop.xlane.xlu0 %2883
        %v2885 = vsel %vm2198, %v2863, 0.0
        %2886 = vadd.xlane.f32.xlu0 %v2885
        %v2887 = vpop.xlane.xlu0 %2886
        %v2888 = vrcp.pop %v2866
        %v2889 = vrcp.pop %v2869
        %v2890 = vrcp.pop %v2872
        %v2891 = vrcp.pop %v2875
        %v2892 = vrcp.pop %v2878
        %v2893 = vrcp.pop %v2881
        %v2894 = vrcp.pop %v2884
        %v2895 = vrcp.pop %v2887
        %v2896 = vmul.f32 %v2866, %v2888
        %v2897 = vmul.f32 %v2869, %v2889
        %v2898 = vmul.f32 %v2872, %v2890
        %v2899 = vmul.f32 %v2875, %v2891
        %v2900 = vmul.f32 %v2878, %v2892
        %v2901 = vmul.f32 %v2881, %v2893
        %v2902 = vmul.f32 %v2884, %v2894
        %v2903 = vmul.f32 %v2887, %v2895
        %v2904 = vsub.f32 2.0, %v2896
        %v2905 = vsub.f32 2.0, %v2897
        %v2906 = vsub.f32 2.0, %v2898
        %v2907 = vsub.f32 2.0, %v2899
        %v2908 = vsub.f32 2.0, %v2900
        %v2909 = vsub.f32 2.0, %v2901
        %v2910 = vsub.f32 2.0, %v2902
        %v2911 = vsub.f32 2.0, %v2903
        %v2912 = vmul.f32 %v2888, %v2904
        %v2913 = vmul.f32 %v2889, %v2905
        %v2914 = vmul.f32 %v2890, %v2906
        %v2915 = vmul.f32 %v2891, %v2907
        %v2916 = vmul.f32 %v2892, %v2908
        %v2917 = vmul.f32 %v2893, %v2909
        %v2918 = vmul.f32 %v2894, %v2910
        %v2919 = vmul.f32 %v2895, %v2911
        %v2920 = vmul.f32 %v2849, %v2912
        %v2921 = vmul.f32 %v2851, %v2913
        %v2922 = vmul.f32 %v2853, %v2914
        %v2923 = vmul.f32 %v2855, %v2915
        %v2924 = vmul.f32 %v2857, %v2916
        %v2925 = vmul.f32 %v2859, %v2917
        %v2926 = vmul.f32 %v2861, %v2918
        %v2927 = vmul.f32 %v2863, %v2919
        %v2929 = vsel %vm2198, %v2920, 0
        %2931 = vmatprep.subr.mxu0 0.0
        %2932 = vmatpush1.msra.mxu0 %v2190
        %2933 = vmatprep.subr.mxu0 0.0
        %2934 = vmatpush1.msra.mxu0 0.0
        %2935 = vmatprep.subr.mxu0 0.0
        %2936 = vmatpush1.msra.mxu0 0.0
        %2937 = vmatprep.subr.mxu0 0.0
        %2938 = vmatpush1.msra.mxu0 0.0
        %2939 = vmatprep.subr.mxu0 0.0
        %2940 = vmatpush1.msra.mxu0 0.0
        %2941 = vmatprep.subr.mxu0 0.0
        %2942 = vmatpush1.msra.mxu0 0.0
        %2943 = vmatprep.subr.mxu0 0.0
        %2944 = vmatpush1.msra.mxu0 0.0
        %2945 = vmatprep.subr.mxu0 0.0
        %2946 = vmatpush1.msra.mxu0 0.0
        %2947 = vmatprep.subr.mxu0 0.0
        %2948 = vmatpush1.msra.mxu0 0.0
        %2949 = vmatprep.subr.mxu0 0.0
        %2950 = vmatpush1.msra.mxu0 0.0
        %2951 = vmatprep.subr.mxu0 0.0
        %2952 = vmatpush1.msra.mxu0 0.0
        %2953 = vmatprep.subr.mxu0 0.0
        %2954 = vmatpush1.msra.mxu0 0.0
        %2955 = vmatprep.subr.mxu0 0.0
        %2956 = vmatpush1.msra.mxu0 0.0
        %2957 = vmatprep.subr.mxu0 0.0
        %2958 = vmatpush1.msra.mxu0 0.0
        %2959 = vmatprep.subr.mxu0 0.0
        %2960 = vmatpush1.msra.mxu0 0.0
        %2961 = vmatprep.subr.mxu0 0.0
        %2962 = vmatpush1.msra.mxu0 0.0
        %2963 = vmatprep.subr.mxu0 0.0
        %2964 = vmatpush1.msra.mxu0 0.0
        %2965 = vmatprep.subr.mxu0 0.0
        %2966 = vmatpush1.msra.mxu0 0.0
        %2967 = vmatprep.subr.mxu0 0.0
        %2968 = vmatpush1.msra.mxu0 0.0
        %2969 = vmatprep.subr.mxu0 0.0
        %2970 = vmatpush1.msra.mxu0 0.0
        %2971 = vmatprep.subr.mxu0 0.0
        %2972 = vmatpush1.msra.mxu0 0.0
        %2973 = vmatprep.subr.mxu0 0.0
        %2974 = vmatpush1.msra.mxu0 0.0
        %2975 = vmatprep.subr.mxu0 0.0
        %2976 = vmatpush1.msra.mxu0 0.0
        %2977 = vmatprep.subr.mxu0 0.0
        %2978 = vmatpush1.msra.mxu0 0.0
        %2979 = vmatprep.subr.mxu0 0.0
        %2980 = vmatpush1.msra.mxu0 0.0
        %2981 = vmatprep.subr.mxu0 0.0
        %2982 = vmatpush1.msra.mxu0 0.0
        %2983 = vmatprep.subr.mxu0 0.0
        %2984 = vmatpush1.msra.mxu0 0.0
        %2985 = vmatprep.subr.mxu0 0.0
        %2986 = vmatpush1.msra.mxu0 0.0
        %2987 = vmatprep.subr.mxu0 0.0
        %2988 = vmatpush1.msra.mxu0 0.0
        %2989 = vmatprep.subr.mxu0 0.0
        %2990 = vmatpush1.msra.mxu0 0.0
        %2991 = vmatprep.subr.mxu0 0.0
        %2992 = vmatpush1.msra.mxu0 0.0
        %2993 = vmatprep.subr.mxu0 0.0
        %2994 = vmatpush1.msra.mxu0 0.0
        %2995 = vmatprep.mubr.f32.mxu0 0.0
        %2996 = vmatmul.mubr.f32.gmra.mrb[0].mxu0 %v2929
        %v2997 = vpop.f32.mrb[0].mxu0
        %v2998 = vadd.f32 0.0, %v2997
        %v2999 = vpop.f32.mrb[0].mxu0
        %3000 = vdwg.mxu0
        %v3002 = vsel %vm2198, %v2921, 0
        %3004 = vmatprep.subr.mxu0 0.0
        %3005 = vmatpush1.msra.mxu0 %v2191
        %3006 = vmatprep.subr.mxu0 0.0
        %3007 = vmatpush1.msra.mxu0 0.0
        %3008 = vmatprep.subr.mxu0 0.0
        %3009 = vmatpush1.msra.mxu0 0.0
        %3010 = vmatprep.subr.mxu0 0.0
        %3011 = vmatpush1.msra.mxu0 0.0
        %3012 = vmatprep.subr.mxu0 0.0
        %3013 = vmatpush1.msra.mxu0 0.0
        %3014 = vmatprep.subr.mxu0 0.0
        %3015 = vmatpush1.msra.mxu0 0.0
        %3016 = vmatprep.subr.mxu0 0.0
        %3017 = vmatpush1.msra.mxu0 0.0
        %3018 = vmatprep.subr.mxu0 0.0
        %3019 = vmatpush1.msra.mxu0 0.0
        %3020 = vmatprep.subr.mxu0 0.0
        %3021 = vmatpush1.msra.mxu0 0.0
        %3022 = vmatprep.subr.mxu0 0.0
        %3023 = vmatpush1.msra.mxu0 0.0
        %3024 = vmatprep.subr.mxu0 0.0
        %3025 = vmatpush1.msra.mxu0 0.0
        %3026 = vmatprep.subr.mxu0 0.0
        %3027 = vmatpush1.msra.mxu0 0.0
        %3028 = vmatprep.subr.mxu0 0.0
        %3029 = vmatpush1.msra.mxu0 0.0
        %3030 = vmatprep.subr.mxu0 0.0
        %3031 = vmatpush1.msra.mxu0 0.0
        %3032 = vmatprep.subr.mxu0 0.0
        %3033 = vmatpush1.msra.mxu0 0.0
        %3034 = vmatprep.subr.mxu0 0.0
        %3035 = vmatpush1.msra.mxu0 0.0
        %3036 = vmatprep.subr.mxu0 0.0
        %3037 = vmatpush1.msra.mxu0 0.0
        %3038 = vmatprep.subr.mxu0 0.0
        %3039 = vmatpush1.msra.mxu0 0.0
        %3040 = vmatprep.subr.mxu0 0.0
        %3041 = vmatpush1.msra.mxu0 0.0
        %3042 = vmatprep.subr.mxu0 0.0
        %3043 = vmatpush1.msra.mxu0 0.0
        %3044 = vmatprep.subr.mxu0 0.0
        %3045 = vmatpush1.msra.mxu0 0.0
        %3046 = vmatprep.subr.mxu0 0.0
        %3047 = vmatpush1.msra.mxu0 0.0
        %3048 = vmatprep.subr.mxu0 0.0
        %3049 = vmatpush1.msra.mxu0 0.0
        %3050 = vmatprep.subr.mxu0 0.0
        %3051 = vmatpush1.msra.mxu0 0.0
        %3052 = vmatprep.subr.mxu0 0.0
        %3053 = vmatpush1.msra.mxu0 0.0
        %3054 = vmatprep.subr.mxu0 0.0
        %3055 = vmatpush1.msra.mxu0 0.0
        %3056 = vmatprep.subr.mxu0 0.0
        %3057 = vmatpush1.msra.mxu0 0.0
        %3058 = vmatprep.subr.mxu0 0.0
        %3059 = vmatpush1.msra.mxu0 0.0
        %3060 = vmatprep.subr.mxu0 0.0
        %3061 = vmatpush1.msra.mxu0 0.0
        %3062 = vmatprep.subr.mxu0 0.0
        %3063 = vmatpush1.msra.mxu0 0.0
        %3064 = vmatprep.subr.mxu0 0.0
        %3065 = vmatpush1.msra.mxu0 0.0
        %3066 = vmatprep.subr.mxu0 0.0
        %3067 = vmatpush1.msra.mxu0 0.0
        %3068 = vmatprep.mubr.f32.mxu0 0.0
        %3069 = vmatmul.mubr.f32.gmra.mrb[0].mxu0 %v3002
        %v3070 = vpop.f32.mrb[0].mxu0
        %v3071 = vadd.f32 0.0, %v3070
        %v3072 = vpop.f32.mrb[0].mxu0
        %3073 = vdwg.mxu0
        %v3075 = vsel %vm2198, %v2922, 0
        %3077 = vmatprep.subr.mxu0 0.0
        %3078 = vmatpush1.msra.mxu0 %v2192
        %3079 = vmatprep.subr.mxu0 0.0
        %3080 = vmatpush1.msra.mxu0 0.0
        %3081 = vmatprep.subr.mxu0 0.0
        %3082 = vmatpush1.msra.mxu0 0.0
        %3083 = vmatprep.subr.mxu0 0.0
        %3084 = vmatpush1.msra.mxu0 0.0
        %3085 = vmatprep.subr.mxu0 0.0
        %3086 = vmatpush1.msra.mxu0 0.0
        %3087 = vmatprep.subr.mxu0 0.0
        %3088 = vmatpush1.msra.mxu0 0.0
        %3089 = vmatprep.subr.mxu0 0.0
        %3090 = vmatpush1.msra.mxu0 0.0
        %3091 = vmatprep.subr.mxu0 0.0
        %3092 = vmatpush1.msra.mxu0 0.0
        %3093 = vmatprep.subr.mxu0 0.0
        %3094 = vmatpush1.msra.mxu0 0.0
        %3095 = vmatprep.subr.mxu0 0.0
        %3096 = vmatpush1.msra.mxu0 0.0
        %3097 = vmatprep.subr.mxu0 0.0
        %3098 = vmatpush1.msra.mxu0 0.0
        %3099 = vmatprep.subr.mxu0 0.0
        %3100 = vmatpush1.msra.mxu0 0.0
        %3101 = vmatprep.subr.mxu0 0.0
        %3102 = vmatpush1.msra.mxu0 0.0
        %3103 = vmatprep.subr.mxu0 0.0
        %3104 = vmatpush1.msra.mxu0 0.0
        %3105 = vmatprep.subr.mxu0 0.0
        %3106 = vmatpush1.msra.mxu0 0.0
        %3107 = vmatprep.subr.mxu0 0.0
        %3108 = vmatpush1.msra.mxu0 0.0
        %3109 = vmatprep.subr.mxu0 0.0
        %3110 = vmatpush1.msra.mxu0 0.0
        %3111 = vmatprep.subr.mxu0 0.0
        %3112 = vmatpush1.msra.mxu0 0.0
        %3113 = vmatprep.subr.mxu0 0.0
        %3114 = vmatpush1.msra.mxu0 0.0
        %3115 = vmatprep.subr.mxu0 0.0
        %3116 = vmatpush1.msra.mxu0 0.0
        %3117 = vmatprep.subr.mxu0 0.0
        %3118 = vmatpush1.msra.mxu0 0.0
        %3119 = vmatprep.subr.mxu0 0.0
        %3120 = vmatpush1.msra.mxu0 0.0
        %3121 = vmatprep.subr.mxu0 0.0
        %3122 = vmatpush1.msra.mxu0 0.0
        %3123 = vmatprep.subr.mxu0 0.0
        %3124 = vmatpush1.msra.mxu0 0.0
        %3125 = vmatprep.subr.mxu0 0.0
        %3126 = vmatpush1.msra.mxu0 0.0
        %3127 = vmatprep.subr.mxu0 0.0
        %3128 = vmatpush1.msra.mxu0 0.0
        %3129 = vmatprep.subr.mxu0 0.0
        %3130 = vmatpush1.msra.mxu0 0.0
        %3131 = vmatprep.subr.mxu0 0.0
        %3132 = vmatpush1.msra.mxu0 0.0
        %3133 = vmatprep.subr.mxu0 0.0
        %3134 = vmatpush1.msra.mxu0 0.0
        %3135 = vmatprep.subr.mxu0 0.0
        %3136 = vmatpush1.msra.mxu0 0.0
        %3137 = vmatprep.subr.mxu0 0.0
        %3138 = vmatpush1.msra.mxu0 0.0
        %3139 = vmatprep.subr.mxu0 0.0
        %3140 = vmatpush1.msra.mxu0 0.0
        %3141 = vmatprep.mubr.f32.mxu0 0.0
        %3142 = vmatmul.mubr.f32.gmra.mrb[0].mxu0 %v3075
        %v3143 = vpop.f32.mrb[0].mxu0
        %v3144 = vadd.f32 0.0, %v3143
        %v3145 = vpop.f32.mrb[0].mxu0
        %3146 = vdwg.mxu0
        %v3148 = vsel %vm2198, %v2923, 0
        %3150 = vmatprep.subr.mxu0 0.0
        %3151 = vmatpush1.msra.mxu0 %v2193
        %3152 = vmatprep.subr.mxu0 0.0
        %3153 = vmatpush1.msra.mxu0 0.0
        %3154 = vmatprep.subr.mxu0 0.0
        %3155 = vmatpush1.msra.mxu0 0.0
        %3156 = vmatprep.subr.mxu0 0.0
        %3157 = vmatpush1.msra.mxu0 0.0
        %3158 = vmatprep.subr.mxu0 0.0
        %3159 = vmatpush1.msra.mxu0 0.0
        %3160 = vmatprep.subr.mxu0 0.0
        %3161 = vmatpush1.msra.mxu0 0.0
        %3162 = vmatprep.subr.mxu0 0.0
        %3163 = vmatpush1.msra.mxu0 0.0
        %3164 = vmatprep.subr.mxu0 0.0
        %3165 = vmatpush1.msra.mxu0 0.0
        %3166 = vmatprep.subr.mxu0 0.0
        %3167 = vmatpush1.msra.mxu0 0.0
        %3168 = vmatprep.subr.mxu0 0.0
        %3169 = vmatpush1.msra.mxu0 0.0
        %3170 = vmatprep.subr.mxu0 0.0
        %3171 = vmatpush1.msra.mxu0 0.0
        %3172 = vmatprep.subr.mxu0 0.0
        %3173 = vmatpush1.msra.mxu0 0.0
        %3174 = vmatprep.subr.mxu0 0.0
        %3175 = vmatpush1.msra.mxu0 0.0
        %3176 = vmatprep.subr.mxu0 0.0
        %3177 = vmatpush1.msra.mxu0 0.0
        %3178 = vmatprep.subr.mxu0 0.0
        %3179 = vmatpush1.msra.mxu0 0.0
        %3180 = vmatprep.subr.mxu0 0.0
        %3181 = vmatpush1.msra.mxu0 0.0
        %3182 = vmatprep.subr.mxu0 0.0
        %3183 = vmatpush1.msra.mxu0 0.0
        %3184 = vmatprep.subr.mxu0 0.0
        %3185 = vmatpush1.msra.mxu0 0.0
        %3186 = vmatprep.subr.mxu0 0.0
        %3187 = vmatpush1.msra.mxu0 0.0
        %3188 = vmatprep.subr.mxu0 0.0
        %3189 = vmatpush1.msra.mxu0 0.0
        %3190 = vmatprep.subr.mxu0 0.0
        %3191 = vmatpush1.msra.mxu0 0.0
        %3192 = vmatprep.subr.mxu0 0.0
        %3193 = vmatpush1.msra.mxu0 0.0
        %3194 = vmatprep.subr.mxu0 0.0
        %3195 = vmatpush1.msra.mxu0 0.0
        %3196 = vmatprep.subr.mxu0 0.0
        %3197 = vmatpush1.msra.mxu0 0.0
        %3198 = vmatprep.subr.mxu0 0.0
        %3199 = vmatpush1.msra.mxu0 0.0
        %3200 = vmatprep.subr.mxu0 0.0
        %3201 = vmatpush1.msra.mxu0 0.0
        %3202 = vmatprep.subr.mxu0 0.0
        %3203 = vmatpush1.msra.mxu0 0.0
        %3204 = vmatprep.subr.mxu0 0.0
        %3205 = vmatpush1.msra.mxu0 0.0
        %3206 = vmatprep.subr.mxu0 0.0
        %3207 = vmatpush1.msra.mxu0 0.0
        %3208 = vmatprep.subr.mxu0 0.0
        %3209 = vmatpush1.msra.mxu0 0.0
        %3210 = vmatprep.subr.mxu0 0.0
        %3211 = vmatpush1.msra.mxu0 0.0
        %3212 = vmatprep.subr.mxu0 0.0
        %3213 = vmatpush1.msra.mxu0 0.0
        %3214 = vmatprep.mubr.f32.mxu0 0.0
        %3215 = vmatmul.mubr.f32.gmra.mrb[0].mxu0 %v3148
        %v3216 = vpop.f32.mrb[0].mxu0
        %v3217 = vadd.f32 0.0, %v3216
        %v3218 = vpop.f32.mrb[0].mxu0
        %3219 = vdwg.mxu0
        %v3221 = vsel %vm2198, %v2924, 0
        %3223 = vmatprep.subr.mxu0 0.0
        %3224 = vmatpush1.msra.mxu0 %v2194
        %3225 = vmatprep.subr.mxu0 0.0
        %3226 = vmatpush1.msra.mxu0 0.0
        %3227 = vmatprep.subr.mxu0 0.0
        %3228 = vmatpush1.msra.mxu0 0.0
        %3229 = vmatprep.subr.mxu0 0.0
        %3230 = vmatpush1.msra.mxu0 0.0
        %3231 = vmatprep.subr.mxu0 0.0
        %3232 = vmatpush1.msra.mxu0 0.0
        %3233 = vmatprep.subr.mxu0 0.0
        %3234 = vmatpush1.msra.mxu0 0.0
        %3235 = vmatprep.subr.mxu0 0.0
        %3236 = vmatpush1.msra.mxu0 0.0
        %3237 = vmatprep.subr.mxu0 0.0
        %3238 = vmatpush1.msra.mxu0 0.0
        %3239 = vmatprep.subr.mxu0 0.0
        %3240 = vmatpush1.msra.mxu0 0.0
        %3241 = vmatprep.subr.mxu0 0.0
        %3242 = vmatpush1.msra.mxu0 0.0
        %3243 = vmatprep.subr.mxu0 0.0
        %3244 = vmatpush1.msra.mxu0 0.0
        %3245 = vmatprep.subr.mxu0 0.0
        %3246 = vmatpush1.msra.mxu0 0.0
        %3247 = vmatprep.subr.mxu0 0.0
        %3248 = vmatpush1.msra.mxu0 0.0
        %3249 = vmatprep.subr.mxu0 0.0
        %3250 = vmatpush1.msra.mxu0 0.0
        %3251 = vmatprep.subr.mxu0 0.0
        %3252 = vmatpush1.msra.mxu0 0.0
        %3253 = vmatprep.subr.mxu0 0.0
        %3254 = vmatpush1.msra.mxu0 0.0
        %3255 = vmatprep.subr.mxu0 0.0
        %3256 = vmatpush1.msra.mxu0 0.0
        %3257 = vmatprep.subr.mxu0 0.0
        %3258 = vmatpush1.msra.mxu0 0.0
        %3259 = vmatprep.subr.mxu0 0.0
        %3260 = vmatpush1.msra.mxu0 0.0
        %3261 = vmatprep.subr.mxu0 0.0
        %3262 = vmatpush1.msra.mxu0 0.0
        %3263 = vmatprep.subr.mxu0 0.0
        %3264 = vmatpush1.msra.mxu0 0.0
        %3265 = vmatprep.subr.mxu0 0.0
        %3266 = vmatpush1.msra.mxu0 0.0
        %3267 = vmatprep.subr.mxu0 0.0
        %3268 = vmatpush1.msra.mxu0 0.0
        %3269 = vmatprep.subr.mxu0 0.0
        %3270 = vmatpush1.msra.mxu0 0.0
        %3271 = vmatprep.subr.mxu0 0.0
        %3272 = vmatpush1.msra.mxu0 0.0
        %3273 = vmatprep.subr.mxu0 0.0
        %3274 = vmatpush1.msra.mxu0 0.0
        %3275 = vmatprep.subr.mxu0 0.0
        %3276 = vmatpush1.msra.mxu0 0.0
        %3277 = vmatprep.subr.mxu0 0.0
        %3278 = vmatpush1.msra.mxu0 0.0
        %3279 = vmatprep.subr.mxu0 0.0
        %3280 = vmatpush1.msra.mxu0 0.0
        %3281 = vmatprep.subr.mxu0 0.0
        %3282 = vmatpush1.msra.mxu0 0.0
        %3283 = vmatprep.subr.mxu0 0.0
        %3284 = vmatpush1.msra.mxu0 0.0
        %3285 = vmatprep.subr.mxu0 0.0
        %3286 = vmatpush1.msra.mxu0 0.0
        %3287 = vmatprep.mubr.f32.mxu0 0.0
        %3288 = vmatmul.mubr.f32.gmra.mrb[0].mxu0 %v3221
        %v3289 = vpop.f32.mrb[0].mxu0
        %v3290 = vadd.f32 0.0, %v3289
        %v3291 = vpop.f32.mrb[0].mxu0
        %3292 = vdwg.mxu0
        %v3294 = vsel %vm2198, %v2925, 0
        %3296 = vmatprep.subr.mxu0 0.0
        %3297 = vmatpush1.msra.mxu0 %v2195
        %3298 = vmatprep.subr.mxu0 0.0
        %3299 = vmatpush1.msra.mxu0 0.0
        %3300 = vmatprep.subr.mxu0 0.0
        %3301 = vmatpush1.msra.mxu0 0.0
        %3302 = vmatprep.subr.mxu0 0.0
        %3303 = vmatpush1.msra.mxu0 0.0
        %3304 = vmatprep.subr.mxu0 0.0
        %3305 = vmatpush1.msra.mxu0 0.0
        %3306 = vmatprep.subr.mxu0 0.0
        %3307 = vmatpush1.msra.mxu0 0.0
        %3308 = vmatprep.subr.mxu0 0.0
        %3309 = vmatpush1.msra.mxu0 0.0
        %3310 = vmatprep.subr.mxu0 0.0
        %3311 = vmatpush1.msra.mxu0 0.0
        %3312 = vmatprep.subr.mxu0 0.0
        %3313 = vmatpush1.msra.mxu0 0.0
        %3314 = vmatprep.subr.mxu0 0.0
        %3315 = vmatpush1.msra.mxu0 0.0
        %3316 = vmatprep.subr.mxu0 0.0
        %3317 = vmatpush1.msra.mxu0 0.0
        %3318 = vmatprep.subr.mxu0 0.0
        %3319 = vmatpush1.msra.mxu0 0.0
        %3320 = vmatprep.subr.mxu0 0.0
        %3321 = vmatpush1.msra.mxu0 0.0
        %3322 = vmatprep.subr.mxu0 0.0
        %3323 = vmatpush1.msra.mxu0 0.0
        %3324 = vmatprep.subr.mxu0 0.0
        %3325 = vmatpush1.msra.mxu0 0.0
        %3326 = vmatprep.subr.mxu0 0.0
        %3327 = vmatpush1.msra.mxu0 0.0
        %3328 = vmatprep.subr.mxu0 0.0
        %3329 = vmatpush1.msra.mxu0 0.0
        %3330 = vmatprep.subr.mxu0 0.0
        %3331 = vmatpush1.msra.mxu0 0.0
        %3332 = vmatprep.subr.mxu0 0.0
        %3333 = vmatpush1.msra.mxu0 0.0
        %3334 = vmatprep.subr.mxu0 0.0
        %3335 = vmatpush1.msra.mxu0 0.0
        %3336 = vmatprep.subr.mxu0 0.0
        %3337 = vmatpush1.msra.mxu0 0.0
        %3338 = vmatprep.subr.mxu0 0.0
        %3339 = vmatpush1.msra.mxu0 0.0
        %3340 = vmatprep.subr.mxu0 0.0
        %3341 = vmatpush1.msra.mxu0 0.0
        %3342 = vmatprep.subr.mxu0 0.0
        %3343 = vmatpush1.msra.mxu0 0.0
        %3344 = vmatprep.subr.mxu0 0.0
        %3345 = vmatpush1.msra.mxu0 0.0
        %3346 = vmatprep.subr.mxu0 0.0
        %3347 = vmatpush1.msra.mxu0 0.0
        %3348 = vmatprep.subr.mxu0 0.0
        %3349 = vmatpush1.msra.mxu0 0.0
        %3350 = vmatprep.subr.mxu0 0.0
        %3351 = vmatpush1.msra.mxu0 0.0
        %3352 = vmatprep.subr.mxu0 0.0
        %3353 = vmatpush1.msra.mxu0 0.0
        %3354 = vmatprep.subr.mxu0 0.0
        %3355 = vmatpush1.msra.mxu0 0.0
        %3356 = vmatprep.subr.mxu0 0.0
        %3357 = vmatpush1.msra.mxu0 0.0
        %3358 = vmatprep.subr.mxu0 0.0
        %3359 = vmatpush1.msra.mxu0 0.0
        %3360 = vmatprep.mubr.f32.mxu0 0.0
        %3361 = vmatmul.mubr.f32.gmra.mrb[0].mxu0 %v3294
        %v3362 = vpop.f32.mrb[0].mxu0
        %v3363 = vadd.f32 0.0, %v3362
        %v3364 = vpop.f32.mrb[0].mxu0
        %3365 = vdwg.mxu0
        %v3367 = vsel %vm2198, %v2926, 0
        %3369 = vmatprep.subr.mxu0 0.0
        %3370 = vmatpush1.msra.mxu0 %v2196
        %3371 = vmatprep.subr.mxu0 0.0
        %3372 = vmatpush1.msra.mxu0 0.0
        %3373 = vmatprep.subr.mxu0 0.0
        %3374 = vmatpush1.msra.mxu0 0.0
        %3375 = vmatprep.subr.mxu0 0.0
        %3376 = vmatpush1.msra.mxu0 0.0
        %3377 = vmatprep.subr.mxu0 0.0
        %3378 = vmatpush1.msra.mxu0 0.0
        %3379 = vmatprep.subr.mxu0 0.0
        %3380 = vmatpush1.msra.mxu0 0.0
        %3381 = vmatprep.subr.mxu0 0.0
        %3382 = vmatpush1.msra.mxu0 0.0
        %3383 = vmatprep.subr.mxu0 0.0
        %3384 = vmatpush1.msra.mxu0 0.0
        %3385 = vmatprep.subr.mxu0 0.0
        %3386 = vmatpush1.msra.mxu0 0.0
        %3387 = vmatprep.subr.mxu0 0.0
        %3388 = vmatpush1.msra.mxu0 0.0
        %3389 = vmatprep.subr.mxu0 0.0
        %3390 = vmatpush1.msra.mxu0 0.0
        %3391 = vmatprep.subr.mxu0 0.0
        %3392 = vmatpush1.msra.mxu0 0.0
        %3393 = vmatprep.subr.mxu0 0.0
        %3394 = vmatpush1.msra.mxu0 0.0
        %3395 = vmatprep.subr.mxu0 0.0
        %3396 = vmatpush1.msra.mxu0 0.0
        %3397 = vmatprep.subr.mxu0 0.0
        %3398 = vmatpush1.msra.mxu0 0.0
        %3399 = vmatprep.subr.mxu0 0.0
        %3400 = vmatpush1.msra.mxu0 0.0
        %3401 = vmatprep.subr.mxu0 0.0
        %3402 = vmatpush1.msra.mxu0 0.0
        %3403 = vmatprep.subr.mxu0 0.0
        %3404 = vmatpush1.msra.mxu0 0.0
        %3405 = vmatprep.subr.mxu0 0.0
        %3406 = vmatpush1.msra.mxu0 0.0
        %3407 = vmatprep.subr.mxu0 0.0
        %3408 = vmatpush1.msra.mxu0 0.0
        %3409 = vmatprep.subr.mxu0 0.0
        %3410 = vmatpush1.msra.mxu0 0.0
        %3411 = vmatprep.subr.mxu0 0.0
        %3412 = vmatpush1.msra.mxu0 0.0
        %3413 = vmatprep.subr.mxu0 0.0
        %3414 = vmatpush1.msra.mxu0 0.0
        %3415 = vmatprep.subr.mxu0 0.0
        %3416 = vmatpush1.msra.mxu0 0.0
        %3417 = vmatprep.subr.mxu0 0.0
        %3418 = vmatpush1.msra.mxu0 0.0
        %3419 = vmatprep.subr.mxu0 0.0
        %3420 = vmatpush1.msra.mxu0 0.0
        %3421 = vmatprep.subr.mxu0 0.0
        %3422 = vmatpush1.msra.mxu0 0.0
        %3423 = vmatprep.subr.mxu0 0.0
        %3424 = vmatpush1.msra.mxu0 0.0
        %3425 = vmatprep.subr.mxu0 0.0
        %3426 = vmatpush1.msra.mxu0 0.0
        %3427 = vmatprep.subr.mxu0 0.0
        %3428 = vmatpush1.msra.mxu0 0.0
        %3429 = vmatprep.subr.mxu0 0.0
        %3430 = vmatpush1.msra.mxu0 0.0
        %3431 = vmatprep.subr.mxu0 0.0
        %3432 = vmatpush1.msra.mxu0 0.0
        %3433 = vmatprep.mubr.f32.mxu0 0.0
        %3434 = vmatmul.mubr.f32.gmra.mrb[0].mxu0 %v3367
        %v3435 = vpop.f32.mrb[0].mxu0
        %v3436 = vadd.f32 0.0, %v3435
        %v3437 = vpop.f32.mrb[0].mxu0
        %3438 = vdwg.mxu0
        %v3440 = vsel %vm2198, %v2927, 0
        %3442 = vmatprep.subr.mxu0 0.0
        %3443 = vmatpush1.msra.mxu0 %v2197
        %3444 = vmatprep.subr.mxu0 0.0
        %3445 = vmatpush1.msra.mxu0 0.0
        %3446 = vmatprep.subr.mxu0 0.0
        %3447 = vmatpush1.msra.mxu0 0.0
        %3448 = vmatprep.subr.mxu0 0.0
        %3449 = vmatpush1.msra.mxu0 0.0
        %3450 = vmatprep.subr.mxu0 0.0
        %3451 = vmatpush1.msra.mxu0 0.0
        %3452 = vmatprep.subr.mxu0 0.0
        %3453 = vmatpush1.msra.mxu0 0.0
        %3454 = vmatprep.subr.mxu0 0.0
        %3455 = vmatpush1.msra.mxu0 0.0
        %3456 = vmatprep.subr.mxu0 0.0
        %3457 = vmatpush1.msra.mxu0 0.0
        %3458 = vmatprep.subr.mxu0 0.0
        %3459 = vmatpush1.msra.mxu0 0.0
        %3460 = vmatprep.subr.mxu0 0.0
        %3461 = vmatpush1.msra.mxu0 0.0
        %3462 = vmatprep.subr.mxu0 0.0
        %3463 = vmatpush1.msra.mxu0 0.0
        %3464 = vmatprep.subr.mxu0 0.0
        %3465 = vmatpush1.msra.mxu0 0.0
        %3466 = vmatprep.subr.mxu0 0.0
        %3467 = vmatpush1.msra.mxu0 0.0
        %3468 = vmatprep.subr.mxu0 0.0
        %3469 = vmatpush1.msra.mxu0 0.0
        %3470 = vmatprep.subr.mxu0 0.0
        %3471 = vmatpush1.msra.mxu0 0.0
        %3472 = vmatprep.subr.mxu0 0.0
        %3473 = vmatpush1.msra.mxu0 0.0
        %3474 = vmatprep.subr.mxu0 0.0
        %3475 = vmatpush1.msra.mxu0 0.0
        %3476 = vmatprep.subr.mxu0 0.0
        %3477 = vmatpush1.msra.mxu0 0.0
        %3478 = vmatprep.subr.mxu0 0.0
        %3479 = vmatpush1.msra.mxu0 0.0
        %3480 = vmatprep.subr.mxu0 0.0
        %3481 = vmatpush1.msra.mxu0 0.0
        %3482 = vmatprep.subr.mxu0 0.0
        %3483 = vmatpush1.msra.mxu0 0.0
        %3484 = vmatprep.subr.mxu0 0.0
        %3485 = vmatpush1.msra.mxu0 0.0
        %3486 = vmatprep.subr.mxu0 0.0
        %3487 = vmatpush1.msra.mxu0 0.0
        %3488 = vmatprep.subr.mxu0 0.0
        %3489 = vmatpush1.msra.mxu0 0.0
        %3490 = vmatprep.subr.mxu0 0.0
        %3491 = vmatpush1.msra.mxu0 0.0
        %3492 = vmatprep.subr.mxu0 0.0
        %3493 = vmatpush1.msra.mxu0 0.0
        %3494 = vmatprep.subr.mxu0 0.0
        %3495 = vmatpush1.msra.mxu0 0.0
        %3496 = vmatprep.subr.mxu0 0.0
        %3497 = vmatpush1.msra.mxu0 0.0
        %3498 = vmatprep.subr.mxu0 0.0
        %3499 = vmatpush1.msra.mxu0 0.0
        %3500 = vmatprep.subr.mxu0 0.0
        %3501 = vmatpush1.msra.mxu0 0.0
        %3502 = vmatprep.subr.mxu0 0.0
        %3503 = vmatpush1.msra.mxu0 0.0
        %3504 = vmatprep.subr.mxu0 0.0
        %3505 = vmatpush1.msra.mxu0 0.0
        %3506 = vmatprep.mubr.f32.mxu0 0.0
        %3507 = vmatmul.mubr.f32.gmra.mrb[0].mxu0 %v3440
        %v3508 = vpop.f32.mrb[0].mxu0
        %v3509 = vadd.f32 0.0, %v3508
        %v3510 = vpop.f32.mrb[0].mxu0
        %3511 = vdwg.mxu0
        %v3512 = vcombine.low %v2998, %v3144
        %v3513 = vcombine.high %v2998, %v3144
        %v3515 = vunpack.c.l.s4 1983009808
        %v3516 = vunpack.c.0.s8 %v3515
        %v3517 = vlaneseq
        %v3518 = vshrl.u32 %v3517, 7
        %v3519 = vsub.s32 %v3516, %v3518
        %v3520 = vrot.slane %v3512, %v3519
        %v3522 = vunpack.c.l.s4 1983009808
        %v3523 = vunpack.c.0.s8 %v3522
        %v3524 = vlaneseq
        %v3525 = vshrl.u32 %v3524, 7
        %v3526 = vsub.s32 %v3523, %v3525
        %v3527 = vrot.slane %v3513, %v3526
        %v3528 = vcombine.low %v3071, %v3217
        %v3529 = vcombine.high %v3071, %v3217
        %v3531 = vunpack.c.l.s4 1983009808
        %v3532 = vunpack.c.0.s8 %v3531
        %v3533 = vlaneseq
        %v3534 = vshrl.u32 %v3533, 7
        %v3535 = vsub.s32 %v3532, %v3534
        %v3536 = vrot.slane %v3528, %v3535
        %v3538 = vunpack.c.l.s4 1983009808
        %v3539 = vunpack.c.0.s8 %v3538
        %v3540 = vlaneseq
        %v3541 = vshrl.u32 %v3540, 7
        %v3542 = vsub.s32 %v3539, %v3541
        %v3543 = vrot.slane %v3529, %v3542
        %v3544 = vcombine.low %v3290, %v3436
        %v3545 = vcombine.high %v3290, %v3436
        %v3547 = vunpack.c.l.s4 1983009808
        %v3548 = vunpack.c.0.s8 %v3547
        %v3549 = vlaneseq
        %v3550 = vshrl.u32 %v3549, 7
        %v3551 = vsub.s32 %v3548, %v3550
        %v3552 = vrot.slane %v3544, %v3551
        %v3554 = vunpack.c.l.s4 1983009808
        %v3555 = vunpack.c.0.s8 %v3554
        %v3556 = vlaneseq
        %v3557 = vshrl.u32 %v3556, 7
        %v3558 = vsub.s32 %v3555, %v3557
        %v3559 = vrot.slane %v3545, %v3558
        %v3560 = vcombine.low %v3363, %v3509
        %v3561 = vcombine.high %v3363, %v3509
        %v3563 = vunpack.c.l.s4 1983009808
        %v3564 = vunpack.c.0.s8 %v3563
        %v3565 = vlaneseq
        %v3566 = vshrl.u32 %v3565, 7
        %v3567 = vsub.s32 %v3564, %v3566
        %v3568 = vrot.slane %v3560, %v3567
        %v3570 = vunpack.c.l.s4 1983009808
        %v3571 = vunpack.c.0.s8 %v3570
        %v3572 = vlaneseq
        %v3573 = vshrl.u32 %v3572, 7
        %v3574 = vsub.s32 %v3571, %v3573
        %v3575 = vrot.slane %v3561, %v3574
        %v3576 = vcombine.low %v3520, %v3536
        %v3577 = vcombine.high %v3520, %v3536
        %v3579 = vunpack.c.l.s4 1934713408
        %v3580 = vunpack.c.0.s8 %v3579
        %v3581 = vlaneseq
        %v3582 = vshrl.u32 %v3581, 7
        %v3583 = vsub.s32 %v3580, %v3582
        %v3584 = vrot.slane %v3576, %v3583
        %v3586 = vunpack.c.l.s4 1934713408
        %v3587 = vunpack.c.0.s8 %v3586
        %v3588 = vlaneseq
        %v3589 = vshrl.u32 %v3588, 7
        %v3590 = vsub.s32 %v3587, %v3589
        %v3591 = vrot.slane %v3577, %v3590
        %v3592 = vcombine.low %v3527, %v3543
        %v3593 = vcombine.high %v3527, %v3543
        %v3595 = vunpack.c.l.s4 1934713408
        %v3596 = vunpack.c.0.s8 %v3595
        %v3597 = vlaneseq
        %v3598 = vshrl.u32 %v3597, 7
        %v3599 = vsub.s32 %v3596, %v3598
        %v3600 = vrot.slane %v3592, %v3599
        %v3602 = vunpack.c.l.s4 1934713408
        %v3603 = vunpack.c.0.s8 %v3602
        %v3604 = vlaneseq
        %v3605 = vshrl.u32 %v3604, 7
        %v3606 = vsub.s32 %v3603, %v3605
        %v3607 = vrot.slane %v3593, %v3606
        %v3608 = vcombine.low %v3552, %v3568
        %v3609 = vcombine.high %v3552, %v3568
        %v3611 = vunpack.c.l.s4 1934713408
        %v3612 = vunpack.c.0.s8 %v3611
        %v3613 = vlaneseq
        %v3614 = vshrl.u32 %v3613, 7
        %v3615 = vsub.s32 %v3612, %v3614
        %v3616 = vrot.slane %v3608, %v3615
        %v3618 = vunpack.c.l.s4 1934713408
        %v3619 = vunpack.c.0.s8 %v3618
        %v3620 = vlaneseq
        %v3621 = vshrl.u32 %v3620, 7
        %v3622 = vsub.s32 %v3619, %v3621
        %v3623 = vrot.slane %v3609, %v3622
        %v3624 = vcombine.low %v3559, %v3575
        %v3625 = vcombine.high %v3559, %v3575
        %v3627 = vunpack.c.l.s4 1934713408
        %v3628 = vunpack.c.0.s8 %v3627
        %v3629 = vlaneseq
        %v3630 = vshrl.u32 %v3629, 7
        %v3631 = vsub.s32 %v3628, %v3630
        %v3632 = vrot.slane %v3624, %v3631
        %v3634 = vunpack.c.l.s4 1934713408
        %v3635 = vunpack.c.0.s8 %v3634
        %v3636 = vlaneseq
        %v3637 = vshrl.u32 %v3636, 7
        %v3638 = vsub.s32 %v3635, %v3637
        %v3639 = vrot.slane %v3625, %v3638
        %v3640 = vcombine.low %v3584, %v3616
        %v3641 = vcombine.high %v3584, %v3616
        %v3642 = vcombine.low %v3591, %v3623
        %v3643 = vcombine.high %v3591, %v3623
        %v3644 = vcombine.low %v3600, %v3632
        %v3645 = vcombine.high %v3600, %v3632
        %v3646 = vcombine.low %v3607, %v3639
        %v3647 = vcombine.high %v3607, %v3639
        %v3648 = vcombine.low %v3640, %v3642
        %v3649 = vcombine.high %v3640, %v3642
        %v3651 = vunpack.c.l.s4 1983009808
        %v3652 = vunpack.c.0.s8 %v3651
        %v3653 = vlaneseq
        %v3654 = vshrl.u32 %v3653, 7
        %v3655 = vsub.s32 %v3652, %v3654
        %v3656 = vrot.slane %v3648, %v3655
        %v3658 = vunpack.c.l.s4 1983009808
        %v3659 = vunpack.c.0.s8 %v3658
        %v3660 = vlaneseq
        %v3661 = vshrl.u32 %v3660, 7
        %v3662 = vsub.s32 %v3659, %v3661
        %v3663 = vrot.slane %v3649, %v3662
        %v3664 = vcombine.low %v3641, %v3643
        %v3665 = vcombine.high %v3641, %v3643
        %v3667 = vunpack.c.l.s4 1983009808
        %v3668 = vunpack.c.0.s8 %v3667
        %v3669 = vlaneseq
        %v3670 = vshrl.u32 %v3669, 7
        %v3671 = vsub.s32 %v3668, %v3670
        %v3672 = vrot.slane %v3664, %v3671
        %v3674 = vunpack.c.l.s4 1983009808
        %v3675 = vunpack.c.0.s8 %v3674
        %v3676 = vlaneseq
        %v3677 = vshrl.u32 %v3676, 7
        %v3678 = vsub.s32 %v3675, %v3677
        %v3679 = vrot.slane %v3665, %v3678
        %v3680 = vcombine.low %v3644, %v3646
        %v3681 = vcombine.high %v3644, %v3646
        %v3683 = vunpack.c.l.s4 1983009808
        %v3684 = vunpack.c.0.s8 %v3683
        %v3685 = vlaneseq
        %v3686 = vshrl.u32 %v3685, 7
        %v3687 = vsub.s32 %v3684, %v3686
        %v3688 = vrot.slane %v3680, %v3687
        %v3690 = vunpack.c.l.s4 1983009808
        %v3691 = vunpack.c.0.s8 %v3690
        %v3692 = vlaneseq
        %v3693 = vshrl.u32 %v3692, 7
        %v3694 = vsub.s32 %v3691, %v3693
        %v3695 = vrot.slane %v3681, %v3694
        %v3696 = vcombine.low %v3645, %v3647
        %v3697 = vcombine.high %v3645, %v3647
        %v3699 = vunpack.c.l.s4 1983009808
        %v3700 = vunpack.c.0.s8 %v3699
        %v3701 = vlaneseq
        %v3702 = vshrl.u32 %v3701, 7
        %v3703 = vsub.s32 %v3700, %v3702
        %v3704 = vrot.slane %v3696, %v3703
        %v3706 = vunpack.c.l.s4 1983009808
        %v3707 = vunpack.c.0.s8 %v3706
        %v3708 = vlaneseq
        %v3709 = vshrl.u32 %v3708, 7
        %v3710 = vsub.s32 %v3707, %v3709
        %v3711 = vrot.slane %v3697, %v3710
        %v3712 = vcombine.low %v3656, %v3672
        %v3713 = vcombine.high %v3656, %v3672
        %v3715 = vunpack.c.l.s4 1934713408
        %v3716 = vunpack.c.0.s8 %v3715
        %v3717 = vlaneseq
        %v3718 = vshrl.u32 %v3717, 7
        %v3719 = vsub.s32 %v3716, %v3718
        %v3720 = vrot.slane %v3712, %v3719
        %v3722 = vunpack.c.l.s4 1934713408
        %v3723 = vunpack.c.0.s8 %v3722
        %v3724 = vlaneseq
        %v3725 = vshrl.u32 %v3724, 7
        %v3726 = vsub.s32 %v3723, %v3725
        %v3727 = vrot.slane %v3713, %v3726
        %v3728 = vcombine.low %v3663, %v3679
        %v3729 = vcombine.high %v3663, %v3679
        %v3731 = vunpack.c.l.s4 1934713408
        %v3732 = vunpack.c.0.s8 %v3731
        %v3733 = vlaneseq
        %v3734 = vshrl.u32 %v3733, 7
        %v3735 = vsub.s32 %v3732, %v3734
        %v3736 = vrot.slane %v3728, %v3735
        %v3738 = vunpack.c.l.s4 1934713408
        %v3739 = vunpack.c.0.s8 %v3738
        %v3740 = vlaneseq
        %v3741 = vshrl.u32 %v3740, 7
        %v3742 = vsub.s32 %v3739, %v3741
        %v3743 = vrot.slane %v3729, %v3742
        %v3744 = vcombine.low %v3688, %v3704
        %v3745 = vcombine.high %v3688, %v3704
        %v3747 = vunpack.c.l.s4 1934713408
        %v3748 = vunpack.c.0.s8 %v3747
        %v3749 = vlaneseq
        %v3750 = vshrl.u32 %v3749, 7
        %v3751 = vsub.s32 %v3748, %v3750
        %v3752 = vrot.slane %v3744, %v3751
        %v3754 = vunpack.c.l.s4 1934713408
        %v3755 = vunpack.c.0.s8 %v3754
        %v3756 = vlaneseq
        %v3757 = vshrl.u32 %v3756, 7
        %v3758 = vsub.s32 %v3755, %v3757
        %v3759 = vrot.slane %v3745, %v3758
        %v3760 = vcombine.low %v3695, %v3711
        %v3761 = vcombine.high %v3695, %v3711
        %v3763 = vunpack.c.l.s4 1934713408
        %v3764 = vunpack.c.0.s8 %v3763
        %v3765 = vlaneseq
        %v3766 = vshrl.u32 %v3765, 7
        %v3767 = vsub.s32 %v3764, %v3766
        %v3768 = vrot.slane %v3760, %v3767
        %v3770 = vunpack.c.l.s4 1934713408
        %v3771 = vunpack.c.0.s8 %v3770
        %v3772 = vlaneseq
        %v3773 = vshrl.u32 %v3772, 7
        %v3774 = vsub.s32 %v3771, %v3773
        %v3775 = vrot.slane %v3761, %v3774
        %v3776 = vcombine.low %v3720, %v3752
        %v3777 = vcombine.high %v3720, %v3752
        %v3778 = vcombine.low %v3727, %v3759
        %v3779 = vcombine.high %v3727, %v3759
        %v3780 = vcombine.low %v3736, %v3768
        %v3781 = vcombine.high %v3736, %v3768
        %v3782 = vcombine.low %v3743, %v3775
        %v3783 = vcombine.high %v3743, %v3775
        %3785 = vrot.lane.b32.xlu0 %v3777, 4
        %v3786 = vpop.permute.xlu0 %3785
        %3789 = vrot.lane.b32.xlu0 %v3778, 8
        %v3790 = vpop.permute.xlu0 %3789
        %3793 = vrot.lane.b32.xlu0 %v3779, 12
        %v3794 = vpop.permute.xlu0 %3793
        %3797 = vrot.lane.b32.xlu0 %v3780, 16
        %v3798 = vpop.permute.xlu0 %3797
        %3801 = vrot.lane.b32.xlu0 %v3781, 20
        %v3802 = vpop.permute.xlu0 %3801
        %3805 = vrot.lane.b32.xlu0 %v3782, 24
        %v3806 = vpop.permute.xlu0 %3805
        %3809 = vrot.lane.b32.xlu0 %v3783, 28
        %v3810 = vpop.permute.xlu0 %3809
        %v3812 = vsel %vm1246, %v3776, %v3786
        %v3813 = vsel %vm2198, %v3812, %v3790
        %vm3814 = vcmask 97280
        %v3815 = vsel %vm3814, %v3813, %v3794
        %vm3816 = vcmask 130048
        %v3817 = vsel %vm3816, %v3815, %v3798
        %vm3818 = vcmask 162816
        %v3819 = vsel %vm3818, %v3817, %v3802
        %vm3820 = vcmask 195584
        %v3821 = vsel %vm3820, %v3819, %v3806
        %vm3822 = vcmask 228352
        %v3823 = vsel %vm3822, %v3821, %v3810
        %v3824 = vld [vmem:[#allocation8] sm:$0xff]
        %v3825 = vld [vmem:[#allocation8 + $0x8] sm:$0xff]
        %v3826 = vld [vmem:[#allocation8 + $0x10] sm:$0xff]
        %v3827 = vld [vmem:[#allocation8 + $0x18] sm:$0xff]
        %v3828 = vld [vmem:[%s5] sm:$0x1]
        %v3830 = vlaneseq
        %v3831 = vshrl.u32 %v3830, 7
        %v3832 = vsub.s32 0, %v3831
        %v3833 = vrot.slane %v3828, %v3832
        %v3836 = vsel %vm345, %v3823, 0
        %3838 = vmatprep.subr.mxu0 0.0
        %3839 = vmatpush1.msra.mxu0 %v3824
        %3840 = vmatprep.subr.mxu0 0.0
        %3841 = vmatpush1.msra.mxu0 %v3825
        %3842 = vmatprep.subr.mxu0 0.0
        %3843 = vmatpush1.msra.mxu0 %v3826
        %3844 = vmatprep.subr.mxu0 0.0
        %3845 = vmatpush1.msra.mxu0 %v3827
        %3846 = vmatprep.subr.mxu0 0.0
        %3847 = vmatpush1.msra.mxu0 0.0
        %3848 = vmatprep.subr.mxu0 0.0
        %3849 = vmatpush1.msra.mxu0 0.0
        %3850 = vmatprep.subr.mxu0 0.0
        %3851 = vmatpush1.msra.mxu0 0.0
        %3852 = vmatprep.subr.mxu0 0.0
        %3853 = vmatpush1.msra.mxu0 0.0
        %3854 = vmatprep.subr.mxu0 0.0
        %3855 = vmatpush1.msra.mxu0 0.0
        %3856 = vmatprep.subr.mxu0 0.0
        %3857 = vmatpush1.msra.mxu0 0.0
        %3858 = vmatprep.subr.mxu0 0.0
        %3859 = vmatpush1.msra.mxu0 0.0
        %3860 = vmatprep.subr.mxu0 0.0
        %3861 = vmatpush1.msra.mxu0 0.0
        %3862 = vmatprep.subr.mxu0 0.0
        %3863 = vmatpush1.msra.mxu0 0.0
        %3864 = vmatprep.subr.mxu0 0.0
        %3865 = vmatpush1.msra.mxu0 0.0
        %3866 = vmatprep.subr.mxu0 0.0
        %3867 = vmatpush1.msra.mxu0 0.0
        %3868 = vmatprep.subr.mxu0 0.0
        %3869 = vmatpush1.msra.mxu0 0.0
        %3870 = vmatprep.subr.mxu0 0.0
        %3871 = vmatpush1.msra.mxu0 0.0
        %3872 = vmatprep.subr.mxu0 0.0
        %3873 = vmatpush1.msra.mxu0 0.0
        %3874 = vmatprep.subr.mxu0 0.0
        %3875 = vmatpush1.msra.mxu0 0.0
        %3876 = vmatprep.subr.mxu0 0.0
        %3877 = vmatpush1.msra.mxu0 0.0
        %3878 = vmatprep.subr.mxu0 0.0
        %3879 = vmatpush1.msra.mxu0 0.0
        %3880 = vmatprep.subr.mxu0 0.0
        %3881 = vmatpush1.msra.mxu0 0.0
        %3882 = vmatprep.subr.mxu0 0.0
        %3883 = vmatpush1.msra.mxu0 0.0
        %3884 = vmatprep.subr.mxu0 0.0
        %3885 = vmatpush1.msra.mxu0 0.0
        %3886 = vmatprep.subr.mxu0 0.0
        %3887 = vmatpush1.msra.mxu0 0.0
        %3888 = vmatprep.subr.mxu0 0.0
        %3889 = vmatpush1.msra.mxu0 0.0
        %3890 = vmatprep.subr.mxu0 0.0
        %3891 = vmatpush1.msra.mxu0 0.0
        %3892 = vmatprep.subr.mxu0 0.0
        %3893 = vmatpush1.msra.mxu0 0.0
        %3894 = vmatprep.subr.mxu0 0.0
        %3895 = vmatpush1.msra.mxu0 0.0
        %3896 = vmatprep.subr.mxu0 0.0
        %3897 = vmatpush1.msra.mxu0 0.0
        %3898 = vmatprep.subr.mxu0 0.0
        %3899 = vmatpush1.msra.mxu0 0.0
        %3900 = vmatprep.subr.mxu0 0.0
        %3901 = vmatpush1.msra.mxu0 0.0
        %3902 = vmatprep.mubr.f32.mxu0 0.0
        %3903 = vmatmul.mubr.f32.gmra.mrb[0].mxu0 %v3836
        %v3904 = vpop.f32.mrb[0].mxu0
        %v3905 = vadd.f32 %v3833, %v3904
        %v3906 = vpop.f32.mrb[0].mxu0
        %3907 = vdwg.mxu0
        %3908 = vst.msk [vmem:[%s332] sm:$0xff] %vm345, %v3905
        %s3909 = sand.u32 %s171, 1
        %s3910 = scalar_lea.sflag [#allocation4], %s3909
        %s3911 = sand.u32 %s171, 1
        %s3912 = smul.addr %s3911, 8
        %s3913 = scalar_lea.vmem [#allocation10], %s3912
        // Predicated region
        $region61: #{tpu_custom_call.1} parent=43 // pred_check
          %p3914 = pneg %p181
        $region62: #{tpu_custom_call.1} parent=43 // pred_check_branch
          %3916 = sbr.rel (%p3914) target = $region64
        $region63: #{tpu_custom_call.1} parent=43 // pred_region
          %s3918 = ssub.s32 128, 128
          %3919 = vsyncadd %s3910, %s3918
          %s3920 = smul.addr %s27, 128
          %s3921 = scalar_lea.hbm %s6, %s3920
          %s3923 = sshll.u32 %s3913, 4
          %s3924 = int_to_ptr.vmem [resolvable:$true] %s3923
          %3926 = dma.vmem_to_hbm [thread:$0]  %s3924, 128, %s3921, %s3910
        $region64: #{tpu_custom_call.1} parent=43 // pred_fallthru
          _
      $region44: #{tpu_custom_call.1} parent=5 // pred_fallthru
        _
      %p3927 = scmp.le.s32.totalorder 2, %s22
      // Predicated region
      $region65: #{tpu_custom_call.1} parent=5 // pred_check
        %p3928 = pneg %p3927
      $region66: #{tpu_custom_call.1} parent=5 // pred_check_branch
        %3930 = sbr.rel (%p3928) target = $region68
      $region67: #{tpu_custom_call.1} parent=5 // pred_region
        %s3931 = ssub.s32 %s22, 2
        // Predicated region
        $region69: #{tpu_custom_call.1} parent=67 // pred_check
          %p3932 = pneg %p187
        $region70: #{tpu_custom_call.1} parent=67 // pred_check_branch
          %3934 = sbr.rel (%p3932) target = $region72
        $region71: #{tpu_custom_call.1} parent=67 // pred_region
          %s3935 = sand.u32 %s172, 1
          %s3936 = scalar_lea.sflag [#allocation4], %s3935
          %s3937 = sand.u32 %s172, 1
          %s3938 = smul.addr %s3937, 8
          %s3939 = scalar_lea.vmem [#allocation10], %s3938
          %3940 = dma.done %s3936, 128
        $region72: #{tpu_custom_call.1} parent=67 // pred_fallthru
          _
      $region68: #{tpu_custom_call.1} parent=5 // pred_fallthru
        _
    $region6: #{tpu_custom_call.1} parent=1 // loop_footer
      %s26 = sadd.s32 1, %s22
    $region7: #{tpu_custom_call.1} parent=1 // loop_footer_branch
      %21 = sbr.rel target = $region3
    $region8: #{tpu_custom_call.1} parent=1 // loop_exit
      _
    %3941 = vsyncpa [#allocation3], 1
    %s3942 = scalar_lea.sflag [#allocation3], 1
    %3943 = vsyncpa %s3942, 1
    %3944 = vsyncpa [#allocation6], 1
    %s3945 = scalar_lea.sflag [#allocation6], 1
    %3946 = vsyncpa %s3945, 1
    %3947 = vsyncpa [#allocation9], 1
    %3948 = vsyncpa [#allocation4], 1
    %s3949 = scalar_lea.sflag [#allocation4], 1
    %3950 = vsyncpa %s3949, 1

// kernel: tpu_custom_call.1
$region0: #{tpu_custom_call.1}
  #allocation0 [shape = 'u32[]', space=smem, size = 0x4, offset = 0x4, fixed_abs, tag = 'smem constant byte address 0x4 - core index']
  #allocation1 [shape = 'u32[144,128]{1,0:T(1,128)}', space=vmem, size = 0x12000, scoped, tag = 'internal scratch']
  %s0 = inlined_call_operand.hbm [shape: f32[2,8,32], index: 0, kind: input, shape index: {}]
  %s1 = inlined_call_operand.hbm [shape: f32[2,8,8], index: 1, kind: input, shape index: {}]
  %s2 = inlined_call_operand.hbm [shape: f32[32,96], index: 2, kind: input, shape index: {}]
  %s3 = inlined_call_operand.vmem [shape: f32[1,96], index: 3, kind: input, shape index: {}]
  %s4 = inlined_call_operand.hbm [shape: f32[32,32], index: 4, kind: input, shape index: {}]
  %s5 = inlined_call_operand.vmem [shape: f32[1,32], index: 5, kind: input, shape index: {}]
  %s6 = inlined_call_operand.hbm [shape: f32[2,8,32], index: 6, kind: output, shape index: {}]
  %s7 = sld [smem:[#allocation0]]
  $region73: #{tpu_custom_call.1} parent=0
    _
  %s9 = ssub.s32 1, %s7
  %s10 = scalar_select 0, %s9, %s7
  $region1: #{tpu_custom_call.1} parent=0
    #allocation2 [shape = 'u8[8192]{0}', space=vmem, size = 0x2000, scoped, tag = 'input window, operand 0']
    #allocation3 [shape = 's32[2]{0}', space=sflag, size = 0x8, scoped, tag = 'scoped memory for tpu_custom_call.1']
    #allocation4 [shape = 's32[2]{0}', space=sflag, size = 0x8, scoped, tag = 'scoped memory for tpu_custom_call.1']
    #allocation5 [shape = 'u8[8192]{0}', space=vmem, size = 0x2000, scoped, tag = 'input window, operand 1']
    #allocation6 [shape = 's32[2]{0}', space=sflag, size = 0x8, scoped, tag = 'scoped memory for tpu_custom_call.1']
    #allocation7 [shape = 'u8[16384]{0}', space=vmem, size = 0x4000, scoped, tag = 'input window, operand 2, single buffered']
    #allocation8 [shape = 'u8[16384]{0}', space=vmem, size = 0x4000, scoped, tag = 'input window, operand 4, single buffered']
    #allocation9 [shape = 's32[1]{0}', space=sflag, size = 0x4, scoped, tag = 'scoped memory for tpu_custom_call.1']
    #allocation10 [shape = 'u8[8192]{0}', space=vmem, size = 0x2000, scoped, tag = 'output window, operand 0']
    %11 = vsyncpa [#allocation3], 0
    %s12 = scalar_lea.sflag [#allocation3], 1
    %13 = vsyncpa %s12, 0
    %14 = vsyncpa [#allocation6], 0
    %s15 = scalar_lea.sflag [#allocation6], 1
    %16 = vsyncpa %s15, 0
    %17 = vsyncpa [#allocation9], 0
    %18 = vsyncpa [#allocation4], 0
    %s19 = scalar_lea.sflag [#allocation4], 1
    %20 = vsyncpa %s19, 0
    loop: start=0, step=1, limit=4
    $region2: #{tpu_custom_call.1} parent=1 // loop_pre_header
      _
    $region3: #{tpu_custom_call.1} parent=1 // loop_header
      %s22 = sphi 0, %s26
      %p23 = scmp.ge.s32.totalorder %s22, 4
      %s32 = sphi 0, %s34
      %s35 = sphi 0, %s32
      %s36 = sphi 0, %s35
      %s52 = sphi 0, %s36
      %s58 = sphi 0, %s60
      %s61 = sphi 0, %s58
      %s62 = sphi 0, %s61
      %s78 = sphi 0, %s62
      %s82 = sphi 0, %s82
      %s84 = sphi 0, %s82
      %s85 = sphi 0, %s84
      %s99 = sphi 0, %s85
      %s103 = sphi 0, %s103
      %s105 = sphi 0, %s103
      %s106 = sphi 0, %s105
      %s120 = sphi 0, %s106
      %s124 = sphi 0, %s124
      %s126 = sphi 0, %s124
      %s127 = sphi 0, %s126
      %s141 = sphi 0, %s127
      %s145 = sphi 0, %s145
      %s147 = sphi 0, %s145
      %s148 = sphi 0, %s147
      %s162 = sphi 0, %s148
      %s168 = sphi 0, %s170
      %s171 = sphi 0, %s168
      %s172 = sphi 0, %s171
      %s188 = sphi 0, %s172
    $region4: #{tpu_custom_call.1} parent=1 // loop_header_branch
      %25 = sbr.rel (%p23) target = $region8
    $region5: #{tpu_custom_call.1} parent=1 // loop_body
      %s27 = ssub.s32 %s22, 1
      %s28 = ssub.s32 %s22, 2
      %s29 = sadd.s32 %s22, 1
      %s30 = ssub.s32 %s22, %s29
      %p31 = scmp.eq.s32.totalorder %s30, 0
      %s33 = sadd.s32 %s32, 1
      %s34 = scalar_select %p31, %s32, %s33
      %p37 = pneg %p31
      %p38 = scmp.eq.s32.totalorder %s22, 1
      %p39 = por %p37, %p38
      %p40 = scmp.ne.s32.totalorder %s32, %s35
      %p41 = scmp.eq.s32.totalorder %s22, 0
      %p42 = por %p40, %p41
      %p43 = scmp.ne.s32.totalorder %s32, %s35
      %p44 = scmp.eq.s32.totalorder %s27, 1
      %p45 = por %p43, %p44
      %p46 = scmp.ne.s32.totalorder %s35, %s36
      %p47 = scmp.eq.s32.totalorder %s27, 0
      %p48 = por %p46, %p47
      %p49 = scmp.ne.s32.totalorder %s35, %s36
      %p50 = scmp.eq.s32.totalorder %s28, 1
      %p51 = por %p49, %p50
      %p53 = scmp.ne.s32.totalorder %s36, %s52
      %p54 = scmp.eq.s32.totalorder %s28, 0
      %p55 = por %p53, %p54
      %s56 = ssub.s32 %s22, %s29
      %p57 = scmp.eq.s32.totalorder %s56, 0
      %s59 = sadd.s32 %s58, 1
      %s60 = scalar_select %p57, %s58, %s59
      %p63 = pneg %p57
      %p64 = scmp.eq.s32.totalorder %s22, 1
      %p65 = por %p63, %p64
      %p66 = scmp.ne.s32.totalorder %s58, %s61
      %p67 = scmp.eq.s32.totalorder %s22, 0
      %p68 = por %p66, %p67
      %p69 = scmp.ne.s32.totalorder %s58, %s61
      %p70 = scmp.eq.s32.totalorder %s27, 1
      %p71 = por %p69, %p70
      %p72 = scmp.ne.s32.totalorder %s61, %s62
      %p73 = scmp.eq.s32.totalorder %s27, 0
      %p74 = por %p72, %p73
      %p75 = scmp.ne.s32.totalorder %s61, %s62
      %p76 = scmp.eq.s32.totalorder %s28, 1
      %p77 = por %p75, %p76
      %p79 = scmp.ne.s32.totalorder %s62, %s78
      %p80 = scmp.eq.s32.totalorder %s28, 0
      %p81 = por %p79, %p80
      %s83 = sadd.s32 %s82, 1
      %p86 = scmp.eq.s32.totalorder %s22, 1
      %p87 = scmp.ne.s32.totalorder %s82, %s84
      %p88 = scmp.eq.s32.totalorder %s22, 0
      %p89 = por %p87, %p88
      %p90 = scmp.ne.s32.totalorder %s82, %s84
      %p91 = scmp.eq.s32.totalorder %s27, 1
      %p92 = por %p90, %p91
      %p93 = scmp.ne.s32.totalorder %s84, %s85
      %p94 = scmp.eq.s32.totalorder %s27, 0
      %p95 = por %p93, %p94
      %p96 = scmp.ne.s32.totalorder %s84, %s85
      %p97 = scmp.eq.s32.totalorder %s28, 1
      %p98 = por %p96, %p97
      %p100 = scmp.ne.s32.totalorder %s85, %s99
      %p101 = scmp.eq.s32.totalorder %s28, 0
      %p102 = por %p100, %p101
      %s104 = sadd.s32 %s103, 1
      %p107 = scmp.eq.s32.totalorder %s22, 1
      %p108 = scmp.ne.s32.totalorder %s103, %s105
      %p109 = scmp.eq.s32.totalorder %s22, 0
      %p110 = por %p108, %p109
      %p111 = scmp.ne.s32.totalorder %s103, %s105
      %p112 = scmp.eq.s32.totalorder %s27, 1
      %p113 = por %p111, %p112
      %p114 = scmp.ne.s32.totalorder %s105, %s106
      %p115 = scmp.eq.s32.totalorder %s27, 0
      %p116 = por %p114, %p115
      %p117 = scmp.ne.s32.totalorder %s105, %s106
      %p118 = scmp.eq.s32.totalorder %s28, 1
      %p119 = por %p117, %p118
      %p121 = scmp.ne.s32.totalorder %s106, %s120
      %p122 = scmp.eq.s32.totalorder %s28, 0
      %p123 = por %p121, %p122
      %s125 = sadd.s32 %s124, 1
      %p128 = scmp.eq.s32.totalorder %s22, 1
      %p129 = scmp.ne.s32.totalorder %s124, %s126
      %p130 = scmp.eq.s32.totalorder %s22, 0
      %p131 = por %p129, %p130
      %p132 = scmp.ne.s32.totalorder %s124, %s126
      %p133 = scmp.eq.s32.totalorder %s27, 1
      %p134 = por %p132, %p133
      %p135 = scmp.ne.s32.totalorder %s126, %s127
      %p136 = scmp.eq.s32.totalorder %s27, 0
      %p137 = por %p135, %p136
      %p138 = scmp.ne.s32.totalorder %s126, %s127
      %p139 = scmp.eq.s32.totalorder %s28, 1
      %p140 = por %p138, %p139
      %p142 = scmp.ne.s32.totalorder %s127, %s141
      %p143 = scmp.eq.s32.totalorder %s28, 0
      %p144 = por %p142, %p143
      %s146 = sadd.s32 %s145, 1
      %p149 = scmp.eq.s32.totalorder %s22, 1
      %p150 = scmp.ne.s32.totalorder %s145, %s147
      %p151 = scmp.eq.s32.totalorder %s22, 0
      %p152 = por %p150, %p151
      %p153 = scmp.ne.s32.totalorder %s145, %s147
      %p154 = scmp.eq.s32.totalorder %s27, 1
      %p155 = por %p153, %p154
      %p156 = scmp.ne.s32.totalorder %s147, %s148
      %p157 = scmp.eq.s32.totalorder %s27, 0
      %p158 = por %p156, %p157
      %p159 = scmp.ne.s32.totalorder %s147, %s148
      %p160 = scmp.eq.s32.totalorder %s28, 1
      %p161 = por %p159, %p160
      %p163 = scmp.ne.s32.totalorder %s148, %s162
      %p164 = scmp.eq.s32.totalorder %s28, 0
      %p165 = por %p163, %p164
      %s166 = ssub.s32 %s22, %s29
      %p167 = scmp.eq.s32.totalorder %s166, 0
      %s169 = sadd.s32 %s168, 1
      %s170 = scalar_select %p167, %s168, %s169
      %p173 = pneg %p167
      %p174 = scmp.eq.s32.totalorder %s22, 1
      %p175 = por %p173, %p174
      %p176 = scmp.ne.s32.totalorder %s168, %s171
      %p177 = scmp.eq.s32.totalorder %s22, 0
      %p178 = por %p176, %p177
      %p179 = scmp.ne.s32.totalorder %s168, %s171
      %p180 = scmp.eq.s32.totalorder %s27, 1
      %p181 = por %p179, %p180
      %p182 = scmp.ne.s32.totalorder %s171, %s172
      %p183 = scmp.eq.s32.totalorder %s27, 0
      %p184 = por %p182, %p183
      %p185 = scmp.ne.s32.totalorder %s171, %s172
      %p186 = scmp.eq.s32.totalorder %s28, 1
      %p187 = por %p185, %p186
      %p189 = scmp.ne.s32.totalorder %s172, %s188
      %p190 = scmp.eq.s32.totalorder %s28, 0
      %p191 = por %p189, %p190
      %p192 = scmp.le.s32.totalorder 1, %s22
      %p193 = scmp.lt.s32.totalorder %s22, 3
      %p194 = pnand %p192, %p193
      %p195 = pneg %p194
      // Predicated region
      $region9: #{tpu_custom_call.1} parent=5 // pred_check
        _
      $region10: #{tpu_custom_call.1} parent=5 // pred_check_branch
        %197 = sbr.rel (%p194) target = $region12
      $region11: #{tpu_custom_call.1} parent=5 // pred_region
        %s198 = ssub.s32 %s22, 1
        // Predicated region
        $region13: #{tpu_custom_call.1} parent=11 // pred_check
          %p199 = pneg %p95
        $region14: #{tpu_custom_call.1} parent=11 // pred_check_branch
          %201 = sbr.rel (%p199) target = $region16
        $region15: #{tpu_custom_call.1} parent=11 // pred_region
          %s203 = ssub.s32 512, 512
          %204 = vsyncadd [#allocation6], %s203
          %s205 = sshll.u32 [#allocation7], 4
          %s206 = int_to_ptr.vmem [resolvable:$true] %s205
          %211 = dma.hbm_to_vmem [thread:$0]  %s2, 512, %s206, [#allocation6], 128, 128, 8
        $region16: #{tpu_custom_call.1} parent=11 // pred_fallthru
          _
        // Predicated region
        $region17: #{tpu_custom_call.1} parent=11 // pred_check
          %p212 = pneg %p116
        $region18: #{tpu_custom_call.1} parent=11 // pred_check_branch
          %214 = sbr.rel (%p212) target = $region20
        $region19: #{tpu_custom_call.1} parent=11 // pred_region
          _
        $region20: #{tpu_custom_call.1} parent=11 // pred_fallthru
          _
        // Predicated region
        $region21: #{tpu_custom_call.1} parent=11 // pred_check
          %p215 = pneg %p137
        $region22: #{tpu_custom_call.1} parent=11 // pred_check_branch
          %217 = sbr.rel (%p215) target = $region24
        $region23: #{tpu_custom_call.1} parent=11 // pred_region
          %s219 = ssub.s32 512, 512
          %220 = vsyncadd [#allocation9], %s219
          %s221 = sshll.u32 [#allocation8], 4
          %s222 = int_to_ptr.vmem [resolvable:$true] %s221
          %227 = dma.hbm_to_vmem [thread:$0]  %s4, 512, %s222, [#allocation9], 128, 128, 8
        $region24: #{tpu_custom_call.1} parent=11 // pred_fallthru
          _
        // Predicated region
        $region25: #{tpu_custom_call.1} parent=11 // pred_check
          %p228 = pneg %p158
        $region26: #{tpu_custom_call.1} parent=11 // pred_check_branch
          %230 = sbr.rel (%p228) target = $region28
        $region27: #{tpu_custom_call.1} parent=11 // pred_region
          _
        $region28: #{tpu_custom_call.1} parent=11 // pred_fallthru
          _
      $region12: #{tpu_custom_call.1} parent=5 // pred_fallthru
        _
      %p231 = scmp.lt.s32.totalorder %s22, 2
      // Predicated region
      $region29: #{tpu_custom_call.1} parent=5 // pred_check
        %p232 = pneg %p231
      $region30: #{tpu_custom_call.1} parent=5 // pred_check_branch
        %234 = sbr.rel (%p232) target = $region32
      $region31: #{tpu_custom_call.1} parent=5 // pred_region
        // Predicated region
        $region33: #{tpu_custom_call.1} parent=31 // pred_check
          %p235 = pneg %p42
        $region34: #{tpu_custom_call.1} parent=31 // pred_check_branch
          %237 = sbr.rel (%p235) target = $region36
        $region35: #{tpu_custom_call.1} parent=31 // pred_region
          %s238 = sand.u32 %s32, 1
          %s239 = scalar_lea.sflag [#allocation3], %s238
          %s240 = sand.u32 %s32, 1
          %s241 = smul.addr %s240, 8
          %s242 = scalar_lea.vmem [#allocation2], %s241
          %s244 = ssub.s32 128, 128
          %245 = vsyncadd %s239, %s244
          %s246 = smul.addr %s22, 128
          %s247 = scalar_lea.hbm %s0, %s246
          %s249 = sshll.u32 %s242, 4
          %s250 = int_to_ptr.vmem [resolvable:$true] %s249
          %252 = dma.hbm_to_vmem [thread:$0]  %s247, 128, %s250, %s239
        $region36: #{tpu_custom_call.1} parent=31 // pred_fallthru
          _
        // Predicated region
        $region37: #{tpu_custom_call.1} parent=31 // pred_check
          %p253 = pneg %p68
        $region38: #{tpu_custom_call.1} parent=31 // pred_check_branch
          %255 = sbr.rel (%p253) target = $region40
        $region39: #{tpu_custom_call.1} parent=31 // pred_region
          %s256 = sand.u32 %s22, 1
          %s257 = scalar_lea.sflag [#allocation6], %s256
          %s258 = sand.u32 %s58, 1
          %s259 = smul.addr %s258, 8
          %s260 = scalar_lea.vmem [#allocation5], %s259
          %s262 = ssub.s32 128, 128
          %263 = vsyncadd %s257, %s262
          %s264 = smul.addr %s22, 128
          %s265 = scalar_lea.hbm %s1, %s264
          %s267 = sshll.u32 %s260, 4
          %s268 = int_to_ptr.vmem [resolvable:$true] %s267
          %270 = dma.hbm_to_vmem [thread:$0]  %s265, 128, %s268, %s257
        $region40: #{tpu_custom_call.1} parent=31 // pred_fallthru
          _
      $region32: #{tpu_custom_call.1} parent=5 // pred_fallthru
        _
      %p271 = scmp.le.s32.totalorder 1, %s22
      %p272 = scmp.lt.s32.totalorder %s22, 3
      %p273 = pnand %p271, %p272
      %p274 = pneg %p273
      // Predicated region
      $region41: #{tpu_custom_call.1} parent=5 // pred_check
        _
      $region42: #{tpu_custom_call.1} parent=5 // pred_check_branch
        %276 = sbr.rel (%p273) target = $region44
      $region43: #{tpu_custom_call.1} parent=5 // pred_region
        %s277 = ssub.s32 %s22, 1
        %s278 = sand.u32 %s35, 1
        %s279 = scalar_lea.sflag [#allocation3], %s278
        %s280 = sand.u32 %s35, 1
        %s281 = smul.addr %s280, 8
        %s282 = scalar_lea.vmem [#allocation2], %s281
        // Predicated region
        $region45: #{tpu_custom_call.1} parent=43 // pred_check
          %p283 = pneg %p48
        $region46: #{tpu_custom_call.1} parent=43 // pred_check_branch
          %285 = sbr.rel (%p283) target = $region48
        $region47: #{tpu_custom_call.1} parent=43 // pred_region
          %286 = dma.done %s279, 128
        $region48: #{tpu_custom_call.1} parent=43 // pred_fallthru
          _
        %s287 = sand.u32 %s27, 1
        %s288 = scalar_lea.sflag [#allocation6], %s287
        %s289 = sand.u32 %s61, 1
        %s290 = smul.addr %s289, 8
        %s291 = scalar_lea.vmem [#allocation5], %s290
        // Predicated region
        $region49: #{tpu_custom_call.1} parent=43 // pred_check
          %p292 = pneg %p74
        $region50: #{tpu_custom_call.1} parent=43 // pred_check_branch
          %294 = sbr.rel (%p292) target = $region52
        $region51: #{tpu_custom_call.1} parent=43 // pred_region
          %295 = dma.done %s288, 128
        $region52: #{tpu_custom_call.1} parent=43 // pred_fallthru
          _
        // Predicated region
        $region53: #{tpu_custom_call.1} parent=43 // pred_check
          %p296 = pneg %p95
        $region54: #{tpu_custom_call.1} parent=43 // pred_check_branch
          %298 = sbr.rel (%p296) target = $region56
        $region55: #{tpu_custom_call.1} parent=43 // pred_region
          %299 = dma.done [#allocation6], 512
        $region56: #{tpu_custom_call.1} parent=43 // pred_fallthru
          _
        // Predicated region
        $region57: #{tpu_custom_call.1} parent=43 // pred_check
          %p300 = pneg %p137
        $region58: #{tpu_custom_call.1} parent=43 // pred_check_branch
          %302 = sbr.rel (%p300) target = $region60
        $region59: #{tpu_custom_call.1} parent=43 // pred_region
          %303 = dma.done [#allocation9], 512
        $region60: #{tpu_custom_call.1} parent=43 // pred_fallthru
          _
        %s304 = sand.u32 %s35, 1
        %s305 = scalar_lea.sflag [#allocation3], %s304
        %s306 = sand.u32 %s35, 1
        %s307 = smul.addr %s306, 8
        %s308 = scalar_lea.vmem [#allocation2], %s307
        %p309 = pneg %p48
        %p310 = pneg %p45
        %s311 = sand.u32 %s27, 1
        %s312 = scalar_lea.sflag [#allocation6], %s311
        %s313 = sand.u32 %s61, 1
        %s314 = smul.addr %s313, 8
        %s315 = scalar_lea.vmem [#allocation5], %s314
        %p316 = pneg %p74
        %p317 = pneg %p71
        %p318 = pneg %p95
        %p319 = pneg %p92
        %p320 = pneg %p116
        %p321 = pneg %p113
        %p322 = pneg %p137
        %p323 = pneg %p134
        %p324 = pneg %p158
        %p325 = pneg %p155
        %p326 = pneg %p184
        %p327 = pneg %p181
        %s328 = sand.u32 %s171, 1
        %s329 = scalar_lea.sflag [#allocation4], %s328
        %s330 = sand.u32 %s171, 1
        %s331 = smul.addr %s330, 8
        %s332 = scalar_lea.vmem [#allocation10], %s331
        %v333 = vld [vmem:[%s282] sm:$0xff]
        %v334 = vld [vmem:[#allocation7] sm:$0xff]
        %v335 = vld [vmem:[#allocation7 + $0x8] sm:$0xff]
        %v336 = vld [vmem:[#allocation7 + $0x10] sm:$0xff]
        %v337 = vld [vmem:[#allocation7 + $0x18] sm:$0xff]
        %v338 = vld [vmem:[%s3] sm:$0x1]
        %v340 = vlaneseq
        %v341 = vshrl.u32 %v340, 7
        %v342 = vsub.s32 0, %v341
        %v343 = vrot.slane %v338, %v342
        %vm345 = vcmask 261120
        %v347 = vsel %vm345, %v333, 0
        %349 = vmatprep.subr.mxu0 0.0
        %350 = vmatpush1.msra.mxu0 %v334
        %351 = vmatprep.subr.mxu0 0.0
        %352 = vmatpush1.msra.mxu0 %v335
        %353 = vmatprep.subr.mxu0 0.0
        %354 = vmatpush1.msra.mxu0 %v336
        %355 = vmatprep.subr.mxu0 0.0
        %356 = vmatpush1.msra.mxu0 %v337
        %357 = vmatprep.subr.mxu0 0.0
        %358 = vmatpush1.msra.mxu0 0.0
        %359 = vmatprep.subr.mxu0 0.0
        %360 = vmatpush1.msra.mxu0 0.0
        %361 = vmatprep.subr.mxu0 0.0
        %362 = vmatpush1.msra.mxu0 0.0
        %363 = vmatprep.subr.mxu0 0.0
        %364 = vmatpush1.msra.mxu0 0.0
        %365 = vmatprep.subr.mxu0 0.0
        %366 = vmatpush1.msra.mxu0 0.0
        %367 = vmatprep.subr.mxu0 0.0
        %368 = vmatpush1.msra.mxu0 0.0
        %369 = vmatprep.subr.mxu0 0.0
        %370 = vmatpush1.msra.mxu0 0.0
        %371 = vmatprep.subr.mxu0 0.0
        %372 = vmatpush1.msra.mxu0 0.0
        %373 = vmatprep.subr.mxu0 0.0
        %374 = vmatpush1.msra.mxu0 0.0
        %375 = vmatprep.subr.mxu0 0.0
        %376 = vmatpush1.msra.mxu0 0.0
        %377 = vmatprep.subr.mxu0 0.0
        %378 = vmatpush1.msra.mxu0 0.0
        %379 = vmatprep.subr.mxu0 0.0
        %380 = vmatpush1.msra.mxu0 0.0
        %381 = vmatprep.subr.mxu0 0.0
        %382 = vmatpush1.msra.mxu0 0.0
        %383 = vmatprep.subr.mxu0 0.0
        %384 = vmatpush1.msra.mxu0 0.0
        %385 = vmatprep.subr.mxu0 0.0
        %386 = vmatpush1.msra.mxu0 0.0
        %387 = vmatprep.subr.mxu0 0.0
        %388 = vmatpush1.msra.mxu0 0.0
        %389 = vmatprep.subr.mxu0 0.0
        %390 = vmatpush1.msra.mxu0 0.0
        %391 = vmatprep.subr.mxu0 0.0
        %392 = vmatpush1.msra.mxu0 0.0
        %393 = vmatprep.subr.mxu0 0.0
        %394 = vmatpush1.msra.mxu0 0.0
        %395 = vmatprep.subr.mxu0 0.0
        %396 = vmatpush1.msra.mxu0 0.0
        %397 = vmatprep.subr.mxu0 0.0
        %398 = vmatpush1.msra.mxu0 0.0
        %399 = vmatprep.subr.mxu0 0.0
        %400 = vmatpush1.msra.mxu0 0.0
        %401 = vmatprep.subr.mxu0 0.0
        %402 = vmatpush1.msra.mxu0 0.0
        %403 = vmatprep.subr.mxu0 0.0
        %404 = vmatpush1.msra.mxu0 0.0
        %405 = vmatprep.subr.mxu0 0.0
        %406 = vmatpush1.msra.mxu0 0.0
        %407 = vmatprep.subr.mxu0 0.0
        %408 = vmatpush1.msra.mxu0 0.0
        %409 = vmatprep.subr.mxu0 0.0
        %410 = vmatpush1.msra.mxu0 0.0
        %411 = vmatprep.subr.mxu0 0.0
        %412 = vmatpush1.msra.mxu0 0.0
        %413 = vmatprep.mubr.f32.mxu0 0.0
        %414 = vmatmul.mubr.f32.gmra.mrb[0].mxu0 %v347
        %v415 = vpop.f32.mrb[0].mxu0
        %v416 = vadd.f32 %v343, %v415
        %v417 = vpop.f32.mrb[0].mxu0
        %418 = vdwg.mxu0
        %v419 = vand.u32 2147483647, %v416
        %vm420 = vcmp.le.f32.partialorder %v419, 0.7853982
        %vm421 = vcmp.lt.s32.totalorder %v416, 0
        %v422 = vand.u32 %v416, 2139095040
        %v423 = vshrl.u32 %v422, 23
        %v424 = vsub.s32 %v423, 127
        %v425 = vand.u32 2147483647, %v416
        %v426 = vand.u32 %v425, 8388607
        %v427 = vor.u32 %v426, 8388608
        %v428 = vsub.s32 0, %v427
        %v429 = vadd.s32 %v424, 1
        %vm430 = vcmp.gt.s32.totalorder %v429, 0
        %v431 = vsel %vm430, %v429, 0
        %v432 = vshrl.u32 %v431, 5
        %v433 = vand.u32 %v431, 31
        %v434 = vsub.s32 32, %v433
        %v435 = vshrl.u32 683565275, %v434
        %v436 = vshll.u32 683565275, %v433
        %v437 = vshrl.u32 2475754826, %v434
        %v438 = vor.u32 %v436, %v437
        %v439 = vshll.u32 2475754826, %v433
        %v440 = vshrl.u32 2131351028, %v434
        %v441 = vor.u32 %v439, %v440
        %v442 = vshll.u32 2131351028, %v433
        %v443 = vshrl.u32 2102212464, %v434
        %v444 = vor.u32 %v442, %v443
        %v445 = vshll.u32 2102212464, %v433
        %v446 = vshrl.u32 920167782, %v434
        %v447 = vor.u32 %v445, %v446
        %v448 = vshll.u32 920167782, %v433
        %v449 = vshrl.u32 1326507024, %v434
        %v450 = vor.u32 %v448, %v449
        %vm451 = vcmp.lt.s32.totalorder %v432, 1
        %vm452 = vcmp.lt.s32.totalorder %v432, 2
        %vm453 = vcmp.lt.s32.totalorder %v432, 3
        %vm454 = vcmp.lt.s32.totalorder %v432, 4
        %v455 = vsel %vm451, %v435, %v438
        %v456 = vsel %vm454, %v444, 2102212464
        %v457 = vsel %vm453, %v441, %v456
        %v458 = vsel %vm452, %v455, %v457
        %v459 = vsel %vm451, %v438, %v441
        %v460 = vsel %vm454, %v447, 920167782
        %v461 = vsel %vm453, %v444, %v460
        %v462 = vsel %vm452, %v459, %v461
        %v463 = vsel %vm451, %v441, %v444
        %v464 = vsel %vm454, %v450, 1326507024
        %v465 = vsel %vm453, %v447, %v464
        %v466 = vsel %vm452, %v463, %v465
        %v467 = vshll.u32 %v427, 8
        %v468 = vmul.u32.u64.compose %v467, %v466
        %v469 = vextract.low.u32 %v468
        %v470 = vextract.high.u32 %v468
        %v471 = vmul.u32.u64.compose %v467, %v462
        %v472 = vextract.low.u32 %v471
        %v473 = vextract.high.u32 %v471
        %v474 = vmul.u32 %v467, %v458
        %v475 = vadd.s32 %v470, %v472
        %vm476 = vc.u32 %v470, %v472
        %v477 = vadd.s32 %v473, 1
        %v478 = vsel %vm476, %v477, %v473
        %v479 = vadd.s32 %v474, %v478
        %v480 = vadd.s32 %v479, 536870912
        %v481 = vshrl.u32 %v480, 30
        %v482 = vshll.u32 %v481, 30
        %v483 = vsub.s32 %v479, %v482
        %vm484 = vcmp.lt.s32.totalorder %v483, 0
        %v485 = vsub.s32 0, %v483
        %v486 = vsel %vm484, %v485, %v483
        %v487 = vclz %v486
        %v488 = vsub.s32 %v487, 2
        %vm489 = vcmp.gt.s32.totalorder 0, %v488
        %v490 = vsel %vm489, 0, %v488
        %v491 = vsub.s32 32, %v490
        %v492 = vshll.u32 %v483, %v490
        %v493 = vshrl.u32 %v475, %v491
        %v494 = vor.u32 %v492, %v493
        %v495 = vsub.s32 4294967266, %v490
        %v496 = vadd.s32 %v495, 127
        %v497 = vshll.u32 %v496, 23
        %v498 = vor.u32 4788187, %v497
        %v499 = vand.u32 2147483647, %v498
        %v501 = vcvt.s32.f32 %v494
        %v502 = vmul.f32 %v501, %v499
        %v503 = vxor.u32 %v502, 2147483648
        %v504 = vsel %vm421, %v503, %v502
        %v505 = vsub.s32 4, %v481
        %v506 = vsel %vm421, %v505, %v481
        %v507 = vsel %vm420, %v416, %v504
        %v508 = vsel %vm420, 0, %v506
        %v509 = vcosq.f32.pop %v507
        %v510 = vsinq.f32.pop %v507
        %vm511 = vweird.f32 %v416
        %v512 = vand.u32 %v508, 3
        %vm513 = vcmp.lt.s32.totalorder %v512, 2
        %vm514 = vcmp.eq.s32.totalorder %v512, 0
        %v515 = vxor.u32 %v510, 2147483648
        %v516 = vsel %vm514, %v509, %v515
        %vm517 = vcmp.eq.s32.totalorder %v512, 2
        %v518 = vxor.u32 %v509, 2147483648
        %v519 = vsel %vm517, %v518, %v510
        %v520 = vsel %vm513, %v516, %v519
        %v521 = vsel %vm511, nan, %v520
        %v522 = vand.u32 2147483647, %v416
        %vm523 = vcmp.le.f32.partialorder %v522, 0.7853982
        %vm524 = vcmp.lt.s32.totalorder %v416, 0
        %v525 = vand.u32 %v416, 2139095040
        %v526 = vshrl.u32 %v525, 23
        %v527 = vsub.s32 %v526, 127
        %v528 = vand.u32 2147483647, %v416
        %v529 = vand.u32 %v528, 8388607
        %v530 = vor.u32 %v529, 8388608
        %v531 = vsub.s32 0, %v530
        %v532 = vadd.s32 %v527, 1
        %vm533 = vcmp.gt.s32.totalorder %v532, 0
        %v534 = vsel %vm533, %v532, 0
        %v535 = vshrl.u32 %v534, 5
        %v536 = vand.u32 %v534, 31
        %v537 = vsub.s32 32, %v536
        %v538 = vshrl.u32 683565275, %v537
        %v539 = vshll.u32 683565275, %v536
        %v540 = vshrl.u32 2475754826, %v537
        %v541 = vor.u32 %v539, %v540
        %v542 = vshll.u32 2475754826, %v536
        %v543 = vshrl.u32 2131351028, %v537
        %v544 = vor.u32 %v542, %v543
        %v545 = vshll.u32 2131351028, %v536
        %v546 = vshrl.u32 2102212464, %v537
        %v547 = vor.u32 %v545, %v546
        %v548 = vshll.u32 2102212464, %v536
        %v549 = vshrl.u32 920167782, %v537
        %v550 = vor.u32 %v548, %v549
        %v551 = vshll.u32 920167782, %v536
        %v552 = vshrl.u32 1326507024, %v537
        %v553 = vor.u32 %v551, %v552
        %vm554 = vcmp.lt.s32.totalorder %v535, 1
        %vm555 = vcmp.lt.s32.totalorder %v535, 2
        %vm556 = vcmp.lt.s32.totalorder %v535, 3
        %vm557 = vcmp.lt.s32.totalorder %v535, 4
        %v558 = vsel %vm554, %v538, %v541
        %v559 = vsel %vm557, %v547, 2102212464
        %v560 = vsel %vm556, %v544, %v559
        %v561 = vsel %vm555, %v558, %v560
        %v562 = vsel %vm554, %v541, %v544
        %v563 = vsel %vm557, %v550, 920167782
        %v564 = vsel %vm556, %v547, %v563
        %v565 = vsel %vm555, %v562, %v564
        %v566 = vsel %vm554, %v544, %v547
        %v567 = vsel %vm557, %v553, 1326507024
        %v568 = vsel %vm556, %v550, %v567
        %v569 = vsel %vm555, %v566, %v568
        %v570 = vshll.u32 %v530, 8
        %v571 = vmul.u32.u64.compose %v570, %v569
        %v572 = vextract.low.u32 %v571
        %v573 = vextract.high.u32 %v571
        %v574 = vmul.u32.u64.compose %v570, %v565
        %v575 = vextract.low.u32 %v574
        %v576 = vextract.high.u32 %v574
        %v577 = vmul.u32 %v570, %v561
        %v578 = vadd.s32 %v573, %v575
        %vm579 = vc.u32 %v573, %v575
        %v580 = vadd.s32 %v576, 1
        %v581 = vsel %vm579, %v580, %v576
        %v582 = vadd.s32 %v577, %v581
        %v583 = vadd.s32 %v582, 536870912
        %v584 = vshrl.u32 %v583, 30
        %v585 = vshll.u32 %v584, 30
        %v586 = vsub.s32 %v582, %v585
        %vm587 = vcmp.lt.s32.totalorder %v586, 0
        %v588 = vsub.s32 0, %v586
        %v589 = vsel %vm587, %v588, %v586
        %v590 = vclz %v589
        %v591 = vsub.s32 %v590, 2
        %vm592 = vcmp.gt.s32.totalorder 0, %v591
        %v593 = vsel %vm592, 0, %v591
        %v594 = vsub.s32 32, %v593
        %v595 = vshll.u32 %v586, %v593
        %v596 = vshrl.u32 %v578, %v594
        %v597 = vor.u32 %v595, %v596
        %v598 = vsub.s32 4294967266, %v593
        %v599 = vadd.s32 %v598, 127
        %v600 = vshll.u32 %v599, 23
        %v601 = vor.u32 4788187, %v600
        %v602 = vand.u32 2147483647, %v601
        %v604 = vcvt.s32.f32 %v597
        %v605 = vmul.f32 %v604, %v602
        %v606 = vxor.u32 %v605, 2147483648
        %v607 = vsel %vm524, %v606, %v605
        %v608 = vsub.s32 4, %v584
        %v609 = vsel %vm524, %v608, %v584
        %v610 = vsel %vm523, %v416, %v607
        %v611 = vsel %vm523, 0, %v609
        %v612 = vcosq.f32.pop %v610
        %v613 = vsinq.f32.pop %v610
        %vm614 = vweird.f32 %v416
        %v615 = vadd.s32 %v611, 3
        %v616 = vand.u32 %v615, 3
        %vm617 = vcmp.lt.s32.totalorder %v616, 2
        %vm618 = vcmp.eq.s32.totalorder %v616, 0
        %v619 = vxor.u32 %v613, 2147483648
        %v620 = vsel %vm618, %v612, %v619
        %vm621 = vcmp.eq.s32.totalorder %v616, 2
        %v622 = vxor.u32 %v612, 2147483648
        %v623 = vsel %vm621, %v622, %v613
        %v624 = vsel %vm617, %v620, %v623
        %v625 = vsel %vm614, nan, %v624
        %627 = vrot.lane.b32.xlu0 %v521, 124
        %v628 = vpop.permute.xlu0 %627
        %630 = vrot.lane.b32.xlu0 %v521, 120
        %v631 = vpop.permute.xlu0 %630
        %633 = vrot.lane.b32.xlu0 %v521, 116
        %v634 = vpop.permute.xlu0 %633
        %636 = vrot.lane.b32.xlu0 %v521, 112
        %v637 = vpop.permute.xlu0 %636
        %639 = vrot.lane.b32.xlu0 %v521, 108
        %v640 = vpop.permute.xlu0 %639
        %642 = vrot.lane.b32.xlu0 %v521, 104
        %v643 = vpop.permute.xlu0 %642
        %645 = vrot.lane.b32.xlu0 %v521, 100
        %v646 = vpop.permute.xlu0 %645
        %v648 = vcombine.low %v521, %v631
        %v649 = vcombine.high %v521, %v631
        %v651 = vunpack.c.l.s4 1983009808
        %v652 = vunpack.c.0.s8 %v651
        %v653 = vlaneseq
        %v654 = vshrl.u32 %v653, 7
        %v655 = vsub.s32 %v652, %v654
        %v656 = vrot.slane %v648, %v655
        %v658 = vunpack.c.l.s4 1983009808
        %v659 = vunpack.c.0.s8 %v658
        %v660 = vlaneseq
        %v661 = vshrl.u32 %v660, 7
        %v662 = vsub.s32 %v659, %v661
        %v663 = vrot.slane %v649, %v662
        %v664 = vcombine.low %v628, %v634
        %v665 = vcombine.high %v628, %v634
        %v667 = vunpack.c.l.s4 1983009808
        %v668 = vunpack.c.0.s8 %v667
        %v669 = vlaneseq
        %v670 = vshrl.u32 %v669, 7
        %v671 = vsub.s32 %v668, %v670
        %v672 = vrot.slane %v664, %v671
        %v674 = vunpack.c.l.s4 1983009808
        %v675 = vunpack.c.0.s8 %v674
        %v676 = vlaneseq
        %v677 = vshrl.u32 %v676, 7
        %v678 = vsub.s32 %v675, %v677
        %v679 = vrot.slane %v665, %v678
        %v680 = vcombine.low %v637, %v643
        %v681 = vcombine.high %v637, %v643
        %v683 = vunpack.c.l.s4 1983009808
        %v684 = vunpack.c.0.s8 %v683
        %v685 = vlaneseq
        %v686 = vshrl.u32 %v685, 7
        %v687 = vsub.s32 %v684, %v686
        %v688 = vrot.slane %v680, %v687
        %v690 = vunpack.c.l.s4 1983009808
        %v691 = vunpack.c.0.s8 %v690
        %v692 = vlaneseq
        %v693 = vshrl.u32 %v692, 7
        %v694 = vsub.s32 %v691, %v693
        %v695 = vrot.slane %v681, %v694
        %v696 = vcombine.low %v640, %v646
        %v697 = vcombine.high %v640, %v646
        %v699 = vunpack.c.l.s4 1983009808
        %v700 = vunpack.c.0.s8 %v699
        %v701 = vlaneseq
        %v702 = vshrl.u32 %v701, 7
        %v703 = vsub.s32 %v700, %v702
        %v704 = vrot.slane %v696, %v703
        %v706 = vunpack.c.l.s4 1983009808
        %v707 = vunpack.c.0.s8 %v706
        %v708 = vlaneseq
        %v709 = vshrl.u32 %v708, 7
        %v710 = vsub.s32 %v707, %v709
        %v711 = vrot.slane %v697, %v710
        %v712 = vcombine.low %v656, %v672
        %v713 = vcombine.high %v656, %v672
        %v715 = vunpack.c.l.s4 1934713408
        %v716 = vunpack.c.0.s8 %v715
        %v717 = vlaneseq
        %v718 = vshrl.u32 %v717, 7
        %v719 = vsub.s32 %v716, %v718
        %v720 = vrot.slane %v712, %v719
        %v722 = vunpack.c.l.s4 1934713408
        %v723 = vunpack.c.0.s8 %v722
        %v724 = vlaneseq
        %v725 = vshrl.u32 %v724, 7
        %v726 = vsub.s32 %v723, %v725
        %v727 = vrot.slane %v713, %v726
        %v728 = vcombine.low %v663, %v679
        %v729 = vcombine.high %v663, %v679
        %v731 = vunpack.c.l.s4 1934713408
        %v732 = vunpack.c.0.s8 %v731
        %v733 = vlaneseq
        %v734 = vshrl.u32 %v733, 7
        %v735 = vsub.s32 %v732, %v734
        %v736 = vrot.slane %v728, %v735
        %v738 = vunpack.c.l.s4 1934713408
        %v739 = vunpack.c.0.s8 %v738
        %v740 = vlaneseq
        %v741 = vshrl.u32 %v740, 7
        %v742 = vsub.s32 %v739, %v741
        %v743 = vrot.slane %v729, %v742
        %v744 = vcombine.low %v688, %v704
        %v745 = vcombine.high %v688, %v704
        %v747 = vunpack.c.l.s4 1934713408
        %v748 = vunpack.c.0.s8 %v747
        %v749 = vlaneseq
        %v750 = vshrl.u32 %v749, 7
        %v751 = vsub.s32 %v748, %v750
        %v752 = vrot.slane %v744, %v751
        %v754 = vunpack.c.l.s4 1934713408
        %v755 = vunpack.c.0.s8 %v754
        %v756 = vlaneseq
        %v757 = vshrl.u32 %v756, 7
        %v758 = vsub.s32 %v755, %v757
        %v759 = vrot.slane %v745, %v758
        %v760 = vcombine.low %v695, %v711
        %v761 = vcombine.high %v695, %v711
        %v763 = vunpack.c.l.s4 1934713408
        %v764 = vunpack.c.0.s8 %v763
        %v765 = vlaneseq
        %v766 = vshrl.u32 %v765, 7
        %v767 = vsub.s32 %v764, %v766
        %v768 = vrot.slane %v760, %v767
        %v770 = vunpack.c.l.s4 1934713408
        %v771 = vunpack.c.0.s8 %v770
        %v772 = vlaneseq
        %v773 = vshrl.u32 %v772, 7
        %v774 = vsub.s32 %v771, %v773
        %v775 = vrot.slane %v761, %v774
        %v776 = vcombine.low %v720, %v752
        %v777 = vcombine.high %v720, %v752
        %v778 = vcombine.low %v727, %v759
        %v779 = vcombine.high %v727, %v759
        %v780 = vcombine.low %v736, %v768
        %v781 = vcombine.high %v736, %v768
        %v782 = vcombine.low %v743, %v775
        %v783 = vcombine.high %v743, %v775
        %v784 = vcombine.low %v776, %v778
        %v785 = vcombine.high %v776, %v778
        %v787 = vunpack.c.l.s4 1983009808
        %v788 = vunpack.c.0.s8 %v787
        %v789 = vlaneseq
        %v790 = vshrl.u32 %v789, 7
        %v791 = vsub.s32 %v788, %v790
        %v792 = vrot.slane %v784, %v791
        %v794 = vunpack.c.l.s4 1983009808
        %v795 = vunpack.c.0.s8 %v794
        %v796 = vlaneseq
        %v797 = vshrl.u32 %v796, 7
        %v798 = vsub.s32 %v795, %v797
        %v799 = vrot.slane %v785, %v798
        %v800 = vcombine.low %v777, %v779
        %v801 = vcombine.high %v777, %v779
        %v803 = vunpack.c.l.s4 1983009808
        %v804 = vunpack.c.0.s8 %v803
        %v805 = vlaneseq
        %v806 = vshrl.u32 %v805, 7
        %v807 = vsub.s32 %v804, %v806
        %v808 = vrot.slane %v800, %v807
        %v810 = vunpack.c.l.s4 1983009808
        %v811 = vunpack.c.0.s8 %v810
        %v812 = vlaneseq
        %v813 = vshrl.u32 %v812, 7
        %v814 = vsub.s32 %v811, %v813
        %v815 = vrot.slane %v801, %v814
        %v816 = vcombine.low %v780, %v782
        %v817 = vcombine.high %v780, %v782
        %v819 = vunpack.c.l.s4 1983009808
        %v820 = vunpack.c.0.s8 %v819
        %v821 = vlaneseq
        %v822 = vshrl.u32 %v821, 7
        %v823 = vsub.s32 %v820, %v822
        %v824 = vrot.slane %v816, %v823
        %v826 = vunpack.c.l.s4 1983009808
        %v827 = vunpack.c.0.s8 %v826
        %v828 = vlaneseq
        %v829 = vshrl.u32 %v828, 7
        %v830 = vsub.s32 %v827, %v829
        %v831 = vrot.slane %v817, %v830
        %v832 = vcombine.low %v781, %v783
        %v833 = vcombine.high %v781, %v783
        %v835 = vunpack.c.l.s4 1983009808
        %v836 = vunpack.c.0.s8 %v835
        %v837 = vlaneseq
        %v838 = vshrl.u32 %v837, 7
        %v839 = vsub.s32 %v836, %v838
        %v840 = vrot.slane %v832, %v839
        %v842 = vunpack.c.l.s4 1983009808
        %v843 = vunpack.c.0.s8 %v842
        %v844 = vlaneseq
        %v845 = vshrl.u32 %v844, 7
        %v846 = vsub.s32 %v843, %v845
        %v847 = vrot.slane %v833, %v846
        %v848 = vcombine.low %v792, %v808
        %v849 = vcombine.high %v792, %v808
        %v851 = vunpack.c.l.s4 1934713408
        %v852 = vunpack.c.0.s8 %v851
        %v853 = vlaneseq
        %v854 = vshrl.u32 %v853, 7
        %v855 = vsub.s32 %v852, %v854
        %v856 = vrot.slane %v848, %v855
        %v858 = vunpack.c.l.s4 1934713408
        %v859 = vunpack.c.0.s8 %v858
        %v860 = vlaneseq
        %v861 = vshrl.u32 %v860, 7
        %v862 = vsub.s32 %v859, %v861
        %v863 = vrot.slane %v849, %v862
        %v864 = vcombine.low %v799, %v815
        %v865 = vcombine.high %v799, %v815
        %v867 = vunpack.c.l.s4 1934713408
        %v868 = vunpack.c.0.s8 %v867
        %v869 = vlaneseq
        %v870 = vshrl.u32 %v869, 7
        %v871 = vsub.s32 %v868, %v870
        %v872 = vrot.slane %v864, %v871
        %v874 = vunpack.c.l.s4 1934713408
        %v875 = vunpack.c.0.s8 %v874
        %v876 = vlaneseq
        %v877 = vshrl.u32 %v876, 7
        %v878 = vsub.s32 %v875, %v877
        %v879 = vrot.slane %v865, %v878
        %v880 = vcombine.low %v824, %v840
        %v881 = vcombine.high %v824, %v840
        %v883 = vunpack.c.l.s4 1934713408
        %v884 = vunpack.c.0.s8 %v883
        %v885 = vlaneseq
        %v886 = vshrl.u32 %v885, 7
        %v887 = vsub.s32 %v884, %v886
        %v888 = vrot.slane %v880, %v887
        %v890 = vunpack.c.l.s4 1934713408
        %v891 = vunpack.c.0.s8 %v890
        %v892 = vlaneseq
        %v893 = vshrl.u32 %v892, 7
        %v894 = vsub.s32 %v891, %v893
        %v895 = vrot.slane %v881, %v894
        %v896 = vcombine.low %v831, %v847
        %v897 = vcombine.high %v831, %v847
        %v899 = vunpack.c.l.s4 1934713408
        %v900 = vunpack.c.0.s8 %v899
        %v901 = vlaneseq
        %v902 = vshrl.u32 %v901, 7
        %v903 = vsub.s32 %v900, %v902
        %v904 = vrot.slane %v896, %v903
        %v906 = vunpack.c.l.s4 1934713408
        %v907 = vunpack.c.0.s8 %v906
        %v908 = vlaneseq
        %v909 = vshrl.u32 %v908, 7
        %v910 = vsub.s32 %v907, %v909
        %v911 = vrot.slane %v897, %v910
        %v912 = vcombine.low %v856, %v888
        %v913 = vcombine.high %v856, %v888
        %v914 = vcombine.low %v863, %v895
        %v915 = vcombine.high %v863, %v895
        %v916 = vcombine.low %v872, %v904
        %v917 = vcombine.high %v872, %v904
        %v918 = vcombine.low %v879, %v911
        %v919 = vcombine.high %v879, %v911
        %921 = vrot.lane.b32.xlu0 %v625, 124
        %v922 = vpop.permute.xlu0 %921
        %924 = vrot.lane.b32.xlu0 %v625, 120
        %v925 = vpop.permute.xlu0 %924
        %927 = vrot.lane.b32.xlu0 %v625, 116
        %v928 = vpop.permute.xlu0 %927
        %930 = vrot.lane.b32.xlu0 %v625, 112
        %v931 = vpop.permute.xlu0 %930
        %933 = vrot.lane.b32.xlu0 %v625, 108
        %v934 = vpop.permute.xlu0 %933
        %936 = vrot.lane.b32.xlu0 %v625, 104
        %v937 = vpop.permute.xlu0 %936
        %939 = vrot.lane.b32.xlu0 %v625, 100
        %v940 = vpop.permute.xlu0 %939
        %v942 = vcombine.low %v625, %v925
        %v943 = vcombine.high %v625, %v925
        %v945 = vunpack.c.l.s4 1983009808
        %v946 = vunpack.c.0.s8 %v945
        %v947 = vlaneseq
        %v948 = vshrl.u32 %v947, 7
        %v949 = vsub.s32 %v946, %v948
        %v950 = vrot.slane %v942, %v949
        %v952 = vunpack.c.l.s4 1983009808
        %v953 = vunpack.c.0.s8 %v952
        %v954 = vlaneseq
        %v955 = vshrl.u32 %v954, 7
        %v956 = vsub.s32 %v953, %v955
        %v957 = vrot.slane %v943, %v956
        %v958 = vcombine.low %v922, %v928
        %v959 = vcombine.high %v922, %v928
        %v961 = vunpack.c.l.s4 1983009808
        %v962 = vunpack.c.0.s8 %v961
        %v963 = vlaneseq
        %v964 = vshrl.u32 %v963, 7
        %v965 = vsub.s32 %v962, %v964
        %v966 = vrot.slane %v958, %v965
        %v968 = vunpack.c.l.s4 1983009808
        %v969 = vunpack.c.0.s8 %v968
        %v970 = vlaneseq
        %v971 = vshrl.u32 %v970, 7
        %v972 = vsub.s32 %v969, %v971
        %v973 = vrot.slane %v959, %v972
        %v974 = vcombine.low %v931, %v937
        %v975 = vcombine.high %v931, %v937
        %v977 = vunpack.c.l.s4 1983009808
        %v978 = vunpack.c.0.s8 %v977
        %v979 = vlaneseq
        %v980 = vshrl.u32 %v979, 7
        %v981 = vsub.s32 %v978, %v980
        %v982 = vrot.slane %v974, %v981
        %v984 = vunpack.c.l.s4 1983009808
        %v985 = vunpack.c.0.s8 %v984
        %v986 = vlaneseq
        %v987 = vshrl.u32 %v986, 7
        %v988 = vsub.s32 %v985, %v987
        %v989 = vrot.slane %v975, %v988
        %v990 = vcombine.low %v934, %v940
        %v991 = vcombine.high %v934, %v940
        %v993 = vunpack.c.l.s4 1983009808
        %v994 = vunpack.c.0.s8 %v993
        %v995 = vlaneseq
        %v996 = vshrl.u32 %v995, 7
        %v997 = vsub.s32 %v994, %v996
        %v998 = vrot.slane %v990, %v997
        %v1000 = vunpack.c.l.s4 1983009808
        %v1001 = vunpack.c.0.s8 %v1000
        %v1002 = vlaneseq
        %v1003 = vshrl.u32 %v1002, 7
        %v1004 = vsub.s32 %v1001, %v1003
        %v1005 = vrot.slane %v991, %v1004
        %v1006 = vcombine.low %v950, %v966
        %v1007 = vcombine.high %v950, %v966
        %v1009 = vunpack.c.l.s4 1934713408
        %v1010 = vunpack.c.0.s8 %v1009
        %v1011 = vlaneseq
        %v1012 = vshrl.u32 %v1011, 7
        %v1013 = vsub.s32 %v1010, %v1012
        %v1014 = vrot.slane %v1006, %v1013
        %v1016 = vunpack.c.l.s4 1934713408
        %v1017 = vunpack.c.0.s8 %v1016
        %v1018 = vlaneseq
        %v1019 = vshrl.u32 %v1018, 7
        %v1020 = vsub.s32 %v1017, %v1019
        %v1021 = vrot.slane %v1007, %v1020
        %v1022 = vcombine.low %v957, %v973
        %v1023 = vcombine.high %v957, %v973
        %v1025 = vunpack.c.l.s4 1934713408
        %v1026 = vunpack.c.0.s8 %v1025
        %v1027 = vlaneseq
        %v1028 = vshrl.u32 %v1027, 7
        %v1029 = vsub.s32 %v1026, %v1028
        %v1030 = vrot.slane %v1022, %v1029
        %v1032 = vunpack.c.l.s4 1934713408
        %v1033 = vunpack.c.0.s8 %v1032
        %v1034 = vlaneseq
        %v1035 = vshrl.u32 %v1034, 7
        %v1036 = vsub.s32 %v1033, %v1035
        %v1037 = vrot.slane %v1023, %v1036
        %v1038 = vcombine.low %v982, %v998
        %v1039 = vcombine.high %v982, %v998
        %v1041 = vunpack.c.l.s4 1934713408
        %v1042 = vunpack.c.0.s8 %v1041
        %v1043 = vlaneseq
        %v1044 = vshrl.u32 %v1043, 7
        %v1045 = vsub.s32 %v1042, %v1044
        %v1046 = vrot.slane %v1038, %v1045
        %v1048 = vunpack.c.l.s4 1934713408
        %v1049 = vunpack.c.0.s8 %v1048
        %v1050 = vlaneseq
        %v1051 = vshrl.u32 %v1050, 7
        %v1052 = vsub.s32 %v1049, %v1051
        %v1053 = vrot.slane %v1039, %v1052
        %v1054 = vcombine.low %v989, %v1005
        %v1055 = vcombine.high %v989, %v1005
        %v1057 = vunpack.c.l.s4 1934713408
        %v1058 = vunpack.c.0.s8 %v1057
        %v1059 = vlaneseq
        %v1060 = vshrl.u32 %v1059, 7
        %v1061 = vsub.s32 %v1058, %v1060
        %v1062 = vrot.slane %v1054, %v1061
        %v1064 = vunpack.c.l.s4 1934713408
        %v1065 = vunpack.c.0.s8 %v1064
        %v1066 = vlaneseq
        %v1067 = vshrl.u32 %v1066, 7
        %v1068 = vsub.s32 %v1065, %v1067
        %v1069 = vrot.slane %v1055, %v1068
        %v1070 = vcombine.low %v1014, %v1046
        %v1071 = vcombine.high %v1014, %v1046
        %v1072 = vcombine.low %v1021, %v1053
        %v1073 = vcombine.high %v1021, %v1053
        %v1074 = vcombine.low %v1030, %v1062
        %v1075 = vcombine.high %v1030, %v1062
        %v1076 = vcombine.low %v1037, %v1069
        %v1077 = vcombine.high %v1037, %v1069
        %v1078 = vcombine.low %v1070, %v1072
        %v1079 = vcombine.high %v1070, %v1072
        %v1081 = vunpack.c.l.s4 1983009808
        %v1082 = vunpack.c.0.s8 %v1081
        %v1083 = vlaneseq
        %v1084 = vshrl.u32 %v1083, 7
        %v1085 = vsub.s32 %v1082, %v1084
        %v1086 = vrot.slane %v1078, %v1085
        %v1088 = vunpack.c.l.s4 1983009808
        %v1089 = vunpack.c.0.s8 %v1088
        %v1090 = vlaneseq
        %v1091 = vshrl.u32 %v1090, 7
        %v1092 = vsub.s32 %v1089, %v1091
        %v1093 = vrot.slane %v1079, %v1092
        %v1094 = vcombine.low %v1071, %v1073
        %v1095 = vcombine.high %v1071, %v1073
        %v1097 = vunpack.c.l.s4 1983009808
        %v1098 = vunpack.c.0.s8 %v1097
        %v1099 = vlaneseq
        %v1100 = vshrl.u32 %v1099, 7
        %v1101 = vsub.s32 %v1098, %v1100
        %v1102 = vrot.slane %v1094, %v1101
        %v1104 = vunpack.c.l.s4 1983009808
        %v1105 = vunpack.c.0.s8 %v1104
        %v1106 = vlaneseq
        %v1107 = vshrl.u32 %v1106, 7
        %v1108 = vsub.s32 %v1105, %v1107
        %v1109 = vrot.slane %v1095, %v1108
        %v1110 = vcombine.low %v1074, %v1076
        %v1111 = vcombine.high %v1074, %v1076
        %v1113 = vunpack.c.l.s4 1983009808
        %v1114 = vunpack.c.0.s8 %v1113
        %v1115 = vlaneseq
        %v1116 = vshrl.u32 %v1115, 7
        %v1117 = vsub.s32 %v1114, %v1116
        %v1118 = vrot.slane %v1110, %v1117
        %v1120 = vunpack.c.l.s4 1983009808
        %v1121 = vunpack.c.0.s8 %v1120
        %v1122 = vlaneseq
        %v1123 = vshrl.u32 %v1122, 7
        %v1124 = vsub.s32 %v1121, %v1123
        %v1125 = vrot.slane %v1111, %v1124
        %v1126 = vcombine.low %v1075, %v1077
        %v1127 = vcombine.high %v1075, %v1077
        %v1129 = vunpack.c.l.s4 1983009808
        %v1130 = vunpack.c.0.s8 %v1129
        %v1131 = vlaneseq
        %v1132 = vshrl.u32 %v1131, 7
        %v1133 = vsub.s32 %v1130, %v1132
        %v1134 = vrot.slane %v1126, %v1133
        %v1136 = vunpack.c.l.s4 1983009808
        %v1137 = vunpack.c.0.s8 %v1136
        %v1138 = vlaneseq
        %v1139 = vshrl.u32 %v1138, 7
        %v1140 = vsub.s32 %v1137, %v1139
        %v1141 = vrot.slane %v1127, %v1140
        %v1142 = vcombine.low %v1086, %v1102
        %v1143 = vcombine.high %v1086, %v1102
        %v1145 = vunpack.c.l.s4 1934713408
        %v1146 = vunpack.c.0.s8 %v1145
        %v1147 = vlaneseq
        %v1148 = vshrl.u32 %v1147, 7
        %v1149 = vsub.s32 %v1146, %v1148
        %v1150 = vrot.slane %v1142, %v1149
        %v1152 = vunpack.c.l.s4 1934713408
        %v1153 = vunpack.c.0.s8 %v1152
        %v1154 = vlaneseq
        %v1155 = vshrl.u32 %v1154, 7
        %v1156 = vsub.s32 %v1153, %v1155
        %v1157 = vrot.slane %v1143, %v1156
        %v1158 = vcombine.low %v1093, %v1109
        %v1159 = vcombine.high %v1093, %v1109
        %v1161 = vunpack.c.l.s4 1934713408
        %v1162 = vunpack.c.0.s8 %v1161
        %v1163 = vlaneseq
        %v1164 = vshrl.u32 %v1163, 7
        %v1165 = vsub.s32 %v1162, %v1164
        %v1166 = vrot.slane %v1158, %v1165
        %v1168 = vunpack.c.l.s4 1934713408
        %v1169 = vunpack.c.0.s8 %v1168
        %v1170 = vlaneseq
        %v1171 = vshrl.u32 %v1170, 7
        %v1172 = vsub.s32 %v1169, %v1171
        %v1173 = vrot.slane %v1159, %v1172
        %v1174 = vcombine.low %v1118, %v1134
        %v1175 = vcombine.high %v1118, %v1134
        %v1177 = vunpack.c.l.s4 1934713408
        %v1178 = vunpack.c.0.s8 %v1177
        %v1179 = vlaneseq
        %v1180 = vshrl.u32 %v1179, 7
        %v1181 = vsub.s32 %v1178, %v1180
        %v1182 = vrot.slane %v1174, %v1181
        %v1184 = vunpack.c.l.s4 1934713408
        %v1185 = vunpack.c.0.s8 %v1184
        %v1186 = vlaneseq
        %v1187 = vshrl.u32 %v1186, 7
        %v1188 = vsub.s32 %v1185, %v1187
        %v1189 = vrot.slane %v1175, %v1188
        %v1190 = vcombine.low %v1125, %v1141
        %v1191 = vcombine.high %v1125, %v1141
        %v1193 = vunpack.c.l.s4 1934713408
        %v1194 = vunpack.c.0.s8 %v1193
        %v1195 = vlaneseq
        %v1196 = vshrl.u32 %v1195, 7
        %v1197 = vsub.s32 %v1194, %v1196
        %v1198 = vrot.slane %v1190, %v1197
        %v1200 = vunpack.c.l.s4 1934713408
        %v1201 = vunpack.c.0.s8 %v1200
        %v1202 = vlaneseq
        %v1203 = vshrl.u32 %v1202, 7
        %v1204 = vsub.s32 %v1201, %v1203
        %v1205 = vrot.slane %v1191, %v1204
        %v1206 = vcombine.low %v1150, %v1182
        %v1207 = vcombine.high %v1150, %v1182
        %v1208 = vcombine.low %v1157, %v1189
        %v1209 = vcombine.high %v1157, %v1189
        %v1210 = vcombine.low %v1166, %v1198
        %v1211 = vcombine.high %v1166, %v1198
        %v1212 = vcombine.low %v1173, %v1205
        %v1213 = vcombine.high %v1173, %v1205
        %1222 = vrot.lane.b32.xlu0 %v1206, 4
        %v1223 = vpop.permute.xlu0 %1222
        %1224 = vrot.lane.b32.xlu0 %v1207, 4
        %v1225 = vpop.permute.xlu0 %1224
        %1226 = vrot.lane.b32.xlu0 %v1208, 4
        %v1227 = vpop.permute.xlu0 %1226
        %1228 = vrot.lane.b32.xlu0 %v1209, 4
        %v1229 = vpop.permute.xlu0 %1228
        %1230 = vrot.lane.b32.xlu0 %v1210, 4
        %v1231 = vpop.permute.xlu0 %1230
        %1232 = vrot.lane.b32.xlu0 %v1211, 4
        %v1233 = vpop.permute.xlu0 %1232
        %1234 = vrot.lane.b32.xlu0 %v1212, 4
        %v1235 = vpop.permute.xlu0 %1234
        %1236 = vrot.lane.b32.xlu0 %v1213, 4
        %v1237 = vpop.permute.xlu0 %1236
        %vm1246 = vcmask 31744
        %v1247 = vsel %vm1246, %v912, %v1223
        %v1248 = vsel %vm1246, %v913, %v1225
        %v1249 = vsel %vm1246, %v914, %v1227
        %v1250 = vsel %vm1246, %v915, %v1229
        %v1251 = vsel %vm1246, %v916, %v1231
        %v1252 = vsel %vm1246, %v917, %v1233
        %v1253 = vsel %vm1246, %v918, %v1235
        %v1254 = vsel %vm1246, %v919, %v1237
        %1255 = vrot.lane.b32.xlu0 %v521, 96
        %v1256 = vpop.permute.xlu0 %1255
        %1257 = vrot.lane.b32.xlu0 %v628, 96
        %v1258 = vpop.permute.xlu0 %1257
        %1259 = vrot.lane.b32.xlu0 %v631, 96
        %v1260 = vpop.permute.xlu0 %1259
        %1261 = vrot.lane.b32.xlu0 %v634, 96
        %v1262 = vpop.permute.xlu0 %1261
        %1263 = vrot.lane.b32.xlu0 %v637, 96
        %v1264 = vpop.permute.xlu0 %1263
        %1265 = vrot.lane.b32.xlu0 %v640, 96
        %v1266 = vpop.permute.xlu0 %1265
        %1267 = vrot.lane.b32.xlu0 %v643, 96
        %v1268 = vpop.permute.xlu0 %1267
        %1269 = vrot.lane.b32.xlu0 %v646, 96
        %v1270 = vpop.permute.xlu0 %1269
        %v1279 = vcombine.low %v1256, %v1260
        %v1280 = vcombine.high %v1256, %v1260
        %v1282 = vunpack.c.l.s4 1983009808
        %v1283 = vunpack.c.0.s8 %v1282
        %v1284 = vlaneseq
        %v1285 = vshrl.u32 %v1284, 7
        %v1286 = vsub.s32 %v1283, %v1285
        %v1287 = vrot.slane %v1279, %v1286
        %v1289 = vunpack.c.l.s4 1983009808
        %v1290 = vunpack.c.0.s8 %v1289
        %v1291 = vlaneseq
        %v1292 = vshrl.u32 %v1291, 7
        %v1293 = vsub.s32 %v1290, %v1292
        %v1294 = vrot.slane %v1280, %v1293
        %v1295 = vcombine.low %v1258, %v1262
        %v1296 = vcombine.high %v1258, %v1262
        %v1298 = vunpack.c.l.s4 1983009808
        %v1299 = vunpack.c.0.s8 %v1298
        %v1300 = vlaneseq
        %v1301 = vshrl.u32 %v1300, 7
        %v1302 = vsub.s32 %v1299, %v1301
        %v1303 = vrot.slane %v1295, %v1302
        %v1305 = vunpack.c.l.s4 1983009808
        %v1306 = vunpack.c.0.s8 %v1305
        %v1307 = vlaneseq
        %v1308 = vshrl.u32 %v1307, 7
        %v1309 = vsub.s32 %v1306, %v1308
        %v1310 = vrot.slane %v1296, %v1309
        %v1311 = vcombine.low %v1264, %v1268
        %v1312 = vcombine.high %v1264, %v1268
        %v1314 = vunpack.c.l.s4 1983009808
        %v1315 = vunpack.c.0.s8 %v1314
        %v1316 = vlaneseq
        %v1317 = vshrl.u32 %v1316, 7
        %v1318 = vsub.s32 %v1315, %v1317
        %v1319 = vrot.slane %v1311, %v1318
        %v1321 = vunpack.c.l.s4 1983009808
        %v1322 = vunpack.c.0.s8 %v1321
        %v1323 = vlaneseq
        %v1324 = vshrl.u32 %v1323, 7
        %v1325 = vsub.s32 %v1322, %v1324
        %v1326 = vrot.slane %v1312, %v1325
        %v1327 = vcombine.low %v1266, %v1270
        %v1328 = vcombine.high %v1266, %v1270
        %v1330 = vunpack.c.l.s4 1983009808
        %v1331 = vunpack.c.0.s8 %v1330
        %v1332 = vlaneseq
        %v1333 = vshrl.u32 %v1332, 7
        %v1334 = vsub.s32 %v1331, %v1333
        %v1335 = vrot.slane %v1327, %v1334
        %v1337 = vunpack.c.l.s4 1983009808
        %v1338 = vunpack.c.0.s8 %v1337
        %v1339 = vlaneseq
        %v1340 = vshrl.u32 %v1339, 7
        %v1341 = vsub.s32 %v1338, %v1340
        %v1342 = vrot.slane %v1328, %v1341
        %v1343 = vcombine.low %v1287, %v1303
        %v1344 = vcombine.high %v1287, %v1303
        %v1346 = vunpack.c.l.s4 1934713408
        %v1347 = vunpack.c.0.s8 %v1346
        %v1348 = vlaneseq
        %v1349 = vshrl.u32 %v1348, 7
        %v1350 = vsub.s32 %v1347, %v1349
        %v1351 = vrot.slane %v1343, %v1350
        %v1353 = vunpack.c.l.s4 1934713408
        %v1354 = vunpack.c.0.s8 %v1353
        %v1355 = vlaneseq
        %v1356 = vshrl.u32 %v1355, 7
        %v1357 = vsub.s32 %v1354, %v1356
        %v1358 = vrot.slane %v1344, %v1357
        %v1359 = vcombine.low %v1294, %v1310
        %v1360 = vcombine.high %v1294, %v1310
        %v1362 = vunpack.c.l.s4 1934713408
        %v1363 = vunpack.c.0.s8 %v1362
        %v1364 = vlaneseq
        %v1365 = vshrl.u32 %v1364, 7
        %v1366 = vsub.s32 %v1363, %v1365
        %v1367 = vrot.slane %v1359, %v1366
        %v1369 = vunpack.c.l.s4 1934713408
        %v1370 = vunpack.c.0.s8 %v1369
        %v1371 = vlaneseq
        %v1372 = vshrl.u32 %v1371, 7
        %v1373 = vsub.s32 %v1370, %v1372
        %v1374 = vrot.slane %v1360, %v1373
        %v1375 = vcombine.low %v1319, %v1335
        %v1376 = vcombine.high %v1319, %v1335
        %v1378 = vunpack.c.l.s4 1934713408
        %v1379 = vunpack.c.0.s8 %v1378
        %v1380 = vlaneseq
        %v1381 = vshrl.u32 %v1380, 7
        %v1382 = vsub.s32 %v1379, %v1381
        %v1383 = vrot.slane %v1375, %v1382
        %v1385 = vunpack.c.l.s4 1934713408
        %v1386 = vunpack.c.0.s8 %v1385
        %v1387 = vlaneseq
        %v1388 = vshrl.u32 %v1387, 7
        %v1389 = vsub.s32 %v1386, %v1388
        %v1390 = vrot.slane %v1376, %v1389
        %v1391 = vcombine.low %v1326, %v1342
        %v1392 = vcombine.high %v1326, %v1342
        %v1394 = vunpack.c.l.s4 1934713408
        %v1395 = vunpack.c.0.s8 %v1394
        %v1396 = vlaneseq
        %v1397 = vshrl.u32 %v1396, 7
        %v1398 = vsub.s32 %v1395, %v1397
        %v1399 = vrot.slane %v1391, %v1398
        %v1401 = vunpack.c.l.s4 1934713408
        %v1402 = vunpack.c.0.s8 %v1401
        %v1403 = vlaneseq
        %v1404 = vshrl.u32 %v1403, 7
        %v1405 = vsub.s32 %v1402, %v1404
        %v1406 = vrot.slane %v1392, %v1405
        %v1407 = vcombine.low %v1351, %v1383
        %v1408 = vcombine.high %v1351, %v1383
        %v1409 = vcombine.low %v1358, %v1390
        %v1410 = vcombine.high %v1358, %v1390
        %v1411 = vcombine.low %v1367, %v1399
        %v1412 = vcombine.high %v1367, %v1399
        %v1413 = vcombine.low %v1374, %v1406
        %v1414 = vcombine.high %v1374, %v1406
        %v1415 = vcombine.low %v1407, %v1409
        %v1416 = vcombine.high %v1407, %v1409
        %v1418 = vunpack.c.l.s4 1983009808
        %v1419 = vunpack.c.0.s8 %v1418
        %v1420 = vlaneseq
        %v1421 = vshrl.u32 %v1420, 7
        %v1422 = vsub.s32 %v1419, %v1421
        %v1423 = vrot.slane %v1415, %v1422
        %v1425 = vunpack.c.l.s4 1983009808
        %v1426 = vunpack.c.0.s8 %v1425
        %v1427 = vlaneseq
        %v1428 = vshrl.u32 %v1427, 7
        %v1429 = vsub.s32 %v1426, %v1428
        %v1430 = vrot.slane %v1416, %v1429
        %v1431 = vcombine.low %v1408, %v1410
        %v1432 = vcombine.high %v1408, %v1410
        %v1434 = vunpack.c.l.s4 1983009808
        %v1435 = vunpack.c.0.s8 %v1434
        %v1436 = vlaneseq
        %v1437 = vshrl.u32 %v1436, 7
        %v1438 = vsub.s32 %v1435, %v1437
        %v1439 = vrot.slane %v1431, %v1438
        %v1441 = vunpack.c.l.s4 1983009808
        %v1442 = vunpack.c.0.s8 %v1441
        %v1443 = vlaneseq
        %v1444 = vshrl.u32 %v1443, 7
        %v1445 = vsub.s32 %v1442, %v1444
        %v1446 = vrot.slane %v1432, %v1445
        %v1447 = vcombine.low %v1411, %v1413
        %v1448 = vcombine.high %v1411, %v1413
        %v1450 = vunpack.c.l.s4 1983009808
        %v1451 = vunpack.c.0.s8 %v1450
        %v1452 = vlaneseq
        %v1453 = vshrl.u32 %v1452, 7
        %v1454 = vsub.s32 %v1451, %v1453
        %v1455 = vrot.slane %v1447, %v1454
        %v1457 = vunpack.c.l.s4 1983009808
        %v1458 = vunpack.c.0.s8 %v1457
        %v1459 = vlaneseq
        %v1460 = vshrl.u32 %v1459, 7
        %v1461 = vsub.s32 %v1458, %v1460
        %v1462 = vrot.slane %v1448, %v1461
        %v1463 = vcombine.low %v1412, %v1414
        %v1464 = vcombine.high %v1412, %v1414
        %v1466 = vunpack.c.l.s4 1983009808
        %v1467 = vunpack.c.0.s8 %v1466
        %v1468 = vlaneseq
        %v1469 = vshrl.u32 %v1468, 7
        %v1470 = vsub.s32 %v1467, %v1469
        %v1471 = vrot.slane %v1463, %v1470
        %v1473 = vunpack.c.l.s4 1983009808
        %v1474 = vunpack.c.0.s8 %v1473
        %v1475 = vlaneseq
        %v1476 = vshrl.u32 %v1475, 7
        %v1477 = vsub.s32 %v1474, %v1476
        %v1478 = vrot.slane %v1464, %v1477
        %v1479 = vcombine.low %v1423, %v1439
        %v1480 = vcombine.high %v1423, %v1439
        %v1482 = vunpack.c.l.s4 1934713408
        %v1483 = vunpack.c.0.s8 %v1482
        %v1484 = vlaneseq
        %v1485 = vshrl.u32 %v1484, 7
        %v1486 = vsub.s32 %v1483, %v1485
        %v1487 = vrot.slane %v1479, %v1486
        %v1489 = vunpack.c.l.s4 1934713408
        %v1490 = vunpack.c.0.s8 %v1489
        %v1491 = vlaneseq
        %v1492 = vshrl.u32 %v1491, 7
        %v1493 = vsub.s32 %v1490, %v1492
        %v1494 = vrot.slane %v1480, %v1493
        %v1495 = vcombine.low %v1430, %v1446
        %v1496 = vcombine.high %v1430, %v1446
        %v1498 = vunpack.c.l.s4 1934713408
        %v1499 = vunpack.c.0.s8 %v1498
        %v1500 = vlaneseq
        %v1501 = vshrl.u32 %v1500, 7
        %v1502 = vsub.s32 %v1499, %v1501
        %v1503 = vrot.slane %v1495, %v1502
        %v1505 = vunpack.c.l.s4 1934713408
        %v1506 = vunpack.c.0.s8 %v1505
        %v1507 = vlaneseq
        %v1508 = vshrl.u32 %v1507, 7
        %v1509 = vsub.s32 %v1506, %v1508
        %v1510 = vrot.slane %v1496, %v1509
        %v1511 = vcombine.low %v1455, %v1471
        %v1512 = vcombine.high %v1455, %v1471
        %v1514 = vunpack.c.l.s4 1934713408
        %v1515 = vunpack.c.0.s8 %v1514
        %v1516 = vlaneseq
        %v1517 = vshrl.u32 %v1516, 7
        %v1518 = vsub.s32 %v1515, %v1517
        %v1519 = vrot.slane %v1511, %v1518
        %v1521 = vunpack.c.l.s4 1934713408
        %v1522 = vunpack.c.0.s8 %v1521
        %v1523 = vlaneseq
        %v1524 = vshrl.u32 %v1523, 7
        %v1525 = vsub.s32 %v1522, %v1524
        %v1526 = vrot.slane %v1512, %v1525
        %v1527 = vcombine.low %v1462, %v1478
        %v1528 = vcombine.high %v1462, %v1478
        %v1530 = vunpack.c.l.s4 1934713408
        %v1531 = vunpack.c.0.s8 %v1530
        %v1532 = vlaneseq
        %v1533 = vshrl.u32 %v1532, 7
        %v1534 = vsub.s32 %v1531, %v1533
        %v1535 = vrot.slane %v1527, %v1534
        %v1537 = vunpack.c.l.s4 1934713408
        %v1538 = vunpack.c.0.s8 %v1537
        %v1539 = vlaneseq
        %v1540 = vshrl.u32 %v1539, 7
        %v1541 = vsub.s32 %v1538, %v1540
        %v1542 = vrot.slane %v1528, %v1541
        %v1543 = vcombine.low %v1487, %v1519
        %v1544 = vcombine.high %v1487, %v1519
        %v1545 = vcombine.low %v1494, %v1526
        %v1546 = vcombine.high %v1494, %v1526
        %v1547 = vcombine.low %v1503, %v1535
        %v1548 = vcombine.high %v1503, %v1535
        %v1549 = vcombine.low %v1510, %v1542
        %v1550 = vcombine.high %v1510, %v1542
        %1551 = vrot.lane.b32.xlu0 %v625, 96
        %v1552 = vpop.permute.xlu0 %1551
        %1553 = vrot.lane.b32.xlu0 %v922, 96
        %v1554 = vpop.permute.xlu0 %1553
        %1555 = vrot.lane.b32.xlu0 %v925, 96
        %v1556 = vpop.permute.xlu0 %1555
        %1557 = vrot.lane.b32.xlu0 %v928, 96
        %v1558 = vpop.permute.xlu0 %1557
        %1559 = vrot.lane.b32.xlu0 %v931, 96
        %v1560 = vpop.permute.xlu0 %1559
        %1561 = vrot.lane.b32.xlu0 %v934, 96
        %v1562 = vpop.permute.xlu0 %1561
        %1563 = vrot.lane.b32.xlu0 %v937, 96
        %v1564 = vpop.permute.xlu0 %1563
        %1565 = vrot.lane.b32.xlu0 %v940, 96
        %v1566 = vpop.permute.xlu0 %1565
        %v1575 = vcombine.low %v1552, %v1556
        %v1576 = vcombine.high %v1552, %v1556
        %v1578 = vunpack.c.l.s4 1983009808
        %v1579 = vunpack.c.0.s8 %v1578
        %v1580 = vlaneseq
        %v1581 = vshrl.u32 %v1580, 7
        %v1582 = vsub.s32 %v1579, %v1581
        %v1583 = vrot.slane %v1575, %v1582
        %v1585 = vunpack.c.l.s4 1983009808
        %v1586 = vunpack.c.0.s8 %v1585
        %v1587 = vlaneseq
        %v1588 = vshrl.u32 %v1587, 7
        %v1589 = vsub.s32 %v1586, %v1588
        %v1590 = vrot.slane %v1576, %v1589
        %v1591 = vcombine.low %v1554, %v1558
        %v1592 = vcombine.high %v1554, %v1558
        %v1594 = vunpack.c.l.s4 1983009808
        %v1595 = vunpack.c.0.s8 %v1594
        %v1596 = vlaneseq
        %v1597 = vshrl.u32 %v1596, 7
        %v1598 = vsub.s32 %v1595, %v1597
        %v1599 = vrot.slane %v1591, %v1598
        %v1601 = vunpack.c.l.s4 1983009808
        %v1602 = vunpack.c.0.s8 %v1601
        %v1603 = vlaneseq
        %v1604 = vshrl.u32 %v1603, 7
        %v1605 = vsub.s32 %v1602, %v1604
        %v1606 = vrot.slane %v1592, %v1605
        %v1607 = vcombine.low %v1560, %v1564
        %v1608 = vcombine.high %v1560, %v1564
        %v1610 = vunpack.c.l.s4 1983009808
        %v1611 = vunpack.c.0.s8 %v1610
        %v1612 = vlaneseq
        %v1613 = vshrl.u32 %v1612, 7
        %v1614 = vsub.s32 %v1611, %v1613
        %v1615 = vrot.slane %v1607, %v1614
        %v1617 = vunpack.c.l.s4 1983009808
        %v1618 = vunpack.c.0.s8 %v1617
        %v1619 = vlaneseq
        %v1620 = vshrl.u32 %v1619, 7
        %v1621 = vsub.s32 %v1618, %v1620
        %v1622 = vrot.slane %v1608, %v1621
        %v1623 = vcombine.low %v1562, %v1566
        %v1624 = vcombine.high %v1562, %v1566
        %v1626 = vunpack.c.l.s4 1983009808
        %v1627 = vunpack.c.0.s8 %v1626
        %v1628 = vlaneseq
        %v1629 = vshrl.u32 %v1628, 7
        %v1630 = vsub.s32 %v1627, %v1629
        %v1631 = vrot.slane %v1623, %v1630
        %v1633 = vunpack.c.l.s4 1983009808
        %v1634 = vunpack.c.0.s8 %v1633
        %v1635 = vlaneseq
        %v1636 = vshrl.u32 %v1635, 7
        %v1637 = vsub.s32 %v1634, %v1636
        %v1638 = vrot.slane %v1624, %v1637
        %v1639 = vcombine.low %v1583, %v1599
        %v1640 = vcombine.high %v1583, %v1599
        %v1642 = vunpack.c.l.s4 1934713408
        %v1643 = vunpack.c.0.s8 %v1642
        %v1644 = vlaneseq
        %v1645 = vshrl.u32 %v1644, 7
        %v1646 = vsub.s32 %v1643, %v1645
        %v1647 = vrot.slane %v1639, %v1646
        %v1649 = vunpack.c.l.s4 1934713408
        %v1650 = vunpack.c.0.s8 %v1649
        %v1651 = vlaneseq
        %v1652 = vshrl.u32 %v1651, 7
        %v1653 = vsub.s32 %v1650, %v1652
        %v1654 = vrot.slane %v1640, %v1653
        %v1655 = vcombine.low %v1590, %v1606
        %v1656 = vcombine.high %v1590, %v1606
        %v1658 = vunpack.c.l.s4 1934713408
        %v1659 = vunpack.c.0.s8 %v1658
        %v1660 = vlaneseq
        %v1661 = vshrl.u32 %v1660, 7
        %v1662 = vsub.s32 %v1659, %v1661
        %v1663 = vrot.slane %v1655, %v1662
        %v1665 = vunpack.c.l.s4 1934713408
        %v1666 = vunpack.c.0.s8 %v1665
        %v1667 = vlaneseq
        %v1668 = vshrl.u32 %v1667, 7
        %v1669 = vsub.s32 %v1666, %v1668
        %v1670 = vrot.slane %v1656, %v1669
        %v1671 = vcombine.low %v1615, %v1631
        %v1672 = vcombine.high %v1615, %v1631
        %v1674 = vunpack.c.l.s4 1934713408
        %v1675 = vunpack.c.0.s8 %v1674
        %v1676 = vlaneseq
        %v1677 = vshrl.u32 %v1676, 7
        %v1678 = vsub.s32 %v1675, %v1677
        %v1679 = vrot.slane %v1671, %v1678
        %v1681 = vunpack.c.l.s4 1934713408
        %v1682 = vunpack.c.0.s8 %v1681
        %v1683 = vlaneseq
        %v1684 = vshrl.u32 %v1683, 7
        %v1685 = vsub.s32 %v1682, %v1684
        %v1686 = vrot.slane %v1672, %v1685
        %v1687 = vcombine.low %v1622, %v1638
        %v1688 = vcombine.high %v1622, %v1638
        %v1690 = vunpack.c.l.s4 1934713408
        %v1691 = vunpack.c.0.s8 %v1690
        %v1692 = vlaneseq
        %v1693 = vshrl.u32 %v1692, 7
        %v1694 = vsub.s32 %v1691, %v1693
        %v1695 = vrot.slane %v1687, %v1694
        %v1697 = vunpack.c.l.s4 1934713408
        %v1698 = vunpack.c.0.s8 %v1697
        %v1699 = vlaneseq
        %v1700 = vshrl.u32 %v1699, 7
        %v1701 = vsub.s32 %v1698, %v1700
        %v1702 = vrot.slane %v1688, %v1701
        %v1703 = vcombine.low %v1647, %v1679
        %v1704 = vcombine.high %v1647, %v1679
        %v1705 = vcombine.low %v1654, %v1686
        %v1706 = vcombine.high %v1654, %v1686
        %v1707 = vcombine.low %v1663, %v1695
        %v1708 = vcombine.high %v1663, %v1695
        %v1709 = vcombine.low %v1670, %v1702
        %v1710 = vcombine.high %v1670, %v1702
        %v1711 = vcombine.low %v1703, %v1705
        %v1712 = vcombine.high %v1703, %v1705
        %v1714 = vunpack.c.l.s4 1983009808
        %v1715 = vunpack.c.0.s8 %v1714
        %v1716 = vlaneseq
        %v1717 = vshrl.u32 %v1716, 7
        %v1718 = vsub.s32 %v1715, %v1717
        %v1719 = vrot.slane %v1711, %v1718
        %v1721 = vunpack.c.l.s4 1983009808
        %v1722 = vunpack.c.0.s8 %v1721
        %v1723 = vlaneseq
        %v1724 = vshrl.u32 %v1723, 7
        %v1725 = vsub.s32 %v1722, %v1724
        %v1726 = vrot.slane %v1712, %v1725
        %v1727 = vcombine.low %v1704, %v1706
        %v1728 = vcombine.high %v1704, %v1706
        %v1730 = vunpack.c.l.s4 1983009808
        %v1731 = vunpack.c.0.s8 %v1730
        %v1732 = vlaneseq
        %v1733 = vshrl.u32 %v1732, 7
        %v1734 = vsub.s32 %v1731, %v1733
        %v1735 = vrot.slane %v1727, %v1734
        %v1737 = vunpack.c.l.s4 1983009808
        %v1738 = vunpack.c.0.s8 %v1737
        %v1739 = vlaneseq
        %v1740 = vshrl.u32 %v1739, 7
        %v1741 = vsub.s32 %v1738, %v1740
        %v1742 = vrot.slane %v1728, %v1741
        %v1743 = vcombine.low %v1707, %v1709
        %v1744 = vcombine.high %v1707, %v1709
        %v1746 = vunpack.c.l.s4 1983009808
        %v1747 = vunpack.c.0.s8 %v1746
        %v1748 = vlaneseq
        %v1749 = vshrl.u32 %v1748, 7
        %v1750 = vsub.s32 %v1747, %v1749
        %v1751 = vrot.slane %v1743, %v1750
        %v1753 = vunpack.c.l.s4 1983009808
        %v1754 = vunpack.c.0.s8 %v1753
        %v1755 = vlaneseq
        %v1756 = vshrl.u32 %v1755, 7
        %v1757 = vsub.s32 %v1754, %v1756
        %v1758 = vrot.slane %v1744, %v1757
        %v1759 = vcombine.low %v1708, %v1710
        %v1760 = vcombine.high %v1708, %v1710
        %v1762 = vunpack.c.l.s4 1983009808
        %v1763 = vunpack.c.0.s8 %v1762
        %v1764 = vlaneseq
        %v1765 = vshrl.u32 %v1764, 7
        %v1766 = vsub.s32 %v1763, %v1765
        %v1767 = vrot.slane %v1759, %v1766
        %v1769 = vunpack.c.l.s4 1983009808
        %v1770 = vunpack.c.0.s8 %v1769
        %v1771 = vlaneseq
        %v1772 = vshrl.u32 %v1771, 7
        %v1773 = vsub.s32 %v1770, %v1772
        %v1774 = vrot.slane %v1760, %v1773
        %v1775 = vcombine.low %v1719, %v1735
        %v1776 = vcombine.high %v1719, %v1735
        %v1778 = vunpack.c.l.s4 1934713408
        %v1779 = vunpack.c.0.s8 %v1778
        %v1780 = vlaneseq
        %v1781 = vshrl.u32 %v1780, 7
        %v1782 = vsub.s32 %v1779, %v1781
        %v1783 = vrot.slane %v1775, %v1782
        %v1785 = vunpack.c.l.s4 1934713408
        %v1786 = vunpack.c.0.s8 %v1785
        %v1787 = vlaneseq
        %v1788 = vshrl.u32 %v1787, 7
        %v1789 = vsub.s32 %v1786, %v1788
        %v1790 = vrot.slane %v1776, %v1789
        %v1791 = vcombine.low %v1726, %v1742
        %v1792 = vcombine.high %v1726, %v1742
        %v1794 = vunpack.c.l.s4 1934713408
        %v1795 = vunpack.c.0.s8 %v1794
        %v1796 = vlaneseq
        %v1797 = vshrl.u32 %v1796, 7
        %v1798 = vsub.s32 %v1795, %v1797
        %v1799 = vrot.slane %v1791, %v1798
        %v1801 = vunpack.c.l.s4 1934713408
        %v1802 = vunpack.c.0.s8 %v1801
        %v1803 = vlaneseq
        %v1804 = vshrl.u32 %v1803, 7
        %v1805 = vsub.s32 %v1802, %v1804
        %v1806 = vrot.slane %v1792, %v1805
        %v1807 = vcombine.low %v1751, %v1767
        %v1808 = vcombine.high %v1751, %v1767
        %v1810 = vunpack.c.l.s4 1934713408
        %v1811 = vunpack.c.0.s8 %v1810
        %v1812 = vlaneseq
        %v1813 = vshrl.u32 %v1812, 7
        %v1814 = vsub.s32 %v1811, %v1813
        %v1815 = vrot.slane %v1807, %v1814
        %v1817 = vunpack.c.l.s4 1934713408
        %v1818 = vunpack.c.0.s8 %v1817
        %v1819 = vlaneseq
        %v1820 = vshrl.u32 %v1819, 7
        %v1821 = vsub.s32 %v1818, %v1820
        %v1822 = vrot.slane %v1808, %v1821
        %v1823 = vcombine.low %v1758, %v1774
        %v1824 = vcombine.high %v1758, %v1774
        %v1826 = vunpack.c.l.s4 1934713408
        %v1827 = vunpack.c.0.s8 %v1826
        %v1828 = vlaneseq
        %v1829 = vshrl.u32 %v1828, 7
        %v1830 = vsub.s32 %v1827, %v1829
        %v1831 = vrot.slane %v1823, %v1830
        %v1833 = vunpack.c.l.s4 1934713408
        %v1834 = vunpack.c.0.s8 %v1833
        %v1835 = vlaneseq
        %v1836 = vshrl.u32 %v1835, 7
        %v1837 = vsub.s32 %v1834, %v1836
        %v1838 = vrot.slane %v1824, %v1837
        %v1839 = vcombine.low %v1783, %v1815
        %v1840 = vcombine.high %v1783, %v1815
        %v1841 = vcombine.low %v1790, %v1822
        %v1842 = vcombine.high %v1790, %v1822
        %v1843 = vcombine.low %v1799, %v1831
        %v1844 = vcombine.high %v1799, %v1831
        %v1845 = vcombine.low %v1806, %v1838
        %v1846 = vcombine.high %v1806, %v1838
        %1855 = vrot.lane.b32.xlu0 %v1839, 4
        %v1856 = vpop.permute.xlu0 %1855
        %1857 = vrot.lane.b32.xlu0 %v1840, 4
        %v1858 = vpop.permute.xlu0 %1857
        %1859 = vrot.lane.b32.xlu0 %v1841, 4
        %v1860 = vpop.permute.xlu0 %1859
        %1861 = vrot.lane.b32.xlu0 %v1842, 4
        %v1862 = vpop.permute.xlu0 %1861
        %1863 = vrot.lane.b32.xlu0 %v1843, 4
        %v1864 = vpop.permute.xlu0 %1863
        %1865 = vrot.lane.b32.xlu0 %v1844, 4
        %v1866 = vpop.permute.xlu0 %1865
        %1867 = vrot.lane.b32.xlu0 %v1845, 4
        %v1868 = vpop.permute.xlu0 %1867
        %1869 = vrot.lane.b32.xlu0 %v1846, 4
        %v1870 = vpop.permute.xlu0 %1869
        %v1879 = vsel %vm1246, %v1543, %v1856
        %v1880 = vsel %vm1246, %v1544, %v1858
        %v1881 = vsel %vm1246, %v1545, %v1860
        %v1882 = vsel %vm1246, %v1546, %v1862
        %v1883 = vsel %vm1246, %v1547, %v1864
        %v1884 = vsel %vm1246, %v1548, %v1866
        %v1885 = vsel %vm1246, %v1549, %v1868
        %v1886 = vsel %vm1246, %v1550, %v1870
        %1888 = vrot.lane.b32.xlu0 %v416, 124
        %v1889 = vpop.permute.xlu0 %1888
        %1890 = vrot.lane.b32.xlu0 %v416, 120
        %v1891 = vpop.permute.xlu0 %1890
        %1892 = vrot.lane.b32.xlu0 %v416, 116
        %v1893 = vpop.permute.xlu0 %1892
        %1894 = vrot.lane.b32.xlu0 %v416, 112
        %v1895 = vpop.permute.xlu0 %1894
        %1896 = vrot.lane.b32.xlu0 %v416, 108
        %v1897 = vpop.permute.xlu0 %1896
        %1898 = vrot.lane.b32.xlu0 %v416, 104
        %v1899 = vpop.permute.xlu0 %1898
        %1900 = vrot.lane.b32.xlu0 %v416, 100
        %v1901 = vpop.permute.xlu0 %1900
        %1902 = vrot.lane.b32.xlu0 %v416, 64
        %v1903 = vpop.permute.xlu0 %1902
        %1904 = vrot.lane.b32.xlu0 %v1889, 64
        %v1905 = vpop.permute.xlu0 %1904
        %1906 = vrot.lane.b32.xlu0 %v1891, 64
        %v1907 = vpop.permute.xlu0 %1906
        %1908 = vrot.lane.b32.xlu0 %v1893, 64
        %v1909 = vpop.permute.xlu0 %1908
        %1910 = vrot.lane.b32.xlu0 %v1895, 64
        %v1911 = vpop.permute.xlu0 %1910
        %1912 = vrot.lane.b32.xlu0 %v1897, 64
        %v1913 = vpop.permute.xlu0 %1912
        %1914 = vrot.lane.b32.xlu0 %v1899, 64
        %v1915 = vpop.permute.xlu0 %1914
        %1916 = vrot.lane.b32.xlu0 %v1901, 64
        %v1917 = vpop.permute.xlu0 %1916
        %v1926 = vcombine.low %v1903, %v1907
        %v1927 = vcombine.high %v1903, %v1907
        %v1929 = vunpack.c.l.s4 1983009808
        %v1930 = vunpack.c.0.s8 %v1929
        %v1931 = vlaneseq
        %v1932 = vshrl.u32 %v1931, 7
        %v1933 = vsub.s32 %v1930, %v1932
        %v1934 = vrot.slane %v1926, %v1933
        %v1936 = vunpack.c.l.s4 1983009808
        %v1937 = vunpack.c.0.s8 %v1936
        %v1938 = vlaneseq
        %v1939 = vshrl.u32 %v1938, 7
        %v1940 = vsub.s32 %v1937, %v1939
        %v1941 = vrot.slane %v1927, %v1940
        %v1942 = vcombine.low %v1905, %v1909
        %v1943 = vcombine.high %v1905, %v1909
        %v1945 = vunpack.c.l.s4 1983009808
        %v1946 = vunpack.c.0.s8 %v1945
        %v1947 = vlaneseq
        %v1948 = vshrl.u32 %v1947, 7
        %v1949 = vsub.s32 %v1946, %v1948
        %v1950 = vrot.slane %v1942, %v1949
        %v1952 = vunpack.c.l.s4 1983009808
        %v1953 = vunpack.c.0.s8 %v1952
        %v1954 = vlaneseq
        %v1955 = vshrl.u32 %v1954, 7
        %v1956 = vsub.s32 %v1953, %v1955
        %v1957 = vrot.slane %v1943, %v1956
        %v1958 = vcombine.low %v1911, %v1915
        %v1959 = vcombine.high %v1911, %v1915
        %v1961 = vunpack.c.l.s4 1983009808
        %v1962 = vunpack.c.0.s8 %v1961
        %v1963 = vlaneseq
        %v1964 = vshrl.u32 %v1963, 7
        %v1965 = vsub.s32 %v1962, %v1964
        %v1966 = vrot.slane %v1958, %v1965
        %v1968 = vunpack.c.l.s4 1983009808
        %v1969 = vunpack.c.0.s8 %v1968
        %v1970 = vlaneseq
        %v1971 = vshrl.u32 %v1970, 7
        %v1972 = vsub.s32 %v1969, %v1971
        %v1973 = vrot.slane %v1959, %v1972
        %v1974 = vcombine.low %v1913, %v1917
        %v1975 = vcombine.high %v1913, %v1917
        %v1977 = vunpack.c.l.s4 1983009808
        %v1978 = vunpack.c.0.s8 %v1977
        %v1979 = vlaneseq
        %v1980 = vshrl.u32 %v1979, 7
        %v1981 = vsub.s32 %v1978, %v1980
        %v1982 = vrot.slane %v1974, %v1981
        %v1984 = vunpack.c.l.s4 1983009808
        %v1985 = vunpack.c.0.s8 %v1984
        %v1986 = vlaneseq
        %v1987 = vshrl.u32 %v1986, 7
        %v1988 = vsub.s32 %v1985, %v1987
        %v1989 = vrot.slane %v1975, %v1988
        %v1990 = vcombine.low %v1934, %v1950
        %v1991 = vcombine.high %v1934, %v1950
        %v1993 = vunpack.c.l.s4 1934713408
        %v1994 = vunpack.c.0.s8 %v1993
        %v1995 = vlaneseq
        %v1996 = vshrl.u32 %v1995, 7
        %v1997 = vsub.s32 %v1994, %v1996
        %v1998 = vrot.slane %v1990, %v1997
        %v2000 = vunpack.c.l.s4 1934713408
        %v2001 = vunpack.c.0.s8 %v2000
        %v2002 = vlaneseq
        %v2003 = vshrl.u32 %v2002, 7
        %v2004 = vsub.s32 %v2001, %v2003
        %v2005 = vrot.slane %v1991, %v2004
        %v2006 = vcombine.low %v1941, %v1957
        %v2007 = vcombine.high %v1941, %v1957
        %v2009 = vunpack.c.l.s4 1934713408
        %v2010 = vunpack.c.0.s8 %v2009
        %v2011 = vlaneseq
        %v2012 = vshrl.u32 %v2011, 7
        %v2013 = vsub.s32 %v2010, %v2012
        %v2014 = vrot.slane %v2006, %v2013
        %v2016 = vunpack.c.l.s4 1934713408
        %v2017 = vunpack.c.0.s8 %v2016
        %v2018 = vlaneseq
        %v2019 = vshrl.u32 %v2018, 7
        %v2020 = vsub.s32 %v2017, %v2019
        %v2021 = vrot.slane %v2007, %v2020
        %v2022 = vcombine.low %v1966, %v1982
        %v2023 = vcombine.high %v1966, %v1982
        %v2025 = vunpack.c.l.s4 1934713408
        %v2026 = vunpack.c.0.s8 %v2025
        %v2027 = vlaneseq
        %v2028 = vshrl.u32 %v2027, 7
        %v2029 = vsub.s32 %v2026, %v2028
        %v2030 = vrot.slane %v2022, %v2029
        %v2032 = vunpack.c.l.s4 1934713408
        %v2033 = vunpack.c.0.s8 %v2032
        %v2034 = vlaneseq
        %v2035 = vshrl.u32 %v2034, 7
        %v2036 = vsub.s32 %v2033, %v2035
        %v2037 = vrot.slane %v2023, %v2036
        %v2038 = vcombine.low %v1973, %v1989
        %v2039 = vcombine.high %v1973, %v1989
        %v2041 = vunpack.c.l.s4 1934713408
        %v2042 = vunpack.c.0.s8 %v2041
        %v2043 = vlaneseq
        %v2044 = vshrl.u32 %v2043, 7
        %v2045 = vsub.s32 %v2042, %v2044
        %v2046 = vrot.slane %v2038, %v2045
        %v2048 = vunpack.c.l.s4 1934713408
        %v2049 = vunpack.c.0.s8 %v2048
        %v2050 = vlaneseq
        %v2051 = vshrl.u32 %v2050, 7
        %v2052 = vsub.s32 %v2049, %v2051
        %v2053 = vrot.slane %v2039, %v2052
        %v2054 = vcombine.low %v1998, %v2030
        %v2055 = vcombine.high %v1998, %v2030
        %v2056 = vcombine.low %v2005, %v2037
        %v2057 = vcombine.high %v2005, %v2037
        %v2058 = vcombine.low %v2014, %v2046
        %v2059 = vcombine.high %v2014, %v2046
        %v2060 = vcombine.low %v2021, %v2053
        %v2061 = vcombine.high %v2021, %v2053
        %v2062 = vcombine.low %v2054, %v2056
        %v2063 = vcombine.high %v2054, %v2056
        %v2065 = vunpack.c.l.s4 1983009808
        %v2066 = vunpack.c.0.s8 %v2065
        %v2067 = vlaneseq
        %v2068 = vshrl.u32 %v2067, 7
        %v2069 = vsub.s32 %v2066, %v2068
        %v2070 = vrot.slane %v2062, %v2069
        %v2072 = vunpack.c.l.s4 1983009808
        %v2073 = vunpack.c.0.s8 %v2072
        %v2074 = vlaneseq
        %v2075 = vshrl.u32 %v2074, 7
        %v2076 = vsub.s32 %v2073, %v2075
        %v2077 = vrot.slane %v2063, %v2076
        %v2078 = vcombine.low %v2055, %v2057
        %v2079 = vcombine.high %v2055, %v2057
        %v2081 = vunpack.c.l.s4 1983009808
        %v2082 = vunpack.c.0.s8 %v2081
        %v2083 = vlaneseq
        %v2084 = vshrl.u32 %v2083, 7
        %v2085 = vsub.s32 %v2082, %v2084
        %v2086 = vrot.slane %v2078, %v2085
        %v2088 = vunpack.c.l.s4 1983009808
        %v2089 = vunpack.c.0.s8 %v2088
        %v2090 = vlaneseq
        %v2091 = vshrl.u32 %v2090, 7
        %v2092 = vsub.s32 %v2089, %v2091
        %v2093 = vrot.slane %v2079, %v2092
        %v2094 = vcombine.low %v2058, %v2060
        %v2095 = vcombine.high %v2058, %v2060
        %v2097 = vunpack.c.l.s4 1983009808
        %v2098 = vunpack.c.0.s8 %v2097
        %v2099 = vlaneseq
        %v2100 = vshrl.u32 %v2099, 7
        %v2101 = vsub.s32 %v2098, %v2100
        %v2102 = vrot.slane %v2094, %v2101
        %v2104 = vunpack.c.l.s4 1983009808
        %v2105 = vunpack.c.0.s8 %v2104
        %v2106 = vlaneseq
        %v2107 = vshrl.u32 %v2106, 7
        %v2108 = vsub.s32 %v2105, %v2107
        %v2109 = vrot.slane %v2095, %v2108
        %v2110 = vcombine.low %v2059, %v2061
        %v2111 = vcombine.high %v2059, %v2061
        %v2113 = vunpack.c.l.s4 1983009808
        %v2114 = vunpack.c.0.s8 %v2113
        %v2115 = vlaneseq
        %v2116 = vshrl.u32 %v2115, 7
        %v2117 = vsub.s32 %v2114, %v2116
        %v2118 = vrot.slane %v2110, %v2117
        %v2120 = vunpack.c.l.s4 1983009808
        %v2121 = vunpack.c.0.s8 %v2120
        %v2122 = vlaneseq
        %v2123 = vshrl.u32 %v2122, 7
        %v2124 = vsub.s32 %v2121, %v2123
        %v2125 = vrot.slane %v2111, %v2124
        %v2126 = vcombine.low %v2070, %v2086
        %v2127 = vcombine.high %v2070, %v2086
        %v2129 = vunpack.c.l.s4 1934713408
        %v2130 = vunpack.c.0.s8 %v2129
        %v2131 = vlaneseq
        %v2132 = vshrl.u32 %v2131, 7
        %v2133 = vsub.s32 %v2130, %v2132
        %v2134 = vrot.slane %v2126, %v2133
        %v2136 = vunpack.c.l.s4 1934713408
        %v2137 = vunpack.c.0.s8 %v2136
        %v2138 = vlaneseq
        %v2139 = vshrl.u32 %v2138, 7
        %v2140 = vsub.s32 %v2137, %v2139
        %v2141 = vrot.slane %v2127, %v2140
        %v2142 = vcombine.low %v2077, %v2093
        %v2143 = vcombine.high %v2077, %v2093
        %v2145 = vunpack.c.l.s4 1934713408
        %v2146 = vunpack.c.0.s8 %v2145
        %v2147 = vlaneseq
        %v2148 = vshrl.u32 %v2147, 7
        %v2149 = vsub.s32 %v2146, %v2148
        %v2150 = vrot.slane %v2142, %v2149
        %v2152 = vunpack.c.l.s4 1934713408
        %v2153 = vunpack.c.0.s8 %v2152
        %v2154 = vlaneseq
        %v2155 = vshrl.u32 %v2154, 7
        %v2156 = vsub.s32 %v2153, %v2155
        %v2157 = vrot.slane %v2143, %v2156
        %v2158 = vcombine.low %v2102, %v2118
        %v2159 = vcombine.high %v2102, %v2118
        %v2161 = vunpack.c.l.s4 1934713408
        %v2162 = vunpack.c.0.s8 %v2161
        %v2163 = vlaneseq
        %v2164 = vshrl.u32 %v2163, 7
        %v2165 = vsub.s32 %v2162, %v2164
        %v2166 = vrot.slane %v2158, %v2165
        %v2168 = vunpack.c.l.s4 1934713408
        %v2169 = vunpack.c.0.s8 %v2168
        %v2170 = vlaneseq
        %v2171 = vshrl.u32 %v2170, 7
        %v2172 = vsub.s32 %v2169, %v2171
        %v2173 = vrot.slane %v2159, %v2172
        %v2174 = vcombine.low %v2109, %v2125
        %v2175 = vcombine.high %v2109, %v2125
        %v2177 = vunpack.c.l.s4 1934713408
        %v2178 = vunpack.c.0.s8 %v2177
        %v2179 = vlaneseq
        %v2180 = vshrl.u32 %v2179, 7
        %v2181 = vsub.s32 %v2178, %v2180
        %v2182 = vrot.slane %v2174, %v2181
        %v2184 = vunpack.c.l.s4 1934713408
        %v2185 = vunpack.c.0.s8 %v2184
        %v2186 = vlaneseq
        %v2187 = vshrl.u32 %v2186, 7
        %v2188 = vsub.s32 %v2185, %v2187
        %v2189 = vrot.slane %v2175, %v2188
        %v2190 = vcombine.low %v2134, %v2166
        %v2191 = vcombine.high %v2134, %v2166
        %v2192 = vcombine.low %v2141, %v2173
        %v2193 = vcombine.high %v2141, %v2173
        %v2194 = vcombine.low %v2150, %v2182
        %v2195 = vcombine.high %v2150, %v2182
        %v2196 = vcombine.low %v2157, %v2189
        %v2197 = vcombine.high %v2157, %v2189
        %vm2198 = vcmask 64512
        %v2200 = vsel %vm2198, %v1247, 0
        %v2203 = vsel %vm2198, %v1879, 0
        %2205 = vmatprep.subr.mxu0 0.0
        %2206 = vmatpush1.xpose.msra.mxu0 %v2203
        %2207 = vmatprep.subr.mxu0 0.0
        %2208 = vmatpush1.xpose.msra.mxu0 0.0
        %2209 = vmatprep.subr.mxu0 0.0
        %2210 = vmatpush1.xpose.msra.mxu0 0.0
        %2211 = vmatprep.subr.mxu0 0.0
        %2212 = vmatpush1.xpose.msra.mxu0 0.0
        %2213 = vmatprep.subr.mxu0 0.0
        %2214 = vmatpush1.xpose.msra.mxu0 0.0
        %2215 = vmatprep.subr.mxu0 0.0
        %2216 = vmatpush1.xpose.msra.mxu0 0.0
        %2217 = vmatprep.subr.mxu0 0.0
        %2218 = vmatpush1.xpose.msra.mxu0 0.0
        %2219 = vmatprep.subr.mxu0 0.0
        %2220 = vmatpush1.xpose.msra.mxu0 0.0
        %2221 = vmatprep.subr.mxu0 0.0
        %2222 = vmatpush1.xpose.msra.mxu0 0.0
        %2223 = vmatprep.subr.mxu0 0.0
        %2224 = vmatpush1.xpose.msra.mxu0 0.0
        %2225 = vmatprep.subr.mxu0 0.0
        %2226 = vmatpush1.xpose.msra.mxu0 0.0
        %2227 = vmatprep.subr.mxu0 0.0
        %2228 = vmatpush1.xpose.msra.mxu0 0.0
        %2229 = vmatprep.subr.mxu0 0.0
        %2230 = vmatpush1.xpose.msra.mxu0 0.0
        %2231 = vmatprep.subr.mxu0 0.0
        %2232 = vmatpush1.xpose.msra.mxu0 0.0
        %2233 = vmatprep.subr.mxu0 0.0
        %2234 = vmatpush1.xpose.msra.mxu0 0.0
        %2235 = vmatprep.subr.mxu0 0.0
        %2236 = vmatpush1.xpose.msra.mxu0 0.0
        %2237 = vmatprep.subr.mxu0 0.0
        %2238 = vmatpush1.xpose.msra.mxu0 0.0
        %2239 = vmatprep.subr.mxu0 0.0
        %2240 = vmatpush1.xpose.msra.mxu0 0.0
        %2241 = vmatprep.subr.mxu0 0.0
        %2242 = vmatpush1.xpose.msra.mxu0 0.0
        %2243 = vmatprep.subr.mxu0 0.0
        %2244 = vmatpush1.xpose.msra.mxu0 0.0
        %2245 = vmatprep.subr.mxu0 0.0
        %2246 = vmatpush1.xpose.msra.mxu0 0.0
        %2247 = vmatprep.subr.mxu0 0.0
        %2248 = vmatpush1.xpose.msra.mxu0 0.0
        %2249 = vmatprep.subr.mxu0 0.0
        %2250 = vmatpush1.xpose.msra.mxu0 0.0
        %2251 = vmatprep.subr.mxu0 0.0
        %2252 = vmatpush1.xpose.msra.mxu0 0.0
        %2253 = vmatprep.subr.mxu0 0.0
        %2254 = vmatpush1.xpose.msra.mxu0 0.0
        %2255 = vmatprep.subr.mxu0 0.0
        %2256 = vmatpush1.xpose.msra.mxu0 0.0
        %2257 = vmatprep.subr.mxu0 0.0
        %2258 = vmatpush1.xpose.msra.mxu0 0.0
        %2259 = vmatprep.subr.mxu0 0.0
        %2260 = vmatpush1.xpose.msra.mxu0 0.0
        %2261 = vmatprep.subr.mxu0 0.0
        %2262 = vmatpush1.xpose.msra.mxu0 0.0
        %2263 = vmatprep.subr.mxu0 0.0
        %2264 = vmatpush1.xpose.msra.mxu0 0.0
        %2265 = vmatprep.subr.mxu0 0.0
        %2266 = vmatpush1.xpose.msra.mxu0 0.0
        %2267 = vmatprep.subr.mxu0 0.0
        %2268 = vmatpush1.xpose.msra.mxu0 0.0
        %2269 = vmatprep.mubr.f32.mxu0 0.0
        %2270 = vmatmul.mubr.f32.gmra.mrb[0].mxu0 %v2200
        %v2271 = vpop.f32.mrb[0].mxu0
        %v2272 = vadd.f32 0.0, %v2271
        %v2273 = vpop.f32.mrb[0].mxu0
        %2274 = vdwg.mxu0
        %v2276 = vsel %vm2198, %v1248, 0
        %v2279 = vsel %vm2198, %v1880, 0
        %2281 = vmatprep.subr.mxu0 0.0
        %2282 = vmatpush1.xpose.msra.mxu0 %v2279
        %2283 = vmatprep.subr.mxu0 0.0
        %2284 = vmatpush1.xpose.msra.mxu0 0.0
        %2285 = vmatprep.subr.mxu0 0.0
        %2286 = vmatpush1.xpose.msra.mxu0 0.0
        %2287 = vmatprep.subr.mxu0 0.0
        %2288 = vmatpush1.xpose.msra.mxu0 0.0
        %2289 = vmatprep.subr.mxu0 0.0
        %2290 = vmatpush1.xpose.msra.mxu0 0.0
        %2291 = vmatprep.subr.mxu0 0.0
        %2292 = vmatpush1.xpose.msra.mxu0 0.0
        %2293 = vmatprep.subr.mxu0 0.0
        %2294 = vmatpush1.xpose.msra.mxu0 0.0
        %2295 = vmatprep.subr.mxu0 0.0
        %2296 = vmatpush1.xpose.msra.mxu0 0.0
        %2297 = vmatprep.subr.mxu0 0.0
        %2298 = vmatpush1.xpose.msra.mxu0 0.0
        %2299 = vmatprep.subr.mxu0 0.0
        %2300 = vmatpush1.xpose.msra.mxu0 0.0
        %2301 = vmatprep.subr.mxu0 0.0
        %2302 = vmatpush1.xpose.msra.mxu0 0.0
        %2303 = vmatprep.subr.mxu0 0.0
        %2304 = vmatpush1.xpose.msra.mxu0 0.0
        %2305 = vmatprep.subr.mxu0 0.0
        %2306 = vmatpush1.xpose.msra.mxu0 0.0
        %2307 = vmatprep.subr.mxu0 0.0
        %2308 = vmatpush1.xpose.msra.mxu0 0.0
        %2309 = vmatprep.subr.mxu0 0.0
        %2310 = vmatpush1.xpose.msra.mxu0 0.0
        %2311 = vmatprep.subr.mxu0 0.0
        %2312 = vmatpush1.xpose.msra.mxu0 0.0
        %2313 = vmatprep.subr.mxu0 0.0
        %2314 = vmatpush1.xpose.msra.mxu0 0.0
        %2315 = vmatprep.subr.mxu0 0.0
        %2316 = vmatpush1.xpose.msra.mxu0 0.0
        %2317 = vmatprep.subr.mxu0 0.0
        %2318 = vmatpush1.xpose.msra.mxu0 0.0
        %2319 = vmatprep.subr.mxu0 0.0
        %2320 = vmatpush1.xpose.msra.mxu0 0.0
        %2321 = vmatprep.subr.mxu0 0.0
        %2322 = vmatpush1.xpose.msra.mxu0 0.0
        %2323 = vmatprep.subr.mxu0 0.0
        %2324 = vmatpush1.xpose.msra.mxu0 0.0
        %2325 = vmatprep.subr.mxu0 0.0
        %2326 = vmatpush1.xpose.msra.mxu0 0.0
        %2327 = vmatprep.subr.mxu0 0.0
        %2328 = vmatpush1.xpose.msra.mxu0 0.0
        %2329 = vmatprep.subr.mxu0 0.0
        %2330 = vmatpush1.xpose.msra.mxu0 0.0
        %2331 = vmatprep.subr.mxu0 0.0
        %2332 = vmatpush1.xpose.msra.mxu0 0.0
        %2333 = vmatprep.subr.mxu0 0.0
        %2334 = vmatpush1.xpose.msra.mxu0 0.0
        %2335 = vmatprep.subr.mxu0 0.0
        %2336 = vmatpush1.xpose.msra.mxu0 0.0
        %2337 = vmatprep.subr.mxu0 0.0
        %2338 = vmatpush1.xpose.msra.mxu0 0.0
        %2339 = vmatprep.subr.mxu0 0.0
        %2340 = vmatpush1.xpose.msra.mxu0 0.0
        %2341 = vmatprep.subr.mxu0 0.0
        %2342 = vmatpush1.xpose.msra.mxu0 0.0
        %2343 = vmatprep.subr.mxu0 0.0
        %2344 = vmatpush1.xpose.msra.mxu0 0.0
        %2345 = vmatprep.mubr.f32.mxu0 0.0
        %2346 = vmatmul.mubr.f32.gmra.mrb[0].mxu0 %v2276
        %v2347 = vpop.f32.mrb[0].mxu0
        %v2348 = vadd.f32 0.0, %v2347
        %v2349 = vpop.f32.mrb[0].mxu0
        %2350 = vdwg.mxu0
        %v2352 = vsel %vm2198, %v1249, 0
        %v2355 = vsel %vm2198, %v1881, 0
        %2357 = vmatprep.subr.mxu0 0.0
        %2358 = vmatpush1.xpose.msra.mxu0 %v2355
        %2359 = vmatprep.subr.mxu0 0.0
        %2360 = vmatpush1.xpose.msra.mxu0 0.0
        %2361 = vmatprep.subr.mxu0 0.0
        %2362 = vmatpush1.xpose.msra.mxu0 0.0
        %2363 = vmatprep.subr.mxu0 0.0
        %2364 = vmatpush1.xpose.msra.mxu0 0.0
        %2365 = vmatprep.subr.mxu0 0.0
        %2366 = vmatpush1.xpose.msra.mxu0 0.0
        %2367 = vmatprep.subr.mxu0 0.0
        %2368 = vmatpush1.xpose.msra.mxu0 0.0
        %2369 = vmatprep.subr.mxu0 0.0
        %2370 = vmatpush1.xpose.msra.mxu0 0.0
        %2371 = vmatprep.subr.mxu0 0.0
        %2372 = vmatpush1.xpose.msra.mxu0 0.0
        %2373 = vmatprep.subr.mxu0 0.0
        %2374 = vmatpush1.xpose.msra.mxu0 0.0
        %2375 = vmatprep.subr.mxu0 0.0
        %2376 = vmatpush1.xpose.msra.mxu0 0.0
        %2377 = vmatprep.subr.mxu0 0.0
        %2378 = vmatpush1.xpose.msra.mxu0 0.0
        %2379 = vmatprep.subr.mxu0 0.0
        %2380 = vmatpush1.xpose.msra.mxu0 0.0
        %2381 = vmatprep.subr.mxu0 0.0
        %2382 = vmatpush1.xpose.msra.mxu0 0.0
        %2383 = vmatprep.subr.mxu0 0.0
        %2384 = vmatpush1.xpose.msra.mxu0 0.0
        %2385 = vmatprep.subr.mxu0 0.0
        %2386 = vmatpush1.xpose.msra.mxu0 0.0
        %2387 = vmatprep.subr.mxu0 0.0
        %2388 = vmatpush1.xpose.msra.mxu0 0.0
        %2389 = vmatprep.subr.mxu0 0.0
        %2390 = vmatpush1.xpose.msra.mxu0 0.0
        %2391 = vmatprep.subr.mxu0 0.0
        %2392 = vmatpush1.xpose.msra.mxu0 0.0
        %2393 = vmatprep.subr.mxu0 0.0
        %2394 = vmatpush1.xpose.msra.mxu0 0.0
        %2395 = vmatprep.subr.mxu0 0.0
        %2396 = vmatpush1.xpose.msra.mxu0 0.0
        %2397 = vmatprep.subr.mxu0 0.0
        %2398 = vmatpush1.xpose.msra.mxu0 0.0
        %2399 = vmatprep.subr.mxu0 0.0
        %2400 = vmatpush1.xpose.msra.mxu0 0.0
        %2401 = vmatprep.subr.mxu0 0.0
        %2402 = vmatpush1.xpose.msra.mxu0 0.0
        %2403 = vmatprep.subr.mxu0 0.0
        %2404 = vmatpush1.xpose.msra.mxu0 0.0
        %2405 = vmatprep.subr.mxu0 0.0
        %2406 = vmatpush1.xpose.msra.mxu0 0.0
        %2407 = vmatprep.subr.mxu0 0.0
        %2408 = vmatpush1.xpose.msra.mxu0 0.0
        %2409 = vmatprep.subr.mxu0 0.0
        %2410 = vmatpush1.xpose.msra.mxu0 0.0
        %2411 = vmatprep.subr.mxu0 0.0
        %2412 = vmatpush1.xpose.msra.mxu0 0.0
        %2413 = vmatprep.subr.mxu0 0.0
        %2414 = vmatpush1.xpose.msra.mxu0 0.0
        %2415 = vmatprep.subr.mxu0 0.0
        %2416 = vmatpush1.xpose.msra.mxu0 0.0
        %2417 = vmatprep.subr.mxu0 0.0
        %2418 = vmatpush1.xpose.msra.mxu0 0.0
        %2419 = vmatprep.subr.mxu0 0.0
        %2420 = vmatpush1.xpose.msra.mxu0 0.0
        %2421 = vmatprep.mubr.f32.mxu0 0.0
        %2422 = vmatmul.mubr.f32.gmra.mrb[0].mxu0 %v2352
        %v2423 = vpop.f32.mrb[0].mxu0
        %v2424 = vadd.f32 0.0, %v2423
        %v2425 = vpop.f32.mrb[0].mxu0
        %2426 = vdwg.mxu0
        %v2428 = vsel %vm2198, %v1250, 0
        %v2431 = vsel %vm2198, %v1882, 0
        %2433 = vmatprep.subr.mxu0 0.0
        %2434 = vmatpush1.xpose.msra.mxu0 %v2431
        %2435 = vmatprep.subr.mxu0 0.0
        %2436 = vmatpush1.xpose.msra.mxu0 0.0
        %2437 = vmatprep.subr.mxu0 0.0
        %2438 = vmatpush1.xpose.msra.mxu0 0.0
        %2439 = vmatprep.subr.mxu0 0.0
        %2440 = vmatpush1.xpose.msra.mxu0 0.0
        %2441 = vmatprep.subr.mxu0 0.0
        %2442 = vmatpush1.xpose.msra.mxu0 0.0
        %2443 = vmatprep.subr.mxu0 0.0
        %2444 = vmatpush1.xpose.msra.mxu0 0.0
        %2445 = vmatprep.subr.mxu0 0.0
        %2446 = vmatpush1.xpose.msra.mxu0 0.0
        %2447 = vmatprep.subr.mxu0 0.0
        %2448 = vmatpush1.xpose.msra.mxu0 0.0
        %2449 = vmatprep.subr.mxu0 0.0
        %2450 = vmatpush1.xpose.msra.mxu0 0.0
        %2451 = vmatprep.subr.mxu0 0.0
        %2452 = vmatpush1.xpose.msra.mxu0 0.0
        %2453 = vmatprep.subr.mxu0 0.0
        %2454 = vmatpush1.xpose.msra.mxu0 0.0
        %2455 = vmatprep.subr.mxu0 0.0
        %2456 = vmatpush1.xpose.msra.mxu0 0.0
        %2457 = vmatprep.subr.mxu0 0.0
        %2458 = vmatpush1.xpose.msra.mxu0 0.0
        %2459 = vmatprep.subr.mxu0 0.0
        %2460 = vmatpush1.xpose.msra.mxu0 0.0
        %2461 = vmatprep.subr.mxu0 0.0
        %2462 = vmatpush1.xpose.msra.mxu0 0.0
        %2463 = vmatprep.subr.mxu0 0.0
        %2464 = vmatpush1.xpose.msra.mxu0 0.0
        %2465 = vmatprep.subr.mxu0 0.0
        %2466 = vmatpush1.xpose.msra.mxu0 0.0
        %2467 = vmatprep.subr.mxu0 0.0
        %2468 = vmatpush1.xpose.msra.mxu0 0.0
        %2469 = vmatprep.subr.mxu0 0.0
        %2470 = vmatpush1.xpose.msra.mxu0 0.0
        %2471 = vmatprep.subr.mxu0 0.0
        %2472 = vmatpush1.xpose.msra.mxu0 0.0
        %2473 = vmatprep.subr.mxu0 0.0
        %2474 = vmatpush1.xpose.msra.mxu0 0.0
        %2475 = vmatprep.subr.mxu0 0.0
        %2476 = vmatpush1.xpose.msra.mxu0 0.0
        %2477 = vmatprep.subr.mxu0 0.0
        %2478 = vmatpush1.xpose.msra.mxu0 0.0
        %2479 = vmatprep.subr.mxu0 0.0
        %2480 = vmatpush1.xpose.msra.mxu0 0.0
        %2481 = vmatprep.subr.mxu0 0.0
        %2482 = vmatpush1.xpose.msra.mxu0 0.0
        %2483 = vmatprep.subr.mxu0 0.0
        %2484 = vmatpush1.xpose.msra.mxu0 0.0
        %2485 = vmatprep.subr.mxu0 0.0
        %2486 = vmatpush1.xpose.msra.mxu0 0.0
        %2487 = vmatprep.subr.mxu0 0.0
        %2488 = vmatpush1.xpose.msra.mxu0 0.0
        %2489 = vmatprep.subr.mxu0 0.0
        %2490 = vmatpush1.xpose.msra.mxu0 0.0
        %2491 = vmatprep.subr.mxu0 0.0
        %2492 = vmatpush1.xpose.msra.mxu0 0.0
        %2493 = vmatprep.subr.mxu0 0.0
        %2494 = vmatpush1.xpose.msra.mxu0 0.0
        %2495 = vmatprep.subr.mxu0 0.0
        %2496 = vmatpush1.xpose.msra.mxu0 0.0
        %2497 = vmatprep.mubr.f32.mxu0 0.0
        %2498 = vmatmul.mubr.f32.gmra.mrb[0].mxu0 %v2428
        %v2499 = vpop.f32.mrb[0].mxu0
        %v2500 = vadd.f32 0.0, %v2499
        %v2501 = vpop.f32.mrb[0].mxu0
        %2502 = vdwg.mxu0
        %v2504 = vsel %vm2198, %v1251, 0
        %v2507 = vsel %vm2198, %v1883, 0
        %2509 = vmatprep.subr.mxu0 0.0
        %2510 = vmatpush1.xpose.msra.mxu0 %v2507
        %2511 = vmatprep.subr.mxu0 0.0
        %2512 = vmatpush1.xpose.msra.mxu0 0.0
        %2513 = vmatprep.subr.mxu0 0.0
        %2514 = vmatpush1.xpose.msra.mxu0 0.0
        %2515 = vmatprep.subr.mxu0 0.0
        %2516 = vmatpush1.xpose.msra.mxu0 0.0
        %2517 = vmatprep.subr.mxu0 0.0
        %2518 = vmatpush1.xpose.msra.mxu0 0.0
        %2519 = vmatprep.subr.mxu0 0.0
        %2520 = vmatpush1.xpose.msra.mxu0 0.0
        %2521 = vmatprep.subr.mxu0 0.0
        %2522 = vmatpush1.xpose.msra.mxu0 0.0
        %2523 = vmatprep.subr.mxu0 0.0
        %2524 = vmatpush1.xpose.msra.mxu0 0.0
        %2525 = vmatprep.subr.mxu0 0.0
        %2526 = vmatpush1.xpose.msra.mxu0 0.0
        %2527 = vmatprep.subr.mxu0 0.0
        %2528 = vmatpush1.xpose.msra.mxu0 0.0
        %2529 = vmatprep.subr.mxu0 0.0
        %2530 = vmatpush1.xpose.msra.mxu0 0.0
        %2531 = vmatprep.subr.mxu0 0.0
        %2532 = vmatpush1.xpose.msra.mxu0 0.0
        %2533 = vmatprep.subr.mxu0 0.0
        %2534 = vmatpush1.xpose.msra.mxu0 0.0
        %2535 = vmatprep.subr.mxu0 0.0
        %2536 = vmatpush1.xpose.msra.mxu0 0.0
        %2537 = vmatprep.subr.mxu0 0.0
        %2538 = vmatpush1.xpose.msra.mxu0 0.0
        %2539 = vmatprep.subr.mxu0 0.0
        %2540 = vmatpush1.xpose.msra.mxu0 0.0
        %2541 = vmatprep.subr.mxu0 0.0
        %2542 = vmatpush1.xpose.msra.mxu0 0.0
        %2543 = vmatprep.subr.mxu0 0.0
        %2544 = vmatpush1.xpose.msra.mxu0 0.0
        %2545 = vmatprep.subr.mxu0 0.0
        %2546 = vmatpush1.xpose.msra.mxu0 0.0
        %2547 = vmatprep.subr.mxu0 0.0
        %2548 = vmatpush1.xpose.msra.mxu0 0.0
        %2549 = vmatprep.subr.mxu0 0.0
        %2550 = vmatpush1.xpose.msra.mxu0 0.0
        %2551 = vmatprep.subr.mxu0 0.0
        %2552 = vmatpush1.xpose.msra.mxu0 0.0
        %2553 = vmatprep.subr.mxu0 0.0
        %2554 = vmatpush1.xpose.msra.mxu0 0.0
        %2555 = vmatprep.subr.mxu0 0.0
        %2556 = vmatpush1.xpose.msra.mxu0 0.0
        %2557 = vmatprep.subr.mxu0 0.0
        %2558 = vmatpush1.xpose.msra.mxu0 0.0
        %2559 = vmatprep.subr.mxu0 0.0
        %2560 = vmatpush1.xpose.msra.mxu0 0.0
        %2561 = vmatprep.subr.mxu0 0.0
        %2562 = vmatpush1.xpose.msra.mxu0 0.0
        %2563 = vmatprep.subr.mxu0 0.0
        %2564 = vmatpush1.xpose.msra.mxu0 0.0
        %2565 = vmatprep.subr.mxu0 0.0
        %2566 = vmatpush1.xpose.msra.mxu0 0.0
        %2567 = vmatprep.subr.mxu0 0.0
        %2568 = vmatpush1.xpose.msra.mxu0 0.0
        %2569 = vmatprep.subr.mxu0 0.0
        %2570 = vmatpush1.xpose.msra.mxu0 0.0
        %2571 = vmatprep.subr.mxu0 0.0
        %2572 = vmatpush1.xpose.msra.mxu0 0.0
        %2573 = vmatprep.mubr.f32.mxu0 0.0
        %2574 = vmatmul.mubr.f32.gmra.mrb[0].mxu0 %v2504
        %v2575 = vpop.f32.mrb[0].mxu0
        %v2576 = vadd.f32 0.0, %v2575
        %v2577 = vpop.f32.mrb[0].mxu0
        %2578 = vdwg.mxu0
        %v2580 = vsel %vm2198, %v1252, 0
        %v2583 = vsel %vm2198, %v1884, 0
        %2585 = vmatprep.subr.mxu0 0.0
        %2586 = vmatpush1.xpose.msra.mxu0 %v2583
        %2587 = vmatprep.subr.mxu0 0.0
        %2588 = vmatpush1.xpose.msra.mxu0 0.0
        %2589 = vmatprep.subr.mxu0 0.0
        %2590 = vmatpush1.xpose.msra.mxu0 0.0
        %2591 = vmatprep.subr.mxu0 0.0
        %2592 = vmatpush1.xpose.msra.mxu0 0.0
        %2593 = vmatprep.subr.mxu0 0.0
        %2594 = vmatpush1.xpose.msra.mxu0 0.0
        %2595 = vmatprep.subr.mxu0 0.0
        %2596 = vmatpush1.xpose.msra.mxu0 0.0
        %2597 = vmatprep.subr.mxu0 0.0
        %2598 = vmatpush1.xpose.msra.mxu0 0.0
        %2599 = vmatprep.subr.mxu0 0.0
        %2600 = vmatpush1.xpose.msra.mxu0 0.0
        %2601 = vmatprep.subr.mxu0 0.0
        %2602 = vmatpush1.xpose.msra.mxu0 0.0
        %2603 = vmatprep.subr.mxu0 0.0
        %2604 = vmatpush1.xpose.msra.mxu0 0.0
        %2605 = vmatprep.subr.mxu0 0.0
        %2606 = vmatpush1.xpose.msra.mxu0 0.0
        %2607 = vmatprep.subr.mxu0 0.0
        %2608 = vmatpush1.xpose.msra.mxu0 0.0
        %2609 = vmatprep.subr.mxu0 0.0
        %2610 = vmatpush1.xpose.msra.mxu0 0.0
        %2611 = vmatprep.subr.mxu0 0.0
        %2612 = vmatpush1.xpose.msra.mxu0 0.0
        %2613 = vmatprep.subr.mxu0 0.0
        %2614 = vmatpush1.xpose.msra.mxu0 0.0
        %2615 = vmatprep.subr.mxu0 0.0
        %2616 = vmatpush1.xpose.msra.mxu0 0.0
        %2617 = vmatprep.subr.mxu0 0.0
        %2618 = vmatpush1.xpose.msra.mxu0 0.0
        %2619 = vmatprep.subr.mxu0 0.0
        %2620 = vmatpush1.xpose.msra.mxu0 0.0
        %2621 = vmatprep.subr.mxu0 0.0
        %2622 = vmatpush1.xpose.msra.mxu0 0.0
        %2623 = vmatprep.subr.mxu0 0.0
        %2624 = vmatpush1.xpose.msra.mxu0 0.0
        %2625 = vmatprep.subr.mxu0 0.0
        %2626 = vmatpush1.xpose.msra.mxu0 0.0
        %2627 = vmatprep.subr.mxu0 0.0
        %2628 = vmatpush1.xpose.msra.mxu0 0.0
        %2629 = vmatprep.subr.mxu0 0.0
        %2630 = vmatpush1.xpose.msra.mxu0 0.0
        %2631 = vmatprep.subr.mxu0 0.0
        %2632 = vmatpush1.xpose.msra.mxu0 0.0
        %2633 = vmatprep.subr.mxu0 0.0
        %2634 = vmatpush1.xpose.msra.mxu0 0.0
        %2635 = vmatprep.subr.mxu0 0.0
        %2636 = vmatpush1.xpose.msra.mxu0 0.0
        %2637 = vmatprep.subr.mxu0 0.0
        %2638 = vmatpush1.xpose.msra.mxu0 0.0
        %2639 = vmatprep.subr.mxu0 0.0
        %2640 = vmatpush1.xpose.msra.mxu0 0.0
        %2641 = vmatprep.subr.mxu0 0.0
        %2642 = vmatpush1.xpose.msra.mxu0 0.0
        %2643 = vmatprep.subr.mxu0 0.0
        %2644 = vmatpush1.xpose.msra.mxu0 0.0
        %2645 = vmatprep.subr.mxu0 0.0
        %2646 = vmatpush1.xpose.msra.mxu0 0.0
        %2647 = vmatprep.subr.mxu0 0.0
        %2648 = vmatpush1.xpose.msra.mxu0 0.0
        %2649 = vmatprep.mubr.f32.mxu0 0.0
        %2650 = vmatmul.mubr.f32.gmra.mrb[0].mxu0 %v2580
        %v2651 = vpop.f32.mrb[0].mxu0
        %v2652 = vadd.f32 0.0, %v2651
        %v2653 = vpop.f32.mrb[0].mxu0
        %2654 = vdwg.mxu0
        %v2656 = vsel %vm2198, %v1253, 0
        %v2659 = vsel %vm2198, %v1885, 0
        %2661 = vmatprep.subr.mxu0 0.0
        %2662 = vmatpush1.xpose.msra.mxu0 %v2659
        %2663 = vmatprep.subr.mxu0 0.0
        %2664 = vmatpush1.xpose.msra.mxu0 0.0
        %2665 = vmatprep.subr.mxu0 0.0
        %2666 = vmatpush1.xpose.msra.mxu0 0.0
        %2667 = vmatprep.subr.mxu0 0.0
        %2668 = vmatpush1.xpose.msra.mxu0 0.0
        %2669 = vmatprep.subr.mxu0 0.0
        %2670 = vmatpush1.xpose.msra.mxu0 0.0
        %2671 = vmatprep.subr.mxu0 0.0
        %2672 = vmatpush1.xpose.msra.mxu0 0.0
        %2673 = vmatprep.subr.mxu0 0.0
        %2674 = vmatpush1.xpose.msra.mxu0 0.0
        %2675 = vmatprep.subr.mxu0 0.0
        %2676 = vmatpush1.xpose.msra.mxu0 0.0
        %2677 = vmatprep.subr.mxu0 0.0
        %2678 = vmatpush1.xpose.msra.mxu0 0.0
        %2679 = vmatprep.subr.mxu0 0.0
        %2680 = vmatpush1.xpose.msra.mxu0 0.0
        %2681 = vmatprep.subr.mxu0 0.0
        %2682 = vmatpush1.xpose.msra.mxu0 0.0
        %2683 = vmatprep.subr.mxu0 0.0
        %2684 = vmatpush1.xpose.msra.mxu0 0.0
        %2685 = vmatprep.subr.mxu0 0.0
        %2686 = vmatpush1.xpose.msra.mxu0 0.0
        %2687 = vmatprep.subr.mxu0 0.0
        %2688 = vmatpush1.xpose.msra.mxu0 0.0
        %2689 = vmatprep.subr.mxu0 0.0
        %2690 = vmatpush1.xpose.msra.mxu0 0.0
        %2691 = vmatprep.subr.mxu0 0.0
        %2692 = vmatpush1.xpose.msra.mxu0 0.0
        %2693 = vmatprep.subr.mxu0 0.0
        %2694 = vmatpush1.xpose.msra.mxu0 0.0
        %2695 = vmatprep.subr.mxu0 0.0
        %2696 = vmatpush1.xpose.msra.mxu0 0.0
        %2697 = vmatprep.subr.mxu0 0.0
        %2698 = vmatpush1.xpose.msra.mxu0 0.0
        %2699 = vmatprep.subr.mxu0 0.0
        %2700 = vmatpush1.xpose.msra.mxu0 0.0
        %2701 = vmatprep.subr.mxu0 0.0
        %2702 = vmatpush1.xpose.msra.mxu0 0.0
        %2703 = vmatprep.subr.mxu0 0.0
        %2704 = vmatpush1.xpose.msra.mxu0 0.0
        %2705 = vmatprep.subr.mxu0 0.0
        %2706 = vmatpush1.xpose.msra.mxu0 0.0
        %2707 = vmatprep.subr.mxu0 0.0
        %2708 = vmatpush1.xpose.msra.mxu0 0.0
        %2709 = vmatprep.subr.mxu0 0.0
        %2710 = vmatpush1.xpose.msra.mxu0 0.0
        %2711 = vmatprep.subr.mxu0 0.0
        %2712 = vmatpush1.xpose.msra.mxu0 0.0
        %2713 = vmatprep.subr.mxu0 0.0
        %2714 = vmatpush1.xpose.msra.mxu0 0.0
        %2715 = vmatprep.subr.mxu0 0.0
        %2716 = vmatpush1.xpose.msra.mxu0 0.0
        %2717 = vmatprep.subr.mxu0 0.0
        %2718 = vmatpush1.xpose.msra.mxu0 0.0
        %2719 = vmatprep.subr.mxu0 0.0
        %2720 = vmatpush1.xpose.msra.mxu0 0.0
        %2721 = vmatprep.subr.mxu0 0.0
        %2722 = vmatpush1.xpose.msra.mxu0 0.0
        %2723 = vmatprep.subr.mxu0 0.0
        %2724 = vmatpush1.xpose.msra.mxu0 0.0
        %2725 = vmatprep.mubr.f32.mxu0 0.0
        %2726 = vmatmul.mubr.f32.gmra.mrb[0].mxu0 %v2656
        %v2727 = vpop.f32.mrb[0].mxu0
        %v2728 = vadd.f32 0.0, %v2727
        %v2729 = vpop.f32.mrb[0].mxu0
        %2730 = vdwg.mxu0
        %v2732 = vsel %vm2198, %v1254, 0
        %v2735 = vsel %vm2198, %v1886, 0
        %2737 = vmatprep.subr.mxu0 0.0
        %2738 = vmatpush1.xpose.msra.mxu0 %v2735
        %2739 = vmatprep.subr.mxu0 0.0
        %2740 = vmatpush1.xpose.msra.mxu0 0.0
        %2741 = vmatprep.subr.mxu0 0.0
        %2742 = vmatpush1.xpose.msra.mxu0 0.0
        %2743 = vmatprep.subr.mxu0 0.0
        %2744 = vmatpush1.xpose.msra.mxu0 0.0
        %2745 = vmatprep.subr.mxu0 0.0
        %2746 = vmatpush1.xpose.msra.mxu0 0.0
        %2747 = vmatprep.subr.mxu0 0.0
        %2748 = vmatpush1.xpose.msra.mxu0 0.0
        %2749 = vmatprep.subr.mxu0 0.0
        %2750 = vmatpush1.xpose.msra.mxu0 0.0
        %2751 = vmatprep.subr.mxu0 0.0
        %2752 = vmatpush1.xpose.msra.mxu0 0.0
        %2753 = vmatprep.subr.mxu0 0.0
        %2754 = vmatpush1.xpose.msra.mxu0 0.0
        %2755 = vmatprep.subr.mxu0 0.0
        %2756 = vmatpush1.xpose.msra.mxu0 0.0
        %2757 = vmatprep.subr.mxu0 0.0
        %2758 = vmatpush1.xpose.msra.mxu0 0.0
        %2759 = vmatprep.subr.mxu0 0.0
        %2760 = vmatpush1.xpose.msra.mxu0 0.0
        %2761 = vmatprep.subr.mxu0 0.0
        %2762 = vmatpush1.xpose.msra.mxu0 0.0
        %2763 = vmatprep.subr.mxu0 0.0
        %2764 = vmatpush1.xpose.msra.mxu0 0.0
        %2765 = vmatprep.subr.mxu0 0.0
        %2766 = vmatpush1.xpose.msra.mxu0 0.0
        %2767 = vmatprep.subr.mxu0 0.0
        %2768 = vmatpush1.xpose.msra.mxu0 0.0
        %2769 = vmatprep.subr.mxu0 0.0
        %2770 = vmatpush1.xpose.msra.mxu0 0.0
        %2771 = vmatprep.subr.mxu0 0.0
        %2772 = vmatpush1.xpose.msra.mxu0 0.0
        %2773 = vmatprep.subr.mxu0 0.0
        %2774 = vmatpush1.xpose.msra.mxu0 0.0
        %2775 = vmatprep.subr.mxu0 0.0
        %2776 = vmatpush1.xpose.msra.mxu0 0.0
        %2777 = vmatprep.subr.mxu0 0.0
        %2778 = vmatpush1.xpose.msra.mxu0 0.0
        %2779 = vmatprep.subr.mxu0 0.0
        %2780 = vmatpush1.xpose.msra.mxu0 0.0
        %2781 = vmatprep.subr.mxu0 0.0
        %2782 = vmatpush1.xpose.msra.mxu0 0.0
        %2783 = vmatprep.subr.mxu0 0.0
        %2784 = vmatpush1.xpose.msra.mxu0 0.0
        %2785 = vmatprep.subr.mxu0 0.0
        %2786 = vmatpush1.xpose.msra.mxu0 0.0
        %2787 = vmatprep.subr.mxu0 0.0
        %2788 = vmatpush1.xpose.msra.mxu0 0.0
        %2789 = vmatprep.subr.mxu0 0.0
        %2790 = vmatpush1.xpose.msra.mxu0 0.0
        %2791 = vmatprep.subr.mxu0 0.0
        %2792 = vmatpush1.xpose.msra.mxu0 0.0
        %2793 = vmatprep.subr.mxu0 0.0
        %2794 = vmatpush1.xpose.msra.mxu0 0.0
        %2795 = vmatprep.subr.mxu0 0.0
        %2796 = vmatpush1.xpose.msra.mxu0 0.0
        %2797 = vmatprep.subr.mxu0 0.0
        %2798 = vmatpush1.xpose.msra.mxu0 0.0
        %2799 = vmatprep.subr.mxu0 0.0
        %2800 = vmatpush1.xpose.msra.mxu0 0.0
        %2801 = vmatprep.mubr.f32.mxu0 0.0
        %2802 = vmatmul.mubr.f32.gmra.mrb[0].mxu0 %v2732
        %v2803 = vpop.f32.mrb[0].mxu0
        %v2804 = vadd.f32 0.0, %v2803
        %v2805 = vpop.f32.mrb[0].mxu0
        %2806 = vdwg.mxu0
        %v2807 = vld [vmem:[%s291] sm:$0xff]
        %v2808 = vmul.f32 %v2272, %v2807
        %v2809 = vmul.f32 %v2348, %v2807
        %v2810 = vmul.f32 %v2424, %v2807
        %v2811 = vmul.f32 %v2500, %v2807
        %v2812 = vmul.f32 %v2576, %v2807
        %v2813 = vmul.f32 %v2652, %v2807
        %v2814 = vmul.f32 %v2728, %v2807
        %v2815 = vmul.f32 %v2804, %v2807
        %v2816 = vsel %vm2198, %v2808, -inf
        %2817 = vmax.xlane.f32.xlu0 %v2816
        %v2818 = vpop.xlane.xlu0 %2817
        %v2819 = vsel %vm2198, %v2809, -inf
        %2820 = vmax.xlane.f32.xlu0 %v2819
        %v2821 = vpop.xlane.xlu0 %2820
        %v2822 = vsel %vm2198, %v2810, -inf
        %2823 = vmax.xlane.f32.xlu0 %v2822
        %v2824 = vpop.xlane.xlu0 %2823
        %v2825 = vsel %vm2198, %v2811, -inf
        %2826 = vmax.xlane.f32.xlu0 %v2825
        %v2827 = vpop.xlane.xlu0 %2826
        %v2828 = vsel %vm2198, %v2812, -inf
        %2829 = vmax.xlane.f32.xlu0 %v2828
        %v2830 = vpop.xlane.xlu0 %2829
        %v2831 = vsel %vm2198, %v2813, -inf
        %2832 = vmax.xlane.f32.xlu0 %v2831
        %v2833 = vpop.xlane.xlu0 %2832
        %v2834 = vsel %vm2198, %v2814, -inf
        %2835 = vmax.xlane.f32.xlu0 %v2834
        %v2836 = vpop.xlane.xlu0 %2835
        %v2837 = vsel %vm2198, %v2815, -inf
        %2838 = vmax.xlane.f32.xlu0 %v2837
        %v2839 = vpop.xlane.xlu0 %2838
        %v2840 = vsub.f32 %v2808, %v2818
        %v2841 = vsub.f32 %v2809, %v2821
        %v2842 = vsub.f32 %v2810, %v2824
        %v2843 = vsub.f32 %v2811, %v2827
        %v2844 = vsub.f32 %v2812, %v2830
        %v2845 = vsub.f32 %v2813, %v2833
        %v2846 = vsub.f32 %v2814, %v2836
        %v2847 = vsub.f32 %v2815, %v2839
        %v2848 = vmul.f32 %v2840, 1.442695
        %v2849 = vpow.pop %v2848
        %v2850 = vmul.f32 %v2841, 1.442695
        %v2851 = vpow.pop %v2850
        %v2852 = vmul.f32 %v2842, 1.442695
        %v2853 = vpow.pop %v2852
        %v2854 = vmul.f32 %v2843, 1.442695
        %v2855 = vpow.pop %v2854
        %v2856 = vmul.f32 %v2844, 1.442695
        %v2857 = vpow.pop %v2856
        %v2858 = vmul.f32 %v2845, 1.442695
        %v2859 = vpow.pop %v2858
        %v2860 = vmul.f32 %v2846, 1.442695
        %v2861 = vpow.pop %v2860
        %v2862 = vmul.f32 %v2847, 1.442695
        %v2863 = vpow.pop %v2862
        %v2864 = vsel %vm2198, %v2849, 0.0
        %2865 = vadd.xlane.f32.xlu0 %v2864
        %v2866 = vpop.xlane.xlu0 %2865
        %v2867 = vsel %vm2198, %v2851, 0.0
        %2868 = vadd.xlane.f32.xlu0 %v2867
        %v2869 = vpop.xlane.xlu0 %2868
        %v2870 = vsel %vm2198, %v2853, 0.0
        %2871 = vadd.xlane.f32.xlu0 %v2870
        %v2872 = vpop.xlane.xlu0 %2871
        %v2873 = vsel %vm2198, %v2855, 0.0
        %2874 = vadd.xlane.f32.xlu0 %v2873
        %v2875 = vpop.xlane.xlu0 %2874
        %v2876 = vsel %vm2198, %v2857, 0.0
        %2877 = vadd.xlane.f32.xlu0 %v2876
        %v2878 = vpop.xlane.xlu0 %2877
        %v2879 = vsel %vm2198, %v2859, 0.0
        %2880 = vadd.xlane.f32.xlu0 %v2879
        %v2881 = vpop.xlane.xlu0 %2880
        %v2882 = vsel %vm2198, %v2861, 0.0
        %2883 = vadd.xlane.f32.xlu0 %v2882
        %v2884 = vpop.xlane.xlu0 %2883
        %v2885 = vsel %vm2198, %v2863, 0.0
        %2886 = vadd.xlane.f32.xlu0 %v2885
        %v2887 = vpop.xlane.xlu0 %2886
        %v2888 = vrcp.pop %v2866
        %v2889 = vrcp.pop %v2869
        %v2890 = vrcp.pop %v2872
        %v2891 = vrcp.pop %v2875
        %v2892 = vrcp.pop %v2878
        %v2893 = vrcp.pop %v2881
        %v2894 = vrcp.pop %v2884
        %v2895 = vrcp.pop %v2887
        %v2896 = vmul.f32 %v2866, %v2888
        %v2897 = vmul.f32 %v2869, %v2889
        %v2898 = vmul.f32 %v2872, %v2890
        %v2899 = vmul.f32 %v2875, %v2891
        %v2900 = vmul.f32 %v2878, %v2892
        %v2901 = vmul.f32 %v2881, %v2893
        %v2902 = vmul.f32 %v2884, %v2894
        %v2903 = vmul.f32 %v2887, %v2895
        %v2904 = vsub.f32 2.0, %v2896
        %v2905 = vsub.f32 2.0, %v2897
        %v2906 = vsub.f32 2.0, %v2898
        %v2907 = vsub.f32 2.0, %v2899
        %v2908 = vsub.f32 2.0, %v2900
        %v2909 = vsub.f32 2.0, %v2901
        %v2910 = vsub.f32 2.0, %v2902
        %v2911 = vsub.f32 2.0, %v2903
        %v2912 = vmul.f32 %v2888, %v2904
        %v2913 = vmul.f32 %v2889, %v2905
        %v2914 = vmul.f32 %v2890, %v2906
        %v2915 = vmul.f32 %v2891, %v2907
        %v2916 = vmul.f32 %v2892, %v2908
        %v2917 = vmul.f32 %v2893, %v2909
        %v2918 = vmul.f32 %v2894, %v2910
        %v2919 = vmul.f32 %v2895, %v2911
        %v2920 = vmul.f32 %v2849, %v2912
        %v2921 = vmul.f32 %v2851, %v2913
        %v2922 = vmul.f32 %v2853, %v2914
        %v2923 = vmul.f32 %v2855, %v2915
        %v2924 = vmul.f32 %v2857, %v2916
        %v2925 = vmul.f32 %v2859, %v2917
        %v2926 = vmul.f32 %v2861, %v2918
        %v2927 = vmul.f32 %v2863, %v2919
        %v2929 = vsel %vm2198, %v2920, 0
        %2931 = vmatprep.subr.mxu0 0.0
        %2932 = vmatpush1.msra.mxu0 %v2190
        %2933 = vmatprep.subr.mxu0 0.0
        %2934 = vmatpush1.msra.mxu0 0.0
        %2935 = vmatprep.subr.mxu0 0.0
        %2936 = vmatpush1.msra.mxu0 0.0
        %2937 = vmatprep.subr.mxu0 0.0
        %2938 = vmatpush1.msra.mxu0 0.0
        %2939 = vmatprep.subr.mxu0 0.0
        %2940 = vmatpush1.msra.mxu0 0.0
        %2941 = vmatprep.subr.mxu0 0.0
        %2942 = vmatpush1.msra.mxu0 0.0
        %2943 = vmatprep.subr.mxu0 0.0
        %2944 = vmatpush1.msra.mxu0 0.0
        %2945 = vmatprep.subr.mxu0 0.0
        %2946 = vmatpush1.msra.mxu0 0.0
        %2947 = vmatprep.subr.mxu0 0.0
        %2948 = vmatpush1.msra.mxu0 0.0
        %2949 = vmatprep.subr.mxu0 0.0
        %2950 = vmatpush1.msra.mxu0 0.0
        %2951 = vmatprep.subr.mxu0 0.0
        %2952 = vmatpush1.msra.mxu0 0.0
        %2953 = vmatprep.subr.mxu0 0.0
        %2954 = vmatpush1.msra.mxu0 0.0
        %2955 = vmatprep.subr.mxu0 0.0
        %2956 = vmatpush1.msra.mxu0 0.0
        %2957 = vmatprep.subr.mxu0 0.0
        %2958 = vmatpush1.msra.mxu0 0.0
        %2959 = vmatprep.subr.mxu0 0.0
        %2960 = vmatpush1.msra.mxu0 0.0
        %2961 = vmatprep.subr.mxu0 0.0
        %2962 = vmatpush1.msra.mxu0 0.0
        %2963 = vmatprep.subr.mxu0 0.0
        %2964 = vmatpush1.msra.mxu0 0.0
        %2965 = vmatprep.subr.mxu0 0.0
        %2966 = vmatpush1.msra.mxu0 0.0
        %2967 = vmatprep.subr.mxu0 0.0
        %2968 = vmatpush1.msra.mxu0 0.0
        %2969 = vmatprep.subr.mxu0 0.0
        %2970 = vmatpush1.msra.mxu0 0.0
        %2971 = vmatprep.subr.mxu0 0.0
        %2972 = vmatpush1.msra.mxu0 0.0
        %2973 = vmatprep.subr.mxu0 0.0
        %2974 = vmatpush1.msra.mxu0 0.0
        %2975 = vmatprep.subr.mxu0 0.0
        %2976 = vmatpush1.msra.mxu0 0.0
        %2977 = vmatprep.subr.mxu0 0.0
        %2978 = vmatpush1.msra.mxu0 0.0
        %2979 = vmatprep.subr.mxu0 0.0
        %2980 = vmatpush1.msra.mxu0 0.0
        %2981 = vmatprep.subr.mxu0 0.0
        %2982 = vmatpush1.msra.mxu0 0.0
        %2983 = vmatprep.subr.mxu0 0.0
        %2984 = vmatpush1.msra.mxu0 0.0
        %2985 = vmatprep.subr.mxu0 0.0
        %2986 = vmatpush1.msra.mxu0 0.0
        %2987 = vmatprep.subr.mxu0 0.0
        %2988 = vmatpush1.msra.mxu0 0.0
        %2989 = vmatprep.subr.mxu0 0.0
        %2990 = vmatpush1.msra.mxu0 0.0
        %2991 = vmatprep.subr.mxu0 0.0
        %2992 = vmatpush1.msra.mxu0 0.0
        %2993 = vmatprep.subr.mxu0 0.0
        %2994 = vmatpush1.msra.mxu0 0.0
        %2995 = vmatprep.mubr.f32.mxu0 0.0
        %2996 = vmatmul.mubr.f32.gmra.mrb[0].mxu0 %v2929
        %v2997 = vpop.f32.mrb[0].mxu0
        %v2998 = vadd.f32 0.0, %v2997
        %v2999 = vpop.f32.mrb[0].mxu0
        %3000 = vdwg.mxu0
        %v3002 = vsel %vm2198, %v2921, 0
        %3004 = vmatprep.subr.mxu0 0.0
        %3005 = vmatpush1.msra.mxu0 %v2191
        %3006 = vmatprep.subr.mxu0 0.0
        %3007 = vmatpush1.msra.mxu0 0.0
        %3008 = vmatprep.subr.mxu0 0.0
        %3009 = vmatpush1.msra.mxu0 0.0
        %3010 = vmatprep.subr.mxu0 0.0
        %3011 = vmatpush1.msra.mxu0 0.0
        %3012 = vmatprep.subr.mxu0 0.0
        %3013 = vmatpush1.msra.mxu0 0.0
        %3014 = vmatprep.subr.mxu0 0.0
        %3015 = vmatpush1.msra.mxu0 0.0
        %3016 = vmatprep.subr.mxu0 0.0
        %3017 = vmatpush1.msra.mxu0 0.0
        %3018 = vmatprep.subr.mxu0 0.0
        %3019 = vmatpush1.msra.mxu0 0.0
        %3020 = vmatprep.subr.mxu0 0.0
        %3021 = vmatpush1.msra.mxu0 0.0
        %3022 = vmatprep.subr.mxu0 0.0
        %3023 = vmatpush1.msra.mxu0 0.0
        %3024 = vmatprep.subr.mxu0 0.0
        %3025 = vmatpush1.msra.mxu0 0.0
        %3026 = vmatprep.subr.mxu0 0.0
        %3027 = vmatpush1.msra.mxu0 0.0
        %3028 = vmatprep.subr.mxu0 0.0
        %3029 = vmatpush1.msra.mxu0 0.0
        %3030 = vmatprep.subr.mxu0 0.0
        %3031 = vmatpush1.msra.mxu0 0.0
        %3032 = vmatprep.subr.mxu0 0.0
        %3033 = vmatpush1.msra.mxu0 0.0
        %3034 = vmatprep.subr.mxu0 0.0
        %3035 = vmatpush1.msra.mxu0 0.0
        %3036 = vmatprep.subr.mxu0 0.0
        %3037 = vmatpush1.msra.mxu0 0.0
        %3038 = vmatprep.subr.mxu0 0.0
        %3039 = vmatpush1.msra.mxu0 0.0
        %3040 = vmatprep.subr.mxu0 0.0
        %3041 = vmatpush1.msra.mxu0 0.0
        %3042 = vmatprep.subr.mxu0 0.0
        %3043 = vmatpush1.msra.mxu0 0.0
        %3044 = vmatprep.subr.mxu0 0.0
        %3045 = vmatpush1.msra.mxu0 0.0
        %3046 = vmatprep.subr.mxu0 0.0
        %3047 = vmatpush1.msra.mxu0 0.0
        %3048 = vmatprep.subr.mxu0 0.0
        %3049 = vmatpush1.msra.mxu0 0.0
        %3050 = vmatprep.subr.mxu0 0.0
        %3051 = vmatpush1.msra.mxu0 0.0
        %3052 = vmatprep.subr.mxu0 0.0
        %3053 = vmatpush1.msra.mxu0 0.0
        %3054 = vmatprep.subr.mxu0 0.0
        %3055 = vmatpush1.msra.mxu0 0.0
        %3056 = vmatprep.subr.mxu0 0.0
        %3057 = vmatpush1.msra.mxu0 0.0
        %3058 = vmatprep.subr.mxu0 0.0
        %3059 = vmatpush1.msra.mxu0 0.0
        %3060 = vmatprep.subr.mxu0 0.0
        %3061 = vmatpush1.msra.mxu0 0.0
        %3062 = vmatprep.subr.mxu0 0.0
        %3063 = vmatpush1.msra.mxu0 0.0
        %3064 = vmatprep.subr.mxu0 0.0
        %3065 = vmatpush1.msra.mxu0 0.0
        %3066 = vmatprep.subr.mxu0 0.0
        %3067 = vmatpush1.msra.mxu0 0.0
        %3068 = vmatprep.mubr.f32.mxu0 0.0
        %3069 = vmatmul.mubr.f32.gmra.mrb[0].mxu0 %v3002
        %v3070 = vpop.f32.mrb[0].mxu0
        %v3071 = vadd.f32 0.0, %v3070
        %v3072 = vpop.f32.mrb[0].mxu0
        %3073 = vdwg.mxu0
        %v3075 = vsel %vm2198, %v2922, 0
        %3077 = vmatprep.subr.mxu0 0.0
        %3078 = vmatpush1.msra.mxu0 %v2192
        %3079 = vmatprep.subr.mxu0 0.0
        %3080 = vmatpush1.msra.mxu0 0.0
        %3081 = vmatprep.subr.mxu0 0.0
        %3082 = vmatpush1.msra.mxu0 0.0
        %3083 = vmatprep.subr.mxu0 0.0
        %3084 = vmatpush1.msra.mxu0 0.0
        %3085 = vmatprep.subr.mxu0 0.0
        %3086 = vmatpush1.msra.mxu0 0.0
        %3087 = vmatprep.subr.mxu0 0.0
        %3088 = vmatpush1.msra.mxu0 0.0
        %3089 = vmatprep.subr.mxu0 0.0
        %3090 = vmatpush1.msra.mxu0 0.0
        %3091 = vmatprep.subr.mxu0 0.0
        %3092 = vmatpush1.msra.mxu0 0.0
        %3093 = vmatprep.subr.mxu0 0.0
        %3094 = vmatpush1.msra.mxu0 0.0
        %3095 = vmatprep.subr.mxu0 0.0
        %3096 = vmatpush1.msra.mxu0 0.0
        %3097 = vmatprep.subr.mxu0 0.0
        %3098 = vmatpush1.msra.mxu0 0.0
        %3099 = vmatprep.subr.mxu0 0.0
        %3100 = vmatpush1.msra.mxu0 0.0
        %3101 = vmatprep.subr.mxu0 0.0
        %3102 = vmatpush1.msra.mxu0 0.0
        %3103 = vmatprep.subr.mxu0 0.0
        %3104 = vmatpush1.msra.mxu0 0.0
        %3105 = vmatprep.subr.mxu0 0.0
        %3106 = vmatpush1.msra.mxu0 0.0
        %3107 = vmatprep.subr.mxu0 0.0
        %3108 = vmatpush1.msra.mxu0 0.0
        %3109 = vmatprep.subr.mxu0 0.0
        %3110 = vmatpush1.msra.mxu0 0.0
        %3111 = vmatprep.subr.mxu0 0.0
        %3112 = vmatpush1.msra.mxu0 0.0
        %3113 = vmatprep.subr.mxu0 0.0
        %3114 = vmatpush1.msra.mxu0 0.0
        %3115 = vmatprep.subr.mxu0 0.0
        %3116 = vmatpush1.msra.mxu0 0.0
        %3117 = vmatprep.subr.mxu0 0.0
        %3118 = vmatpush1.msra.mxu0 0.0
        %3119 = vmatprep.subr.mxu0 0.0
        %3120 = vmatpush1.msra.mxu0 0.0
        %3121 = vmatprep.subr.mxu0 0.0
        %3122 = vmatpush1.msra.mxu0 0.0
        %3123 = vmatprep.subr.mxu0 0.0
        %3124 = vmatpush1.msra.mxu0 0.0
        %3125 = vmatprep.subr.mxu0 0.0
        %3126 = vmatpush1.msra.mxu0 0.0
        %3127 = vmatprep.subr.mxu0 0.0
        %3128 = vmatpush1.msra.mxu0 0.0
        %3129 = vmatprep.subr.mxu0 0.0
        %3130 = vmatpush1.msra.mxu0 0.0
        %3131 = vmatprep.subr.mxu0 0.0
        %3132 = vmatpush1.msra.mxu0 0.0
        %3133 = vmatprep.subr.mxu0 0.0
        %3134 = vmatpush1.msra.mxu0 0.0
        %3135 = vmatprep.subr.mxu0 0.0
        %3136 = vmatpush1.msra.mxu0 0.0
        %3137 = vmatprep.subr.mxu0 0.0
        %3138 = vmatpush1.msra.mxu0 0.0
        %3139 = vmatprep.subr.mxu0 0.0
        %3140 = vmatpush1.msra.mxu0 0.0
        %3141 = vmatprep.mubr.f32.mxu0 0.0
        %3142 = vmatmul.mubr.f32.gmra.mrb[0].mxu0 %v3075
        %v3143 = vpop.f32.mrb[0].mxu0
        %v3144 = vadd.f32 0.0, %v3143
        %v3145 = vpop.f32.mrb[0].mxu0
        %3146 = vdwg.mxu0
        %v3148 = vsel %vm2198, %v2923, 0
        %3150 = vmatprep.subr.mxu0 0.0
        %3151 = vmatpush1.msra.mxu0 %v2193
        %3152 = vmatprep.subr.mxu0 0.0
        %3153 = vmatpush1.msra.mxu0 0.0
        %3154 = vmatprep.subr.mxu0 0.0
        %3155 = vmatpush1.msra.mxu0 0.0
        %3156 = vmatprep.subr.mxu0 0.0
        %3157 = vmatpush1.msra.mxu0 0.0
        %3158 = vmatprep.subr.mxu0 0.0
        %3159 = vmatpush1.msra.mxu0 0.0
        %3160 = vmatprep.subr.mxu0 0.0
        %3161 = vmatpush1.msra.mxu0 0.0
        %3162 = vmatprep.subr.mxu0 0.0
        %3163 = vmatpush1.msra.mxu0 0.0
        %3164 = vmatprep.subr.mxu0 0.0
        %3165 = vmatpush1.msra.mxu0 0.0
        %3166 = vmatprep.subr.mxu0 0.0
        %3167 = vmatpush1.msra.mxu0 0.0
        %3168 = vmatprep.subr.mxu0 0.0
        %3169 = vmatpush1.msra.mxu0 0.0
        %3170 = vmatprep.subr.mxu0 0.0
        %3171 = vmatpush1.msra.mxu0 0.0
        %3172 = vmatprep.subr.mxu0 0.0
        %3173 = vmatpush1.msra.mxu0 0.0
        %3174 = vmatprep.subr.mxu0 0.0
        %3175 = vmatpush1.msra.mxu0 0.0
        %3176 = vmatprep.subr.mxu0 0.0
        %3177 = vmatpush1.msra.mxu0 0.0
        %3178 = vmatprep.subr.mxu0 0.0
        %3179 = vmatpush1.msra.mxu0 0.0
        %3180 = vmatprep.subr.mxu0 0.0
        %3181 = vmatpush1.msra.mxu0 0.0
        %3182 = vmatprep.subr.mxu0 0.0
        %3183 = vmatpush1.msra.mxu0 0.0
        %3184 = vmatprep.subr.mxu0 0.0
        %3185 = vmatpush1.msra.mxu0 0.0
        %3186 = vmatprep.subr.mxu0 0.0
        %3187 = vmatpush1.msra.mxu0 0.0
        %3188 = vmatprep.subr.mxu0 0.0
        %3189 = vmatpush1.msra.mxu0 0.0
        %3190 = vmatprep.subr.mxu0 0.0
        %3191 = vmatpush1.msra.mxu0 0.0
        %3192 = vmatprep.subr.mxu0 0.0
        %3193 = vmatpush1.msra.mxu0 0.0
        %3194 = vmatprep.subr.mxu0 0.0
        %3195 = vmatpush1.msra.mxu0 0.0
        %3196 = vmatprep.subr.mxu0 0.0
        %3197 = vmatpush1.msra.mxu0 0.0
        %3198 = vmatprep.subr.mxu0 0.0
        %3199 = vmatpush1.msra.mxu0 0.0
        %3200 = vmatprep.subr.mxu0 0.0
        %3201 = vmatpush1.msra.mxu0 0.0
        %3202 = vmatprep.subr.mxu0 0.0
        %3203 = vmatpush1.msra.mxu0 0.0
        %3204 = vmatprep.subr.mxu0 0.0
        %3205 = vmatpush1.msra.mxu0 0.0
        %3206 = vmatprep.subr.mxu0 0.0
        %3207 = vmatpush1.msra.mxu0 0.0
        %3208 = vmatprep.subr.mxu0 0.0
        %3209 = vmatpush1.msra.mxu0 0.0
        %3210 = vmatprep.subr.mxu0 0.0
        %3211 = vmatpush1.msra.mxu0 0.0
        %3212 = vmatprep.subr.mxu0 0.0
        %3213 = vmatpush1.msra.mxu0 0.0
        %3214 = vmatprep.mubr.f32.mxu0 0.0
        %3215 = vmatmul.mubr.f32.gmra.mrb[0].mxu0 %v3148
        %v3216 = vpop.f32.mrb[0].mxu0
        %v3217 = vadd.f32 0.0, %v3216
        %v3218 = vpop.f32.mrb[0].mxu0
        %3219 = vdwg.mxu0
        %v3221 = vsel %vm2198, %v2924, 0
        %3223 = vmatprep.subr.mxu0 0.0
        %3224 = vmatpush1.msra.mxu0 %v2194
        %3225 = vmatprep.subr.mxu0 0.0
        %3226 = vmatpush1.msra.mxu0 0.0
        %3227 = vmatprep.subr.mxu0 0.0
        %3228 = vmatpush1.msra.mxu0 0.0
        %3229 = vmatprep.subr.mxu0 0.0
        %3230 = vmatpush1.msra.mxu0 0.0
        %3231 = vmatprep.subr.mxu0 0.0
        %3232 = vmatpush1.msra.mxu0 0.0
        %3233 = vmatprep.subr.mxu0 0.0
        %3234 = vmatpush1.msra.mxu0 0.0
        %3235 = vmatprep.subr.mxu0 0.0
        %3236 = vmatpush1.msra.mxu0 0.0
        %3237 = vmatprep.subr.mxu0 0.0
        %3238 = vmatpush1.msra.mxu0 0.0
        %3239 = vmatprep.subr.mxu0 0.0
        %3240 = vmatpush1.msra.mxu0 0.0
        %3241 = vmatprep.subr.mxu0 0.0
        %3242 = vmatpush1.msra.mxu0 0.0
        %3243 = vmatprep.subr.mxu0 0.0
        %3244 = vmatpush1.msra.mxu0 0.0
        %3245 = vmatprep.subr.mxu0 0.0
        %3246 = vmatpush1.msra.mxu0 0.0
        %3247 = vmatprep.subr.mxu0 0.0
        %3248 = vmatpush1.msra.mxu0 0.0
        %3249 = vmatprep.subr.mxu0 0.0
        %3250 = vmatpush1.msra.mxu0 0.0
        %3251 = vmatprep.subr.mxu0 0.0
        %3252 = vmatpush1.msra.mxu0 0.0
        %3253 = vmatprep.subr.mxu0 0.0
        %3254 = vmatpush1.msra.mxu0 0.0
        %3255 = vmatprep.subr.mxu0 0.0
        %3256 = vmatpush1.msra.mxu0 0.0
        %3257 = vmatprep.subr.mxu0 0.0
        %3258 = vmatpush1.msra.mxu0 0.0
        %3259 = vmatprep.subr.mxu0 0.0
        %3260 = vmatpush1.msra.mxu0 0.0
        %3261 = vmatprep.subr.mxu0 0.0
        %3262 = vmatpush1.msra.mxu0 0.0
        %3263 = vmatprep.subr.mxu0 0.0
        %3264 = vmatpush1.msra.mxu0 0.0
        %3265 = vmatprep.subr.mxu0 0.0
        %3266 = vmatpush1.msra.mxu0 0.0
        %3267 = vmatprep.subr.mxu0 0.0
        %3268 = vmatpush1.msra.mxu0 0.0
        %3269 = vmatprep.subr.mxu0 0.0
        %3270 = vmatpush1.msra.mxu0 0.0
        %3271 = vmatprep.subr.mxu0 0.0
        %3272 = vmatpush1.msra.mxu0 0.0
        %3273 = vmatprep.subr.mxu0 0.0
        %3274 = vmatpush1.msra.mxu0 0.0
        %3275 = vmatprep.subr.mxu0 0.0
        %3276 = vmatpush1.msra.mxu0 0.0
        %3277 = vmatprep.subr.mxu0 0.0
        %3278 = vmatpush1.msra.mxu0 0.0
        %3279 = vmatprep.subr.mxu0 0.0
        %3280 = vmatpush1.msra.mxu0 0.0
        %3281 = vmatprep.subr.mxu0 0.0
        %3282 = vmatpush1.msra.mxu0 0.0
        %3283 = vmatprep.subr.mxu0 0.0
        %3284 = vmatpush1.msra.mxu0 0.0
        %3285 = vmatprep.subr.mxu0 0.0
        %3286 = vmatpush1.msra.mxu0 0.0
        %3287 = vmatprep.mubr.f32.mxu0 0.0
        %3288 = vmatmul.mubr.f32.gmra.mrb[0].mxu0 %v3221
        %v3289 = vpop.f32.mrb[0].mxu0
        %v3290 = vadd.f32 0.0, %v3289
        %v3291 = vpop.f32.mrb[0].mxu0
        %3292 = vdwg.mxu0
        %v3294 = vsel %vm2198, %v2925, 0
        %3296 = vmatprep.subr.mxu0 0.0
        %3297 = vmatpush1.msra.mxu0 %v2195
        %3298 = vmatprep.subr.mxu0 0.0
        %3299 = vmatpush1.msra.mxu0 0.0
        %3300 = vmatprep.subr.mxu0 0.0
        %3301 = vmatpush1.msra.mxu0 0.0
        %3302 = vmatprep.subr.mxu0 0.0
        %3303 = vmatpush1.msra.mxu0 0.0
        %3304 = vmatprep.subr.mxu0 0.0
        %3305 = vmatpush1.msra.mxu0 0.0
        %3306 = vmatprep.subr.mxu0 0.0
        %3307 = vmatpush1.msra.mxu0 0.0
        %3308 = vmatprep.subr.mxu0 0.0
        %3309 = vmatpush1.msra.mxu0 0.0
        %3310 = vmatprep.subr.mxu0 0.0
        %3311 = vmatpush1.msra.mxu0 0.0
        %3312 = vmatprep.subr.mxu0 0.0
        %3313 = vmatpush1.msra.mxu0 0.0
        %3314 = vmatprep.subr.mxu0 0.0
        %3315 = vmatpush1.msra.mxu0 0.0
        %3316 = vmatprep.subr.mxu0 0.0
        %3317 = vmatpush1.msra.mxu0 0.0
        %3318 = vmatprep.subr.mxu0 0.0
        %3319 = vmatpush1.msra.mxu0 0.0
        %3320 = vmatprep.subr.mxu0 0.0
        %3321 = vmatpush1.msra.mxu0 0.0
        %3322 = vmatprep.subr.mxu0 0.0
        %3323 = vmatpush1.msra.mxu0 0.0
        %3324 = vmatprep.subr.mxu0 0.0
        %3325 = vmatpush1.msra.mxu0 0.0
        %3326 = vmatprep.subr.mxu0 0.0
        %3327 = vmatpush1.msra.mxu0 0.0
        %3328 = vmatprep.subr.mxu0 0.0
        %3329 = vmatpush1.msra.mxu0 0.0
        %3330 = vmatprep.subr.mxu0 0.0
        %3331 = vmatpush1.msra.mxu0 0.0
        %3332 = vmatprep.subr.mxu0 0.0
        %3333 = vmatpush1.msra.mxu0 0.0
        %3334 = vmatprep.subr.mxu0 0.0
        %3335 = vmatpush1.msra.mxu0 0.0
        %3336 = vmatprep.subr.mxu0 0.0
        %3337 = vmatpush1.msra.mxu0 0.0
        %3338 = vmatprep.subr.mxu0 0.0
        %3339 = vmatpush1.msra.mxu0 0.0
        %3340 = vmatprep.subr.mxu0 0.0
        %3341 = vmatpush1.msra.mxu0 0.0
        %3342 = vmatprep.subr.mxu0 0.0
        %3343 = vmatpush1.msra.mxu0 0.0
        %3344 = vmatprep.subr.mxu0 0.0
        %3345 = vmatpush1.msra.mxu0 0.0
        %3346 = vmatprep.subr.mxu0 0.0
        %3347 = vmatpush1.msra.mxu0 0.0
        %3348 = vmatprep.subr.mxu0 0.0
        %3349 = vmatpush1.msra.mxu0 0.0
        %3350 = vmatprep.subr.mxu0 0.0
        %3351 = vmatpush1.msra.mxu0 0.0
        %3352 = vmatprep.subr.mxu0 0.0
        %3353 = vmatpush1.msra.mxu0 0.0
        %3354 = vmatprep.subr.mxu0 0.0
        %3355 = vmatpush1.msra.mxu0 0.0
        %3356 = vmatprep.subr.mxu0 0.0
        %3357 = vmatpush1.msra.mxu0 0.0
        %3358 = vmatprep.subr.mxu0 0.0
        %3359 = vmatpush1.msra.mxu0 0.0
        %3360 = vmatprep.mubr.f32.mxu0 0.0
        %3361 = vmatmul.mubr.f32.gmra.mrb[0].mxu0 %v3294
        %v3362 = vpop.f32.mrb[0].mxu0
        %v3363 = vadd.f32 0.0, %v3362
        %v3364 = vpop.f32.mrb[0].mxu0
        %3365 = vdwg.mxu0
        %v3367 = vsel %vm2198, %v2926, 0
        %3369 = vmatprep.subr.mxu0 0.0
        %3370 = vmatpush1.msra.mxu0 %v2196
        %3371 = vmatprep.subr.mxu0 0.0
        %3372 = vmatpush1.msra.mxu0 0.0
        %3373 = vmatprep.subr.mxu0 0.0
        %3374 = vmatpush1.msra.mxu0 0.0
        %3375 = vmatprep.subr.mxu0 0.0
        %3376 = vmatpush1.msra.mxu0 0.0
        %3377 = vmatprep.subr.mxu0 0.0
        %3378 = vmatpush1.msra.mxu0 0.0
        %3379 = vmatprep.subr.mxu0 0.0
        %3380 = vmatpush1.msra.mxu0 0.0
        %3381 = vmatprep.subr.mxu0 0.0
        %3382 = vmatpush1.msra.mxu0 0.0
        %3383 = vmatprep.subr.mxu0 0.0
        %3384 = vmatpush1.msra.mxu0 0.0
        %3385 = vmatprep.subr.mxu0 0.0
        %3386 = vmatpush1.msra.mxu0 0.0
        %3387 = vmatprep.subr.mxu0 0.0
        %3388 = vmatpush1.msra.mxu0 0.0
        %3389 = vmatprep.subr.mxu0 0.0
        %3390 = vmatpush1.msra.mxu0 0.0
        %3391 = vmatprep.subr.mxu0 0.0
        %3392 = vmatpush1.msra.mxu0 0.0
        %3393 = vmatprep.subr.mxu0 0.0
        %3394 = vmatpush1.msra.mxu0 0.0
        %3395 = vmatprep.subr.mxu0 0.0
        %3396 = vmatpush1.msra.mxu0 0.0
        %3397 = vmatprep.subr.mxu0 0.0
        %3398 = vmatpush1.msra.mxu0 0.0
        %3399 = vmatprep.subr.mxu0 0.0
        %3400 = vmatpush1.msra.mxu0 0.0
        %3401 = vmatprep.subr.mxu0 0.0
        %3402 = vmatpush1.msra.mxu0 0.0
        %3403 = vmatprep.subr.mxu0 0.0
        %3404 = vmatpush1.msra.mxu0 0.0
        %3405 = vmatprep.subr.mxu0 0.0
        %3406 = vmatpush1.msra.mxu0 0.0
        %3407 = vmatprep.subr.mxu0 0.0
        %3408 = vmatpush1.msra.mxu0 0.0
        %3409 = vmatprep.subr.mxu0 0.0
        %3410 = vmatpush1.msra.mxu0 0.0
        %3411 = vmatprep.subr.mxu0 0.0
        %3412 = vmatpush1.msra.mxu0 0.0
        %3413 = vmatprep.subr.mxu0 0.0
        %3414 = vmatpush1.msra.mxu0 0.0
        %3415 = vmatprep.subr.mxu0 0.0
        %3416 = vmatpush1.msra.mxu0 0.0
        %3417 = vmatprep.subr.mxu0 0.0
        %3418 = vmatpush1.msra.mxu0 0.0
        %3419 = vmatprep.subr.mxu0 0.0
        %3420 = vmatpush1.msra.mxu0 0.0
        %3421 = vmatprep.subr.mxu0 0.0
        %3422 = vmatpush1.msra.mxu0 0.0
        %3423 = vmatprep.subr.mxu0 0.0
        %3424 = vmatpush1.msra.mxu0 0.0
        %3425 = vmatprep.subr.mxu0 0.0
        %3426 = vmatpush1.msra.mxu0 0.0
        %3427 = vmatprep.subr.mxu0 0.0
        %3428 = vmatpush1.msra.mxu0 0.0
        %3429 = vmatprep.subr.mxu0 0.0
        %3430 = vmatpush1.msra.mxu0 0.0
        %3431 = vmatprep.subr.mxu0 0.0
        %3432 = vmatpush1.msra.mxu0 0.0
        %3433 = vmatprep.mubr.f32.mxu0 0.0
        %3434 = vmatmul.mubr.f32.gmra.mrb[0].mxu0 %v3367
        %v3435 = vpop.f32.mrb[0].mxu0
        %v3436 = vadd.f32 0.0, %v3435
        %v3437 = vpop.f32.mrb[0].mxu0
        %3438 = vdwg.mxu0
        %v3440 = vsel %vm2198, %v2927, 0
        %3442 = vmatprep.subr.mxu0 0.0
        %3443 = vmatpush1.msra.mxu0 %v2197
        %3444 = vmatprep.subr.mxu0 0.0
        %3445 = vmatpush1.msra.mxu0 0.0
        %3446 = vmatprep.subr.mxu0 0.0
        %3447 = vmatpush1.msra.mxu0 0.0
        %3448 = vmatprep.subr.mxu0 0.0
        %3449 = vmatpush1.msra.mxu0 0.0
        %3450 = vmatprep.subr.mxu0 0.0
        %3451 = vmatpush1.msra.mxu0 0.0
        %3452 = vmatprep.subr.mxu0 0.0
        %3453 = vmatpush1.msra.mxu0 0.0
        %3454 = vmatprep.subr.mxu0 0.0
        %3455 = vmatpush1.msra.mxu0 0.0
        %3456 = vmatprep.subr.mxu0 0.0
        %3457 = vmatpush1.msra.mxu0 0.0
        %3458 = vmatprep.subr.mxu0 0.0
        %3459 = vmatpush1.msra.mxu0 0.0
        %3460 = vmatprep.subr.mxu0 0.0
        %3461 = vmatpush1.msra.mxu0 0.0
        %3462 = vmatprep.subr.mxu0 0.0
        %3463 = vmatpush1.msra.mxu0 0.0
        %3464 = vmatprep.subr.mxu0 0.0
        %3465 = vmatpush1.msra.mxu0 0.0
        %3466 = vmatprep.subr.mxu0 0.0
        %3467 = vmatpush1.msra.mxu0 0.0
        %3468 = vmatprep.subr.mxu0 0.0
        %3469 = vmatpush1.msra.mxu0 0.0
        %3470 = vmatprep.subr.mxu0 0.0
        %3471 = vmatpush1.msra.mxu0 0.0
        %3472 = vmatprep.subr.mxu0 0.0
        %3473 = vmatpush1.msra.mxu0 0.0
        %3474 = vmatprep.subr.mxu0 0.0
        %3475 = vmatpush1.msra.mxu0 0.0
        %3476 = vmatprep.subr.mxu0 0.0
        %3477 = vmatpush1.msra.mxu0 0.0
        %3478 = vmatprep.subr.mxu0 0.0
        %3479 = vmatpush1.msra.mxu0 0.0
        %3480 = vmatprep.subr.mxu0 0.0
        %3481 = vmatpush1.msra.mxu0 0.0
        %3482 = vmatprep.subr.mxu0 0.0
        %3483 = vmatpush1.msra.mxu0 0.0
        %3484 = vmatprep.subr.mxu0 0.0
        %3485 = vmatpush1.msra.mxu0 0.0
        %3486 = vmatprep.subr.mxu0 0.0
        %3487 = vmatpush1.msra.mxu0 0.0
        %3488 = vmatprep.subr.mxu0 0.0
        %3489 = vmatpush1.msra.mxu0 0.0
        %3490 = vmatprep.subr.mxu0 0.0
        %3491 = vmatpush1.msra.mxu0 0.0
        %3492 = vmatprep.subr.mxu0 0.0
        %3493 = vmatpush1.msra.mxu0 0.0
        %3494 = vmatprep.subr.mxu0 0.0
        %3495 = vmatpush1.msra.mxu0 0.0
        %3496 = vmatprep.subr.mxu0 0.0
        %3497 = vmatpush1.msra.mxu0 0.0
        %3498 = vmatprep.subr.mxu0 0.0
        %3499 = vmatpush1.msra.mxu0 0.0
        %3500 = vmatprep.subr.mxu0 0.0
        %3501 = vmatpush1.msra.mxu0 0.0
        %3502 = vmatprep.subr.mxu0 0.0
        %3503 = vmatpush1.msra.mxu0 0.0
        %3504 = vmatprep.subr.mxu0 0.0
        %3505 = vmatpush1.msra.mxu0 0.0
        %3506 = vmatprep.mubr.f32.mxu0 0.0
        %3507 = vmatmul.mubr.f32.gmra.mrb[0].mxu0 %v3440
        %v3508 = vpop.f32.mrb[0].mxu0
        %v3509 = vadd.f32 0.0, %v3508
        %v3510 = vpop.f32.mrb[0].mxu0
        %3511 = vdwg.mxu0
        %v3512 = vcombine.low %v2998, %v3144
        %v3513 = vcombine.high %v2998, %v3144
        %v3515 = vunpack.c.l.s4 1983009808
        %v3516 = vunpack.c.0.s8 %v3515
        %v3517 = vlaneseq
        %v3518 = vshrl.u32 %v3517, 7
        %v3519 = vsub.s32 %v3516, %v3518
        %v3520 = vrot.slane %v3512, %v3519
        %v3522 = vunpack.c.l.s4 1983009808
        %v3523 = vunpack.c.0.s8 %v3522
        %v3524 = vlaneseq
        %v3525 = vshrl.u32 %v3524, 7
        %v3526 = vsub.s32 %v3523, %v3525
        %v3527 = vrot.slane %v3513, %v3526
        %v3528 = vcombine.low %v3071, %v3217
        %v3529 = vcombine.high %v3071, %v3217
        %v3531 = vunpack.c.l.s4 1983009808
        %v3532 = vunpack.c.0.s8 %v3531
        %v3533 = vlaneseq
        %v3534 = vshrl.u32 %v3533, 7
        %v3535 = vsub.s32 %v3532, %v3534
        %v3536 = vrot.slane %v3528, %v3535
        %v3538 = vunpack.c.l.s4 1983009808
        %v3539 = vunpack.c.0.s8 %v3538
        %v3540 = vlaneseq
        %v3541 = vshrl.u32 %v3540, 7
        %v3542 = vsub.s32 %v3539, %v3541
        %v3543 = vrot.slane %v3529, %v3542
        %v3544 = vcombine.low %v3290, %v3436
        %v3545 = vcombine.high %v3290, %v3436
        %v3547 = vunpack.c.l.s4 1983009808
        %v3548 = vunpack.c.0.s8 %v3547
        %v3549 = vlaneseq
        %v3550 = vshrl.u32 %v3549, 7
        %v3551 = vsub.s32 %v3548, %v3550
        %v3552 = vrot.slane %v3544, %v3551
        %v3554 = vunpack.c.l.s4 1983009808
        %v3555 = vunpack.c.0.s8 %v3554
        %v3556 = vlaneseq
        %v3557 = vshrl.u32 %v3556, 7
        %v3558 = vsub.s32 %v3555, %v3557
        %v3559 = vrot.slane %v3545, %v3558
        %v3560 = vcombine.low %v3363, %v3509
        %v3561 = vcombine.high %v3363, %v3509
        %v3563 = vunpack.c.l.s4 1983009808
        %v3564 = vunpack.c.0.s8 %v3563
        %v3565 = vlaneseq
        %v3566 = vshrl.u32 %v3565, 7
        %v3567 = vsub.s32 %v3564, %v3566
        %v3568 = vrot.slane %v3560, %v3567
        %v3570 = vunpack.c.l.s4 1983009808
        %v3571 = vunpack.c.0.s8 %v3570
        %v3572 = vlaneseq
        %v3573 = vshrl.u32 %v3572, 7
        %v3574 = vsub.s32 %v3571, %v3573
        %v3575 = vrot.slane %v3561, %v3574
        %v3576 = vcombine.low %v3520, %v3536
        %v3577 = vcombine.high %v3520, %v3536
        %v3579 = vunpack.c.l.s4 1934713408
        %v3580 = vunpack.c.0.s8 %v3579
        %v3581 = vlaneseq
        %v3582 = vshrl.u32 %v3581, 7
        %v3583 = vsub.s32 %v3580, %v3582
        %v3584 = vrot.slane %v3576, %v3583
        %v3586 = vunpack.c.l.s4 1934713408
        %v3587 = vunpack.c.0.s8 %v3586
        %v3588 = vlaneseq
        %v3589 = vshrl.u32 %v3588, 7
        %v3590 = vsub.s32 %v3587, %v3589
        %v3591 = vrot.slane %v3577, %v3590
        %v3592 = vcombine.low %v3527, %v3543
        %v3593 = vcombine.high %v3527, %v3543
        %v3595 = vunpack.c.l.s4 1934713408
        %v3596 = vunpack.c.0.s8 %v3595
        %v3597 = vlaneseq
        %v3598 = vshrl.u32 %v3597, 7
        %v3599 = vsub.s32 %v3596, %v3598
        %v3600 = vrot.slane %v3592, %v3599
        %v3602 = vunpack.c.l.s4 1934713408
        %v3603 = vunpack.c.0.s8 %v3602
        %v3604 = vlaneseq
        %v3605 = vshrl.u32 %v3604, 7
        %v3606 = vsub.s32 %v3603, %v3605
        %v3607 = vrot.slane %v3593, %v3606
        %v3608 = vcombine.low %v3552, %v3568
        %v3609 = vcombine.high %v3552, %v3568
        %v3611 = vunpack.c.l.s4 1934713408
        %v3612 = vunpack.c.0.s8 %v3611
        %v3613 = vlaneseq
        %v3614 = vshrl.u32 %v3613, 7
        %v3615 = vsub.s32 %v3612, %v3614
        %v3616 = vrot.slane %v3608, %v3615
        %v3618 = vunpack.c.l.s4 1934713408
        %v3619 = vunpack.c.0.s8 %v3618
        %v3620 = vlaneseq
        %v3621 = vshrl.u32 %v3620, 7
        %v3622 = vsub.s32 %v3619, %v3621
        %v3623 = vrot.slane %v3609, %v3622
        %v3624 = vcombine.low %v3559, %v3575
        %v3625 = vcombine.high %v3559, %v3575
        %v3627 = vunpack.c.l.s4 1934713408
        %v3628 = vunpack.c.0.s8 %v3627
        %v3629 = vlaneseq
        %v3630 = vshrl.u32 %v3629, 7
        %v3631 = vsub.s32 %v3628, %v3630
        %v3632 = vrot.slane %v3624, %v3631
        %v3634 = vunpack.c.l.s4 1934713408
        %v3635 = vunpack.c.0.s8 %v3634
        %v3636 = vlaneseq
        %v3637 = vshrl.u32 %v3636, 7
        %v3638 = vsub.s32 %v3635, %v3637
        %v3639 = vrot.slane %v3625, %v3638
        %v3640 = vcombine.low %v3584, %v3616
        %v3641 = vcombine.high %v3584, %v3616
        %v3642 = vcombine.low %v3591, %v3623
        %v3643 = vcombine.high %v3591, %v3623
        %v3644 = vcombine.low %v3600, %v3632
        %v3645 = vcombine.high %v3600, %v3632
        %v3646 = vcombine.low %v3607, %v3639
        %v3647 = vcombine.high %v3607, %v3639
        %v3648 = vcombine.low %v3640, %v3642
        %v3649 = vcombine.high %v3640, %v3642
        %v3651 = vunpack.c.l.s4 1983009808
        %v3652 = vunpack.c.0.s8 %v3651
        %v3653 = vlaneseq
        %v3654 = vshrl.u32 %v3653, 7
        %v3655 = vsub.s32 %v3652, %v3654
        %v3656 = vrot.slane %v3648, %v3655
        %v3658 = vunpack.c.l.s4 1983009808
        %v3659 = vunpack.c.0.s8 %v3658
        %v3660 = vlaneseq
        %v3661 = vshrl.u32 %v3660, 7
        %v3662 = vsub.s32 %v3659, %v3661
        %v3663 = vrot.slane %v3649, %v3662
        %v3664 = vcombine.low %v3641, %v3643
        %v3665 = vcombine.high %v3641, %v3643
        %v3667 = vunpack.c.l.s4 1983009808
        %v3668 = vunpack.c.0.s8 %v3667
        %v3669 = vlaneseq
        %v3670 = vshrl.u32 %v3669, 7
        %v3671 = vsub.s32 %v3668, %v3670
        %v3672 = vrot.slane %v3664, %v3671
        %v3674 = vunpack.c.l.s4 1983009808
        %v3675 = vunpack.c.0.s8 %v3674
        %v3676 = vlaneseq
        %v3677 = vshrl.u32 %v3676, 7
        %v3678 = vsub.s32 %v3675, %v3677
        %v3679 = vrot.slane %v3665, %v3678
        %v3680 = vcombine.low %v3644, %v3646
        %v3681 = vcombine.high %v3644, %v3646
        %v3683 = vunpack.c.l.s4 1983009808
        %v3684 = vunpack.c.0.s8 %v3683
        %v3685 = vlaneseq
        %v3686 = vshrl.u32 %v3685, 7
        %v3687 = vsub.s32 %v3684, %v3686
        %v3688 = vrot.slane %v3680, %v3687
        %v3690 = vunpack.c.l.s4 1983009808
        %v3691 = vunpack.c.0.s8 %v3690
        %v3692 = vlaneseq
        %v3693 = vshrl.u32 %v3692, 7
        %v3694 = vsub.s32 %v3691, %v3693
        %v3695 = vrot.slane %v3681, %v3694
        %v3696 = vcombine.low %v3645, %v3647
        %v3697 = vcombine.high %v3645, %v3647
        %v3699 = vunpack.c.l.s4 1983009808
        %v3700 = vunpack.c.0.s8 %v3699
        %v3701 = vlaneseq
        %v3702 = vshrl.u32 %v3701, 7
        %v3703 = vsub.s32 %v3700, %v3702
        %v3704 = vrot.slane %v3696, %v3703
        %v3706 = vunpack.c.l.s4 1983009808
        %v3707 = vunpack.c.0.s8 %v3706
        %v3708 = vlaneseq
        %v3709 = vshrl.u32 %v3708, 7
        %v3710 = vsub.s32 %v3707, %v3709
        %v3711 = vrot.slane %v3697, %v3710
        %v3712 = vcombine.low %v3656, %v3672
        %v3713 = vcombine.high %v3656, %v3672
        %v3715 = vunpack.c.l.s4 1934713408
        %v3716 = vunpack.c.0.s8 %v3715
        %v3717 = vlaneseq
        %v3718 = vshrl.u32 %v3717, 7
        %v3719 = vsub.s32 %v3716, %v3718
        %v3720 = vrot.slane %v3712, %v3719
        %v3722 = vunpack.c.l.s4 1934713408
        %v3723 = vunpack.c.0.s8 %v3722
        %v3724 = vlaneseq
        %v3725 = vshrl.u32 %v3724, 7
        %v3726 = vsub.s32 %v3723, %v3725
        %v3727 = vrot.slane %v3713, %v3726
        %v3728 = vcombine.low %v3663, %v3679
        %v3729 = vcombine.high %v3663, %v3679
        %v3731 = vunpack.c.l.s4 1934713408
        %v3732 = vunpack.c.0.s8 %v3731
        %v3733 = vlaneseq
        %v3734 = vshrl.u32 %v3733, 7
        %v3735 = vsub.s32 %v3732, %v3734
        %v3736 = vrot.slane %v3728, %v3735
        %v3738 = vunpack.c.l.s4 1934713408
        %v3739 = vunpack.c.0.s8 %v3738
        %v3740 = vlaneseq
        %v3741 = vshrl.u32 %v3740, 7
        %v3742 = vsub.s32 %v3739, %v3741
        %v3743 = vrot.slane %v3729, %v3742
        %v3744 = vcombine.low %v3688, %v3704
        %v3745 = vcombine.high %v3688, %v3704
        %v3747 = vunpack.c.l.s4 1934713408
        %v3748 = vunpack.c.0.s8 %v3747
        %v3749 = vlaneseq
        %v3750 = vshrl.u32 %v3749, 7
        %v3751 = vsub.s32 %v3748, %v3750
        %v3752 = vrot.slane %v3744, %v3751
        %v3754 = vunpack.c.l.s4 1934713408
        %v3755 = vunpack.c.0.s8 %v3754
        %v3756 = vlaneseq
        %v3757 = vshrl.u32 %v3756, 7
        %v3758 = vsub.s32 %v3755, %v3757
        %v3759 = vrot.slane %v3745, %v3758
        %v3760 = vcombine.low %v3695, %v3711
        %v3761 = vcombine.high %v3695, %v3711
        %v3763 = vunpack.c.l.s4 1934713408
        %v3764 = vunpack.c.0.s8 %v3763
        %v3765 = vlaneseq
        %v3766 = vshrl.u32 %v3765, 7
        %v3767 = vsub.s32 %v3764, %v3766
        %v3768 = vrot.slane %v3760, %v3767
        %v3770 = vunpack.c.l.s4 1934713408
        %v3771 = vunpack.c.0.s8 %v3770
        %v3772 = vlaneseq
        %v3773 = vshrl.u32 %v3772, 7
        %v3774 = vsub.s32 %v3771, %v3773
        %v3775 = vrot.slane %v3761, %v3774
        %v3776 = vcombine.low %v3720, %v3752
        %v3777 = vcombine.high %v3720, %v3752
        %v3778 = vcombine.low %v3727, %v3759
        %v3779 = vcombine.high %v3727, %v3759
        %v3780 = vcombine.low %v3736, %v3768
        %v3781 = vcombine.high %v3736, %v3768
        %v3782 = vcombine.low %v3743, %v3775
        %v3783 = vcombine.high %v3743, %v3775
        %3785 = vrot.lane.b32.xlu0 %v3777, 4
        %v3786 = vpop.permute.xlu0 %3785
        %3789 = vrot.lane.b32.xlu0 %v3778, 8
        %v3790 = vpop.permute.xlu0 %3789
        %3793 = vrot.lane.b32.xlu0 %v3779, 12
        %v3794 = vpop.permute.xlu0 %3793
        %3797 = vrot.lane.b32.xlu0 %v3780, 16
        %v3798 = vpop.permute.xlu0 %3797
        %3801 = vrot.lane.b32.xlu0 %v3781, 20
        %v3802 = vpop.permute.xlu0 %3801
        %3805 = vrot.lane.b32.xlu0 %v3782, 24
        %v3806 = vpop.permute.xlu0 %3805
        %3809 = vrot.lane.b32.xlu0 %v3783, 28
        %v3810 = vpop.permute.xlu0 %3809
        %v3812 = vsel %vm1246, %v3776, %v3786
        %v3813 = vsel %vm2198, %v3812, %v3790
        %vm3814 = vcmask 97280
        %v3815 = vsel %vm3814, %v3813, %v3794
        %vm3816 = vcmask 130048
        %v3817 = vsel %vm3816, %v3815, %v3798
        %vm3818 = vcmask 162816
        %v3819 = vsel %vm3818, %v3817, %v3802
        %vm3820 = vcmask 195584
        %v3821 = vsel %vm3820, %v3819, %v3806
        %vm3822 = vcmask 228352
        %v3823 = vsel %vm3822, %v3821, %v3810
        %v3824 = vld [vmem:[#allocation8] sm:$0xff]
        %v3825 = vld [vmem:[#allocation8 + $0x8] sm:$0xff]
        %v3826 = vld [vmem:[#allocation8 + $0x10] sm:$0xff]
        %v3827 = vld [vmem:[#allocation8 + $0x18] sm:$0xff]
        %v3828 = vld [vmem:[%s5] sm:$0x1]
        %v3830 = vlaneseq
        %v3831 = vshrl.u32 %v3830, 7
        %v3832 = vsub.s32 0, %v3831
        %v3833 = vrot.slane %v3828, %v3832
        %v3836 = vsel %vm345, %v3823, 0
        %3838 = vmatprep.subr.mxu0 0.0
        %3839 = vmatpush1.msra.mxu0 %v3824
        %3840 = vmatprep.subr.mxu0 0.0
        %3841 = vmatpush1.msra.mxu0 %v3825
        %3842 = vmatprep.subr.mxu0 0.0
        %3843 = vmatpush1.msra.mxu0 %v3826
        %3844 = vmatprep.subr.mxu0 0.0
        %3845 = vmatpush1.msra.mxu0 %v3827
        %3846 = vmatprep.subr.mxu0 0.0
        %3847 = vmatpush1.msra.mxu0 0.0
        %3848 = vmatprep.subr.mxu0 0.0
        %3849 = vmatpush1.msra.mxu0 0.0
        %3850 = vmatprep.subr.mxu0 0.0
        %3851 = vmatpush1.msra.mxu0 0.0
        %3852 = vmatprep.subr.mxu0 0.0
        %3853 = vmatpush1.msra.mxu0 0.0
        %3854 = vmatprep.subr.mxu0 0.0
        %3855 = vmatpush1.msra.mxu0 0.0
        %3856 = vmatprep.subr.mxu0 0.0
        %3857 = vmatpush1.msra.mxu0 0.0
        %3858 = vmatprep.subr.mxu0 0.0
        %3859 = vmatpush1.msra.mxu0 0.0
        %3860 = vmatprep.subr.mxu0 0.0
        %3861 = vmatpush1.msra.mxu0 0.0
        %3862 = vmatprep.subr.mxu0 0.0
        %3863 = vmatpush1.msra.mxu0 0.0
        %3864 = vmatprep.subr.mxu0 0.0
        %3865 = vmatpush1.msra.mxu0 0.0
        %3866 = vmatprep.subr.mxu0 0.0
        %3867 = vmatpush1.msra.mxu0 0.0
        %3868 = vmatprep.subr.mxu0 0.0
        %3869 = vmatpush1.msra.mxu0 0.0
        %3870 = vmatprep.subr.mxu0 0.0
        %3871 = vmatpush1.msra.mxu0 0.0
        %3872 = vmatprep.subr.mxu0 0.0
        %3873 = vmatpush1.msra.mxu0 0.0
        %3874 = vmatprep.subr.mxu0 0.0
        %3875 = vmatpush1.msra.mxu0 0.0
        %3876 = vmatprep.subr.mxu0 0.0
        %3877 = vmatpush1.msra.mxu0 0.0
        %3878 = vmatprep.subr.mxu0 0.0
        %3879 = vmatpush1.msra.mxu0 0.0
        %3880 = vmatprep.subr.mxu0 0.0
        %3881 = vmatpush1.msra.mxu0 0.0
        %3882 = vmatprep.subr.mxu0 0.0
        %3883 = vmatpush1.msra.mxu0 0.0
        %3884 = vmatprep.subr.mxu0 0.0
        %3885 = vmatpush1.msra.mxu0 0.0
        %3886 = vmatprep.subr.mxu0 0.0
        %3887 = vmatpush1.msra.mxu0 0.0
        %3888 = vmatprep.subr.mxu0 0.0
        %3889 = vmatpush1.msra.mxu0 0.0
        %3890 = vmatprep.subr.mxu0 0.0
        %3891 = vmatpush1.msra.mxu0 0.0
        %3892 = vmatprep.subr.mxu0 0.0
        %3893 = vmatpush1.msra.mxu0 0.0
        %3894 = vmatprep.subr.mxu0 0.0
        %3895 = vmatpush1.msra.mxu0 0.0
        %3896 = vmatprep.subr.mxu0 0.0
        %3897 = vmatpush1.msra.mxu0 0.0
        %3898 = vmatprep.subr.mxu0 0.0
        %3899 = vmatpush1.msra.mxu0 0.0
        %3900 = vmatprep.subr.mxu0 0.0
        %3901 = vmatpush1.msra.mxu0 0.0
        %3902 = vmatprep.mubr.f32.mxu0 0.0
        %3903 = vmatmul.mubr.f32.gmra.mrb[0].mxu0 %v3836
        %v3904 = vpop.f32.mrb[0].mxu0
        %v3905 = vadd.f32 %v3833, %v3904
        %v3906 = vpop.f32.mrb[0].mxu0
        %3907 = vdwg.mxu0
        %3908 = vst.msk [vmem:[%s332] sm:$0xff] %vm345, %v3905
        %s3909 = sand.u32 %s171, 1
        %s3910 = scalar_lea.sflag [#allocation4], %s3909
        %s3911 = sand.u32 %s171, 1
        %s3912 = smul.addr %s3911, 8
        %s3913 = scalar_lea.vmem [#allocation10], %s3912
        // Predicated region
        $region61: #{tpu_custom_call.1} parent=43 // pred_check
          %p3914 = pneg %p181
        $region62: #{tpu_custom_call.1} parent=43 // pred_check_branch
          %3916 = sbr.rel (%p3914) target = $region64
        $region63: #{tpu_custom_call.1} parent=43 // pred_region
          %s3918 = ssub.s32 128, 128
          %3919 = vsyncadd %s3910, %s3918
          %s3920 = smul.addr %s27, 128
          %s3921 = scalar_lea.hbm %s6, %s3920
          %s3923 = sshll.u32 %s3913, 4
          %s3924 = int_to_ptr.vmem [resolvable:$true] %s3923
          %3926 = dma.vmem_to_hbm [thread:$0]  %s3924, 128, %s3921, %s3910
        $region64: #{tpu_custom_call.1} parent=43 // pred_fallthru
          _
      $region44: #{tpu_custom_call.1} parent=5 // pred_fallthru
        _
      %p3927 = scmp.le.s32.totalorder 2, %s22
      // Predicated region
      $region65: #{tpu_custom_call.1} parent=5 // pred_check
        %p3928 = pneg %p3927
      $region66: #{tpu_custom_call.1} parent=5 // pred_check_branch
        %3930 = sbr.rel (%p3928) target = $region68
      $region67: #{tpu_custom_call.1} parent=5 // pred_region
        %s3931 = ssub.s32 %s22, 2
        // Predicated region
        $region69: #{tpu_custom_call.1} parent=67 // pred_check
          %p3932 = pneg %p187
        $region70: #{tpu_custom_call.1} parent=67 // pred_check_branch
          %3934 = sbr.rel (%p3932) target = $region72
        $region71: #{tpu_custom_call.1} parent=67 // pred_region
          %s3935 = sand.u32 %s172, 1
          %s3936 = scalar_lea.sflag [#allocation4], %s3935
          %s3937 = sand.u32 %s172, 1
          %s3938 = smul.addr %s3937, 8
          %s3939 = scalar_lea.vmem [#allocation10], %s3938
          %3940 = dma.done %s3936, 128
        $region72: #{tpu_custom_call.1} parent=67 // pred_fallthru
          _
      $region68: #{tpu_custom_call.1} parent=5 // pred_fallthru
        _
    $region6: #{tpu_custom_call.1} parent=1 // loop_footer
      %s26 = sadd.s32 1, %s22
    $region7: #{tpu_custom_call.1} parent=1 // loop_footer_branch
      %21 = sbr.rel target = $region3
    $region8: #{tpu_custom_call.1} parent=1 // loop_exit
      _
    %3941 = vsyncpa [#allocation3], 1
    %s3942 = scalar_lea.sflag [#allocation3], 1
    %3943 = vsyncpa %s3942, 1
    %3944 = vsyncpa [#allocation6], 1
    %s3945 = scalar_lea.sflag [#allocation6], 1
    %3946 = vsyncpa %s3945, 1
    %3947 = vsyncpa [#allocation9], 1
    %3948 = vsyncpa [#allocation4], 1
    %s3949 = scalar_lea.sflag [#allocation4], 1
    %3950 = vsyncpa %s3949, 1

</llo_original>
